<compile_context>
chip_gen: v6e
topology: v6e:2x2x1
jax: 0.10.0
libtpu: 0.0.40
codegen_flags: <defaults>
</compile_context>

<pallas_src>
import jax
import jax.numpy as jnp
from jax.experimental import pallas as pl
from jax.experimental.pallas import tpu as pltpu

NEG_SLOPE = 0.01          # F.leaky_relu default negative_slope
HEAD_TILE_N = 8192        # N-tile for the fused hypernetwork head matmul

# Hypernetwork heads in concatenation order.  4-D shapes are conv-style
# (O, C, kh, kw); their columns are permuted at init time to (kh, kw, C, O)
# order so the generated vectors reshape directly into the (K, O) matmul
# layout used by the conv kernels (and (576, 128) for fc1).
HEADS = (
    ("c1w", (16, 3, 5, 5)),
    ("c1b", (16,)),
    ("c2w", (32, 16, 5, 5)),
    ("c2b", (32,)),
    ("c3w", (64, 32, 3, 3)),
    ("c3b", (64,)),
    ("l1w", (128, 64, 3, 3)),   # fc1.weight viewed as (O=128, C=64, 3, 3)
    ("l1b", (128,)),
)


def _prod(shape):
    n = 1
    for s in shape:
        n *= s
    return n


def _round_up(x, m):
    return (x + m - 1) // m * m


HEAD_SIZES = tuple(_prod(s) for _, s in HEADS)
HEAD_OFFSETS = tuple(sum(HEAD_SIZES[:i]) for i in range(len(HEADS)))
HEAD_NAMES = tuple(n for n, _ in HEADS)
N_HEADS_TOTAL = sum(HEAD_SIZES)                        # 106400
N_HEADS_PAD = _round_up(N_HEADS_TOTAL, HEAD_TILE_N)    # 106496 = 13 * 8192


# ---------------------------------------------------------------------------
# Pallas kernels
# ---------------------------------------------------------------------------
def _hyper_heads_kernel(emb_ref, mw_ref, mb_ref, hw_ref, hb_ref, o_ref):
    """Fused hypernetwork: feat = relu(emb @ mlp_w + mlp_b); out = feat @ W + b.

    The grid streams the concatenated head-weight matrix along N; the tiny
    MLP is recomputed per tile (negligible) so the whole phase is one call.
    """
    feat = jnp.dot(emb_ref[...], mw_ref[...],
                   preferred_element_type=jnp.float32) + mb_ref[...]
    feat = jnp.maximum(feat, 0.0)                       # ReLU(inplace=True)
    o_ref[...] = (jnp.dot(feat, hw_ref[...],
                          preferred_element_type=jnp.float32) + hb_ref[...])


def hyper_heads(emb, mlp_w, mlp_b, heads_w, heads_b):
    """(1, hidden) embedding -> (1, N_HEADS_PAD) concatenated head outputs."""
    hid, npad = heads_w.shape
    grid = (npad // HEAD_TILE_N,)
    return pl.pallas_call(
        _hyper_heads_kernel,
        out_shape=jax.ShapeDtypeStruct((1, npad), jnp.float32),
        grid_spec=pltpu.PrefetchScalarGridSpec(
            num_scalar_prefetch=0,
            grid=grid,
            in_specs=[
                pl.BlockSpec(emb.shape, lambda j: (0, 0)),
                pl.BlockSpec(mlp_w.shape, lambda j: (0, 0)),
                pl.BlockSpec(mlp_b.shape, lambda j: (0, 0)),
                pl.BlockSpec((hid, HEAD_TILE_N), lambda j: (0, j)),
                pl.BlockSpec((1, HEAD_TILE_N), lambda j: (0, j)),
            ],
            out_specs=pl.BlockSpec((1, HEAD_TILE_N), lambda j: (0, j)),
        ),
        compiler_params=pltpu.CompilerParams(
            dimension_semantics=("parallel",)),
    )(emb, mlp_w, mlp_b, heads_w, heads_b)


def _conv_pool_kernel(x_ref, w_ref, b_ref, o_ref):
    """conv-as-matmul + bias + leaky_relu + 2x2 max-pool, fully fused.

    x: (4*qp, Kpad) bf16 patches, rows ordered (corner, b, i2, j2) so each of
       the 4 contiguous, sublane-aligned row blocks holds one pool-window
       corner; w: (Kpad, 128) bf16; b: (1, 128) f32; o: (qp, 128) f32.
    """
    qp = o_ref.shape[0]
    y = jnp.dot(x_ref[...], w_ref[...], preferred_element_type=jnp.float32)
    y = y + b_ref[...]
    y = jnp.where(y > 0, y, NEG_SLOPE * y)              # leaky_relu (f32 epilogue)
    p0 = y[0 * qp:1 * qp, :]
    p1 = y[1 * qp:2 * qp, :]
    p2 = y[2 * qp:3 * qp, :]
    p3 = y[3 * qp:4 * qp, :]
    o_ref[...] = jnp.maximum(jnp.maximum(p0, p1), jnp.maximum(p2, p3))


def conv_pool(x_nhwc, wmat, bias, *, kh, kw, pad):
    """MaxPool2d(2,2)(leaky_relu(conv2d(x, w, b, padding=pad))) in one kernel.

    x_nhwc: (B, H, W, C) f32; wmat: (K=kh*kw*C, O) f32 (pre-permuted layout);
    bias: (O,) f32.  Returns (B, Ho//2, Wo//2, O) f32 (NHWC).
    """
    B, H, W, C = x_nhwc.shape
    K, O = wmat.shape
    assert K == kh * kw * C
    if pad:
        x_nhwc = jnp.pad(x_nhwc, ((0, 0), (pad, pad), (pad, pad), (0, 0)))
    Hp, Wp = H + 2 * pad, W + 2 * pad
    Ho, Wo = Hp - kh + 1, Wp - kw + 1
    assert Ho % 2 == 0 and Wo % 2 == 0
    Ho2, Wo2 = Ho // 2, Wo // 2

    # im2col with (kh, kw, C) patch ordering (matches wmat row order).
    cols = [x_nhwc[:, i:i + Ho, j:j + Wo, :] for i in range(kh) for j in range(kw)]
    patches = jnp.stack(cols, axis=3).reshape(B, Ho, Wo, K)

    # Reorder rows to pool-window-corner-major: (wi, wj, b, i2, j2).
    patches = patches.reshape(B, Ho2, 2, Wo2, 2, K).transpose(2, 4, 0, 1, 3, 5)
    q = B * Ho2 * Wo2
    qp = _round_up(q, 8)                     # sublane-aligned corner blocks
    Kp = _round_up(K, 128)                   # lane-aligned contraction dim
    patches = patches.reshape(4, q, K)
    patches = jnp.pad(patches, ((0, 0), (0, qp - q), (0, Kp - K)))
    patches = patches.reshape(4 * qp, Kp).astype(jnp.bfloat16)

    w_p = jnp.pad(wmat, ((0, Kp - K), (0, 128 - O))).astype(jnp.bfloat16)
    b_p = jnp.pad(bias, (0, 128 - O)).reshape(1, 128).astype(jnp.float32)

    out = pl.pallas_call(
        _conv_pool_kernel,
        out_shape=jax.ShapeDtypeStruct((qp, 128), jnp.float32),
        in_specs=[pl.BlockSpec(memory_space=pltpu.MemorySpace.VMEM)] * 3,
        out_specs=pl.BlockSpec(memory_space=pltpu.MemorySpace.VMEM),
    )(patches, w_p, b_p)
    return out[:q, :O].reshape(B, Ho2, Wo2, O)


def _fc_tail_kernel(x_ref, w1_ref, b1_ref, w2_ref, b2_ref, feat_ref, y_ref):
    """x_feat = leaky_relu(x @ W1 + b1); y = x_feat @ W2 + b2 (both on MXU)."""
    h = jnp.dot(x_ref[...], w1_ref[...],
                preferred_element_type=jnp.float32) + b1_ref[...]
    h = jnp.where(h > 0, h, NEG_SLOPE * h)
    feat_ref[...] = h
    y_ref[...] = (jnp.dot(h, w2_ref[...],
                          preferred_element_type=jnp.float32) + b2_ref[...])


def fc_tail(x, w1, b1, w2, b2):
    """Fused fc1 (+leaky_relu) and fc2.  x: (B, 576) -> ((B, 128), (B, ncls))."""
    B = x.shape[0]
    ncls = w2.shape[1]
    return pl.pallas_call(
        _fc_tail_kernel,
        out_shape=(jax.ShapeDtypeStruct((B, 128), jnp.float32),
                   jax.ShapeDtypeStruct((B, ncls), jnp.float32)),
        in_specs=[pl.BlockSpec(memory_space=pltpu.MemorySpace.VMEM)] * 5,
        out_specs=(pl.BlockSpec(memory_space=pltpu.MemorySpace.VMEM),
                   pl.BlockSpec(memory_space=pltpu.MemorySpace.VMEM)),
    )(x, w1, b1.reshape(1, 128), w2, b2)


# ---------------------------------------------------------------------------
# Deterministic parameter init (synthetic; matches __init__ shapes)
# ---------------------------------------------------------------------------
def _perm_to_khkwco(O, C, kh, kw):
    """Column permutation: PyTorch (O, C, kh, kw) flatten -> (kh, kw, C, O)."""
    idx = jnp.arange(O * C * kh * kw).reshape(O, C, kh, kw)
    return idx.transpose(2, 3, 1, 0).reshape(-1)


def init_params(key, num_classes=10, embed_dim=32, hidden_dim=32):
    def nrm(k, shape, scale=0.05):
        return scale * jax.random.normal(k, shape, dtype=jnp.float32)

    ks = iter(jax.random.split(key, 32))
    p = {}
    p["embed"] = nrm(next(ks), (1, embed_dim))            # nn.Embedding(1, embed_dim)
    p["mlp_w"] = nrm(next(ks), (embed_dim, hidden_dim))   # hypernet MLP
    p["mlp_b"] = nrm(next(ks), (1, hidden_dim))

    # Per-head weights, with the 4-D heads' columns permuted so the generated
    # weight vectors land directly in (K, O) / (576, 128) matmul layout.
    ws, bs = [], []
    for _, shape in HEADS:
        n = _prod(shape)
        w = nrm(next(ks), (hidden_dim, n))
        b = nrm(next(ks), (n,))
        if len(shape) == 4:
            perm = _perm_to_khkwco(*shape)
            w = w[:, perm]
            b = b[perm]
        ws.append(w)
        bs.append(b)
    heads_w = jnp.concatenate(ws, axis=1)                 # (hidden, 106400)
    heads_b = jnp.concatenate(bs)                         # (106400,)
    padn = N_HEADS_PAD - N_HEADS_TOTAL
    p["heads_w"] = jnp.pad(heads_w, ((0, 0), (0, padn)))  # (hidden, N_HEADS_PAD)
    p["heads_b"] = jnp.pad(heads_b, (0, padn)).reshape(1, N_HEADS_PAD)

    p["fc2_w"] = nrm(next(ks), (128, num_classes))        # stored in x @ W layout
    p["fc2_b"] = nrm(next(ks), (1, num_classes))
    return p


# ---------------------------------------------------------------------------
# Full CifarCNN_Hyper forward
# ---------------------------------------------------------------------------
def cifarcnn_hyper_forward(p, x):
    # --- Hypernetwork: client embedding 0 -> all target-model weights in ONE
    # fused, pipelined matmul.  (The embedding index is the constant 0, so in
    # a training loop the generated weights could be cached across calls; kept
    # inline here to preserve the module's forward semantics.)
    heads = hyper_heads(p["embed"], p["mlp_w"], p["mlp_b"],
                        p["heads_w"], p["heads_b"])[0]    # (N_HEADS_PAD,)

    def head(name):
        i = HEAD_NAMES.index(name)
        off, n = HEAD_OFFSETS[i], HEAD_SIZES[i]
        return heads[off:off + n]

    c1w = head("c1w").reshape(3 * 5 * 5, 16)      # (K, O) layouts (pre-permuted)
    c2w = head("c2w").reshape(16 * 5 * 5, 32)
    c3w = head("c3w").reshape(32 * 3 * 3, 64)
    f1w = head("l1w").reshape(64 * 3 * 3, 128)    # fc1 weight, (576, 128)
    c1b, c2b, c3b, f1b = head("c1b"), head("c2b"), head("c3b"), head("l1b")
    # NOTE: load_state_dict / .cuda() are framework plumbing — functionalized.

    # --- Target CifarCNN forward (NHWC internally; x arrives NCHW).
    B = x.shape[0]
    h = jnp.transpose(x, (0, 2, 3, 1))                    # (B, 32, 32, 3)
    h = conv_pool(h, c1w, c1b, kh=5, kw=5, pad=0)         # (B, 14, 14, 16)
    h = conv_pool(h, c2w, c2b, kh=5, kw=5, pad=1)         # (B, 6, 6, 32)
    h = conv_pool(h, c3w, c3b, kh=3, kw=3, pad=1)         # (B, 3, 3, 64)
    flat = h.reshape(B, 64 * 3 * 3)                       # (i, j, c) == f1w rows
    x_feat, y = fc_tail(flat, f1w, f1b, p["fc2_w"], p["fc2_b"])
    return x_feat, y


if __name__ == "__main__":
    key = jax.random.PRNGKey(0)
    pkey, xkey = jax.random.split(key)
    params = init_params(pkey, num_classes=10, embed_dim=32, hidden_dim=32)
    # fc1 expects 64*3*3 flat features, which forces CIFAR geometry: (B, 3, 32, 32).
    x = jax.random.normal(xkey, (2, 3, 32, 32), dtype=jnp.float32)

    feats, logits = jax.jit(cifarcnn_hyper_forward)(params, x)
    jax.block_until_ready((feats, logits))
    assert feats.shape == (2, 128) and feats.dtype == jnp.float32
    assert logits.shape == (2, 10) and logits.dtype == jnp.float32
    print("KERNEL_OK")
</pallas_src>

<mosaic_0001>
module attributes {stable_mosaic.version = 11 : i64} {
  func.func @_hyper_heads_kernel(%arg0: i32, %arg1: memref<1x32xf32, #tpu.memory_space<vmem>>, %arg2: memref<32x32xf32, #tpu.memory_space<vmem>>, %arg3: memref<1x32xf32, #tpu.memory_space<vmem>>, %arg4: memref<32x8192xf32, #tpu.memory_space<vmem>>, %arg5: memref<1x8192xf32, #tpu.memory_space<vmem>>, %arg6: memref<1x8192xf32, #tpu.memory_space<vmem>>) attributes {dimension_semantics = [#tpu.dimension_semantics<parallel>], iteration_bounds = array<i64: 13>, scalar_prefetch = 0 : i64, scratch_operands = 0 : i64, tpu.core_type = #tpu.core_type<tc>, window_params = [{pipeline_mode = #tpu.pipeline_mode<synchronous>, transform_indices = @transform_0, window_bounds = array<i64: 1, 32>}, {pipeline_mode = #tpu.pipeline_mode<synchronous>, transform_indices = @transform_1, window_bounds = array<i64: 32, 32>}, {pipeline_mode = #tpu.pipeline_mode<synchronous>, transform_indices = @transform_2, window_bounds = array<i64: 1, 32>}, {transform_indices = @transform_3, window_bounds = array<i64: 32, 8192>}, {transform_indices = @transform_4, window_bounds = array<i64: 1, 8192>}, {transform_indices = @transform_5, window_bounds = array<i64: 1, 8192>}]} {
    %c0 = arith.constant 0 : index
    %c0_0 = arith.constant 0 : index
    %0 = vector.load %arg1[%c0, %c0_0] : memref<1x32xf32, #tpu.memory_space<vmem>>, vector<1x32xf32>
    %c0_1 = arith.constant 0 : index
    %c0_2 = arith.constant 0 : index
    %1 = vector.load %arg2[%c0_1, %c0_2] : memref<32x32xf32, #tpu.memory_space<vmem>>, vector<32x32xf32>
    %cst = arith.constant dense<0.000000e+00> : vector<1x32xf32>
    %2 = tpu.matmul %0, %1, %cst {dimension_numbers = #tpu.dot_dimension_numbers<[1], [0], [0], [1], [0, 0, 1, 1], [], []>} : vector<1x32xf32>, vector<32x32xf32>, vector<1x32xf32> -> vector<1x32xf32>
    %c0_3 = arith.constant 0 : index
    %c0_4 = arith.constant 0 : index
    %3 = vector.load %arg3[%c0_3, %c0_4] : memref<1x32xf32, #tpu.memory_space<vmem>>, vector<1x32xf32>
    %4 = arith.addf %2, %3 : vector<1x32xf32>
    %cst_5 = arith.constant 0.000000e+00 : f32
    %5 = vector.broadcast %cst_5 : f32 to vector<1x32xf32>
    %6 = arith.maximumf %4, %5 : vector<1x32xf32>
    %c0_6 = arith.constant 0 : index
    %c0_7 = arith.constant 0 : index
    %7 = vector.load %arg4[%c0_6, %c0_7] : memref<32x8192xf32, #tpu.memory_space<vmem>>, vector<32x8192xf32>
    %cst_8 = arith.constant dense<0.000000e+00> : vector<1x8192xf32>
    %8 = tpu.matmul %6, %7, %cst_8 {dimension_numbers = #tpu.dot_dimension_numbers<[1], [0], [0], [1], [0, 0, 1, 1], [], []>} : vector<1x32xf32>, vector<32x8192xf32>, vector<1x8192xf32> -> vector<1x8192xf32>
    %c0_9 = arith.constant 0 : index
    %c0_10 = arith.constant 0 : index
    %9 = vector.load %arg5[%c0_9, %c0_10] : memref<1x8192xf32, #tpu.memory_space<vmem>>, vector<1x8192xf32>
    %10 = arith.addf %8, %9 : vector<1x8192xf32>
    %c0_11 = arith.constant 0 : index
    %c0_12 = arith.constant 0 : index
    %11 = vector.load %arg6[%c0_11, %c0_12] : memref<1x8192xf32, #tpu.memory_space<vmem>>, vector<1x8192xf32>
    tpu.vector_store %arg6[%c0_11, %c0_12], %10 {strides = array<i32>} : memref<1x8192xf32, #tpu.memory_space<vmem>>, vector<1x8192xf32>,
    return
  }
  func.func @transform_0(%arg0: i32) -> (i32, i32) {
    %c0_i32 = arith.constant 0 : i32
    %c0_i32_0 = arith.constant 0 : i32
    %c0_i32_1 = arith.constant 0 : i32
    return %c0_i32, %c0_i32_0 : i32, i32
  }
  func.func @transform_1(%arg0: i32) -> (i32, i32) {
    %c0_i32 = arith.constant 0 : i32
    %c0_i32_0 = arith.constant 0 : i32
    %c0_i32_1 = arith.constant 0 : i32
    return %c0_i32, %c0_i32_0 : i32, i32
  }
  func.func @transform_2(%arg0: i32) -> (i32, i32) {
    %c0_i32 = arith.constant 0 : i32
    %c0_i32_0 = arith.constant 0 : i32
    %c0_i32_1 = arith.constant 0 : i32
    return %c0_i32, %c0_i32_0 : i32, i32
  }
  func.func @transform_3(%arg0: i32) -> (i32, i32) {
    %c0_i32 = arith.constant 0 : i32
    %c0_i32_0 = arith.constant 0 : i32
    return %c0_i32, %arg0 : i32, i32
  }
  func.func @transform_4(%arg0: i32) -> (i32, i32) {
    %c0_i32 = arith.constant 0 : i32
    %c0_i32_0 = arith.constant 0 : i32
    return %c0_i32, %arg0 : i32, i32
  }
  func.func @transform_5(%arg0: i32) -> (i32, i32) {
    %c0_i32 = arith.constant 0 : i32
    %c0_i32_0 = arith.constant 0 : i32
    return %c0_i32, %arg0 : i32, i32
  }
}

module attributes {stable_mosaic.version = 11 : i64} {
  func.func @_conv_pool_kernel(%arg0: memref<1568x128xbf16, #tpu.memory_space<vmem>>, %arg1: memref<128x128xbf16, #tpu.memory_space<vmem>>, %arg2: memref<1x128xf32, #tpu.memory_space<vmem>>, %arg3: memref<392x128xf32, #tpu.memory_space<vmem>>) attributes {dimension_semantics = [], scalar_prefetch = 0 : i64, scratch_operands = 0 : i64, tpu.core_type = #tpu.core_type<tc>} {
    %c0 = arith.constant 0 : index
    %c0_0 = arith.constant 0 : index
    %0 = vector.load %arg0[%c0, %c0_0] : memref<1568x128xbf16, #tpu.memory_space<vmem>>, vector<1568x128xbf16>
    %c0_1 = arith.constant 0 : index
    %c0_2 = arith.constant 0 : index
    %1 = vector.load %arg1[%c0_1, %c0_2] : memref<128x128xbf16, #tpu.memory_space<vmem>>, vector<128x128xbf16>
    %cst = arith.constant dense<0.000000e+00> : vector<1568x128xf32>
    %2 = tpu.matmul %0, %1, %cst {dimension_numbers = #tpu.dot_dimension_numbers<[1], [0], [0], [1], [0, 0, 1, 1], [], []>} : vector<1568x128xbf16>, vector<128x128xbf16>, vector<1568x128xf32> -> vector<1568x128xf32>
    %c0_3 = arith.constant 0 : index
    %c0_4 = arith.constant 0 : index
    %3 = vector.load %arg2[%c0_3, %c0_4] : memref<1x128xf32, #tpu.memory_space<vmem>>, vector<1x128xf32>
    %4 = vector.broadcast %3 : vector<1x128xf32> to vector<1568x128xf32>
    %5 = arith.addf %2, %4 : vector<1568x128xf32>
    %cst_5 = arith.constant 0.000000e+00 : f32
    %6 = vector.broadcast %cst_5 : f32 to vector<1568x128xf32>
    %7 = arith.cmpf ogt, %5, %6 : vector<1568x128xf32>
    %cst_6 = arith.constant 0.00999999977 : f32
    %8 = vector.broadcast %cst_6 : f32 to vector<1568x128xf32>
    %9 = arith.mulf %8, %5 : vector<1568x128xf32>
    %10 = arith.select %7, %5, %9 : vector<1568x128xi1>, vector<1568x128xf32>
    %11 = vector.extract_strided_slice %10 {offsets = [0, 0], sizes = [392, 128], strides = [1, 1]} : vector<1568x128xf32> to vector<392x128xf32>
    %12 = vector.extract_strided_slice %10 {offsets = [392, 0], sizes = [392, 128], strides = [1, 1]} : vector<1568x128xf32> to vector<392x128xf32>
    %13 = vector.extract_strided_slice %10 {offsets = [784, 0], sizes = [392, 128], strides = [1, 1]} : vector<1568x128xf32> to vector<392x128xf32>
    %14 = vector.extract_strided_slice %10 {offsets = [1176, 0], sizes = [392, 128], strides = [1, 1]} : vector<1568x128xf32> to vector<392x128xf32>
    %15 = arith.maximumf %11, %12 : vector<392x128xf32>
    %16 = arith.maximumf %13, %14 : vector<392x128xf32>
    %17 = arith.maximumf %15, %16 : vector<392x128xf32>
    %c0_7 = arith.constant 0 : index
    %c0_8 = arith.constant 0 : index
    %18 = vector.load %arg3[%c0_7, %c0_8] : memref<392x128xf32, #tpu.memory_space<vmem>>, vector<392x128xf32>
    tpu.vector_store %arg3[%c0_7, %c0_8], %17 {strides = array<i32>} : memref<392x128xf32, #tpu.memory_space<vmem>>, vector<392x128xf32>,
    return
  }
}

module attributes {stable_mosaic.version = 11 : i64} {
  func.func @_conv_pool_kernel(%arg0: memref<288x512xbf16, #tpu.memory_space<vmem>>, %arg1: memref<512x128xbf16, #tpu.memory_space<vmem>>, %arg2: memref<1x128xf32, #tpu.memory_space<vmem>>, %arg3: memref<72x128xf32, #tpu.memory_space<vmem>>) attributes {dimension_semantics = [], scalar_prefetch = 0 : i64, scratch_operands = 0 : i64, tpu.core_type = #tpu.core_type<tc>} {
    %c0 = arith.constant 0 : index
    %c0_0 = arith.constant 0 : index
    %0 = vector.load %arg0[%c0, %c0_0] : memref<288x512xbf16, #tpu.memory_space<vmem>>, vector<288x512xbf16>
    %c0_1 = arith.constant 0 : index
    %c0_2 = arith.constant 0 : index
    %1 = vector.load %arg1[%c0_1, %c0_2] : memref<512x128xbf16, #tpu.memory_space<vmem>>, vector<512x128xbf16>
    %cst = arith.constant dense<0.000000e+00> : vector<288x128xf32>
    %2 = tpu.matmul %0, %1, %cst {dimension_numbers = #tpu.dot_dimension_numbers<[1], [0], [0], [1], [0, 0, 1, 1], [], []>} : vector<288x512xbf16>, vector<512x128xbf16>, vector<288x128xf32> -> vector<288x128xf32>
    %c0_3 = arith.constant 0 : index
    %c0_4 = arith.constant 0 : index
    %3 = vector.load %arg2[%c0_3, %c0_4] : memref<1x128xf32, #tpu.memory_space<vmem>>, vector<1x128xf32>
    %4 = vector.broadcast %3 : vector<1x128xf32> to vector<288x128xf32>
    %5 = arith.addf %2, %4 : vector<288x128xf32>
    %cst_5 = arith.constant 0.000000e+00 : f32
    %6 = vector.broadcast %cst_5 : f32 to vector<288x128xf32>
    %7 = arith.cmpf ogt, %5, %6 : vector<288x128xf32>
    %cst_6 = arith.constant 0.00999999977 : f32
    %8 = vector.broadcast %cst_6 : f32 to vector<288x128xf32>
    %9 = arith.mulf %8, %5 : vector<288x128xf32>
    %10 = arith.select %7, %5, %9 : vector<288x128xi1>, vector<288x128xf32>
    %11 = vector.extract_strided_slice %10 {offsets = [0, 0], sizes = [72, 128], strides = [1, 1]} : vector<288x128xf32> to vector<72x128xf32>
    %12 = vector.extract_strided_slice %10 {offsets = [72, 0], sizes = [72, 128], strides = [1, 1]} : vector<288x128xf32> to vector<72x128xf32>
    %13 = vector.extract_strided_slice %10 {offsets = [144, 0], sizes = [72, 128], strides = [1, 1]} : vector<288x128xf32> to vector<72x128xf32>
    %14 = vector.extract_strided_slice %10 {offsets = [216, 0], sizes = [72, 128], strides = [1, 1]} : vector<288x128xf32> to vector<72x128xf32>
    %15 = arith.maximumf %11, %12 : vector<72x128xf32>
    %16 = arith.maximumf %13, %14 : vector<72x128xf32>
    %17 = arith.maximumf %15, %16 : vector<72x128xf32>
    %c0_7 = arith.constant 0 : index
    %c0_8 = arith.constant 0 : index
    %18 = vector.load %arg3[%c0_7, %c0_8] : memref<72x128xf32, #tpu.memory_space<vmem>>, vector<72x128xf32>
    tpu.vector_store %arg3[%c0_7, %c0_8], %17 {strides = array<i32>} : memref<72x128xf32, #tpu.memory_space<vmem>>, vector<72x128xf32>,
    return
  }
}

module attributes {stable_mosaic.version = 11 : i64} {
  func.func @_conv_pool_kernel(%arg0: memref<96x384xbf16, #tpu.memory_space<vmem>>, %arg1: memref<384x128xbf16, #tpu.memory_space<vmem>>, %arg2: memref<1x128xf32, #tpu.memory_space<vmem>>, %arg3: memref<24x128xf32, #tpu.memory_space<vmem>>) attributes {dimension_semantics = [], scalar_prefetch = 0 : i64, scratch_operands = 0 : i64, tpu.core_type = #tpu.core_type<tc>} {
    %c0 = arith.constant 0 : index
    %c0_0 = arith.constant 0 : index
    %0 = vector.load %arg0[%c0, %c0_0] : memref<96x384xbf16, #tpu.memory_space<vmem>>, vector<96x384xbf16>
    %c0_1 = arith.constant 0 : index
    %c0_2 = arith.constant 0 : index
    %1 = vector.load %arg1[%c0_1, %c0_2] : memref<384x128xbf16, #tpu.memory_space<vmem>>, vector<384x128xbf16>
    %cst = arith.constant dense<0.000000e+00> : vector<96x128xf32>
    %2 = tpu.matmul %0, %1, %cst {dimension_numbers = #tpu.dot_dimension_numbers<[1], [0], [0], [1], [0, 0, 1, 1], [], []>} : vector<96x384xbf16>, vector<384x128xbf16>, vector<96x128xf32> -> vector<96x128xf32>
    %c0_3 = arith.constant 0 : index
    %c0_4 = arith.constant 0 : index
    %3 = vector.load %arg2[%c0_3, %c0_4] : memref<1x128xf32, #tpu.memory_space<vmem>>, vector<1x128xf32>
    %4 = vector.broadcast %3 : vector<1x128xf32> to vector<96x128xf32>
    %5 = arith.addf %2, %4 : vector<96x128xf32>
    %cst_5 = arith.constant 0.000000e+00 : f32
    %6 = vector.broadcast %cst_5 : f32 to vector<96x128xf32>
    %7 = arith.cmpf ogt, %5, %6 : vector<96x128xf32>
    %cst_6 = arith.constant 0.00999999977 : f32
    %8 = vector.broadcast %cst_6 : f32 to vector<96x128xf32>
    %9 = arith.mulf %8, %5 : vector<96x128xf32>
    %10 = arith.select %7, %5, %9 : vector<96x128xi1>, vector<96x128xf32>
    %11 = vector.extract_strided_slice %10 {offsets = [0, 0], sizes = [24, 128], strides = [1, 1]} : vector<96x128xf32> to vector<24x128xf32>
    %12 = vector.extract_strided_slice %10 {offsets = [24, 0], sizes = [24, 128], strides = [1, 1]} : vector<96x128xf32> to vector<24x128xf32>
    %13 = vector.extract_strided_slice %10 {offsets = [48, 0], sizes = [24, 128], strides = [1, 1]} : vector<96x128xf32> to vector<24x128xf32>
    %14 = vector.extract_strided_slice %10 {offsets = [72, 0], sizes = [24, 128], strides = [1, 1]} : vector<96x128xf32> to vector<24x128xf32>
    %15 = arith.maximumf %11, %12 : vector<24x128xf32>
    %16 = arith.maximumf %13, %14 : vector<24x128xf32>
    %17 = arith.maximumf %15, %16 : vector<24x128xf32>
    %c0_7 = arith.constant 0 : index
    %c0_8 = arith.constant 0 : index
    %18 = vector.load %arg3[%c0_7, %c0_8] : memref<24x128xf32, #tpu.memory_space<vmem>>, vector<24x128xf32>
    tpu.vector_store %arg3[%c0_7, %c0_8], %17 {strides = array<i32>} : memref<24x128xf32, #tpu.memory_space<vmem>>, vector<24x128xf32>,
    return
  }
}

module attributes {stable_mosaic.version = 11 : i64} {
  func.func @_fc_tail_kernel(%arg0: memref<2x576xf32, #tpu.memory_space<vmem>>, %arg1: memref<576x128xf32, #tpu.memory_space<vmem>>, %arg2: memref<1x128xf32, #tpu.memory_space<vmem>>, %arg3: memref<128x10xf32, #tpu.memory_space<vmem>>, %arg4: memref<1x10xf32, #tpu.memory_space<vmem>>, %arg5: memref<2x128xf32, #tpu.memory_space<vmem>>, %arg6: memref<2x10xf32, #tpu.memory_space<vmem>>) attributes {dimension_semantics = [], scalar_prefetch = 0 : i64, scratch_operands = 0 : i64, tpu.core_type = #tpu.core_type<tc>} {
    %c0 = arith.constant 0 : index
    %c0_0 = arith.constant 0 : index
    %0 = vector.load %arg0[%c0, %c0_0] : memref<2x576xf32, #tpu.memory_space<vmem>>, vector<2x576xf32>
    %c0_1 = arith.constant 0 : index
    %c0_2 = arith.constant 0 : index
    %1 = vector.load %arg1[%c0_1, %c0_2] : memref<576x128xf32, #tpu.memory_space<vmem>>, vector<576x128xf32>
    %cst = arith.constant dense<0.000000e+00> : vector<2x128xf32>
    %2 = tpu.matmul %0, %1, %cst {dimension_numbers = #tpu.dot_dimension_numbers<[1], [0], [0], [1], [0, 0, 1, 1], [], []>} : vector<2x576xf32>, vector<576x128xf32>, vector<2x128xf32> -> vector<2x128xf32>
    %c0_3 = arith.constant 0 : index
    %c0_4 = arith.constant 0 : index
    %3 = vector.load %arg2[%c0_3, %c0_4] : memref<1x128xf32, #tpu.memory_space<vmem>>, vector<1x128xf32>
    %4 = vector.broadcast %3 : vector<1x128xf32> to vector<2x128xf32>
    %5 = arith.addf %2, %4 : vector<2x128xf32>
    %cst_5 = arith.constant 0.000000e+00 : f32
    %6 = vector.broadcast %cst_5 : f32 to vector<2x128xf32>
    %7 = arith.cmpf ogt, %5, %6 : vector<2x128xf32>
    %cst_6 = arith.constant 0.00999999977 : f32
    %8 = vector.broadcast %cst_6 : f32 to vector<2x128xf32>
    %9 = arith.mulf %8, %5 : vector<2x128xf32>
    %10 = arith.select %7, %5, %9 : vector<2x128xi1>, vector<2x128xf32>
    %c0_7 = arith.constant 0 : index
    %c0_8 = arith.constant 0 : index
    %11 = vector.load %arg5[%c0_7, %c0_8] : memref<2x128xf32, #tpu.memory_space<vmem>>, vector<2x128xf32>
    tpu.vector_store %arg5[%c0_7, %c0_8], %10 {strides = array<i32>} : memref<2x128xf32, #tpu.memory_space<vmem>>, vector<2x128xf32>,
    %c0_9 = arith.constant 0 : index
    %c0_10 = arith.constant 0 : index
    %12 = vector.load %arg3[%c0_9, %c0_10] : memref<128x10xf32, #tpu.memory_space<vmem>>, vector<128x10xf32>
    %cst_11 = arith.constant dense<0.000000e+00> : vector<2x10xf32>
    %13 = tpu.matmul %10, %12, %cst_11 {dimension_numbers = #tpu.dot_dimension_numbers<[1], [0], [0], [1], [0, 0, 1, 1], [], []>} : vector<2x128xf32>, vector<128x10xf32>, vector<2x10xf32> -> vector<2x10xf32>
    %c0_12 = arith.constant 0 : index
    %c0_13 = arith.constant 0 : index
    %14 = vector.load %arg4[%c0_12, %c0_13] : memref<1x10xf32, #tpu.memory_space<vmem>>, vector<1x10xf32>
    %15 = vector.broadcast %14 : vector<1x10xf32> to vector<2x10xf32>
    %16 = arith.addf %13, %15 : vector<2x10xf32>
    %c0_14 = arith.constant 0 : index
    %c0_15 = arith.constant 0 : index
    %17 = vector.load %arg6[%c0_14, %c0_15] : memref<2x10xf32, #tpu.memory_space<vmem>>, vector<2x10xf32>
    tpu.vector_store %arg6[%c0_14, %c0_15], %16 {strides = array<i32>} : memref<2x10xf32, #tpu.memory_space<vmem>>, vector<2x10xf32>,
    return
  }
}

</mosaic_0001>

<llo_original>
// kernel: cifarcnn_hyper_forward.5
$region0: #{cifarcnn_hyper_forward.5}
  #allocation0 [shape = 'u32[]', space=smem, size = 0x4, offset = 0x4, fixed_abs, tag = 'smem constant byte address 0x4 - core index']
  #allocation1 [shape = 'u32[144,128]{1,0:T(1,128)}', space=vmem, size = 0x12000, scoped, tag = 'internal scratch']
  %s0 = inlined_call_operand.vmem [shape: f32[1,32], index: 0, kind: input, shape index: {}]
  %s1 = inlined_call_operand.vmem [shape: f32[32,32], index: 1, kind: input, shape index: {}]
  %s2 = inlined_call_operand.vmem [shape: f32[1,32], index: 2, kind: input, shape index: {}]
  %s3 = inlined_call_operand.vmem [shape: f32[32,106496], index: 3, kind: input, shape index: {}]
  %s4 = inlined_call_operand.vmem [shape: f32[1,106496], index: 4, kind: input, shape index: {}]
  %s5 = inlined_call_operand.vmem [shape: f32[1,106496], index: 5, kind: output, shape index: {}]
  %s6 = sld [smem:[#allocation0]]
  $region76: #{cifarcnn_hyper_forward.5} parent=0
    _
  %s8 = ssub.s32 1, %s6
  %s9 = scalar_select 0, %s8, %s6
  $region1: #{cifarcnn_hyper_forward.5} parent=0
    #allocation2 [shape = 'u8[2097152]{0}', space=vmem, size = 0x200000, scoped, tag = 'input window, operand 3']
    loop: start=0, step=1, limit=15
    $region2: #{cifarcnn_hyper_forward.5} parent=1 // loop_pre_header
      _
    $region3: #{cifarcnn_hyper_forward.5} parent=1 // loop_header
      %s11 = sphi 0, %s15
      %p12 = scmp.ge.s32.totalorder %s11, 15
      %s19 = sphi 0, %s19
      %s21 = sphi 0, %s19
      %s22 = sphi 0, %s21
      %s36 = sphi 0, %s22
      %s40 = sphi 0, %s40
      %s42 = sphi 0, %s40
      %s43 = sphi 0, %s42
      %s57 = sphi 0, %s43
      %s61 = sphi 0, %s61
      %s63 = sphi 0, %s61
      %s64 = sphi 0, %s63
      %s78 = sphi 0, %s64
      %s84 = sphi 0, %s86
      %s87 = sphi 0, %s84
      %s88 = sphi 0, %s87
      %s104 = sphi 0, %s88
      %s110 = sphi 0, %s112
      %s113 = sphi 0, %s110
      %s114 = sphi 0, %s113
      %s130 = sphi 0, %s114
      %s136 = sphi 0, %s138
      %s139 = sphi 0, %s136
      %s140 = sphi 0, %s139
      %s156 = sphi 0, %s140
    $region4: #{cifarcnn_hyper_forward.5} parent=1 // loop_header_branch
      %14 = sbr.rel (%p12) target = $region8
    $region5: #{cifarcnn_hyper_forward.5} parent=1 // loop_body
      %s16 = ssub.s32 %s11, 1
      %s17 = ssub.s32 %s11, 2
      %s18 = sadd.s32 %s11, 1
      %s20 = sadd.s32 %s19, 1
      %p23 = scmp.eq.s32.totalorder %s11, 12
      %p24 = scmp.ne.s32.totalorder %s19, %s21
      %p25 = scmp.eq.s32.totalorder %s11, 0
      %p26 = por %p24, %p25
      %p27 = scmp.ne.s32.totalorder %s19, %s21
      %p28 = scmp.eq.s32.totalorder %s16, 12
      %p29 = por %p27, %p28
      %p30 = scmp.ne.s32.totalorder %s21, %s22
      %p31 = scmp.eq.s32.totalorder %s16, 0
      %p32 = por %p30, %p31
      %p33 = scmp.ne.s32.totalorder %s21, %s22
      %p34 = scmp.eq.s32.totalorder %s17, 12
      %p35 = por %p33, %p34
      %p37 = scmp.ne.s32.totalorder %s22, %s36
      %p38 = scmp.eq.s32.totalorder %s17, 0
      %p39 = por %p37, %p38
      %s41 = sadd.s32 %s40, 1
      %p44 = scmp.eq.s32.totalorder %s11, 12
      %p45 = scmp.ne.s32.totalorder %s40, %s42
      %p46 = scmp.eq.s32.totalorder %s11, 0
      %p47 = por %p45, %p46
      %p48 = scmp.ne.s32.totalorder %s40, %s42
      %p49 = scmp.eq.s32.totalorder %s16, 12
      %p50 = por %p48, %p49
      %p51 = scmp.ne.s32.totalorder %s42, %s43
      %p52 = scmp.eq.s32.totalorder %s16, 0
      %p53 = por %p51, %p52
      %p54 = scmp.ne.s32.totalorder %s42, %s43
      %p55 = scmp.eq.s32.totalorder %s17, 12
      %p56 = por %p54, %p55
      %p58 = scmp.ne.s32.totalorder %s43, %s57
      %p59 = scmp.eq.s32.totalorder %s17, 0
      %p60 = por %p58, %p59
      %s62 = sadd.s32 %s61, 1
      %p65 = scmp.eq.s32.totalorder %s11, 12
      %p66 = scmp.ne.s32.totalorder %s61, %s63
      %p67 = scmp.eq.s32.totalorder %s11, 0
      %p68 = por %p66, %p67
      %p69 = scmp.ne.s32.totalorder %s61, %s63
      %p70 = scmp.eq.s32.totalorder %s16, 12
      %p71 = por %p69, %p70
      %p72 = scmp.ne.s32.totalorder %s63, %s64
      %p73 = scmp.eq.s32.totalorder %s16, 0
      %p74 = por %p72, %p73
      %p75 = scmp.ne.s32.totalorder %s63, %s64
      %p76 = scmp.eq.s32.totalorder %s17, 12
      %p77 = por %p75, %p76
      %p79 = scmp.ne.s32.totalorder %s64, %s78
      %p80 = scmp.eq.s32.totalorder %s17, 0
      %p81 = por %p79, %p80
      %s82 = ssub.s32 %s11, %s18
      %p83 = scmp.eq.s32.totalorder %s82, 0
      %s85 = sadd.s32 %s84, 1
      %s86 = scalar_select %p83, %s84, %s85
      %p89 = pneg %p83
      %p90 = scmp.eq.s32.totalorder %s11, 12
      %p91 = por %p89, %p90
      %p92 = scmp.ne.s32.totalorder %s84, %s87
      %p93 = scmp.eq.s32.totalorder %s11, 0
      %p94 = por %p92, %p93
      %p95 = scmp.ne.s32.totalorder %s84, %s87
      %p96 = scmp.eq.s32.totalorder %s16, 12
      %p97 = por %p95, %p96
      %p98 = scmp.ne.s32.totalorder %s87, %s88
      %p99 = scmp.eq.s32.totalorder %s16, 0
      %p100 = por %p98, %p99
      %p101 = scmp.ne.s32.totalorder %s87, %s88
      %p102 = scmp.eq.s32.totalorder %s17, 12
      %p103 = por %p101, %p102
      %p105 = scmp.ne.s32.totalorder %s88, %s104
      %p106 = scmp.eq.s32.totalorder %s17, 0
      %p107 = por %p105, %p106
      %s108 = ssub.s32 %s11, %s18
      %p109 = scmp.eq.s32.totalorder %s108, 0
      %s111 = sadd.s32 %s110, 1
      %s112 = scalar_select %p109, %s110, %s111
      %p115 = pneg %p109
      %p116 = scmp.eq.s32.totalorder %s11, 12
      %p117 = por %p115, %p116
      %p118 = scmp.ne.s32.totalorder %s110, %s113
      %p119 = scmp.eq.s32.totalorder %s11, 0
      %p120 = por %p118, %p119
      %p121 = scmp.ne.s32.totalorder %s110, %s113
      %p122 = scmp.eq.s32.totalorder %s16, 12
      %p123 = por %p121, %p122
      %p124 = scmp.ne.s32.totalorder %s113, %s114
      %p125 = scmp.eq.s32.totalorder %s16, 0
      %p126 = por %p124, %p125
      %p127 = scmp.ne.s32.totalorder %s113, %s114
      %p128 = scmp.eq.s32.totalorder %s17, 12
      %p129 = por %p127, %p128
      %p131 = scmp.ne.s32.totalorder %s114, %s130
      %p132 = scmp.eq.s32.totalorder %s17, 0
      %p133 = por %p131, %p132
      %s134 = ssub.s32 %s11, %s18
      %p135 = scmp.eq.s32.totalorder %s134, 0
      %s137 = sadd.s32 %s136, 1
      %s138 = scalar_select %p135, %s136, %s137
      %p141 = pneg %p135
      %p142 = scmp.eq.s32.totalorder %s11, 12
      %p143 = por %p141, %p142
      %p144 = scmp.ne.s32.totalorder %s136, %s139
      %p145 = scmp.eq.s32.totalorder %s11, 0
      %p146 = por %p144, %p145
      %p147 = scmp.ne.s32.totalorder %s136, %s139
      %p148 = scmp.eq.s32.totalorder %s16, 12
      %p149 = por %p147, %p148
      %p150 = scmp.ne.s32.totalorder %s139, %s140
      %p151 = scmp.eq.s32.totalorder %s16, 0
      %p152 = por %p150, %p151
      %p153 = scmp.ne.s32.totalorder %s139, %s140
      %p154 = scmp.eq.s32.totalorder %s17, 12
      %p155 = por %p153, %p154
      %p157 = scmp.ne.s32.totalorder %s140, %s156
      %p158 = scmp.eq.s32.totalorder %s17, 0
      %p159 = por %p157, %p158
      %p160 = scmp.le.s32.totalorder 1, %s11
      %p161 = scmp.lt.s32.totalorder %s11, 14
      %p162 = pnand %p160, %p161
      %p163 = pneg %p162
      // Predicated region
      $region9: #{cifarcnn_hyper_forward.5} parent=5 // pred_check
        _
      $region10: #{cifarcnn_hyper_forward.5} parent=5 // pred_check_branch
        %165 = sbr.rel (%p162) target = $region12
      $region11: #{cifarcnn_hyper_forward.5} parent=5 // pred_region
        %s166 = ssub.s32 %s11, 1
        // Predicated region
        $region13: #{cifarcnn_hyper_forward.5} parent=11 // pred_check
          %p167 = pneg %p32
        $region14: #{cifarcnn_hyper_forward.5} parent=11 // pred_check_branch
          %169 = sbr.rel (%p167) target = $region16
        $region15: #{cifarcnn_hyper_forward.5} parent=11 // pred_region
          _
        $region16: #{cifarcnn_hyper_forward.5} parent=11 // pred_fallthru
          _
        // Predicated region
        $region17: #{cifarcnn_hyper_forward.5} parent=11 // pred_check
          %p170 = pneg %p53
        $region18: #{cifarcnn_hyper_forward.5} parent=11 // pred_check_branch
          %172 = sbr.rel (%p170) target = $region20
        $region19: #{cifarcnn_hyper_forward.5} parent=11 // pred_region
          _
        $region20: #{cifarcnn_hyper_forward.5} parent=11 // pred_fallthru
          _
        // Predicated region
        $region21: #{cifarcnn_hyper_forward.5} parent=11 // pred_check
          %p173 = pneg %p74
        $region22: #{cifarcnn_hyper_forward.5} parent=11 // pred_check_branch
          %175 = sbr.rel (%p173) target = $region24
        $region23: #{cifarcnn_hyper_forward.5} parent=11 // pred_region
          _
        $region24: #{cifarcnn_hyper_forward.5} parent=11 // pred_fallthru
          _
      $region12: #{cifarcnn_hyper_forward.5} parent=5 // pred_fallthru
        _
      %p176 = scmp.lt.s32.totalorder %s11, 13
      // Predicated region
      $region25: #{cifarcnn_hyper_forward.5} parent=5 // pred_check
        %p177 = pneg %p176
      $region26: #{cifarcnn_hyper_forward.5} parent=5 // pred_check_branch
        %179 = sbr.rel (%p177) target = $region28
      $region27: #{cifarcnn_hyper_forward.5} parent=5 // pred_region
        // Predicated region
        $region29: #{cifarcnn_hyper_forward.5} parent=27 // pred_check
          %p180 = pneg %p94
        $region30: #{cifarcnn_hyper_forward.5} parent=27 // pred_check_branch
          %182 = sbr.rel (%p180) target = $region32
        $region31: #{cifarcnn_hyper_forward.5} parent=27 // pred_region
          %s183 = sand.u32 %s84, 1
          %s184 = sand.u32 %s84, 1
          %s185 = smul.addr %s184, 2048
          %s186 = scalar_lea.vmem [#allocation2], %s185
          %s187 = smul.u32 64, %s11
          %s188 = smul.addr %s187, 8
          %s189 = scalar_lea.vmem %s3, %s188
          // Predicated region
          $region33: #{cifarcnn_hyper_forward.5} parent=31 // pred_check
            _
          $region34: #{cifarcnn_hyper_forward.5} parent=31 // pred_check_branch
            %191 = sbr.rel (0) target = $region36
          $region35: #{cifarcnn_hyper_forward.5} parent=31 // pred_region
            // Predicated region
            $region37: #{cifarcnn_hyper_forward.5} parent=35 // pred_check
              _
            $region38: #{cifarcnn_hyper_forward.5} parent=35 // pred_check_branch
              %193 = sbr.rel (0) target = $region40
            $region39: #{cifarcnn_hyper_forward.5} parent=35 // pred_region
              loop: start=0, step=1, limit=1
              $region41: #{cifarcnn_hyper_forward.5} parent=39 // loop_pre_header
                _
              $region42: #{cifarcnn_hyper_forward.5} parent=39 // loop_header
                %s195 = sphi 0, %s199
                %p196 = scmp.ge.s32.totalorder %s195, 1
                %s200 = sphi %s189, %s189
                %s201 = sphi %s186, %s186
              $region43: #{cifarcnn_hyper_forward.5} parent=39 // loop_header_branch
                %198 = sbr.rel (%p196) target = $region47
              $region44: #{cifarcnn_hyper_forward.5} parent=39 // loop_body
                %v202 = vld [vmem:[%s200] sm:$0xff]
                %203 = vst [vmem:[%s201] sm:$0xff] %v202
                %v204 = vld [vmem:[%s200 + $0x8] sm:$0xff]
                %205 = vst [vmem:[%s201 + $0x8] sm:$0xff] %v204
                %v206 = vld [vmem:[%s200 + $0x10] sm:$0xff]
                %207 = vst [vmem:[%s201 + $0x10] sm:$0xff] %v206
                %v208 = vld [vmem:[%s200 + $0x18] sm:$0xff]
                %209 = vst [vmem:[%s201 + $0x18] sm:$0xff] %v208
                %v210 = vld [vmem:[%s200 + $0x20] sm:$0xff]
                %211 = vst [vmem:[%s201 + $0x20] sm:$0xff] %v210
                %v212 = vld [vmem:[%s200 + $0x28] sm:$0xff]
                %213 = vst [vmem:[%s201 + $0x28] sm:$0xff] %v212
                %v214 = vld [vmem:[%s200 + $0x30] sm:$0xff]
                %215 = vst [vmem:[%s201 + $0x30] sm:$0xff] %v214
                %v216 = vld [vmem:[%s200 + $0x38] sm:$0xff]
                %217 = vst [vmem:[%s201 + $0x38] sm:$0xff] %v216
                %v218 = vld [vmem:[%s200 + $0x40] sm:$0xff]
                %219 = vst [vmem:[%s201 + $0x40] sm:$0xff] %v218
                %v220 = vld [vmem:[%s200 + $0x48] sm:$0xff]
                %221 = vst [vmem:[%s201 + $0x48] sm:$0xff] %v220
                %v222 = vld [vmem:[%s200 + $0x50] sm:$0xff]
                %223 = vst [vmem:[%s201 + $0x50] sm:$0xff] %v222
                %v224 = vld [vmem:[%s200 + $0x58] sm:$0xff]
                %225 = vst [vmem:[%s201 + $0x58] sm:$0xff] %v224
                %v226 = vld [vmem:[%s200 + $0x60] sm:$0xff]
                %227 = vst [vmem:[%s201 + $0x60] sm:$0xff] %v226
                %v228 = vld [vmem:[%s200 + $0x68] sm:$0xff]
                %229 = vst [vmem:[%s201 + $0x68] sm:$0xff] %v228
                %v230 = vld [vmem:[%s200 + $0x70] sm:$0xff]
                %231 = vst [vmem:[%s201 + $0x70] sm:$0xff] %v230
                %v232 = vld [vmem:[%s200 + $0x78] sm:$0xff]
                %233 = vst [vmem:[%s201 + $0x78] sm:$0xff] %v232
                %v234 = vld [vmem:[%s200 + $0x80] sm:$0xff]
                %235 = vst [vmem:[%s201 + $0x80] sm:$0xff] %v234
                %v236 = vld [vmem:[%s200 + $0x88] sm:$0xff]
                %237 = vst [vmem:[%s201 + $0x88] sm:$0xff] %v236
                %v238 = vld [vmem:[%s200 + $0x90] sm:$0xff]
                %239 = vst [vmem:[%s201 + $0x90] sm:$0xff] %v238
                %v240 = vld [vmem:[%s200 + $0x98] sm:$0xff]
                %241 = vst [vmem:[%s201 + $0x98] sm:$0xff] %v240
                %v242 = vld [vmem:[%s200 + $0xa0] sm:$0xff]
                %243 = vst [vmem:[%s201 + $0xa0] sm:$0xff] %v242
                %v244 = vld [vmem:[%s200 + $0xa8] sm:$0xff]
                %245 = vst [vmem:[%s201 + $0xa8] sm:$0xff] %v244
                %v246 = vld [vmem:[%s200 + $0xb0] sm:$0xff]
                %247 = vst [vmem:[%s201 + $0xb0] sm:$0xff] %v246
                %v248 = vld [vmem:[%s200 + $0xb8] sm:$0xff]
                %249 = vst [vmem:[%s201 + $0xb8] sm:$0xff] %v248
                %v250 = vld [vmem:[%s200 + $0xc0] sm:$0xff]
                %251 = vst [vmem:[%s201 + $0xc0] sm:$0xff] %v250
                %v252 = vld [vmem:[%s200 + $0xc8] sm:$0xff]
                %253 = vst [vmem:[%s201 + $0xc8] sm:$0xff] %v252
                %v254 = vld [vmem:[%s200 + $0xd0] sm:$0xff]
                %255 = vst [vmem:[%s201 + $0xd0] sm:$0xff] %v254
                %v256 = vld [vmem:[%s200 + $0xd8] sm:$0xff]
                %257 = vst [vmem:[%s201 + $0xd8] sm:$0xff] %v256
                %v258 = vld [vmem:[%s200 + $0xe0] sm:$0xff]
                %259 = vst [vmem:[%s201 + $0xe0] sm:$0xff] %v258
                %v260 = vld [vmem:[%s200 + $0xe8] sm:$0xff]
                %261 = vst [vmem:[%s201 + $0xe8] sm:$0xff] %v260
                %v262 = vld [vmem:[%s200 + $0xf0] sm:$0xff]
                %263 = vst [vmem:[%s201 + $0xf0] sm:$0xff] %v262
                %v264 = vld [vmem:[%s200 + $0xf8] sm:$0xff]
                %265 = vst [vmem:[%s201 + $0xf8] sm:$0xff] %v264
                %v266 = vld [vmem:[%s200 + $0x100] sm:$0xff]
                %267 = vst [vmem:[%s201 + $0x100] sm:$0xff] %v266
                %v268 = vld [vmem:[%s200 + $0x108] sm:$0xff]
                %269 = vst [vmem:[%s201 + $0x108] sm:$0xff] %v268
                %v270 = vld [vmem:[%s200 + $0x110] sm:$0xff]
                %271 = vst [vmem:[%s201 + $0x110] sm:$0xff] %v270
                %v272 = vld [vmem:[%s200 + $0x118] sm:$0xff]
                %273 = vst [vmem:[%s201 + $0x118] sm:$0xff] %v272
                %v274 = vld [vmem:[%s200 + $0x120] sm:$0xff]
                %275 = vst [vmem:[%s201 + $0x120] sm:$0xff] %v274
                %v276 = vld [vmem:[%s200 + $0x128] sm:$0xff]
                %277 = vst [vmem:[%s201 + $0x128] sm:$0xff] %v276
                %v278 = vld [vmem:[%s200 + $0x130] sm:$0xff]
                %279 = vst [vmem:[%s201 + $0x130] sm:$0xff] %v278
                %v280 = vld [vmem:[%s200 + $0x138] sm:$0xff]
                %281 = vst [vmem:[%s201 + $0x138] sm:$0xff] %v280
                %v282 = vld [vmem:[%s200 + $0x140] sm:$0xff]
                %283 = vst [vmem:[%s201 + $0x140] sm:$0xff] %v282
                %v284 = vld [vmem:[%s200 + $0x148] sm:$0xff]
                %285 = vst [vmem:[%s201 + $0x148] sm:$0xff] %v284
                %v286 = vld [vmem:[%s200 + $0x150] sm:$0xff]
                %287 = vst [vmem:[%s201 + $0x150] sm:$0xff] %v286
                %v288 = vld [vmem:[%s200 + $0x158] sm:$0xff]
                %289 = vst [vmem:[%s201 + $0x158] sm:$0xff] %v288
                %v290 = vld [vmem:[%s200 + $0x160] sm:$0xff]
                %291 = vst [vmem:[%s201 + $0x160] sm:$0xff] %v290
                %v292 = vld [vmem:[%s200 + $0x168] sm:$0xff]
                %293 = vst [vmem:[%s201 + $0x168] sm:$0xff] %v292
                %v294 = vld [vmem:[%s200 + $0x170] sm:$0xff]
                %295 = vst [vmem:[%s201 + $0x170] sm:$0xff] %v294
                %v296 = vld [vmem:[%s200 + $0x178] sm:$0xff]
                %297 = vst [vmem:[%s201 + $0x178] sm:$0xff] %v296
                %v298 = vld [vmem:[%s200 + $0x180] sm:$0xff]
                %299 = vst [vmem:[%s201 + $0x180] sm:$0xff] %v298
                %v300 = vld [vmem:[%s200 + $0x188] sm:$0xff]
                %301 = vst [vmem:[%s201 + $0x188] sm:$0xff] %v300
                %v302 = vld [vmem:[%s200 + $0x190] sm:$0xff]
                %303 = vst [vmem:[%s201 + $0x190] sm:$0xff] %v302
                %v304 = vld [vmem:[%s200 + $0x198] sm:$0xff]
                %305 = vst [vmem:[%s201 + $0x198] sm:$0xff] %v304
                %v306 = vld [vmem:[%s200 + $0x1a0] sm:$0xff]
                %307 = vst [vmem:[%s201 + $0x1a0] sm:$0xff] %v306
                %v308 = vld [vmem:[%s200 + $0x1a8] sm:$0xff]
                %309 = vst [vmem:[%s201 + $0x1a8] sm:$0xff] %v308
                %v310 = vld [vmem:[%s200 + $0x1b0] sm:$0xff]
                %311 = vst [vmem:[%s201 + $0x1b0] sm:$0xff] %v310
                %v312 = vld [vmem:[%s200 + $0x1b8] sm:$0xff]
                %313 = vst [vmem:[%s201 + $0x1b8] sm:$0xff] %v312
                %v314 = vld [vmem:[%s200 + $0x1c0] sm:$0xff]
                %315 = vst [vmem:[%s201 + $0x1c0] sm:$0xff] %v314
                %v316 = vld [vmem:[%s200 + $0x1c8] sm:$0xff]
                %317 = vst [vmem:[%s201 + $0x1c8] sm:$0xff] %v316
                %v318 = vld [vmem:[%s200 + $0x1d0] sm:$0xff]
                %319 = vst [vmem:[%s201 + $0x1d0] sm:$0xff] %v318
                %v320 = vld [vmem:[%s200 + $0x1d8] sm:$0xff]
                %321 = vst [vmem:[%s201 + $0x1d8] sm:$0xff] %v320
                %v322 = vld [vmem:[%s200 + $0x1e0] sm:$0xff]
                %323 = vst [vmem:[%s201 + $0x1e0] sm:$0xff] %v322
                %v324 = vld [vmem:[%s200 + $0x1e8] sm:$0xff]
                %325 = vst [vmem:[%s201 + $0x1e8] sm:$0xff] %v324
                %v326 = vld [vmem:[%s200 + $0x1f0] sm:$0xff]
                %327 = vst [vmem:[%s201 + $0x1f0] sm:$0xff] %v326
                %v328 = vld [vmem:[%s200 + $0x1f8] sm:$0xff]
                %329 = vst [vmem:[%s201 + $0x1f8] sm:$0xff] %v328
                %v330 = vld [vmem:[%s200 + $0x1a00] sm:$0xff]
                %331 = vst [vmem:[%s201 + $0x200] sm:$0xff] %v330
                %v332 = vld [vmem:[%s200 + $0x1a08] sm:$0xff]
                %333 = vst [vmem:[%s201 + $0x208] sm:$0xff] %v332
                %v334 = vld [vmem:[%s200 + $0x1a10] sm:$0xff]
                %335 = vst [vmem:[%s201 + $0x210] sm:$0xff] %v334
                %v336 = vld [vmem:[%s200 + $0x1a18] sm:$0xff]
                %337 = vst [vmem:[%s201 + $0x218] sm:$0xff] %v336
                %v338 = vld [vmem:[%s200 + $0x1a20] sm:$0xff]
                %339 = vst [vmem:[%s201 + $0x220] sm:$0xff] %v338
                %v340 = vld [vmem:[%s200 + $0x1a28] sm:$0xff]
                %341 = vst [vmem:[%s201 + $0x228] sm:$0xff] %v340
                %v342 = vld [vmem:[%s200 + $0x1a30] sm:$0xff]
                %343 = vst [vmem:[%s201 + $0x230] sm:$0xff] %v342
                %v344 = vld [vmem:[%s200 + $0x1a38] sm:$0xff]
                %345 = vst [vmem:[%s201 + $0x238] sm:$0xff] %v344
                %v346 = vld [vmem:[%s200 + $0x1a40] sm:$0xff]
                %347 = vst [vmem:[%s201 + $0x240] sm:$0xff] %v346
                %v348 = vld [vmem:[%s200 + $0x1a48] sm:$0xff]
                %349 = vst [vmem:[%s201 + $0x248] sm:$0xff] %v348
                %v350 = vld [vmem:[%s200 + $0x1a50] sm:$0xff]
                %351 = vst [vmem:[%s201 + $0x250] sm:$0xff] %v350
                %v352 = vld [vmem:[%s200 + $0x1a58] sm:$0xff]
                %353 = vst [vmem:[%s201 + $0x258] sm:$0xff] %v352
                %v354 = vld [vmem:[%s200 + $0x1a60] sm:$0xff]
                %355 = vst [vmem:[%s201 + $0x260] sm:$0xff] %v354
                %v356 = vld [vmem:[%s200 + $0x1a68] sm:$0xff]
                %357 = vst [vmem:[%s201 + $0x268] sm:$0xff] %v356
                %v358 = vld [vmem:[%s200 + $0x1a70] sm:$0xff]
                %359 = vst [vmem:[%s201 + $0x270] sm:$0xff] %v358
                %v360 = vld [vmem:[%s200 + $0x1a78] sm:$0xff]
                %361 = vst [vmem:[%s201 + $0x278] sm:$0xff] %v360
                %v362 = vld [vmem:[%s200 + $0x1a80] sm:$0xff]
                %363 = vst [vmem:[%s201 + $0x280] sm:$0xff] %v362
                %v364 = vld [vmem:[%s200 + $0x1a88] sm:$0xff]
                %365 = vst [vmem:[%s201 + $0x288] sm:$0xff] %v364
                %v366 = vld [vmem:[%s200 + $0x1a90] sm:$0xff]
                %367 = vst [vmem:[%s201 + $0x290] sm:$0xff] %v366
                %v368 = vld [vmem:[%s200 + $0x1a98] sm:$0xff]
                %369 = vst [vmem:[%s201 + $0x298] sm:$0xff] %v368
                %v370 = vld [vmem:[%s200 + $0x1aa0] sm:$0xff]
                %371 = vst [vmem:[%s201 + $0x2a0] sm:$0xff] %v370
                %v372 = vld [vmem:[%s200 + $0x1aa8] sm:$0xff]
                %373 = vst [vmem:[%s201 + $0x2a8] sm:$0xff] %v372
                %v374 = vld [vmem:[%s200 + $0x1ab0] sm:$0xff]
                %375 = vst [vmem:[%s201 + $0x2b0] sm:$0xff] %v374
                %v376 = vld [vmem:[%s200 + $0x1ab8] sm:$0xff]
                %377 = vst [vmem:[%s201 + $0x2b8] sm:$0xff] %v376
                %v378 = vld [vmem:[%s200 + $0x1ac0] sm:$0xff]
                %379 = vst [vmem:[%s201 + $0x2c0] sm:$0xff] %v378
                %v380 = vld [vmem:[%s200 + $0x1ac8] sm:$0xff]
                %381 = vst [vmem:[%s201 + $0x2c8] sm:$0xff] %v380
                %v382 = vld [vmem:[%s200 + $0x1ad0] sm:$0xff]
                %383 = vst [vmem:[%s201 + $0x2d0] sm:$0xff] %v382
                %v384 = vld [vmem:[%s200 + $0x1ad8] sm:$0xff]
                %385 = vst [vmem:[%s201 + $0x2d8] sm:$0xff] %v384
                %v386 = vld [vmem:[%s200 + $0x1ae0] sm:$0xff]
                %387 = vst [vmem:[%s201 + $0x2e0] sm:$0xff] %v386
                %v388 = vld [vmem:[%s200 + $0x1ae8] sm:$0xff]
                %389 = vst [vmem:[%s201 + $0x2e8] sm:$0xff] %v388
                %v390 = vld [vmem:[%s200 + $0x1af0] sm:$0xff]
                %391 = vst [vmem:[%s201 + $0x2f0] sm:$0xff] %v390
                %v392 = vld [vmem:[%s200 + $0x1af8] sm:$0xff]
                %393 = vst [vmem:[%s201 + $0x2f8] sm:$0xff] %v392
                %v394 = vld [vmem:[%s200 + $0x1b00] sm:$0xff]
                %395 = vst [vmem:[%s201 + $0x300] sm:$0xff] %v394
                %v396 = vld [vmem:[%s200 + $0x1b08] sm:$0xff]
                %397 = vst [vmem:[%s201 + $0x308] sm:$0xff] %v396
                %v398 = vld [vmem:[%s200 + $0x1b10] sm:$0xff]
                %399 = vst [vmem:[%s201 + $0x310] sm:$0xff] %v398
                %v400 = vld [vmem:[%s200 + $0x1b18] sm:$0xff]
                %401 = vst [vmem:[%s201 + $0x318] sm:$0xff] %v400
                %v402 = vld [vmem:[%s200 + $0x1b20] sm:$0xff]
                %403 = vst [vmem:[%s201 + $0x320] sm:$0xff] %v402
                %v404 = vld [vmem:[%s200 + $0x1b28] sm:$0xff]
                %405 = vst [vmem:[%s201 + $0x328] sm:$0xff] %v404
                %v406 = vld [vmem:[%s200 + $0x1b30] sm:$0xff]
                %407 = vst [vmem:[%s201 + $0x330] sm:$0xff] %v406
                %v408 = vld [vmem:[%s200 + $0x1b38] sm:$0xff]
                %409 = vst [vmem:[%s201 + $0x338] sm:$0xff] %v408
                %v410 = vld [vmem:[%s200 + $0x1b40] sm:$0xff]
                %411 = vst [vmem:[%s201 + $0x340] sm:$0xff] %v410
                %v412 = vld [vmem:[%s200 + $0x1b48] sm:$0xff]
                %413 = vst [vmem:[%s201 + $0x348] sm:$0xff] %v412
                %v414 = vld [vmem:[%s200 + $0x1b50] sm:$0xff]
                %415 = vst [vmem:[%s201 + $0x350] sm:$0xff] %v414
                %v416 = vld [vmem:[%s200 + $0x1b58] sm:$0xff]
                %417 = vst [vmem:[%s201 + $0x358] sm:$0xff] %v416
                %v418 = vld [vmem:[%s200 + $0x1b60] sm:$0xff]
                %419 = vst [vmem:[%s201 + $0x360] sm:$0xff] %v418
                %v420 = vld [vmem:[%s200 + $0x1b68] sm:$0xff]
                %421 = vst [vmem:[%s201 + $0x368] sm:$0xff] %v420
                %v422 = vld [vmem:[%s200 + $0x1b70] sm:$0xff]
                %423 = vst [vmem:[%s201 + $0x370] sm:$0xff] %v422
                %v424 = vld [vmem:[%s200 + $0x1b78] sm:$0xff]
                %425 = vst [vmem:[%s201 + $0x378] sm:$0xff] %v424
                %v426 = vld [vmem:[%s200 + $0x1b80] sm:$0xff]
                %427 = vst [vmem:[%s201 + $0x380] sm:$0xff] %v426
                %v428 = vld [vmem:[%s200 + $0x1b88] sm:$0xff]
                %429 = vst [vmem:[%s201 + $0x388] sm:$0xff] %v428
                %v430 = vld [vmem:[%s200 + $0x1b90] sm:$0xff]
                %431 = vst [vmem:[%s201 + $0x390] sm:$0xff] %v430
                %v432 = vld [vmem:[%s200 + $0x1b98] sm:$0xff]
                %433 = vst [vmem:[%s201 + $0x398] sm:$0xff] %v432
                %v434 = vld [vmem:[%s200 + $0x1ba0] sm:$0xff]
                %435 = vst [vmem:[%s201 + $0x3a0] sm:$0xff] %v434
                %v436 = vld [vmem:[%s200 + $0x1ba8] sm:$0xff]
                %437 = vst [vmem:[%s201 + $0x3a8] sm:$0xff] %v436
                %v438 = vld [vmem:[%s200 + $0x1bb0] sm:$0xff]
                %439 = vst [vmem:[%s201 + $0x3b0] sm:$0xff] %v438
                %v440 = vld [vmem:[%s200 + $0x1bb8] sm:$0xff]
                %441 = vst [vmem:[%s201 + $0x3b8] sm:$0xff] %v440
                %v442 = vld [vmem:[%s200 + $0x1bc0] sm:$0xff]
                %443 = vst [vmem:[%s201 + $0x3c0] sm:$0xff] %v442
                %v444 = vld [vmem:[%s200 + $0x1bc8] sm:$0xff]
                %445 = vst [vmem:[%s201 + $0x3c8] sm:$0xff] %v444
                %v446 = vld [vmem:[%s200 + $0x1bd0] sm:$0xff]
                %447 = vst [vmem:[%s201 + $0x3d0] sm:$0xff] %v446
                %v448 = vld [vmem:[%s200 + $0x1bd8] sm:$0xff]
                %449 = vst [vmem:[%s201 + $0x3d8] sm:$0xff] %v448
                %v450 = vld [vmem:[%s200 + $0x1be0] sm:$0xff]
                %451 = vst [vmem:[%s201 + $0x3e0] sm:$0xff] %v450
                %v452 = vld [vmem:[%s200 + $0x1be8] sm:$0xff]
                %453 = vst [vmem:[%s201 + $0x3e8] sm:$0xff] %v452
                %v454 = vld [vmem:[%s200 + $0x1bf0] sm:$0xff]
                %455 = vst [vmem:[%s201 + $0x3f0] sm:$0xff] %v454
                %v456 = vld [vmem:[%s200 + $0x1bf8] sm:$0xff]
                %457 = vst [vmem:[%s201 + $0x3f8] sm:$0xff] %v456
                %v458 = vld [vmem:[%s200 + $0x3400] sm:$0xff]
                %459 = vst [vmem:[%s201 + $0x400] sm:$0xff] %v458
                %v460 = vld [vmem:[%s200 + $0x3408] sm:$0xff]
                %461 = vst [vmem:[%s201 + $0x408] sm:$0xff] %v460
                %v462 = vld [vmem:[%s200 + $0x3410] sm:$0xff]
                %463 = vst [vmem:[%s201 + $0x410] sm:$0xff] %v462
                %v464 = vld [vmem:[%s200 + $0x3418] sm:$0xff]
                %465 = vst [vmem:[%s201 + $0x418] sm:$0xff] %v464
                %v466 = vld [vmem:[%s200 + $0x3420] sm:$0xff]
                %467 = vst [vmem:[%s201 + $0x420] sm:$0xff] %v466
                %v468 = vld [vmem:[%s200 + $0x3428] sm:$0xff]
                %469 = vst [vmem:[%s201 + $0x428] sm:$0xff] %v468
                %v470 = vld [vmem:[%s200 + $0x3430] sm:$0xff]
                %471 = vst [vmem:[%s201 + $0x430] sm:$0xff] %v470
                %v472 = vld [vmem:[%s200 + $0x3438] sm:$0xff]
                %473 = vst [vmem:[%s201 + $0x438] sm:$0xff] %v472
                %v474 = vld [vmem:[%s200 + $0x3440] sm:$0xff]
                %475 = vst [vmem:[%s201 + $0x440] sm:$0xff] %v474
                %v476 = vld [vmem:[%s200 + $0x3448] sm:$0xff]
                %477 = vst [vmem:[%s201 + $0x448] sm:$0xff] %v476
                %v478 = vld [vmem:[%s200 + $0x3450] sm:$0xff]
                %479 = vst [vmem:[%s201 + $0x450] sm:$0xff] %v478
                %v480 = vld [vmem:[%s200 + $0x3458] sm:$0xff]
                %481 = vst [vmem:[%s201 + $0x458] sm:$0xff] %v480
                %v482 = vld [vmem:[%s200 + $0x3460] sm:$0xff]
                %483 = vst [vmem:[%s201 + $0x460] sm:$0xff] %v482
                %v484 = vld [vmem:[%s200 + $0x3468] sm:$0xff]
                %485 = vst [vmem:[%s201 + $0x468] sm:$0xff] %v484
                %v486 = vld [vmem:[%s200 + $0x3470] sm:$0xff]
                %487 = vst [vmem:[%s201 + $0x470] sm:$0xff] %v486
                %v488 = vld [vmem:[%s200 + $0x3478] sm:$0xff]
                %489 = vst [vmem:[%s201 + $0x478] sm:$0xff] %v488
                %v490 = vld [vmem:[%s200 + $0x3480] sm:$0xff]
                %491 = vst [vmem:[%s201 + $0x480] sm:$0xff] %v490
                %v492 = vld [vmem:[%s200 + $0x3488] sm:$0xff]
                %493 = vst [vmem:[%s201 + $0x488] sm:$0xff] %v492
                %v494 = vld [vmem:[%s200 + $0x3490] sm:$0xff]
                %495 = vst [vmem:[%s201 + $0x490] sm:$0xff] %v494
                %v496 = vld [vmem:[%s200 + $0x3498] sm:$0xff]
                %497 = vst [vmem:[%s201 + $0x498] sm:$0xff] %v496
                %v498 = vld [vmem:[%s200 + $0x34a0] sm:$0xff]
                %499 = vst [vmem:[%s201 + $0x4a0] sm:$0xff] %v498
                %v500 = vld [vmem:[%s200 + $0x34a8] sm:$0xff]
                %501 = vst [vmem:[%s201 + $0x4a8] sm:$0xff] %v500
                %v502 = vld [vmem:[%s200 + $0x34b0] sm:$0xff]
                %503 = vst [vmem:[%s201 + $0x4b0] sm:$0xff] %v502
                %v504 = vld [vmem:[%s200 + $0x34b8] sm:$0xff]
                %505 = vst [vmem:[%s201 + $0x4b8] sm:$0xff] %v504
                %v506 = vld [vmem:[%s200 + $0x34c0] sm:$0xff]
                %507 = vst [vmem:[%s201 + $0x4c0] sm:$0xff] %v506
                %v508 = vld [vmem:[%s200 + $0x34c8] sm:$0xff]
                %509 = vst [vmem:[%s201 + $0x4c8] sm:$0xff] %v508
                %v510 = vld [vmem:[%s200 + $0x34d0] sm:$0xff]
                %511 = vst [vmem:[%s201 + $0x4d0] sm:$0xff] %v510
                %v512 = vld [vmem:[%s200 + $0x34d8] sm:$0xff]
                %513 = vst [vmem:[%s201 + $0x4d8] sm:$0xff] %v512
                %v514 = vld [vmem:[%s200 + $0x34e0] sm:$0xff]
                %515 = vst [vmem:[%s201 + $0x4e0] sm:$0xff] %v514
                %v516 = vld [vmem:[%s200 + $0x34e8] sm:$0xff]
                %517 = vst [vmem:[%s201 + $0x4e8] sm:$0xff] %v516
                %v518 = vld [vmem:[%s200 + $0x34f0] sm:$0xff]
                %519 = vst [vmem:[%s201 + $0x4f0] sm:$0xff] %v518
                %v520 = vld [vmem:[%s200 + $0x34f8] sm:$0xff]
                %521 = vst [vmem:[%s201 + $0x4f8] sm:$0xff] %v520
                %v522 = vld [vmem:[%s200 + $0x3500] sm:$0xff]
                %523 = vst [vmem:[%s201 + $0x500] sm:$0xff] %v522
                %v524 = vld [vmem:[%s200 + $0x3508] sm:$0xff]
                %525 = vst [vmem:[%s201 + $0x508] sm:$0xff] %v524
                %v526 = vld [vmem:[%s200 + $0x3510] sm:$0xff]
                %527 = vst [vmem:[%s201 + $0x510] sm:$0xff] %v526
                %v528 = vld [vmem:[%s200 + $0x3518] sm:$0xff]
                %529 = vst [vmem:[%s201 + $0x518] sm:$0xff] %v528
                %v530 = vld [vmem:[%s200 + $0x3520] sm:$0xff]
                %531 = vst [vmem:[%s201 + $0x520] sm:$0xff] %v530
                %v532 = vld [vmem:[%s200 + $0x3528] sm:$0xff]
                %533 = vst [vmem:[%s201 + $0x528] sm:$0xff] %v532
                %v534 = vld [vmem:[%s200 + $0x3530] sm:$0xff]
                %535 = vst [vmem:[%s201 + $0x530] sm:$0xff] %v534
                %v536 = vld [vmem:[%s200 + $0x3538] sm:$0xff]
                %537 = vst [vmem:[%s201 + $0x538] sm:$0xff] %v536
                %v538 = vld [vmem:[%s200 + $0x3540] sm:$0xff]
                %539 = vst [vmem:[%s201 + $0x540] sm:$0xff] %v538
                %v540 = vld [vmem:[%s200 + $0x3548] sm:$0xff]
                %541 = vst [vmem:[%s201 + $0x548] sm:$0xff] %v540
                %v542 = vld [vmem:[%s200 + $0x3550] sm:$0xff]
                %543 = vst [vmem:[%s201 + $0x550] sm:$0xff] %v542
                %v544 = vld [vmem:[%s200 + $0x3558] sm:$0xff]
                %545 = vst [vmem:[%s201 + $0x558] sm:$0xff] %v544
                %v546 = vld [vmem:[%s200 + $0x3560] sm:$0xff]
                %547 = vst [vmem:[%s201 + $0x560] sm:$0xff] %v546
                %v548 = vld [vmem:[%s200 + $0x3568] sm:$0xff]
                %549 = vst [vmem:[%s201 + $0x568] sm:$0xff] %v548
                %v550 = vld [vmem:[%s200 + $0x3570] sm:$0xff]
                %551 = vst [vmem:[%s201 + $0x570] sm:$0xff] %v550
                %v552 = vld [vmem:[%s200 + $0x3578] sm:$0xff]
                %553 = vst [vmem:[%s201 + $0x578] sm:$0xff] %v552
                %v554 = vld [vmem:[%s200 + $0x3580] sm:$0xff]
                %555 = vst [vmem:[%s201 + $0x580] sm:$0xff] %v554
                %v556 = vld [vmem:[%s200 + $0x3588] sm:$0xff]
                %557 = vst [vmem:[%s201 + $0x588] sm:$0xff] %v556
                %v558 = vld [vmem:[%s200 + $0x3590] sm:$0xff]
                %559 = vst [vmem:[%s201 + $0x590] sm:$0xff] %v558
                %v560 = vld [vmem:[%s200 + $0x3598] sm:$0xff]
                %561 = vst [vmem:[%s201 + $0x598] sm:$0xff] %v560
                %v562 = vld [vmem:[%s200 + $0x35a0] sm:$0xff]
                %563 = vst [vmem:[%s201 + $0x5a0] sm:$0xff] %v562
                %v564 = vld [vmem:[%s200 + $0x35a8] sm:$0xff]
                %565 = vst [vmem:[%s201 + $0x5a8] sm:$0xff] %v564
                %v566 = vld [vmem:[%s200 + $0x35b0] sm:$0xff]
                %567 = vst [vmem:[%s201 + $0x5b0] sm:$0xff] %v566
                %v568 = vld [vmem:[%s200 + $0x35b8] sm:$0xff]
                %569 = vst [vmem:[%s201 + $0x5b8] sm:$0xff] %v568
                %v570 = vld [vmem:[%s200 + $0x35c0] sm:$0xff]
                %571 = vst [vmem:[%s201 + $0x5c0] sm:$0xff] %v570
                %v572 = vld [vmem:[%s200 + $0x35c8] sm:$0xff]
                %573 = vst [vmem:[%s201 + $0x5c8] sm:$0xff] %v572
                %v574 = vld [vmem:[%s200 + $0x35d0] sm:$0xff]
                %575 = vst [vmem:[%s201 + $0x5d0] sm:$0xff] %v574
                %v576 = vld [vmem:[%s200 + $0x35d8] sm:$0xff]
                %577 = vst [vmem:[%s201 + $0x5d8] sm:$0xff] %v576
                %v578 = vld [vmem:[%s200 + $0x35e0] sm:$0xff]
                %579 = vst [vmem:[%s201 + $0x5e0] sm:$0xff] %v578
                %v580 = vld [vmem:[%s200 + $0x35e8] sm:$0xff]
                %581 = vst [vmem:[%s201 + $0x5e8] sm:$0xff] %v580
                %v582 = vld [vmem:[%s200 + $0x35f0] sm:$0xff]
                %583 = vst [vmem:[%s201 + $0x5f0] sm:$0xff] %v582
                %v584 = vld [vmem:[%s200 + $0x35f8] sm:$0xff]
                %585 = vst [vmem:[%s201 + $0x5f8] sm:$0xff] %v584
                %v586 = vld [vmem:[%s200 + $0x4e00] sm:$0xff]
                %587 = vst [vmem:[%s201 + $0x600] sm:$0xff] %v586
                %v588 = vld [vmem:[%s200 + $0x4e08] sm:$0xff]
                %589 = vst [vmem:[%s201 + $0x608] sm:$0xff] %v588
                %v590 = vld [vmem:[%s200 + $0x4e10] sm:$0xff]
                %591 = vst [vmem:[%s201 + $0x610] sm:$0xff] %v590
                %v592 = vld [vmem:[%s200 + $0x4e18] sm:$0xff]
                %593 = vst [vmem:[%s201 + $0x618] sm:$0xff] %v592
                %v594 = vld [vmem:[%s200 + $0x4e20] sm:$0xff]
                %595 = vst [vmem:[%s201 + $0x620] sm:$0xff] %v594
                %v596 = vld [vmem:[%s200 + $0x4e28] sm:$0xff]
                %597 = vst [vmem:[%s201 + $0x628] sm:$0xff] %v596
                %v598 = vld [vmem:[%s200 + $0x4e30] sm:$0xff]
                %599 = vst [vmem:[%s201 + $0x630] sm:$0xff] %v598
                %v600 = vld [vmem:[%s200 + $0x4e38] sm:$0xff]
                %601 = vst [vmem:[%s201 + $0x638] sm:$0xff] %v600
                %v602 = vld [vmem:[%s200 + $0x4e40] sm:$0xff]
                %603 = vst [vmem:[%s201 + $0x640] sm:$0xff] %v602
                %v604 = vld [vmem:[%s200 + $0x4e48] sm:$0xff]
                %605 = vst [vmem:[%s201 + $0x648] sm:$0xff] %v604
                %v606 = vld [vmem:[%s200 + $0x4e50] sm:$0xff]
                %607 = vst [vmem:[%s201 + $0x650] sm:$0xff] %v606
                %v608 = vld [vmem:[%s200 + $0x4e58] sm:$0xff]
                %609 = vst [vmem:[%s201 + $0x658] sm:$0xff] %v608
                %v610 = vld [vmem:[%s200 + $0x4e60] sm:$0xff]
                %611 = vst [vmem:[%s201 + $0x660] sm:$0xff] %v610
                %v612 = vld [vmem:[%s200 + $0x4e68] sm:$0xff]
                %613 = vst [vmem:[%s201 + $0x668] sm:$0xff] %v612
                %v614 = vld [vmem:[%s200 + $0x4e70] sm:$0xff]
                %615 = vst [vmem:[%s201 + $0x670] sm:$0xff] %v614
                %v616 = vld [vmem:[%s200 + $0x4e78] sm:$0xff]
                %617 = vst [vmem:[%s201 + $0x678] sm:$0xff] %v616
                %v618 = vld [vmem:[%s200 + $0x4e80] sm:$0xff]
                %619 = vst [vmem:[%s201 + $0x680] sm:$0xff] %v618
                %v620 = vld [vmem:[%s200 + $0x4e88] sm:$0xff]
                %621 = vst [vmem:[%s201 + $0x688] sm:$0xff] %v620
                %v622 = vld [vmem:[%s200 + $0x4e90] sm:$0xff]
                %623 = vst [vmem:[%s201 + $0x690] sm:$0xff] %v622
                %v624 = vld [vmem:[%s200 + $0x4e98] sm:$0xff]
                %625 = vst [vmem:[%s201 + $0x698] sm:$0xff] %v624
                %v626 = vld [vmem:[%s200 + $0x4ea0] sm:$0xff]
                %627 = vst [vmem:[%s201 + $0x6a0] sm:$0xff] %v626
                %v628 = vld [vmem:[%s200 + $0x4ea8] sm:$0xff]
                %629 = vst [vmem:[%s201 + $0x6a8] sm:$0xff] %v628
                %v630 = vld [vmem:[%s200 + $0x4eb0] sm:$0xff]
                %631 = vst [vmem:[%s201 + $0x6b0] sm:$0xff] %v630
                %v632 = vld [vmem:[%s200 + $0x4eb8] sm:$0xff]
                %633 = vst [vmem:[%s201 + $0x6b8] sm:$0xff] %v632
                %v634 = vld [vmem:[%s200 + $0x4ec0] sm:$0xff]
                %635 = vst [vmem:[%s201 + $0x6c0] sm:$0xff] %v634
                %v636 = vld [vmem:[%s200 + $0x4ec8] sm:$0xff]
                %637 = vst [vmem:[%s201 + $0x6c8] sm:$0xff] %v636
                %v638 = vld [vmem:[%s200 + $0x4ed0] sm:$0xff]
                %639 = vst [vmem:[%s201 + $0x6d0] sm:$0xff] %v638
                %v640 = vld [vmem:[%s200 + $0x4ed8] sm:$0xff]
                %641 = vst [vmem:[%s201 + $0x6d8] sm:$0xff] %v640
                %v642 = vld [vmem:[%s200 + $0x4ee0] sm:$0xff]
                %643 = vst [vmem:[%s201 + $0x6e0] sm:$0xff] %v642
                %v644 = vld [vmem:[%s200 + $0x4ee8] sm:$0xff]
                %645 = vst [vmem:[%s201 + $0x6e8] sm:$0xff] %v644
                %v646 = vld [vmem:[%s200 + $0x4ef0] sm:$0xff]
                %647 = vst [vmem:[%s201 + $0x6f0] sm:$0xff] %v646
                %v648 = vld [vmem:[%s200 + $0x4ef8] sm:$0xff]
                %649 = vst [vmem:[%s201 + $0x6f8] sm:$0xff] %v648
                %v650 = vld [vmem:[%s200 + $0x4f00] sm:$0xff]
                %651 = vst [vmem:[%s201 + $0x700] sm:$0xff] %v650
                %v652 = vld [vmem:[%s200 + $0x4f08] sm:$0xff]
                %653 = vst [vmem:[%s201 + $0x708] sm:$0xff] %v652
                %v654 = vld [vmem:[%s200 + $0x4f10] sm:$0xff]
                %655 = vst [vmem:[%s201 + $0x710] sm:$0xff] %v654
                %v656 = vld [vmem:[%s200 + $0x4f18] sm:$0xff]
                %657 = vst [vmem:[%s201 + $0x718] sm:$0xff] %v656
                %v658 = vld [vmem:[%s200 + $0x4f20] sm:$0xff]
                %659 = vst [vmem:[%s201 + $0x720] sm:$0xff] %v658
                %v660 = vld [vmem:[%s200 + $0x4f28] sm:$0xff]
                %661 = vst [vmem:[%s201 + $0x728] sm:$0xff] %v660
                %v662 = vld [vmem:[%s200 + $0x4f30] sm:$0xff]
                %663 = vst [vmem:[%s201 + $0x730] sm:$0xff] %v662
                %v664 = vld [vmem:[%s200 + $0x4f38] sm:$0xff]
                %665 = vst [vmem:[%s201 + $0x738] sm:$0xff] %v664
                %v666 = vld [vmem:[%s200 + $0x4f40] sm:$0xff]
                %667 = vst [vmem:[%s201 + $0x740] sm:$0xff] %v666
                %v668 = vld [vmem:[%s200 + $0x4f48] sm:$0xff]
                %669 = vst [vmem:[%s201 + $0x748] sm:$0xff] %v668
                %v670 = vld [vmem:[%s200 + $0x4f50] sm:$0xff]
                %671 = vst [vmem:[%s201 + $0x750] sm:$0xff] %v670
                %v672 = vld [vmem:[%s200 + $0x4f58] sm:$0xff]
                %673 = vst [vmem:[%s201 + $0x758] sm:$0xff] %v672
                %v674 = vld [vmem:[%s200 + $0x4f60] sm:$0xff]
                %675 = vst [vmem:[%s201 + $0x760] sm:$0xff] %v674
                %v676 = vld [vmem:[%s200 + $0x4f68] sm:$0xff]
                %677 = vst [vmem:[%s201 + $0x768] sm:$0xff] %v676
                %v678 = vld [vmem:[%s200 + $0x4f70] sm:$0xff]
                %679 = vst [vmem:[%s201 + $0x770] sm:$0xff] %v678
                %v680 = vld [vmem:[%s200 + $0x4f78] sm:$0xff]
                %681 = vst [vmem:[%s201 + $0x778] sm:$0xff] %v680
                %v682 = vld [vmem:[%s200 + $0x4f80] sm:$0xff]
                %683 = vst [vmem:[%s201 + $0x780] sm:$0xff] %v682
                %v684 = vld [vmem:[%s200 + $0x4f88] sm:$0xff]
                %685 = vst [vmem:[%s201 + $0x788] sm:$0xff] %v684
                %v686 = vld [vmem:[%s200 + $0x4f90] sm:$0xff]
                %687 = vst [vmem:[%s201 + $0x790] sm:$0xff] %v686
                %v688 = vld [vmem:[%s200 + $0x4f98] sm:$0xff]
                %689 = vst [vmem:[%s201 + $0x798] sm:$0xff] %v688
                %v690 = vld [vmem:[%s200 + $0x4fa0] sm:$0xff]
                %691 = vst [vmem:[%s201 + $0x7a0] sm:$0xff] %v690
                %v692 = vld [vmem:[%s200 + $0x4fa8] sm:$0xff]
                %693 = vst [vmem:[%s201 + $0x7a8] sm:$0xff] %v692
                %v694 = vld [vmem:[%s200 + $0x4fb0] sm:$0xff]
                %695 = vst [vmem:[%s201 + $0x7b0] sm:$0xff] %v694
                %v696 = vld [vmem:[%s200 + $0x4fb8] sm:$0xff]
                %697 = vst [vmem:[%s201 + $0x7b8] sm:$0xff] %v696
                %v698 = vld [vmem:[%s200 + $0x4fc0] sm:$0xff]
                %699 = vst [vmem:[%s201 + $0x7c0] sm:$0xff] %v698
                %v700 = vld [vmem:[%s200 + $0x4fc8] sm:$0xff]
                %701 = vst [vmem:[%s201 + $0x7c8] sm:$0xff] %v700
                %v702 = vld [vmem:[%s200 + $0x4fd0] sm:$0xff]
                %703 = vst [vmem:[%s201 + $0x7d0] sm:$0xff] %v702
                %v704 = vld [vmem:[%s200 + $0x4fd8] sm:$0xff]
                %705 = vst [vmem:[%s201 + $0x7d8] sm:$0xff] %v704
                %v706 = vld [vmem:[%s200 + $0x4fe0] sm:$0xff]
                %707 = vst [vmem:[%s201 + $0x7e0] sm:$0xff] %v706
                %v708 = vld [vmem:[%s200 + $0x4fe8] sm:$0xff]
                %709 = vst [vmem:[%s201 + $0x7e8] sm:$0xff] %v708
                %v710 = vld [vmem:[%s200 + $0x4ff0] sm:$0xff]
                %711 = vst [vmem:[%s201 + $0x7f0] sm:$0xff] %v710
                %v712 = vld [vmem:[%s200 + $0x4ff8] sm:$0xff]
                %713 = vst [vmem:[%s201 + $0x7f8] sm:$0xff] %v712
              $region45: #{cifarcnn_hyper_forward.5} parent=39 // loop_footer
                %s199 = sadd.s32 1, %s195
              $region46: #{cifarcnn_hyper_forward.5} parent=39 // loop_footer_branch
                %194 = sbr.rel target = $region42
              $region47: #{cifarcnn_hyper_forward.5} parent=39 // loop_exit
                _
            $region40: #{cifarcnn_hyper_forward.5} parent=35 // pred_fallthru
              _
            // Predicated region
            $region48: #{cifarcnn_hyper_forward.5} parent=35 // pred_check
              _
            $region49: #{cifarcnn_hyper_forward.5} parent=35 // pred_check_branch
              %715 = sbr.rel target = $region51
            $region50: #{cifarcnn_hyper_forward.5} parent=35 // pred_region
              _
            $region51: #{cifarcnn_hyper_forward.5} parent=35 // pred_fallthru
              _
          $region36: #{cifarcnn_hyper_forward.5} parent=31 // pred_fallthru
            _
          %716 = vnop
        $region32: #{cifarcnn_hyper_forward.5} parent=27 // pred_fallthru
          _
        // Predicated region
        $region52: #{cifarcnn_hyper_forward.5} parent=27 // pred_check
          %p717 = pneg %p120
        $region53: #{cifarcnn_hyper_forward.5} parent=27 // pred_check_branch
          %719 = sbr.rel (%p717) target = $region55
        $region54: #{cifarcnn_hyper_forward.5} parent=27 // pred_region
          %s720 = smul.u32 64, %s11
          %p721 = scmp.lt.s32.totalorder %s720, 831
          %s722 = scalar_select %p721, %s720, 831
          %s723 = scalar_lea.vmem %s4, %s722
          %s724 = smul.u32 64, %s11
        $region55: #{cifarcnn_hyper_forward.5} parent=27 // pred_fallthru
          _
      $region28: #{cifarcnn_hyper_forward.5} parent=5 // pred_fallthru
        _
      %p725 = scmp.le.s32.totalorder 1, %s11
      %p726 = scmp.lt.s32.totalorder %s11, 14
      %p727 = pnand %p725, %p726
      %p728 = pneg %p727
      // Predicated region
      $region56: #{cifarcnn_hyper_forward.5} parent=5 // pred_check
        _
      $region57: #{cifarcnn_hyper_forward.5} parent=5 // pred_check_branch
        %730 = sbr.rel (%p727) target = $region59
      $region58: #{cifarcnn_hyper_forward.5} parent=5 // pred_region
        %s731 = ssub.s32 %s11, 1
        %s732 = sand.u32 %s87, 1
        %s733 = sand.u32 %s87, 1
        %s734 = smul.addr %s733, 2048
        %s735 = scalar_lea.vmem [#allocation2], %s734
        // Predicated region
        $region60: #{cifarcnn_hyper_forward.5} parent=58 // pred_check
          %p736 = pneg %p100
        $region61: #{cifarcnn_hyper_forward.5} parent=58 // pred_check_branch
          %738 = sbr.rel (%p736) target = $region63
        $region62: #{cifarcnn_hyper_forward.5} parent=58 // pred_region
          _
        $region63: #{cifarcnn_hyper_forward.5} parent=58 // pred_fallthru
          _
        %p739 = pneg %p32
        %p740 = pneg %p29
        %p741 = pneg %p53
        %p742 = pneg %p50
        %p743 = pneg %p74
        %p744 = pneg %p71
        %s745 = sand.u32 %s87, 1
        %s746 = sand.u32 %s87, 1
        %s747 = smul.addr %s746, 2048
        %s748 = scalar_lea.vmem [#allocation2], %s747
        %p749 = pneg %p100
        %p750 = pneg %p97
        %s751 = smul.u32 64, %s16
        %p752 = scmp.lt.s32.totalorder %s751, 831
        %s753 = scalar_select %p752, %s751, 831
        %s754 = scalar_lea.vmem %s4, %s753
        %p755 = pneg %p126
        %p756 = pneg %p123
        %p757 = pneg %p152
        %p758 = pneg %p149
        %s759 = smul.u32 64, %s16
        %p760 = scmp.lt.s32.totalorder %s759, 831
        %s761 = scalar_select %p760, %s759, 831
        %s762 = scalar_lea.vmem %s5, %s761
        %s763 = smul.u32 64, %s16
        %s764 = smul.u32 64, %s16
        %p765 = scmp.lt.s32.totalorder %s764, 831
        %s766 = scalar_select %p765, %s764, 831
        %s767 = scalar_lea.vmem %s4, %s766
        %s768 = smul.u32 64, %s16
        %s769 = smul.u32 64, %s16
        %p770 = scmp.lt.s32.totalorder %s769, 831
        %s771 = scalar_select %p770, %s769, 831
        %s772 = scalar_lea.vmem %s5, %s771
        %s773 = smul.u32 64, %s16
        %v774 = vld [vmem:[%s0] sm:$0x1]
        %v775 = vld [vmem:[%s1] sm:$0xff]
        %v776 = vld [vmem:[%s1 + $0x8] sm:$0xff]
        %v777 = vld [vmem:[%s1 + $0x10] sm:$0xff]
        %v778 = vld [vmem:[%s1 + $0x18] sm:$0xff]
        %v779 = vld [vmem:[%s2] sm:$0x1]
        %vm780 = vcmask 261120
        %v782 = vsel %vm780, %v774, 0
        %784 = vmatprep.subr.mxu0 0.0
        %785 = vmatpush1.msra.mxu0 0.0
        %786 = vmatprep.subr.mxu0 0.0
        %787 = vmatpush1.msra.mxu0 0.0
        %788 = vmatprep.subr.mxu0 0.0
        %789 = vmatpush1.msra.mxu0 0.0
        %790 = vmatprep.subr.mxu0 0.0
        %791 = vmatpush1.msra.mxu0 0.0
        %792 = vmatprep.subr.mxu0 0.0
        %793 = vmatpush1.msra.mxu0 0.0
        %794 = vmatprep.subr.mxu0 0.0
        %795 = vmatpush1.msra.mxu0 0.0
        %796 = vmatprep.subr.mxu0 0.0
        %797 = vmatpush1.msra.mxu0 0.0
        %798 = vmatprep.subr.mxu0 0.0
        %799 = vmatpush1.msra.mxu0 0.0
        %800 = vmatprep.subr.mxu0 0.0
        %801 = vmatpush1.msra.mxu0 0.0
        %802 = vmatprep.subr.mxu0 0.0
        %803 = vmatpush1.msra.mxu0 0.0
        %804 = vmatprep.subr.mxu0 0.0
        %805 = vmatpush1.msra.mxu0 0.0
        %806 = vmatprep.subr.mxu0 0.0
        %807 = vmatpush1.msra.mxu0 0.0
        %808 = vmatprep.subr.mxu0 0.0
        %809 = vmatpush1.msra.mxu0 %v778
        %810 = vmatprep.subr.mxu0 0.0
        %811 = vmatpush1.msra.mxu0 %v777
        %812 = vmatprep.subr.mxu0 0.0
        %813 = vmatpush1.msra.mxu0 %v776
        %814 = vmatprep.subr.mxu0 0.0
        %815 = vmatpush1.msra.mxu0 %v775
        %816 = vmatprep.subr.mxu0 0.0
        %817 = vmatpush2.msra.mxu0 0.0
        %818 = vmatprep.subr.mxu0 0.0
        %819 = vmatpush2.msra.mxu0 0.0
        %820 = vmatprep.subr.mxu0 0.0
        %821 = vmatpush2.msra.mxu0 0.0
        %822 = vmatprep.subr.mxu0 0.0
        %823 = vmatpush2.msra.mxu0 0.0
        %824 = vmatprep.subr.mxu0 0.0
        %825 = vmatpush2.msra.mxu0 0.0
        %826 = vmatprep.subr.mxu0 0.0
        %827 = vmatpush2.msra.mxu0 0.0
        %828 = vmatprep.subr.mxu0 0.0
        %829 = vmatpush2.msra.mxu0 0.0
        %830 = vmatprep.subr.mxu0 0.0
        %831 = vmatpush2.msra.mxu0 0.0
        %832 = vmatprep.subr.mxu0 0.0
        %833 = vmatpush2.msra.mxu0 0.0
        %834 = vmatprep.subr.mxu0 0.0
        %835 = vmatpush2.msra.mxu0 0.0
        %836 = vmatprep.subr.mxu0 0.0
        %837 = vmatpush2.msra.mxu0 0.0
        %838 = vmatprep.subr.mxu0 0.0
        %839 = vmatpush2.msra.mxu0 0.0
        %840 = vmatprep.subr.mxu0 0.0
        %841 = vmatpush2.msra.mxu0 0.0
        %842 = vmatprep.subr.mxu0 0.0
        %843 = vmatpush2.msra.mxu0 0.0
        %844 = vmatprep.subr.mxu0 0.0
        %845 = vmatpush2.msra.mxu0 0.0
        %846 = vmatprep.subr.mxu0 0.0
        %847 = vmatpush2.msra.mxu0 0.0
        %848 = vmatprep.mubr.f32.mxu0 0.0
        %849 = vmatmul.mubr.f32.gmra.mxu0 %v782
        %v850 = vpop.f32.mrf.mxu0
        %v851 = vadd.f32 %v779, %v850
        %v852 = vpop.f32.mrf.mxu0
        %853 = vdwg.mxu0
        %v854 = vmax.f32 %v851, 0.0
        %v855 = vld [vmem:[%s735] sm:$0xff]
        %v856 = vld [vmem:[%s735 + $0x8] sm:$0xff]
        %v857 = vld [vmem:[%s735 + $0x10] sm:$0xff]
        %v858 = vld [vmem:[%s735 + $0x18] sm:$0xff]
        %v859 = vld [vmem:[%s735 + $0x20] sm:$0xff]
        %v860 = vld [vmem:[%s735 + $0x28] sm:$0xff]
        %v861 = vld [vmem:[%s735 + $0x30] sm:$0xff]
        %v862 = vld [vmem:[%s735 + $0x38] sm:$0xff]
        %v863 = vld [vmem:[%s735 + $0x40] sm:$0xff]
        %v864 = vld [vmem:[%s735 + $0x48] sm:$0xff]
        %v865 = vld [vmem:[%s735 + $0x50] sm:$0xff]
        %v866 = vld [vmem:[%s735 + $0x58] sm:$0xff]
        %v867 = vld [vmem:[%s735 + $0x60] sm:$0xff]
        %v868 = vld [vmem:[%s735 + $0x68] sm:$0xff]
        %v869 = vld [vmem:[%s735 + $0x70] sm:$0xff]
        %v870 = vld [vmem:[%s735 + $0x78] sm:$0xff]
        %v871 = vld [vmem:[%s735 + $0x80] sm:$0xff]
        %v872 = vld [vmem:[%s735 + $0x88] sm:$0xff]
        %v873 = vld [vmem:[%s735 + $0x90] sm:$0xff]
        %v874 = vld [vmem:[%s735 + $0x98] sm:$0xff]
        %v875 = vld [vmem:[%s735 + $0xa0] sm:$0xff]
        %v876 = vld [vmem:[%s735 + $0xa8] sm:$0xff]
        %v877 = vld [vmem:[%s735 + $0xb0] sm:$0xff]
        %v878 = vld [vmem:[%s735 + $0xb8] sm:$0xff]
        %v879 = vld [vmem:[%s735 + $0xc0] sm:$0xff]
        %v880 = vld [vmem:[%s735 + $0xc8] sm:$0xff]
        %v881 = vld [vmem:[%s735 + $0xd0] sm:$0xff]
        %v882 = vld [vmem:[%s735 + $0xd8] sm:$0xff]
        %v883 = vld [vmem:[%s735 + $0xe0] sm:$0xff]
        %v884 = vld [vmem:[%s735 + $0xe8] sm:$0xff]
        %v885 = vld [vmem:[%s735 + $0xf0] sm:$0xff]
        %v886 = vld [vmem:[%s735 + $0xf8] sm:$0xff]
        %v887 = vld [vmem:[%s735 + $0x100] sm:$0xff]
        %v888 = vld [vmem:[%s735 + $0x108] sm:$0xff]
        %v889 = vld [vmem:[%s735 + $0x110] sm:$0xff]
        %v890 = vld [vmem:[%s735 + $0x118] sm:$0xff]
        %v891 = vld [vmem:[%s735 + $0x120] sm:$0xff]
        %v892 = vld [vmem:[%s735 + $0x128] sm:$0xff]
        %v893 = vld [vmem:[%s735 + $0x130] sm:$0xff]
        %v894 = vld [vmem:[%s735 + $0x138] sm:$0xff]
        %v895 = vld [vmem:[%s735 + $0x140] sm:$0xff]
        %v896 = vld [vmem:[%s735 + $0x148] sm:$0xff]
        %v897 = vld [vmem:[%s735 + $0x150] sm:$0xff]
        %v898 = vld [vmem:[%s735 + $0x158] sm:$0xff]
        %v899 = vld [vmem:[%s735 + $0x160] sm:$0xff]
        %v900 = vld [vmem:[%s735 + $0x168] sm:$0xff]
        %v901 = vld [vmem:[%s735 + $0x170] sm:$0xff]
        %v902 = vld [vmem:[%s735 + $0x178] sm:$0xff]
        %v903 = vld [vmem:[%s735 + $0x180] sm:$0xff]
        %v904 = vld [vmem:[%s735 + $0x188] sm:$0xff]
        %v905 = vld [vmem:[%s735 + $0x190] sm:$0xff]
        %v906 = vld [vmem:[%s735 + $0x198] sm:$0xff]
        %v907 = vld [vmem:[%s735 + $0x1a0] sm:$0xff]
        %v908 = vld [vmem:[%s735 + $0x1a8] sm:$0xff]
        %v909 = vld [vmem:[%s735 + $0x1b0] sm:$0xff]
        %v910 = vld [vmem:[%s735 + $0x1b8] sm:$0xff]
        %v911 = vld [vmem:[%s735 + $0x1c0] sm:$0xff]
        %v912 = vld [vmem:[%s735 + $0x1c8] sm:$0xff]
        %v913 = vld [vmem:[%s735 + $0x1d0] sm:$0xff]
        %v914 = vld [vmem:[%s735 + $0x1d8] sm:$0xff]
        %v915 = vld [vmem:[%s735 + $0x1e0] sm:$0xff]
        %v916 = vld [vmem:[%s735 + $0x1e8] sm:$0xff]
        %v917 = vld [vmem:[%s735 + $0x1f0] sm:$0xff]
        %v918 = vld [vmem:[%s735 + $0x1f8] sm:$0xff]
        %v919 = vld [vmem:[%s735 + $0x200] sm:$0xff]
        %v920 = vld [vmem:[%s735 + $0x208] sm:$0xff]
        %v921 = vld [vmem:[%s735 + $0x210] sm:$0xff]
        %v922 = vld [vmem:[%s735 + $0x218] sm:$0xff]
        %v923 = vld [vmem:[%s735 + $0x220] sm:$0xff]
        %v924 = vld [vmem:[%s735 + $0x228] sm:$0xff]
        %v925 = vld [vmem:[%s735 + $0x230] sm:$0xff]
        %v926 = vld [vmem:[%s735 + $0x238] sm:$0xff]
        %v927 = vld [vmem:[%s735 + $0x240] sm:$0xff]
        %v928 = vld [vmem:[%s735 + $0x248] sm:$0xff]
        %v929 = vld [vmem:[%s735 + $0x250] sm:$0xff]
        %v930 = vld [vmem:[%s735 + $0x258] sm:$0xff]
        %v931 = vld [vmem:[%s735 + $0x260] sm:$0xff]
        %v932 = vld [vmem:[%s735 + $0x268] sm:$0xff]
        %v933 = vld [vmem:[%s735 + $0x270] sm:$0xff]
        %v934 = vld [vmem:[%s735 + $0x278] sm:$0xff]
        %v935 = vld [vmem:[%s735 + $0x280] sm:$0xff]
        %v936 = vld [vmem:[%s735 + $0x288] sm:$0xff]
        %v937 = vld [vmem:[%s735 + $0x290] sm:$0xff]
        %v938 = vld [vmem:[%s735 + $0x298] sm:$0xff]
        %v939 = vld [vmem:[%s735 + $0x2a0] sm:$0xff]
        %v940 = vld [vmem:[%s735 + $0x2a8] sm:$0xff]
        %v941 = vld [vmem:[%s735 + $0x2b0] sm:$0xff]
        %v942 = vld [vmem:[%s735 + $0x2b8] sm:$0xff]
        %v943 = vld [vmem:[%s735 + $0x2c0] sm:$0xff]
        %v944 = vld [vmem:[%s735 + $0x2c8] sm:$0xff]
        %v945 = vld [vmem:[%s735 + $0x2d0] sm:$0xff]
        %v946 = vld [vmem:[%s735 + $0x2d8] sm:$0xff]
        %v947 = vld [vmem:[%s735 + $0x2e0] sm:$0xff]
        %v948 = vld [vmem:[%s735 + $0x2e8] sm:$0xff]
        %v949 = vld [vmem:[%s735 + $0x2f0] sm:$0xff]
        %v950 = vld [vmem:[%s735 + $0x2f8] sm:$0xff]
        %v951 = vld [vmem:[%s735 + $0x300] sm:$0xff]
        %v952 = vld [vmem:[%s735 + $0x308] sm:$0xff]
        %v953 = vld [vmem:[%s735 + $0x310] sm:$0xff]
        %v954 = vld [vmem:[%s735 + $0x318] sm:$0xff]
        %v955 = vld [vmem:[%s735 + $0x320] sm:$0xff]
        %v956 = vld [vmem:[%s735 + $0x328] sm:$0xff]
        %v957 = vld [vmem:[%s735 + $0x330] sm:$0xff]
        %v958 = vld [vmem:[%s735 + $0x338] sm:$0xff]
        %v959 = vld [vmem:[%s735 + $0x340] sm:$0xff]
        %v960 = vld [vmem:[%s735 + $0x348] sm:$0xff]
        %v961 = vld [vmem:[%s735 + $0x350] sm:$0xff]
        %v962 = vld [vmem:[%s735 + $0x358] sm:$0xff]
        %v963 = vld [vmem:[%s735 + $0x360] sm:$0xff]
        %v964 = vld [vmem:[%s735 + $0x368] sm:$0xff]
        %v965 = vld [vmem:[%s735 + $0x370] sm:$0xff]
        %v966 = vld [vmem:[%s735 + $0x378] sm:$0xff]
        %v967 = vld [vmem:[%s735 + $0x380] sm:$0xff]
        %v968 = vld [vmem:[%s735 + $0x388] sm:$0xff]
        %v969 = vld [vmem:[%s735 + $0x390] sm:$0xff]
        %v970 = vld [vmem:[%s735 + $0x398] sm:$0xff]
        %v971 = vld [vmem:[%s735 + $0x3a0] sm:$0xff]
        %v972 = vld [vmem:[%s735 + $0x3a8] sm:$0xff]
        %v973 = vld [vmem:[%s735 + $0x3b0] sm:$0xff]
        %v974 = vld [vmem:[%s735 + $0x3b8] sm:$0xff]
        %v975 = vld [vmem:[%s735 + $0x3c0] sm:$0xff]
        %v976 = vld [vmem:[%s735 + $0x3c8] sm:$0xff]
        %v977 = vld [vmem:[%s735 + $0x3d0] sm:$0xff]
        %v978 = vld [vmem:[%s735 + $0x3d8] sm:$0xff]
        %v979 = vld [vmem:[%s735 + $0x3e0] sm:$0xff]
        %v980 = vld [vmem:[%s735 + $0x3e8] sm:$0xff]
        %v981 = vld [vmem:[%s735 + $0x3f0] sm:$0xff]
        %v982 = vld [vmem:[%s735 + $0x3f8] sm:$0xff]
        %v983 = vld [vmem:[%s735 + $0x400] sm:$0xff]
        %v984 = vld [vmem:[%s735 + $0x408] sm:$0xff]
        %v985 = vld [vmem:[%s735 + $0x410] sm:$0xff]
        %v986 = vld [vmem:[%s735 + $0x418] sm:$0xff]
        %v987 = vld [vmem:[%s735 + $0x420] sm:$0xff]
        %v988 = vld [vmem:[%s735 + $0x428] sm:$0xff]
        %v989 = vld [vmem:[%s735 + $0x430] sm:$0xff]
        %v990 = vld [vmem:[%s735 + $0x438] sm:$0xff]
        %v991 = vld [vmem:[%s735 + $0x440] sm:$0xff]
        %v992 = vld [vmem:[%s735 + $0x448] sm:$0xff]
        %v993 = vld [vmem:[%s735 + $0x450] sm:$0xff]
        %v994 = vld [vmem:[%s735 + $0x458] sm:$0xff]
        %v995 = vld [vmem:[%s735 + $0x460] sm:$0xff]
        %v996 = vld [vmem:[%s735 + $0x468] sm:$0xff]
        %v997 = vld [vmem:[%s735 + $0x470] sm:$0xff]
        %v998 = vld [vmem:[%s735 + $0x478] sm:$0xff]
        %v999 = vld [vmem:[%s735 + $0x480] sm:$0xff]
        %v1000 = vld [vmem:[%s735 + $0x488] sm:$0xff]
        %v1001 = vld [vmem:[%s735 + $0x490] sm:$0xff]
        %v1002 = vld [vmem:[%s735 + $0x498] sm:$0xff]
        %v1003 = vld [vmem:[%s735 + $0x4a0] sm:$0xff]
        %v1004 = vld [vmem:[%s735 + $0x4a8] sm:$0xff]
        %v1005 = vld [vmem:[%s735 + $0x4b0] sm:$0xff]
        %v1006 = vld [vmem:[%s735 + $0x4b8] sm:$0xff]
        %v1007 = vld [vmem:[%s735 + $0x4c0] sm:$0xff]
        %v1008 = vld [vmem:[%s735 + $0x4c8] sm:$0xff]
        %v1009 = vld [vmem:[%s735 + $0x4d0] sm:$0xff]
        %v1010 = vld [vmem:[%s735 + $0x4d8] sm:$0xff]
        %v1011 = vld [vmem:[%s735 + $0x4e0] sm:$0xff]
        %v1012 = vld [vmem:[%s735 + $0x4e8] sm:$0xff]
        %v1013 = vld [vmem:[%s735 + $0x4f0] sm:$0xff]
        %v1014 = vld [vmem:[%s735 + $0x4f8] sm:$0xff]
        %v1015 = vld [vmem:[%s735 + $0x500] sm:$0xff]
        %v1016 = vld [vmem:[%s735 + $0x508] sm:$0xff]
        %v1017 = vld [vmem:[%s735 + $0x510] sm:$0xff]
        %v1018 = vld [vmem:[%s735 + $0x518] sm:$0xff]
        %v1019 = vld [vmem:[%s735 + $0x520] sm:$0xff]
        %v1020 = vld [vmem:[%s735 + $0x528] sm:$0xff]
        %v1021 = vld [vmem:[%s735 + $0x530] sm:$0xff]
        %v1022 = vld [vmem:[%s735 + $0x538] sm:$0xff]
        %v1023 = vld [vmem:[%s735 + $0x540] sm:$0xff]
        %v1024 = vld [vmem:[%s735 + $0x548] sm:$0xff]
        %v1025 = vld [vmem:[%s735 + $0x550] sm:$0xff]
        %v1026 = vld [vmem:[%s735 + $0x558] sm:$0xff]
        %v1027 = vld [vmem:[%s735 + $0x560] sm:$0xff]
        %v1028 = vld [vmem:[%s735 + $0x568] sm:$0xff]
        %v1029 = vld [vmem:[%s735 + $0x570] sm:$0xff]
        %v1030 = vld [vmem:[%s735 + $0x578] sm:$0xff]
        %v1031 = vld [vmem:[%s735 + $0x580] sm:$0xff]
        %v1032 = vld [vmem:[%s735 + $0x588] sm:$0xff]
        %v1033 = vld [vmem:[%s735 + $0x590] sm:$0xff]
        %v1034 = vld [vmem:[%s735 + $0x598] sm:$0xff]
        %v1035 = vld [vmem:[%s735 + $0x5a0] sm:$0xff]
        %v1036 = vld [vmem:[%s735 + $0x5a8] sm:$0xff]
        %v1037 = vld [vmem:[%s735 + $0x5b0] sm:$0xff]
        %v1038 = vld [vmem:[%s735 + $0x5b8] sm:$0xff]
        %v1039 = vld [vmem:[%s735 + $0x5c0] sm:$0xff]
        %v1040 = vld [vmem:[%s735 + $0x5c8] sm:$0xff]
        %v1041 = vld [vmem:[%s735 + $0x5d0] sm:$0xff]
        %v1042 = vld [vmem:[%s735 + $0x5d8] sm:$0xff]
        %v1043 = vld [vmem:[%s735 + $0x5e0] sm:$0xff]
        %v1044 = vld [vmem:[%s735 + $0x5e8] sm:$0xff]
        %v1045 = vld [vmem:[%s735 + $0x5f0] sm:$0xff]
        %v1046 = vld [vmem:[%s735 + $0x5f8] sm:$0xff]
        %v1047 = vld [vmem:[%s735 + $0x600] sm:$0xff]
        %v1048 = vld [vmem:[%s735 + $0x608] sm:$0xff]
        %v1049 = vld [vmem:[%s735 + $0x610] sm:$0xff]
        %v1050 = vld [vmem:[%s735 + $0x618] sm:$0xff]
        %v1051 = vld [vmem:[%s735 + $0x620] sm:$0xff]
        %v1052 = vld [vmem:[%s735 + $0x628] sm:$0xff]
        %v1053 = vld [vmem:[%s735 + $0x630] sm:$0xff]
        %v1054 = vld [vmem:[%s735 + $0x638] sm:$0xff]
        %v1055 = vld [vmem:[%s735 + $0x640] sm:$0xff]
        %v1056 = vld [vmem:[%s735 + $0x648] sm:$0xff]
        %v1057 = vld [vmem:[%s735 + $0x650] sm:$0xff]
        %v1058 = vld [vmem:[%s735 + $0x658] sm:$0xff]
        %v1059 = vld [vmem:[%s735 + $0x660] sm:$0xff]
        %v1060 = vld [vmem:[%s735 + $0x668] sm:$0xff]
        %v1061 = vld [vmem:[%s735 + $0x670] sm:$0xff]
        %v1062 = vld [vmem:[%s735 + $0x678] sm:$0xff]
        %v1063 = vld [vmem:[%s735 + $0x680] sm:$0xff]
        %v1064 = vld [vmem:[%s735 + $0x688] sm:$0xff]
        %v1065 = vld [vmem:[%s735 + $0x690] sm:$0xff]
        %v1066 = vld [vmem:[%s735 + $0x698] sm:$0xff]
        %v1067 = vld [vmem:[%s735 + $0x6a0] sm:$0xff]
        %v1068 = vld [vmem:[%s735 + $0x6a8] sm:$0xff]
        %v1069 = vld [vmem:[%s735 + $0x6b0] sm:$0xff]
        %v1070 = vld [vmem:[%s735 + $0x6b8] sm:$0xff]
        %v1071 = vld [vmem:[%s735 + $0x6c0] sm:$0xff]
        %v1072 = vld [vmem:[%s735 + $0x6c8] sm:$0xff]
        %v1073 = vld [vmem:[%s735 + $0x6d0] sm:$0xff]
        %v1074 = vld [vmem:[%s735 + $0x6d8] sm:$0xff]
        %v1075 = vld [vmem:[%s735 + $0x6e0] sm:$0xff]
        %v1076 = vld [vmem:[%s735 + $0x6e8] sm:$0xff]
        %v1077 = vld [vmem:[%s735 + $0x6f0] sm:$0xff]
        %v1078 = vld [vmem:[%s735 + $0x6f8] sm:$0xff]
        %v1079 = vld [vmem:[%s735 + $0x700] sm:$0xff]
        %v1080 = vld [vmem:[%s735 + $0x708] sm:$0xff]
        %v1081 = vld [vmem:[%s735 + $0x710] sm:$0xff]
        %v1082 = vld [vmem:[%s735 + $0x718] sm:$0xff]
        %v1083 = vld [vmem:[%s735 + $0x720] sm:$0xff]
        %v1084 = vld [vmem:[%s735 + $0x728] sm:$0xff]
        %v1085 = vld [vmem:[%s735 + $0x730] sm:$0xff]
        %v1086 = vld [vmem:[%s735 + $0x738] sm:$0xff]
        %v1087 = vld [vmem:[%s735 + $0x740] sm:$0xff]
        %v1088 = vld [vmem:[%s735 + $0x748] sm:$0xff]
        %v1089 = vld [vmem:[%s735 + $0x750] sm:$0xff]
        %v1090 = vld [vmem:[%s735 + $0x758] sm:$0xff]
        %v1091 = vld [vmem:[%s735 + $0x760] sm:$0xff]
        %v1092 = vld [vmem:[%s735 + $0x768] sm:$0xff]
        %v1093 = vld [vmem:[%s735 + $0x770] sm:$0xff]
        %v1094 = vld [vmem:[%s735 + $0x778] sm:$0xff]
        %v1095 = vld [vmem:[%s735 + $0x780] sm:$0xff]
        %v1096 = vld [vmem:[%s735 + $0x788] sm:$0xff]
        %v1097 = vld [vmem:[%s735 + $0x790] sm:$0xff]
        %v1098 = vld [vmem:[%s735 + $0x798] sm:$0xff]
        %v1099 = vld [vmem:[%s735 + $0x7a0] sm:$0xff]
        %v1100 = vld [vmem:[%s735 + $0x7a8] sm:$0xff]
        %v1101 = vld [vmem:[%s735 + $0x7b0] sm:$0xff]
        %v1102 = vld [vmem:[%s735 + $0x7b8] sm:$0xff]
        %v1103 = vld [vmem:[%s735 + $0x7c0] sm:$0xff]
        %v1104 = vld [vmem:[%s735 + $0x7c8] sm:$0xff]
        %v1105 = vld [vmem:[%s735 + $0x7d0] sm:$0xff]
        %v1106 = vld [vmem:[%s735 + $0x7d8] sm:$0xff]
        %v1107 = vld [vmem:[%s735 + $0x7e0] sm:$0xff]
        %v1108 = vld [vmem:[%s735 + $0x7e8] sm:$0xff]
        %v1109 = vld [vmem:[%s735 + $0x7f0] sm:$0xff]
        %v1110 = vld [vmem:[%s735 + $0x7f8] sm:$0xff]
        %v1111 = vld [vmem:[%s767] sm:$0xff]
        %v1112 = vld [vmem:[%s767 + $0x8] sm:$0xff]
        %v1113 = vld [vmem:[%s767 + $0x10] sm:$0xff]
        %v1114 = vld [vmem:[%s767 + $0x18] sm:$0xff]
        %v1115 = vld [vmem:[%s767 + $0x20] sm:$0xff]
        %v1116 = vld [vmem:[%s767 + $0x28] sm:$0xff]
        %v1117 = vld [vmem:[%s767 + $0x30] sm:$0xff]
        %v1118 = vld [vmem:[%s767 + $0x38] sm:$0xff]
        %v1127 = vlaneseq
        %v1128 = vshrl.u32 %v1127, 7
        %v1129 = vsub.s32 0, %v1128
        %v1130 = vrot.slane %v1111, %v1129
        %v1131 = vlaneseq
        %v1132 = vshrl.u32 %v1131, 7
        %v1133 = vsub.s32 1, %v1132
        %v1134 = vrot.slane %v1111, %v1133
        %v1135 = vlaneseq
        %v1136 = vshrl.u32 %v1135, 7
        %v1137 = vsub.s32 2, %v1136
        %v1138 = vrot.slane %v1111, %v1137
        %v1139 = vlaneseq
        %v1140 = vshrl.u32 %v1139, 7
        %v1141 = vsub.s32 3, %v1140
        %v1142 = vrot.slane %v1111, %v1141
        %v1143 = vlaneseq
        %v1144 = vshrl.u32 %v1143, 7
        %v1145 = vsub.s32 4, %v1144
        %v1146 = vrot.slane %v1111, %v1145
        %v1147 = vlaneseq
        %v1148 = vshrl.u32 %v1147, 7
        %v1149 = vsub.s32 5, %v1148
        %v1150 = vrot.slane %v1111, %v1149
        %v1151 = vlaneseq
        %v1152 = vshrl.u32 %v1151, 7
        %v1153 = vsub.s32 6, %v1152
        %v1154 = vrot.slane %v1111, %v1153
        %v1155 = vlaneseq
        %v1156 = vshrl.u32 %v1155, 7
        %v1157 = vsub.s32 7, %v1156
        %v1158 = vrot.slane %v1111, %v1157
        %v1159 = vlaneseq
        %v1160 = vshrl.u32 %v1159, 7
        %v1161 = vsub.s32 0, %v1160
        %v1162 = vrot.slane %v1112, %v1161
        %v1163 = vlaneseq
        %v1164 = vshrl.u32 %v1163, 7
        %v1165 = vsub.s32 1, %v1164
        %v1166 = vrot.slane %v1112, %v1165
        %v1167 = vlaneseq
        %v1168 = vshrl.u32 %v1167, 7
        %v1169 = vsub.s32 2, %v1168
        %v1170 = vrot.slane %v1112, %v1169
        %v1171 = vlaneseq
        %v1172 = vshrl.u32 %v1171, 7
        %v1173 = vsub.s32 3, %v1172
        %v1174 = vrot.slane %v1112, %v1173
        %v1175 = vlaneseq
        %v1176 = vshrl.u32 %v1175, 7
        %v1177 = vsub.s32 4, %v1176
        %v1178 = vrot.slane %v1112, %v1177
        %v1179 = vlaneseq
        %v1180 = vshrl.u32 %v1179, 7
        %v1181 = vsub.s32 5, %v1180
        %v1182 = vrot.slane %v1112, %v1181
        %v1183 = vlaneseq
        %v1184 = vshrl.u32 %v1183, 7
        %v1185 = vsub.s32 6, %v1184
        %v1186 = vrot.slane %v1112, %v1185
        %v1187 = vlaneseq
        %v1188 = vshrl.u32 %v1187, 7
        %v1189 = vsub.s32 7, %v1188
        %v1190 = vrot.slane %v1112, %v1189
        %v1191 = vlaneseq
        %v1192 = vshrl.u32 %v1191, 7
        %v1193 = vsub.s32 0, %v1192
        %v1194 = vrot.slane %v1113, %v1193
        %v1195 = vlaneseq
        %v1196 = vshrl.u32 %v1195, 7
        %v1197 = vsub.s32 1, %v1196
        %v1198 = vrot.slane %v1113, %v1197
        %v1199 = vlaneseq
        %v1200 = vshrl.u32 %v1199, 7
        %v1201 = vsub.s32 2, %v1200
        %v1202 = vrot.slane %v1113, %v1201
        %v1203 = vlaneseq
        %v1204 = vshrl.u32 %v1203, 7
        %v1205 = vsub.s32 3, %v1204
        %v1206 = vrot.slane %v1113, %v1205
        %v1207 = vlaneseq
        %v1208 = vshrl.u32 %v1207, 7
        %v1209 = vsub.s32 4, %v1208
        %v1210 = vrot.slane %v1113, %v1209
        %v1211 = vlaneseq
        %v1212 = vshrl.u32 %v1211, 7
        %v1213 = vsub.s32 5, %v1212
        %v1214 = vrot.slane %v1113, %v1213
        %v1215 = vlaneseq
        %v1216 = vshrl.u32 %v1215, 7
        %v1217 = vsub.s32 6, %v1216
        %v1218 = vrot.slane %v1113, %v1217
        %v1219 = vlaneseq
        %v1220 = vshrl.u32 %v1219, 7
        %v1221 = vsub.s32 7, %v1220
        %v1222 = vrot.slane %v1113, %v1221
        %v1223 = vlaneseq
        %v1224 = vshrl.u32 %v1223, 7
        %v1225 = vsub.s32 0, %v1224
        %v1226 = vrot.slane %v1114, %v1225
        %v1227 = vlaneseq
        %v1228 = vshrl.u32 %v1227, 7
        %v1229 = vsub.s32 1, %v1228
        %v1230 = vrot.slane %v1114, %v1229
        %v1231 = vlaneseq
        %v1232 = vshrl.u32 %v1231, 7
        %v1233 = vsub.s32 2, %v1232
        %v1234 = vrot.slane %v1114, %v1233
        %v1235 = vlaneseq
        %v1236 = vshrl.u32 %v1235, 7
        %v1237 = vsub.s32 3, %v1236
        %v1238 = vrot.slane %v1114, %v1237
        %v1239 = vlaneseq
        %v1240 = vshrl.u32 %v1239, 7
        %v1241 = vsub.s32 4, %v1240
        %v1242 = vrot.slane %v1114, %v1241
        %v1243 = vlaneseq
        %v1244 = vshrl.u32 %v1243, 7
        %v1245 = vsub.s32 5, %v1244
        %v1246 = vrot.slane %v1114, %v1245
        %v1247 = vlaneseq
        %v1248 = vshrl.u32 %v1247, 7
        %v1249 = vsub.s32 6, %v1248
        %v1250 = vrot.slane %v1114, %v1249
        %v1251 = vlaneseq
        %v1252 = vshrl.u32 %v1251, 7
        %v1253 = vsub.s32 7, %v1252
        %v1254 = vrot.slane %v1114, %v1253
        %v1255 = vlaneseq
        %v1256 = vshrl.u32 %v1255, 7
        %v1257 = vsub.s32 0, %v1256
        %v1258 = vrot.slane %v1115, %v1257
        %v1259 = vlaneseq
        %v1260 = vshrl.u32 %v1259, 7
        %v1261 = vsub.s32 1, %v1260
        %v1262 = vrot.slane %v1115, %v1261
        %v1263 = vlaneseq
        %v1264 = vshrl.u32 %v1263, 7
        %v1265 = vsub.s32 2, %v1264
        %v1266 = vrot.slane %v1115, %v1265
        %v1267 = vlaneseq
        %v1268 = vshrl.u32 %v1267, 7
        %v1269 = vsub.s32 3, %v1268
        %v1270 = vrot.slane %v1115, %v1269
        %v1271 = vlaneseq
        %v1272 = vshrl.u32 %v1271, 7
        %v1273 = vsub.s32 4, %v1272
        %v1274 = vrot.slane %v1115, %v1273
        %v1275 = vlaneseq
        %v1276 = vshrl.u32 %v1275, 7
        %v1277 = vsub.s32 5, %v1276
        %v1278 = vrot.slane %v1115, %v1277
        %v1279 = vlaneseq
        %v1280 = vshrl.u32 %v1279, 7
        %v1281 = vsub.s32 6, %v1280
        %v1282 = vrot.slane %v1115, %v1281
        %v1283 = vlaneseq
        %v1284 = vshrl.u32 %v1283, 7
        %v1285 = vsub.s32 7, %v1284
        %v1286 = vrot.slane %v1115, %v1285
        %v1287 = vlaneseq
        %v1288 = vshrl.u32 %v1287, 7
        %v1289 = vsub.s32 0, %v1288
        %v1290 = vrot.slane %v1116, %v1289
        %v1291 = vlaneseq
        %v1292 = vshrl.u32 %v1291, 7
        %v1293 = vsub.s32 1, %v1292
        %v1294 = vrot.slane %v1116, %v1293
        %v1295 = vlaneseq
        %v1296 = vshrl.u32 %v1295, 7
        %v1297 = vsub.s32 2, %v1296
        %v1298 = vrot.slane %v1116, %v1297
        %v1299 = vlaneseq
        %v1300 = vshrl.u32 %v1299, 7
        %v1301 = vsub.s32 3, %v1300
        %v1302 = vrot.slane %v1116, %v1301
        %v1303 = vlaneseq
        %v1304 = vshrl.u32 %v1303, 7
        %v1305 = vsub.s32 4, %v1304
        %v1306 = vrot.slane %v1116, %v1305
        %v1307 = vlaneseq
        %v1308 = vshrl.u32 %v1307, 7
        %v1309 = vsub.s32 5, %v1308
        %v1310 = vrot.slane %v1116, %v1309
        %v1311 = vlaneseq
        %v1312 = vshrl.u32 %v1311, 7
        %v1313 = vsub.s32 6, %v1312
        %v1314 = vrot.slane %v1116, %v1313
        %v1315 = vlaneseq
        %v1316 = vshrl.u32 %v1315, 7
        %v1317 = vsub.s32 7, %v1316
        %v1318 = vrot.slane %v1116, %v1317
        %v1319 = vlaneseq
        %v1320 = vshrl.u32 %v1319, 7
        %v1321 = vsub.s32 0, %v1320
        %v1322 = vrot.slane %v1117, %v1321
        %v1323 = vlaneseq
        %v1324 = vshrl.u32 %v1323, 7
        %v1325 = vsub.s32 1, %v1324
        %v1326 = vrot.slane %v1117, %v1325
        %v1327 = vlaneseq
        %v1328 = vshrl.u32 %v1327, 7
        %v1329 = vsub.s32 2, %v1328
        %v1330 = vrot.slane %v1117, %v1329
        %v1331 = vlaneseq
        %v1332 = vshrl.u32 %v1331, 7
        %v1333 = vsub.s32 3, %v1332
        %v1334 = vrot.slane %v1117, %v1333
        %v1335 = vlaneseq
        %v1336 = vshrl.u32 %v1335, 7
        %v1337 = vsub.s32 4, %v1336
        %v1338 = vrot.slane %v1117, %v1337
        %v1339 = vlaneseq
        %v1340 = vshrl.u32 %v1339, 7
        %v1341 = vsub.s32 5, %v1340
        %v1342 = vrot.slane %v1117, %v1341
        %v1343 = vlaneseq
        %v1344 = vshrl.u32 %v1343, 7
        %v1345 = vsub.s32 6, %v1344
        %v1346 = vrot.slane %v1117, %v1345
        %v1347 = vlaneseq
        %v1348 = vshrl.u32 %v1347, 7
        %v1349 = vsub.s32 7, %v1348
        %v1350 = vrot.slane %v1117, %v1349
        %v1351 = vlaneseq
        %v1352 = vshrl.u32 %v1351, 7
        %v1353 = vsub.s32 0, %v1352
        %v1354 = vrot.slane %v1118, %v1353
        %v1355 = vlaneseq
        %v1356 = vshrl.u32 %v1355, 7
        %v1357 = vsub.s32 1, %v1356
        %v1358 = vrot.slane %v1118, %v1357
        %v1359 = vlaneseq
        %v1360 = vshrl.u32 %v1359, 7
        %v1361 = vsub.s32 2, %v1360
        %v1362 = vrot.slane %v1118, %v1361
        %v1363 = vlaneseq
        %v1364 = vshrl.u32 %v1363, 7
        %v1365 = vsub.s32 3, %v1364
        %v1366 = vrot.slane %v1118, %v1365
        %v1367 = vlaneseq
        %v1368 = vshrl.u32 %v1367, 7
        %v1369 = vsub.s32 4, %v1368
        %v1370 = vrot.slane %v1118, %v1369
        %v1371 = vlaneseq
        %v1372 = vshrl.u32 %v1371, 7
        %v1373 = vsub.s32 5, %v1372
        %v1374 = vrot.slane %v1118, %v1373
        %v1375 = vlaneseq
        %v1376 = vshrl.u32 %v1375, 7
        %v1377 = vsub.s32 6, %v1376
        %v1378 = vrot.slane %v1118, %v1377
        %v1379 = vlaneseq
        %v1380 = vshrl.u32 %v1379, 7
        %v1381 = vsub.s32 7, %v1380
        %v1382 = vrot.slane %v1118, %v1381
        %v1448 = vsel %vm780, %v854, 0
        %1450 = vmatprep.subr.mxu0 0.0
        %1451 = vmatpush1.msra.mxu0 0.0
        %1452 = vmatprep.subr.mxu0 0.0
        %1453 = vmatpush1.msra.mxu0 0.0
        %1454 = vmatprep.subr.mxu0 0.0
        %1455 = vmatpush1.msra.mxu0 0.0
        %1456 = vmatprep.subr.mxu0 0.0
        %1457 = vmatpush1.msra.mxu0 0.0
        %1458 = vmatprep.subr.mxu0 0.0
        %1459 = vmatpush1.msra.mxu0 0.0
        %1460 = vmatprep.subr.mxu0 0.0
        %1461 = vmatpush1.msra.mxu0 0.0
        %1462 = vmatprep.subr.mxu0 0.0
        %1463 = vmatpush1.msra.mxu0 0.0
        %1464 = vmatprep.subr.mxu0 0.0
        %1465 = vmatpush1.msra.mxu0 0.0
        %1466 = vmatprep.subr.mxu0 0.0
        %1467 = vmatpush1.msra.mxu0 0.0
        %1468 = vmatprep.subr.mxu0 0.0
        %1469 = vmatpush1.msra.mxu0 0.0
        %1470 = vmatprep.subr.mxu0 0.0
        %1471 = vmatpush1.msra.mxu0 0.0
        %1472 = vmatprep.subr.mxu0 0.0
        %1473 = vmatpush1.msra.mxu0 0.0
        %1474 = vmatprep.subr.mxu0 %v1048
        %1475 = vmatpush1.msra.mxu0 %v1047
        %1476 = vmatprep.subr.mxu0 %v984
        %1477 = vmatpush1.msra.mxu0 %v983
        %1478 = vmatprep.subr.mxu0 %v920
        %1479 = vmatpush1.msra.mxu0 %v919
        %1480 = vmatprep.subr.mxu0 %v856
        %1481 = vmatpush1.msra.mxu0 %v855
        %1482 = vmatprep.subr.mxu0 0.0
        %1483 = vmatpush2.msra.mxu0 0.0
        %1484 = vmatprep.subr.mxu0 0.0
        %1485 = vmatpush2.msra.mxu0 0.0
        %1486 = vmatprep.subr.mxu0 0.0
        %1487 = vmatpush2.msra.mxu0 0.0
        %1488 = vmatprep.subr.mxu0 0.0
        %1489 = vmatpush2.msra.mxu0 0.0
        %1490 = vmatprep.subr.mxu0 0.0
        %1491 = vmatpush2.msra.mxu0 0.0
        %1492 = vmatprep.subr.mxu0 0.0
        %1493 = vmatpush2.msra.mxu0 0.0
        %1494 = vmatprep.subr.mxu0 0.0
        %1495 = vmatpush2.msra.mxu0 0.0
        %1496 = vmatprep.subr.mxu0 0.0
        %1497 = vmatpush2.msra.mxu0 0.0
        %1498 = vmatprep.subr.mxu0 0.0
        %1499 = vmatpush2.msra.mxu0 0.0
        %1500 = vmatprep.subr.mxu0 0.0
        %1501 = vmatpush2.msra.mxu0 0.0
        %1502 = vmatprep.subr.mxu0 0.0
        %1503 = vmatpush2.msra.mxu0 0.0
        %1504 = vmatprep.subr.mxu0 0.0
        %1505 = vmatpush2.msra.mxu0 0.0
        %1506 = vmatprep.subr.mxu0 0.0
        %1507 = vmatpush2.msra.mxu0 0.0
        %1508 = vmatprep.subr.mxu0 0.0
        %1509 = vmatpush2.msra.mxu0 0.0
        %1510 = vmatprep.subr.mxu0 0.0
        %1511 = vmatpush2.msra.mxu0 0.0
        %1512 = vmatprep.subr.mxu0 0.0
        %1513 = vmatpush2.msra.mxu0 0.0
        %1514 = vmatprep.mubr.f32.mxu0 0.0
        %1515 = vmatmul.mubr.f32.gmra.mxu0 %v1448
        %v1516 = vpop.f32.mrf.mxu0
        %v1517 = vadd.f32 %v1130, %v1516
        %v1518 = vpop.f32.mrf.mxu0
        %v1519 = vadd.f32 %v1134, %v1518
        %1520 = vdwg.mxu0
        %1521 = vmatprep.subr.mxu0 0.0
        %1522 = vmatpush1.msra.mxu0 0.0
        %1523 = vmatprep.subr.mxu0 0.0
        %1524 = vmatpush1.msra.mxu0 0.0
        %1525 = vmatprep.subr.mxu0 0.0
        %1526 = vmatpush1.msra.mxu0 0.0
        %1527 = vmatprep.subr.mxu0 0.0
        %1528 = vmatpush1.msra.mxu0 0.0
        %1529 = vmatprep.subr.mxu0 0.0
        %1530 = vmatpush1.msra.mxu0 0.0
        %1531 = vmatprep.subr.mxu0 0.0
        %1532 = vmatpush1.msra.mxu0 0.0
        %1533 = vmatprep.subr.mxu0 0.0
        %1534 = vmatpush1.msra.mxu0 0.0
        %1535 = vmatprep.subr.mxu0 0.0
        %1536 = vmatpush1.msra.mxu0 0.0
        %1537 = vmatprep.subr.mxu0 0.0
        %1538 = vmatpush1.msra.mxu0 0.0
        %1539 = vmatprep.subr.mxu0 0.0
        %1540 = vmatpush1.msra.mxu0 0.0
        %1541 = vmatprep.subr.mxu0 0.0
        %1542 = vmatpush1.msra.mxu0 0.0
        %1543 = vmatprep.subr.mxu0 0.0
        %1544 = vmatpush1.msra.mxu0 0.0
        %1545 = vmatprep.subr.mxu0 %v1050
        %1546 = vmatpush1.msra.mxu0 %v1049
        %1547 = vmatprep.subr.mxu0 %v986
        %1548 = vmatpush1.msra.mxu0 %v985
        %1549 = vmatprep.subr.mxu0 %v922
        %1550 = vmatpush1.msra.mxu0 %v921
        %1551 = vmatprep.subr.mxu0 %v858
        %1552 = vmatpush1.msra.mxu0 %v857
        %1553 = vmatprep.subr.mxu0 0.0
        %1554 = vmatpush2.msra.mxu0 0.0
        %1555 = vmatprep.subr.mxu0 0.0
        %1556 = vmatpush2.msra.mxu0 0.0
        %1557 = vmatprep.subr.mxu0 0.0
        %1558 = vmatpush2.msra.mxu0 0.0
        %1559 = vmatprep.subr.mxu0 0.0
        %1560 = vmatpush2.msra.mxu0 0.0
        %1561 = vmatprep.subr.mxu0 0.0
        %1562 = vmatpush2.msra.mxu0 0.0
        %1563 = vmatprep.subr.mxu0 0.0
        %1564 = vmatpush2.msra.mxu0 0.0
        %1565 = vmatprep.subr.mxu0 0.0
        %1566 = vmatpush2.msra.mxu0 0.0
        %1567 = vmatprep.subr.mxu0 0.0
        %1568 = vmatpush2.msra.mxu0 0.0
        %1569 = vmatprep.subr.mxu0 0.0
        %1570 = vmatpush2.msra.mxu0 0.0
        %1571 = vmatprep.subr.mxu0 0.0
        %1572 = vmatpush2.msra.mxu0 0.0
        %1573 = vmatprep.subr.mxu0 0.0
        %1574 = vmatpush2.msra.mxu0 0.0
        %1575 = vmatprep.subr.mxu0 0.0
        %1576 = vmatpush2.msra.mxu0 0.0
        %1577 = vmatprep.subr.mxu0 0.0
        %1578 = vmatpush2.msra.mxu0 0.0
        %1579 = vmatprep.subr.mxu0 0.0
        %1580 = vmatpush2.msra.mxu0 0.0
        %1581 = vmatprep.subr.mxu0 0.0
        %1582 = vmatpush2.msra.mxu0 0.0
        %1583 = vmatprep.subr.mxu0 0.0
        %1584 = vmatpush2.msra.mxu0 0.0
        %1585 = vmatprep.mubr.f32.mxu0 0.0
        %1586 = vmatmul.mubr.f32.gmra.mxu0 %v1448
        %v1587 = vpop.f32.mrf.mxu0
        %v1588 = vadd.f32 %v1138, %v1587
        %v1589 = vpop.f32.mrf.mxu0
        %v1590 = vadd.f32 %v1142, %v1589
        %1591 = vdwg.mxu0
        %1592 = vmatprep.subr.mxu0 0.0
        %1593 = vmatpush1.msra.mxu0 0.0
        %1594 = vmatprep.subr.mxu0 0.0
        %1595 = vmatpush1.msra.mxu0 0.0
        %1596 = vmatprep.subr.mxu0 0.0
        %1597 = vmatpush1.msra.mxu0 0.0
        %1598 = vmatprep.subr.mxu0 0.0
        %1599 = vmatpush1.msra.mxu0 0.0
        %1600 = vmatprep.subr.mxu0 0.0
        %1601 = vmatpush1.msra.mxu0 0.0
        %1602 = vmatprep.subr.mxu0 0.0
        %1603 = vmatpush1.msra.mxu0 0.0
        %1604 = vmatprep.subr.mxu0 0.0
        %1605 = vmatpush1.msra.mxu0 0.0
        %1606 = vmatprep.subr.mxu0 0.0
        %1607 = vmatpush1.msra.mxu0 0.0
        %1608 = vmatprep.subr.mxu0 0.0
        %1609 = vmatpush1.msra.mxu0 0.0
        %1610 = vmatprep.subr.mxu0 0.0
        %1611 = vmatpush1.msra.mxu0 0.0
        %1612 = vmatprep.subr.mxu0 0.0
        %1613 = vmatpush1.msra.mxu0 0.0
        %1614 = vmatprep.subr.mxu0 0.0
        %1615 = vmatpush1.msra.mxu0 0.0
        %1616 = vmatprep.subr.mxu0 %v1052
        %1617 = vmatpush1.msra.mxu0 %v1051
        %1618 = vmatprep.subr.mxu0 %v988
        %1619 = vmatpush1.msra.mxu0 %v987
        %1620 = vmatprep.subr.mxu0 %v924
        %1621 = vmatpush1.msra.mxu0 %v923
        %1622 = vmatprep.subr.mxu0 %v860
        %1623 = vmatpush1.msra.mxu0 %v859
        %1624 = vmatprep.subr.mxu0 0.0
        %1625 = vmatpush2.msra.mxu0 0.0
        %1626 = vmatprep.subr.mxu0 0.0
        %1627 = vmatpush2.msra.mxu0 0.0
        %1628 = vmatprep.subr.mxu0 0.0
        %1629 = vmatpush2.msra.mxu0 0.0
        %1630 = vmatprep.subr.mxu0 0.0
        %1631 = vmatpush2.msra.mxu0 0.0
        %1632 = vmatprep.subr.mxu0 0.0
        %1633 = vmatpush2.msra.mxu0 0.0
        %1634 = vmatprep.subr.mxu0 0.0
        %1635 = vmatpush2.msra.mxu0 0.0
        %1636 = vmatprep.subr.mxu0 0.0
        %1637 = vmatpush2.msra.mxu0 0.0
        %1638 = vmatprep.subr.mxu0 0.0
        %1639 = vmatpush2.msra.mxu0 0.0
        %1640 = vmatprep.subr.mxu0 0.0
        %1641 = vmatpush2.msra.mxu0 0.0
        %1642 = vmatprep.subr.mxu0 0.0
        %1643 = vmatpush2.msra.mxu0 0.0
        %1644 = vmatprep.subr.mxu0 0.0
        %1645 = vmatpush2.msra.mxu0 0.0
        %1646 = vmatprep.subr.mxu0 0.0
        %1647 = vmatpush2.msra.mxu0 0.0
        %1648 = vmatprep.subr.mxu0 0.0
        %1649 = vmatpush2.msra.mxu0 0.0
        %1650 = vmatprep.subr.mxu0 0.0
        %1651 = vmatpush2.msra.mxu0 0.0
        %1652 = vmatprep.subr.mxu0 0.0
        %1653 = vmatpush2.msra.mxu0 0.0
        %1654 = vmatprep.subr.mxu0 0.0
        %1655 = vmatpush2.msra.mxu0 0.0
        %1656 = vmatprep.mubr.f32.mxu0 0.0
        %1657 = vmatmul.mubr.f32.gmra.mxu0 %v1448
        %v1658 = vpop.f32.mrf.mxu0
        %v1659 = vadd.f32 %v1146, %v1658
        %v1660 = vpop.f32.mrf.mxu0
        %v1661 = vadd.f32 %v1150, %v1660
        %1662 = vdwg.mxu0
        %1663 = vmatprep.subr.mxu0 0.0
        %1664 = vmatpush1.msra.mxu0 0.0
        %1665 = vmatprep.subr.mxu0 0.0
        %1666 = vmatpush1.msra.mxu0 0.0
        %1667 = vmatprep.subr.mxu0 0.0
        %1668 = vmatpush1.msra.mxu0 0.0
        %1669 = vmatprep.subr.mxu0 0.0
        %1670 = vmatpush1.msra.mxu0 0.0
        %1671 = vmatprep.subr.mxu0 0.0
        %1672 = vmatpush1.msra.mxu0 0.0
        %1673 = vmatprep.subr.mxu0 0.0
        %1674 = vmatpush1.msra.mxu0 0.0
        %1675 = vmatprep.subr.mxu0 0.0
        %1676 = vmatpush1.msra.mxu0 0.0
        %1677 = vmatprep.subr.mxu0 0.0
        %1678 = vmatpush1.msra.mxu0 0.0
        %1679 = vmatprep.subr.mxu0 0.0
        %1680 = vmatpush1.msra.mxu0 0.0
        %1681 = vmatprep.subr.mxu0 0.0
        %1682 = vmatpush1.msra.mxu0 0.0
        %1683 = vmatprep.subr.mxu0 0.0
        %1684 = vmatpush1.msra.mxu0 0.0
        %1685 = vmatprep.subr.mxu0 0.0
        %1686 = vmatpush1.msra.mxu0 0.0
        %1687 = vmatprep.subr.mxu0 %v1054
        %1688 = vmatpush1.msra.mxu0 %v1053
        %1689 = vmatprep.subr.mxu0 %v990
        %1690 = vmatpush1.msra.mxu0 %v989
        %1691 = vmatprep.subr.mxu0 %v926
        %1692 = vmatpush1.msra.mxu0 %v925
        %1693 = vmatprep.subr.mxu0 %v862
        %1694 = vmatpush1.msra.mxu0 %v861
        %1695 = vmatprep.subr.mxu0 0.0
        %1696 = vmatpush2.msra.mxu0 0.0
        %1697 = vmatprep.subr.mxu0 0.0
        %1698 = vmatpush2.msra.mxu0 0.0
        %1699 = vmatprep.subr.mxu0 0.0
        %1700 = vmatpush2.msra.mxu0 0.0
        %1701 = vmatprep.subr.mxu0 0.0
        %1702 = vmatpush2.msra.mxu0 0.0
        %1703 = vmatprep.subr.mxu0 0.0
        %1704 = vmatpush2.msra.mxu0 0.0
        %1705 = vmatprep.subr.mxu0 0.0
        %1706 = vmatpush2.msra.mxu0 0.0
        %1707 = vmatprep.subr.mxu0 0.0
        %1708 = vmatpush2.msra.mxu0 0.0
        %1709 = vmatprep.subr.mxu0 0.0
        %1710 = vmatpush2.msra.mxu0 0.0
        %1711 = vmatprep.subr.mxu0 0.0
        %1712 = vmatpush2.msra.mxu0 0.0
        %1713 = vmatprep.subr.mxu0 0.0
        %1714 = vmatpush2.msra.mxu0 0.0
        %1715 = vmatprep.subr.mxu0 0.0
        %1716 = vmatpush2.msra.mxu0 0.0
        %1717 = vmatprep.subr.mxu0 0.0
        %1718 = vmatpush2.msra.mxu0 0.0
        %1719 = vmatprep.subr.mxu0 0.0
        %1720 = vmatpush2.msra.mxu0 0.0
        %1721 = vmatprep.subr.mxu0 0.0
        %1722 = vmatpush2.msra.mxu0 0.0
        %1723 = vmatprep.subr.mxu0 0.0
        %1724 = vmatpush2.msra.mxu0 0.0
        %1725 = vmatprep.subr.mxu0 0.0
        %1726 = vmatpush2.msra.mxu0 0.0
        %1727 = vmatprep.mubr.f32.mxu0 0.0
        %1728 = vmatmul.mubr.f32.gmra.mxu0 %v1448
        %v1729 = vpop.f32.mrf.mxu0
        %v1730 = vadd.f32 %v1154, %v1729
        %v1731 = vpop.f32.mrf.mxu0
        %v1732 = vadd.f32 %v1158, %v1731
        %1733 = vdwg.mxu0
        %1734 = vmatprep.subr.mxu0 0.0
        %1735 = vmatpush1.msra.mxu0 0.0
        %1736 = vmatprep.subr.mxu0 0.0
        %1737 = vmatpush1.msra.mxu0 0.0
        %1738 = vmatprep.subr.mxu0 0.0
        %1739 = vmatpush1.msra.mxu0 0.0
        %1740 = vmatprep.subr.mxu0 0.0
        %1741 = vmatpush1.msra.mxu0 0.0
        %1742 = vmatprep.subr.mxu0 0.0
        %1743 = vmatpush1.msra.mxu0 0.0
        %1744 = vmatprep.subr.mxu0 0.0
        %1745 = vmatpush1.msra.mxu0 0.0
        %1746 = vmatprep.subr.mxu0 0.0
        %1747 = vmatpush1.msra.mxu0 0.0
        %1748 = vmatprep.subr.mxu0 0.0
        %1749 = vmatpush1.msra.mxu0 0.0
        %1750 = vmatprep.subr.mxu0 0.0
        %1751 = vmatpush1.msra.mxu0 0.0
        %1752 = vmatprep.subr.mxu0 0.0
        %1753 = vmatpush1.msra.mxu0 0.0
        %1754 = vmatprep.subr.mxu0 0.0
        %1755 = vmatpush1.msra.mxu0 0.0
        %1756 = vmatprep.subr.mxu0 0.0
        %1757 = vmatpush1.msra.mxu0 0.0
        %1758 = vmatprep.subr.mxu0 %v1056
        %1759 = vmatpush1.msra.mxu0 %v1055
        %1760 = vmatprep.subr.mxu0 %v992
        %1761 = vmatpush1.msra.mxu0 %v991
        %1762 = vmatprep.subr.mxu0 %v928
        %1763 = vmatpush1.msra.mxu0 %v927
        %1764 = vmatprep.subr.mxu0 %v864
        %1765 = vmatpush1.msra.mxu0 %v863
        %1766 = vmatprep.subr.mxu0 0.0
        %1767 = vmatpush2.msra.mxu0 0.0
        %1768 = vmatprep.subr.mxu0 0.0
        %1769 = vmatpush2.msra.mxu0 0.0
        %1770 = vmatprep.subr.mxu0 0.0
        %1771 = vmatpush2.msra.mxu0 0.0
        %1772 = vmatprep.subr.mxu0 0.0
        %1773 = vmatpush2.msra.mxu0 0.0
        %1774 = vmatprep.subr.mxu0 0.0
        %1775 = vmatpush2.msra.mxu0 0.0
        %1776 = vmatprep.subr.mxu0 0.0
        %1777 = vmatpush2.msra.mxu0 0.0
        %1778 = vmatprep.subr.mxu0 0.0
        %1779 = vmatpush2.msra.mxu0 0.0
        %1780 = vmatprep.subr.mxu0 0.0
        %1781 = vmatpush2.msra.mxu0 0.0
        %1782 = vmatprep.subr.mxu0 0.0
        %1783 = vmatpush2.msra.mxu0 0.0
        %1784 = vmatprep.subr.mxu0 0.0
        %1785 = vmatpush2.msra.mxu0 0.0
        %1786 = vmatprep.subr.mxu0 0.0
        %1787 = vmatpush2.msra.mxu0 0.0
        %1788 = vmatprep.subr.mxu0 0.0
        %1789 = vmatpush2.msra.mxu0 0.0
        %1790 = vmatprep.subr.mxu0 0.0
        %1791 = vmatpush2.msra.mxu0 0.0
        %1792 = vmatprep.subr.mxu0 0.0
        %1793 = vmatpush2.msra.mxu0 0.0
        %1794 = vmatprep.subr.mxu0 0.0
        %1795 = vmatpush2.msra.mxu0 0.0
        %1796 = vmatprep.subr.mxu0 0.0
        %1797 = vmatpush2.msra.mxu0 0.0
        %1798 = vmatprep.mubr.f32.mxu0 0.0
        %1799 = vmatmul.mubr.f32.gmra.mxu0 %v1448
        %v1800 = vpop.f32.mrf.mxu0
        %v1801 = vadd.f32 %v1162, %v1800
        %v1802 = vpop.f32.mrf.mxu0
        %v1803 = vadd.f32 %v1166, %v1802
        %1804 = vdwg.mxu0
        %1805 = vmatprep.subr.mxu0 0.0
        %1806 = vmatpush1.msra.mxu0 0.0
        %1807 = vmatprep.subr.mxu0 0.0
        %1808 = vmatpush1.msra.mxu0 0.0
        %1809 = vmatprep.subr.mxu0 0.0
        %1810 = vmatpush1.msra.mxu0 0.0
        %1811 = vmatprep.subr.mxu0 0.0
        %1812 = vmatpush1.msra.mxu0 0.0
        %1813 = vmatprep.subr.mxu0 0.0
        %1814 = vmatpush1.msra.mxu0 0.0
        %1815 = vmatprep.subr.mxu0 0.0
        %1816 = vmatpush1.msra.mxu0 0.0
        %1817 = vmatprep.subr.mxu0 0.0
        %1818 = vmatpush1.msra.mxu0 0.0
        %1819 = vmatprep.subr.mxu0 0.0
        %1820 = vmatpush1.msra.mxu0 0.0
        %1821 = vmatprep.subr.mxu0 0.0
        %1822 = vmatpush1.msra.mxu0 0.0
        %1823 = vmatprep.subr.mxu0 0.0
        %1824 = vmatpush1.msra.mxu0 0.0
        %1825 = vmatprep.subr.mxu0 0.0
        %1826 = vmatpush1.msra.mxu0 0.0
        %1827 = vmatprep.subr.mxu0 0.0
        %1828 = vmatpush1.msra.mxu0 0.0
        %1829 = vmatprep.subr.mxu0 %v1058
        %1830 = vmatpush1.msra.mxu0 %v1057
        %1831 = vmatprep.subr.mxu0 %v994
        %1832 = vmatpush1.msra.mxu0 %v993
        %1833 = vmatprep.subr.mxu0 %v930
        %1834 = vmatpush1.msra.mxu0 %v929
        %1835 = vmatprep.subr.mxu0 %v866
        %1836 = vmatpush1.msra.mxu0 %v865
        %1837 = vmatprep.subr.mxu0 0.0
        %1838 = vmatpush2.msra.mxu0 0.0
        %1839 = vmatprep.subr.mxu0 0.0
        %1840 = vmatpush2.msra.mxu0 0.0
        %1841 = vmatprep.subr.mxu0 0.0
        %1842 = vmatpush2.msra.mxu0 0.0
        %1843 = vmatprep.subr.mxu0 0.0
        %1844 = vmatpush2.msra.mxu0 0.0
        %1845 = vmatprep.subr.mxu0 0.0
        %1846 = vmatpush2.msra.mxu0 0.0
        %1847 = vmatprep.subr.mxu0 0.0
        %1848 = vmatpush2.msra.mxu0 0.0
        %1849 = vmatprep.subr.mxu0 0.0
        %1850 = vmatpush2.msra.mxu0 0.0
        %1851 = vmatprep.subr.mxu0 0.0
        %1852 = vmatpush2.msra.mxu0 0.0
        %1853 = vmatprep.subr.mxu0 0.0
        %1854 = vmatpush2.msra.mxu0 0.0
        %1855 = vmatprep.subr.mxu0 0.0
        %1856 = vmatpush2.msra.mxu0 0.0
        %1857 = vmatprep.subr.mxu0 0.0
        %1858 = vmatpush2.msra.mxu0 0.0
        %1859 = vmatprep.subr.mxu0 0.0
        %1860 = vmatpush2.msra.mxu0 0.0
        %1861 = vmatprep.subr.mxu0 0.0
        %1862 = vmatpush2.msra.mxu0 0.0
        %1863 = vmatprep.subr.mxu0 0.0
        %1864 = vmatpush2.msra.mxu0 0.0
        %1865 = vmatprep.subr.mxu0 0.0
        %1866 = vmatpush2.msra.mxu0 0.0
        %1867 = vmatprep.subr.mxu0 0.0
        %1868 = vmatpush2.msra.mxu0 0.0
        %1869 = vmatprep.mubr.f32.mxu0 0.0
        %1870 = vmatmul.mubr.f32.gmra.mxu0 %v1448
        %v1871 = vpop.f32.mrf.mxu0
        %v1872 = vadd.f32 %v1170, %v1871
        %v1873 = vpop.f32.mrf.mxu0
        %v1874 = vadd.f32 %v1174, %v1873
        %1875 = vdwg.mxu0
        %1876 = vmatprep.subr.mxu0 0.0
        %1877 = vmatpush1.msra.mxu0 0.0
        %1878 = vmatprep.subr.mxu0 0.0
        %1879 = vmatpush1.msra.mxu0 0.0
        %1880 = vmatprep.subr.mxu0 0.0
        %1881 = vmatpush1.msra.mxu0 0.0
        %1882 = vmatprep.subr.mxu0 0.0
        %1883 = vmatpush1.msra.mxu0 0.0
        %1884 = vmatprep.subr.mxu0 0.0
        %1885 = vmatpush1.msra.mxu0 0.0
        %1886 = vmatprep.subr.mxu0 0.0
        %1887 = vmatpush1.msra.mxu0 0.0
        %1888 = vmatprep.subr.mxu0 0.0
        %1889 = vmatpush1.msra.mxu0 0.0
        %1890 = vmatprep.subr.mxu0 0.0
        %1891 = vmatpush1.msra.mxu0 0.0
        %1892 = vmatprep.subr.mxu0 0.0
        %1893 = vmatpush1.msra.mxu0 0.0
        %1894 = vmatprep.subr.mxu0 0.0
        %1895 = vmatpush1.msra.mxu0 0.0
        %1896 = vmatprep.subr.mxu0 0.0
        %1897 = vmatpush1.msra.mxu0 0.0
        %1898 = vmatprep.subr.mxu0 0.0
        %1899 = vmatpush1.msra.mxu0 0.0
        %1900 = vmatprep.subr.mxu0 %v1060
        %1901 = vmatpush1.msra.mxu0 %v1059
        %1902 = vmatprep.subr.mxu0 %v996
        %1903 = vmatpush1.msra.mxu0 %v995
        %1904 = vmatprep.subr.mxu0 %v932
        %1905 = vmatpush1.msra.mxu0 %v931
        %1906 = vmatprep.subr.mxu0 %v868
        %1907 = vmatpush1.msra.mxu0 %v867
        %1908 = vmatprep.subr.mxu0 0.0
        %1909 = vmatpush2.msra.mxu0 0.0
        %1910 = vmatprep.subr.mxu0 0.0
        %1911 = vmatpush2.msra.mxu0 0.0
        %1912 = vmatprep.subr.mxu0 0.0
        %1913 = vmatpush2.msra.mxu0 0.0
        %1914 = vmatprep.subr.mxu0 0.0
        %1915 = vmatpush2.msra.mxu0 0.0
        %1916 = vmatprep.subr.mxu0 0.0
        %1917 = vmatpush2.msra.mxu0 0.0
        %1918 = vmatprep.subr.mxu0 0.0
        %1919 = vmatpush2.msra.mxu0 0.0
        %1920 = vmatprep.subr.mxu0 0.0
        %1921 = vmatpush2.msra.mxu0 0.0
        %1922 = vmatprep.subr.mxu0 0.0
        %1923 = vmatpush2.msra.mxu0 0.0
        %1924 = vmatprep.subr.mxu0 0.0
        %1925 = vmatpush2.msra.mxu0 0.0
        %1926 = vmatprep.subr.mxu0 0.0
        %1927 = vmatpush2.msra.mxu0 0.0
        %1928 = vmatprep.subr.mxu0 0.0
        %1929 = vmatpush2.msra.mxu0 0.0
        %1930 = vmatprep.subr.mxu0 0.0
        %1931 = vmatpush2.msra.mxu0 0.0
        %1932 = vmatprep.subr.mxu0 0.0
        %1933 = vmatpush2.msra.mxu0 0.0
        %1934 = vmatprep.subr.mxu0 0.0
        %1935 = vmatpush2.msra.mxu0 0.0
        %1936 = vmatprep.subr.mxu0 0.0
        %1937 = vmatpush2.msra.mxu0 0.0
        %1938 = vmatprep.subr.mxu0 0.0
        %1939 = vmatpush2.msra.mxu0 0.0
        %1940 = vmatprep.mubr.f32.mxu0 0.0
        %1941 = vmatmul.mubr.f32.gmra.mxu0 %v1448
        %v1942 = vpop.f32.mrf.mxu0
        %v1943 = vadd.f32 %v1178, %v1942
        %v1944 = vpop.f32.mrf.mxu0
        %v1945 = vadd.f32 %v1182, %v1944
        %1946 = vdwg.mxu0
        %1947 = vmatprep.subr.mxu0 0.0
        %1948 = vmatpush1.msra.mxu0 0.0
        %1949 = vmatprep.subr.mxu0 0.0
        %1950 = vmatpush1.msra.mxu0 0.0
        %1951 = vmatprep.subr.mxu0 0.0
        %1952 = vmatpush1.msra.mxu0 0.0
        %1953 = vmatprep.subr.mxu0 0.0
        %1954 = vmatpush1.msra.mxu0 0.0
        %1955 = vmatprep.subr.mxu0 0.0
        %1956 = vmatpush1.msra.mxu0 0.0
        %1957 = vmatprep.subr.mxu0 0.0
        %1958 = vmatpush1.msra.mxu0 0.0
        %1959 = vmatprep.subr.mxu0 0.0
        %1960 = vmatpush1.msra.mxu0 0.0
        %1961 = vmatprep.subr.mxu0 0.0
        %1962 = vmatpush1.msra.mxu0 0.0
        %1963 = vmatprep.subr.mxu0 0.0
        %1964 = vmatpush1.msra.mxu0 0.0
        %1965 = vmatprep.subr.mxu0 0.0
        %1966 = vmatpush1.msra.mxu0 0.0
        %1967 = vmatprep.subr.mxu0 0.0
        %1968 = vmatpush1.msra.mxu0 0.0
        %1969 = vmatprep.subr.mxu0 0.0
        %1970 = vmatpush1.msra.mxu0 0.0
        %1971 = vmatprep.subr.mxu0 %v1062
        %1972 = vmatpush1.msra.mxu0 %v1061
        %1973 = vmatprep.subr.mxu0 %v998
        %1974 = vmatpush1.msra.mxu0 %v997
        %1975 = vmatprep.subr.mxu0 %v934
        %1976 = vmatpush1.msra.mxu0 %v933
        %1977 = vmatprep.subr.mxu0 %v870
        %1978 = vmatpush1.msra.mxu0 %v869
        %1979 = vmatprep.subr.mxu0 0.0
        %1980 = vmatpush2.msra.mxu0 0.0
        %1981 = vmatprep.subr.mxu0 0.0
        %1982 = vmatpush2.msra.mxu0 0.0
        %1983 = vmatprep.subr.mxu0 0.0
        %1984 = vmatpush2.msra.mxu0 0.0
        %1985 = vmatprep.subr.mxu0 0.0
        %1986 = vmatpush2.msra.mxu0 0.0
        %1987 = vmatprep.subr.mxu0 0.0
        %1988 = vmatpush2.msra.mxu0 0.0
        %1989 = vmatprep.subr.mxu0 0.0
        %1990 = vmatpush2.msra.mxu0 0.0
        %1991 = vmatprep.subr.mxu0 0.0
        %1992 = vmatpush2.msra.mxu0 0.0
        %1993 = vmatprep.subr.mxu0 0.0
        %1994 = vmatpush2.msra.mxu0 0.0
        %1995 = vmatprep.subr.mxu0 0.0
        %1996 = vmatpush2.msra.mxu0 0.0
        %1997 = vmatprep.subr.mxu0 0.0
        %1998 = vmatpush2.msra.mxu0 0.0
        %1999 = vmatprep.subr.mxu0 0.0
        %2000 = vmatpush2.msra.mxu0 0.0
        %2001 = vmatprep.subr.mxu0 0.0
        %2002 = vmatpush2.msra.mxu0 0.0
        %2003 = vmatprep.subr.mxu0 0.0
        %2004 = vmatpush2.msra.mxu0 0.0
        %2005 = vmatprep.subr.mxu0 0.0
        %2006 = vmatpush2.msra.mxu0 0.0
        %2007 = vmatprep.subr.mxu0 0.0
        %2008 = vmatpush2.msra.mxu0 0.0
        %2009 = vmatprep.subr.mxu0 0.0
        %2010 = vmatpush2.msra.mxu0 0.0
        %2011 = vmatprep.mubr.f32.mxu0 0.0
        %2012 = vmatmul.mubr.f32.gmra.mxu0 %v1448
        %v2013 = vpop.f32.mrf.mxu0
        %v2014 = vadd.f32 %v1186, %v2013
        %v2015 = vpop.f32.mrf.mxu0
        %v2016 = vadd.f32 %v1190, %v2015
        %2017 = vdwg.mxu0
        %2018 = vmatprep.subr.mxu0 0.0
        %2019 = vmatpush1.msra.mxu0 0.0
        %2020 = vmatprep.subr.mxu0 0.0
        %2021 = vmatpush1.msra.mxu0 0.0
        %2022 = vmatprep.subr.mxu0 0.0
        %2023 = vmatpush1.msra.mxu0 0.0
        %2024 = vmatprep.subr.mxu0 0.0
        %2025 = vmatpush1.msra.mxu0 0.0
        %2026 = vmatprep.subr.mxu0 0.0
        %2027 = vmatpush1.msra.mxu0 0.0
        %2028 = vmatprep.subr.mxu0 0.0
        %2029 = vmatpush1.msra.mxu0 0.0
        %2030 = vmatprep.subr.mxu0 0.0
        %2031 = vmatpush1.msra.mxu0 0.0
        %2032 = vmatprep.subr.mxu0 0.0
        %2033 = vmatpush1.msra.mxu0 0.0
        %2034 = vmatprep.subr.mxu0 0.0
        %2035 = vmatpush1.msra.mxu0 0.0
        %2036 = vmatprep.subr.mxu0 0.0
        %2037 = vmatpush1.msra.mxu0 0.0
        %2038 = vmatprep.subr.mxu0 0.0
        %2039 = vmatpush1.msra.mxu0 0.0
        %2040 = vmatprep.subr.mxu0 0.0
        %2041 = vmatpush1.msra.mxu0 0.0
        %2042 = vmatprep.subr.mxu0 %v1064
        %2043 = vmatpush1.msra.mxu0 %v1063
        %2044 = vmatprep.subr.mxu0 %v1000
        %2045 = vmatpush1.msra.mxu0 %v999
        %2046 = vmatprep.subr.mxu0 %v936
        %2047 = vmatpush1.msra.mxu0 %v935
        %2048 = vmatprep.subr.mxu0 %v872
        %2049 = vmatpush1.msra.mxu0 %v871
        %2050 = vmatprep.subr.mxu0 0.0
        %2051 = vmatpush2.msra.mxu0 0.0
        %2052 = vmatprep.subr.mxu0 0.0
        %2053 = vmatpush2.msra.mxu0 0.0
        %2054 = vmatprep.subr.mxu0 0.0
        %2055 = vmatpush2.msra.mxu0 0.0
        %2056 = vmatprep.subr.mxu0 0.0
        %2057 = vmatpush2.msra.mxu0 0.0
        %2058 = vmatprep.subr.mxu0 0.0
        %2059 = vmatpush2.msra.mxu0 0.0
        %2060 = vmatprep.subr.mxu0 0.0
        %2061 = vmatpush2.msra.mxu0 0.0
        %2062 = vmatprep.subr.mxu0 0.0
        %2063 = vmatpush2.msra.mxu0 0.0
        %2064 = vmatprep.subr.mxu0 0.0
        %2065 = vmatpush2.msra.mxu0 0.0
        %2066 = vmatprep.subr.mxu0 0.0
        %2067 = vmatpush2.msra.mxu0 0.0
        %2068 = vmatprep.subr.mxu0 0.0
        %2069 = vmatpush2.msra.mxu0 0.0
        %2070 = vmatprep.subr.mxu0 0.0
        %2071 = vmatpush2.msra.mxu0 0.0
        %2072 = vmatprep.subr.mxu0 0.0
        %2073 = vmatpush2.msra.mxu0 0.0
        %2074 = vmatprep.subr.mxu0 0.0
        %2075 = vmatpush2.msra.mxu0 0.0
        %2076 = vmatprep.subr.mxu0 0.0
        %2077 = vmatpush2.msra.mxu0 0.0
        %2078 = vmatprep.subr.mxu0 0.0
        %2079 = vmatpush2.msra.mxu0 0.0
        %2080 = vmatprep.subr.mxu0 0.0
        %2081 = vmatpush2.msra.mxu0 0.0
        %2082 = vmatprep.mubr.f32.mxu0 0.0
        %2083 = vmatmul.mubr.f32.gmra.mxu0 %v1448
        %v2084 = vpop.f32.mrf.mxu0
        %v2085 = vadd.f32 %v1194, %v2084
        %v2086 = vpop.f32.mrf.mxu0
        %v2087 = vadd.f32 %v1198, %v2086
        %2088 = vdwg.mxu0
        %2089 = vmatprep.subr.mxu0 0.0
        %2090 = vmatpush1.msra.mxu0 0.0
        %2091 = vmatprep.subr.mxu0 0.0
        %2092 = vmatpush1.msra.mxu0 0.0
        %2093 = vmatprep.subr.mxu0 0.0
        %2094 = vmatpush1.msra.mxu0 0.0
        %2095 = vmatprep.subr.mxu0 0.0
        %2096 = vmatpush1.msra.mxu0 0.0
        %2097 = vmatprep.subr.mxu0 0.0
        %2098 = vmatpush1.msra.mxu0 0.0
        %2099 = vmatprep.subr.mxu0 0.0
        %2100 = vmatpush1.msra.mxu0 0.0
        %2101 = vmatprep.subr.mxu0 0.0
        %2102 = vmatpush1.msra.mxu0 0.0
        %2103 = vmatprep.subr.mxu0 0.0
        %2104 = vmatpush1.msra.mxu0 0.0
        %2105 = vmatprep.subr.mxu0 0.0
        %2106 = vmatpush1.msra.mxu0 0.0
        %2107 = vmatprep.subr.mxu0 0.0
        %2108 = vmatpush1.msra.mxu0 0.0
        %2109 = vmatprep.subr.mxu0 0.0
        %2110 = vmatpush1.msra.mxu0 0.0
        %2111 = vmatprep.subr.mxu0 0.0
        %2112 = vmatpush1.msra.mxu0 0.0
        %2113 = vmatprep.subr.mxu0 %v1066
        %2114 = vmatpush1.msra.mxu0 %v1065
        %2115 = vmatprep.subr.mxu0 %v1002
        %2116 = vmatpush1.msra.mxu0 %v1001
        %2117 = vmatprep.subr.mxu0 %v938
        %2118 = vmatpush1.msra.mxu0 %v937
        %2119 = vmatprep.subr.mxu0 %v874
        %2120 = vmatpush1.msra.mxu0 %v873
        %2121 = vmatprep.subr.mxu0 0.0
        %2122 = vmatpush2.msra.mxu0 0.0
        %2123 = vmatprep.subr.mxu0 0.0
        %2124 = vmatpush2.msra.mxu0 0.0
        %2125 = vmatprep.subr.mxu0 0.0
        %2126 = vmatpush2.msra.mxu0 0.0
        %2127 = vmatprep.subr.mxu0 0.0
        %2128 = vmatpush2.msra.mxu0 0.0
        %2129 = vmatprep.subr.mxu0 0.0
        %2130 = vmatpush2.msra.mxu0 0.0
        %2131 = vmatprep.subr.mxu0 0.0
        %2132 = vmatpush2.msra.mxu0 0.0
        %2133 = vmatprep.subr.mxu0 0.0
        %2134 = vmatpush2.msra.mxu0 0.0
        %2135 = vmatprep.subr.mxu0 0.0
        %2136 = vmatpush2.msra.mxu0 0.0
        %2137 = vmatprep.subr.mxu0 0.0
        %2138 = vmatpush2.msra.mxu0 0.0
        %2139 = vmatprep.subr.mxu0 0.0
        %2140 = vmatpush2.msra.mxu0 0.0
        %2141 = vmatprep.subr.mxu0 0.0
        %2142 = vmatpush2.msra.mxu0 0.0
        %2143 = vmatprep.subr.mxu0 0.0
        %2144 = vmatpush2.msra.mxu0 0.0
        %2145 = vmatprep.subr.mxu0 0.0
        %2146 = vmatpush2.msra.mxu0 0.0
        %2147 = vmatprep.subr.mxu0 0.0
        %2148 = vmatpush2.msra.mxu0 0.0
        %2149 = vmatprep.subr.mxu0 0.0
        %2150 = vmatpush2.msra.mxu0 0.0
        %2151 = vmatprep.subr.mxu0 0.0
        %2152 = vmatpush2.msra.mxu0 0.0
        %2153 = vmatprep.mubr.f32.mxu0 0.0
        %2154 = vmatmul.mubr.f32.gmra.mxu0 %v1448
        %v2155 = vpop.f32.mrf.mxu0
        %v2156 = vadd.f32 %v1202, %v2155
        %v2157 = vpop.f32.mrf.mxu0
        %v2158 = vadd.f32 %v1206, %v2157
        %2159 = vdwg.mxu0
        %2160 = vmatprep.subr.mxu0 0.0
        %2161 = vmatpush1.msra.mxu0 0.0
        %2162 = vmatprep.subr.mxu0 0.0
        %2163 = vmatpush1.msra.mxu0 0.0
        %2164 = vmatprep.subr.mxu0 0.0
        %2165 = vmatpush1.msra.mxu0 0.0
        %2166 = vmatprep.subr.mxu0 0.0
        %2167 = vmatpush1.msra.mxu0 0.0
        %2168 = vmatprep.subr.mxu0 0.0
        %2169 = vmatpush1.msra.mxu0 0.0
        %2170 = vmatprep.subr.mxu0 0.0
        %2171 = vmatpush1.msra.mxu0 0.0
        %2172 = vmatprep.subr.mxu0 0.0
        %2173 = vmatpush1.msra.mxu0 0.0
        %2174 = vmatprep.subr.mxu0 0.0
        %2175 = vmatpush1.msra.mxu0 0.0
        %2176 = vmatprep.subr.mxu0 0.0
        %2177 = vmatpush1.msra.mxu0 0.0
        %2178 = vmatprep.subr.mxu0 0.0
        %2179 = vmatpush1.msra.mxu0 0.0
        %2180 = vmatprep.subr.mxu0 0.0
        %2181 = vmatpush1.msra.mxu0 0.0
        %2182 = vmatprep.subr.mxu0 0.0
        %2183 = vmatpush1.msra.mxu0 0.0
        %2184 = vmatprep.subr.mxu0 %v1068
        %2185 = vmatpush1.msra.mxu0 %v1067
        %2186 = vmatprep.subr.mxu0 %v1004
        %2187 = vmatpush1.msra.mxu0 %v1003
        %2188 = vmatprep.subr.mxu0 %v940
        %2189 = vmatpush1.msra.mxu0 %v939
        %2190 = vmatprep.subr.mxu0 %v876
        %2191 = vmatpush1.msra.mxu0 %v875
        %2192 = vmatprep.subr.mxu0 0.0
        %2193 = vmatpush2.msra.mxu0 0.0
        %2194 = vmatprep.subr.mxu0 0.0
        %2195 = vmatpush2.msra.mxu0 0.0
        %2196 = vmatprep.subr.mxu0 0.0
        %2197 = vmatpush2.msra.mxu0 0.0
        %2198 = vmatprep.subr.mxu0 0.0
        %2199 = vmatpush2.msra.mxu0 0.0
        %2200 = vmatprep.subr.mxu0 0.0
        %2201 = vmatpush2.msra.mxu0 0.0
        %2202 = vmatprep.subr.mxu0 0.0
        %2203 = vmatpush2.msra.mxu0 0.0
        %2204 = vmatprep.subr.mxu0 0.0
        %2205 = vmatpush2.msra.mxu0 0.0
        %2206 = vmatprep.subr.mxu0 0.0
        %2207 = vmatpush2.msra.mxu0 0.0
        %2208 = vmatprep.subr.mxu0 0.0
        %2209 = vmatpush2.msra.mxu0 0.0
        %2210 = vmatprep.subr.mxu0 0.0
        %2211 = vmatpush2.msra.mxu0 0.0
        %2212 = vmatprep.subr.mxu0 0.0
        %2213 = vmatpush2.msra.mxu0 0.0
        %2214 = vmatprep.subr.mxu0 0.0
        %2215 = vmatpush2.msra.mxu0 0.0
        %2216 = vmatprep.subr.mxu0 0.0
        %2217 = vmatpush2.msra.mxu0 0.0
        %2218 = vmatprep.subr.mxu0 0.0
        %2219 = vmatpush2.msra.mxu0 0.0
        %2220 = vmatprep.subr.mxu0 0.0
        %2221 = vmatpush2.msra.mxu0 0.0
        %2222 = vmatprep.subr.mxu0 0.0
        %2223 = vmatpush2.msra.mxu0 0.0
        %2224 = vmatprep.mubr.f32.mxu0 0.0
        %2225 = vmatmul.mubr.f32.gmra.mxu0 %v1448
        %v2226 = vpop.f32.mrf.mxu0
        %v2227 = vadd.f32 %v1210, %v2226
        %v2228 = vpop.f32.mrf.mxu0
        %v2229 = vadd.f32 %v1214, %v2228
        %2230 = vdwg.mxu0
        %2231 = vmatprep.subr.mxu0 0.0
        %2232 = vmatpush1.msra.mxu0 0.0
        %2233 = vmatprep.subr.mxu0 0.0
        %2234 = vmatpush1.msra.mxu0 0.0
        %2235 = vmatprep.subr.mxu0 0.0
        %2236 = vmatpush1.msra.mxu0 0.0
        %2237 = vmatprep.subr.mxu0 0.0
        %2238 = vmatpush1.msra.mxu0 0.0
        %2239 = vmatprep.subr.mxu0 0.0
        %2240 = vmatpush1.msra.mxu0 0.0
        %2241 = vmatprep.subr.mxu0 0.0
        %2242 = vmatpush1.msra.mxu0 0.0
        %2243 = vmatprep.subr.mxu0 0.0
        %2244 = vmatpush1.msra.mxu0 0.0
        %2245 = vmatprep.subr.mxu0 0.0
        %2246 = vmatpush1.msra.mxu0 0.0
        %2247 = vmatprep.subr.mxu0 0.0
        %2248 = vmatpush1.msra.mxu0 0.0
        %2249 = vmatprep.subr.mxu0 0.0
        %2250 = vmatpush1.msra.mxu0 0.0
        %2251 = vmatprep.subr.mxu0 0.0
        %2252 = vmatpush1.msra.mxu0 0.0
        %2253 = vmatprep.subr.mxu0 0.0
        %2254 = vmatpush1.msra.mxu0 0.0
        %2255 = vmatprep.subr.mxu0 %v1070
        %2256 = vmatpush1.msra.mxu0 %v1069
        %2257 = vmatprep.subr.mxu0 %v1006
        %2258 = vmatpush1.msra.mxu0 %v1005
        %2259 = vmatprep.subr.mxu0 %v942
        %2260 = vmatpush1.msra.mxu0 %v941
        %2261 = vmatprep.subr.mxu0 %v878
        %2262 = vmatpush1.msra.mxu0 %v877
        %2263 = vmatprep.subr.mxu0 0.0
        %2264 = vmatpush2.msra.mxu0 0.0
        %2265 = vmatprep.subr.mxu0 0.0
        %2266 = vmatpush2.msra.mxu0 0.0
        %2267 = vmatprep.subr.mxu0 0.0
        %2268 = vmatpush2.msra.mxu0 0.0
        %2269 = vmatprep.subr.mxu0 0.0
        %2270 = vmatpush2.msra.mxu0 0.0
        %2271 = vmatprep.subr.mxu0 0.0
        %2272 = vmatpush2.msra.mxu0 0.0
        %2273 = vmatprep.subr.mxu0 0.0
        %2274 = vmatpush2.msra.mxu0 0.0
        %2275 = vmatprep.subr.mxu0 0.0
        %2276 = vmatpush2.msra.mxu0 0.0
        %2277 = vmatprep.subr.mxu0 0.0
        %2278 = vmatpush2.msra.mxu0 0.0
        %2279 = vmatprep.subr.mxu0 0.0
        %2280 = vmatpush2.msra.mxu0 0.0
        %2281 = vmatprep.subr.mxu0 0.0
        %2282 = vmatpush2.msra.mxu0 0.0
        %2283 = vmatprep.subr.mxu0 0.0
        %2284 = vmatpush2.msra.mxu0 0.0
        %2285 = vmatprep.subr.mxu0 0.0
        %2286 = vmatpush2.msra.mxu0 0.0
        %2287 = vmatprep.subr.mxu0 0.0
        %2288 = vmatpush2.msra.mxu0 0.0
        %2289 = vmatprep.subr.mxu0 0.0
        %2290 = vmatpush2.msra.mxu0 0.0
        %2291 = vmatprep.subr.mxu0 0.0
        %2292 = vmatpush2.msra.mxu0 0.0
        %2293 = vmatprep.subr.mxu0 0.0
        %2294 = vmatpush2.msra.mxu0 0.0
        %2295 = vmatprep.mubr.f32.mxu0 0.0
        %2296 = vmatmul.mubr.f32.gmra.mxu0 %v1448
        %v2297 = vpop.f32.mrf.mxu0
        %v2298 = vadd.f32 %v1218, %v2297
        %v2299 = vpop.f32.mrf.mxu0
        %v2300 = vadd.f32 %v1222, %v2299
        %2301 = vdwg.mxu0
        %2302 = vmatprep.subr.mxu0 0.0
        %2303 = vmatpush1.msra.mxu0 0.0
        %2304 = vmatprep.subr.mxu0 0.0
        %2305 = vmatpush1.msra.mxu0 0.0
        %2306 = vmatprep.subr.mxu0 0.0
        %2307 = vmatpush1.msra.mxu0 0.0
        %2308 = vmatprep.subr.mxu0 0.0
        %2309 = vmatpush1.msra.mxu0 0.0
        %2310 = vmatprep.subr.mxu0 0.0
        %2311 = vmatpush1.msra.mxu0 0.0
        %2312 = vmatprep.subr.mxu0 0.0
        %2313 = vmatpush1.msra.mxu0 0.0
        %2314 = vmatprep.subr.mxu0 0.0
        %2315 = vmatpush1.msra.mxu0 0.0
        %2316 = vmatprep.subr.mxu0 0.0
        %2317 = vmatpush1.msra.mxu0 0.0
        %2318 = vmatprep.subr.mxu0 0.0
        %2319 = vmatpush1.msra.mxu0 0.0
        %2320 = vmatprep.subr.mxu0 0.0
        %2321 = vmatpush1.msra.mxu0 0.0
        %2322 = vmatprep.subr.mxu0 0.0
        %2323 = vmatpush1.msra.mxu0 0.0
        %2324 = vmatprep.subr.mxu0 0.0
        %2325 = vmatpush1.msra.mxu0 0.0
        %2326 = vmatprep.subr.mxu0 %v1072
        %2327 = vmatpush1.msra.mxu0 %v1071
        %2328 = vmatprep.subr.mxu0 %v1008
        %2329 = vmatpush1.msra.mxu0 %v1007
        %2330 = vmatprep.subr.mxu0 %v944
        %2331 = vmatpush1.msra.mxu0 %v943
        %2332 = vmatprep.subr.mxu0 %v880
        %2333 = vmatpush1.msra.mxu0 %v879
        %2334 = vmatprep.subr.mxu0 0.0
        %2335 = vmatpush2.msra.mxu0 0.0
        %2336 = vmatprep.subr.mxu0 0.0
        %2337 = vmatpush2.msra.mxu0 0.0
        %2338 = vmatprep.subr.mxu0 0.0
        %2339 = vmatpush2.msra.mxu0 0.0
        %2340 = vmatprep.subr.mxu0 0.0
        %2341 = vmatpush2.msra.mxu0 0.0
        %2342 = vmatprep.subr.mxu0 0.0
        %2343 = vmatpush2.msra.mxu0 0.0
        %2344 = vmatprep.subr.mxu0 0.0
        %2345 = vmatpush2.msra.mxu0 0.0
        %2346 = vmatprep.subr.mxu0 0.0
        %2347 = vmatpush2.msra.mxu0 0.0
        %2348 = vmatprep.subr.mxu0 0.0
        %2349 = vmatpush2.msra.mxu0 0.0
        %2350 = vmatprep.subr.mxu0 0.0
        %2351 = vmatpush2.msra.mxu0 0.0
        %2352 = vmatprep.subr.mxu0 0.0
        %2353 = vmatpush2.msra.mxu0 0.0
        %2354 = vmatprep.subr.mxu0 0.0
        %2355 = vmatpush2.msra.mxu0 0.0
        %2356 = vmatprep.subr.mxu0 0.0
        %2357 = vmatpush2.msra.mxu0 0.0
        %2358 = vmatprep.subr.mxu0 0.0
        %2359 = vmatpush2.msra.mxu0 0.0
        %2360 = vmatprep.subr.mxu0 0.0
        %2361 = vmatpush2.msra.mxu0 0.0
        %2362 = vmatprep.subr.mxu0 0.0
        %2363 = vmatpush2.msra.mxu0 0.0
        %2364 = vmatprep.subr.mxu0 0.0
        %2365 = vmatpush2.msra.mxu0 0.0
        %2366 = vmatprep.mubr.f32.mxu0 0.0
        %2367 = vmatmul.mubr.f32.gmra.mxu0 %v1448
        %v2368 = vpop.f32.mrf.mxu0
        %v2369 = vadd.f32 %v1226, %v2368
        %v2370 = vpop.f32.mrf.mxu0
        %v2371 = vadd.f32 %v1230, %v2370
        %2372 = vdwg.mxu0
        %2373 = vmatprep.subr.mxu0 0.0
        %2374 = vmatpush1.msra.mxu0 0.0
        %2375 = vmatprep.subr.mxu0 0.0
        %2376 = vmatpush1.msra.mxu0 0.0
        %2377 = vmatprep.subr.mxu0 0.0
        %2378 = vmatpush1.msra.mxu0 0.0
        %2379 = vmatprep.subr.mxu0 0.0
        %2380 = vmatpush1.msra.mxu0 0.0
        %2381 = vmatprep.subr.mxu0 0.0
        %2382 = vmatpush1.msra.mxu0 0.0
        %2383 = vmatprep.subr.mxu0 0.0
        %2384 = vmatpush1.msra.mxu0 0.0
        %2385 = vmatprep.subr.mxu0 0.0
        %2386 = vmatpush1.msra.mxu0 0.0
        %2387 = vmatprep.subr.mxu0 0.0
        %2388 = vmatpush1.msra.mxu0 0.0
        %2389 = vmatprep.subr.mxu0 0.0
        %2390 = vmatpush1.msra.mxu0 0.0
        %2391 = vmatprep.subr.mxu0 0.0
        %2392 = vmatpush1.msra.mxu0 0.0
        %2393 = vmatprep.subr.mxu0 0.0
        %2394 = vmatpush1.msra.mxu0 0.0
        %2395 = vmatprep.subr.mxu0 0.0
        %2396 = vmatpush1.msra.mxu0 0.0
        %2397 = vmatprep.subr.mxu0 %v1074
        %2398 = vmatpush1.msra.mxu0 %v1073
        %2399 = vmatprep.subr.mxu0 %v1010
        %2400 = vmatpush1.msra.mxu0 %v1009
        %2401 = vmatprep.subr.mxu0 %v946
        %2402 = vmatpush1.msra.mxu0 %v945
        %2403 = vmatprep.subr.mxu0 %v882
        %2404 = vmatpush1.msra.mxu0 %v881
        %2405 = vmatprep.subr.mxu0 0.0
        %2406 = vmatpush2.msra.mxu0 0.0
        %2407 = vmatprep.subr.mxu0 0.0
        %2408 = vmatpush2.msra.mxu0 0.0
        %2409 = vmatprep.subr.mxu0 0.0
        %2410 = vmatpush2.msra.mxu0 0.0
        %2411 = vmatprep.subr.mxu0 0.0
        %2412 = vmatpush2.msra.mxu0 0.0
        %2413 = vmatprep.subr.mxu0 0.0
        %2414 = vmatpush2.msra.mxu0 0.0
        %2415 = vmatprep.subr.mxu0 0.0
        %2416 = vmatpush2.msra.mxu0 0.0
        %2417 = vmatprep.subr.mxu0 0.0
        %2418 = vmatpush2.msra.mxu0 0.0
        %2419 = vmatprep.subr.mxu0 0.0
        %2420 = vmatpush2.msra.mxu0 0.0
        %2421 = vmatprep.subr.mxu0 0.0
        %2422 = vmatpush2.msra.mxu0 0.0
        %2423 = vmatprep.subr.mxu0 0.0
        %2424 = vmatpush2.msra.mxu0 0.0
        %2425 = vmatprep.subr.mxu0 0.0
        %2426 = vmatpush2.msra.mxu0 0.0
        %2427 = vmatprep.subr.mxu0 0.0
        %2428 = vmatpush2.msra.mxu0 0.0
        %2429 = vmatprep.subr.mxu0 0.0
        %2430 = vmatpush2.msra.mxu0 0.0
        %2431 = vmatprep.subr.mxu0 0.0
        %2432 = vmatpush2.msra.mxu0 0.0
        %2433 = vmatprep.subr.mxu0 0.0
        %2434 = vmatpush2.msra.mxu0 0.0
        %2435 = vmatprep.subr.mxu0 0.0
        %2436 = vmatpush2.msra.mxu0 0.0
        %2437 = vmatprep.mubr.f32.mxu0 0.0
        %2438 = vmatmul.mubr.f32.gmra.mxu0 %v1448
        %v2439 = vpop.f32.mrf.mxu0
        %v2440 = vadd.f32 %v1234, %v2439
        %v2441 = vpop.f32.mrf.mxu0
        %v2442 = vadd.f32 %v1238, %v2441
        %2443 = vdwg.mxu0
        %2444 = vmatprep.subr.mxu0 0.0
        %2445 = vmatpush1.msra.mxu0 0.0
        %2446 = vmatprep.subr.mxu0 0.0
        %2447 = vmatpush1.msra.mxu0 0.0
        %2448 = vmatprep.subr.mxu0 0.0
        %2449 = vmatpush1.msra.mxu0 0.0
        %2450 = vmatprep.subr.mxu0 0.0
        %2451 = vmatpush1.msra.mxu0 0.0
        %2452 = vmatprep.subr.mxu0 0.0
        %2453 = vmatpush1.msra.mxu0 0.0
        %2454 = vmatprep.subr.mxu0 0.0
        %2455 = vmatpush1.msra.mxu0 0.0
        %2456 = vmatprep.subr.mxu0 0.0
        %2457 = vmatpush1.msra.mxu0 0.0
        %2458 = vmatprep.subr.mxu0 0.0
        %2459 = vmatpush1.msra.mxu0 0.0
        %2460 = vmatprep.subr.mxu0 0.0
        %2461 = vmatpush1.msra.mxu0 0.0
        %2462 = vmatprep.subr.mxu0 0.0
        %2463 = vmatpush1.msra.mxu0 0.0
        %2464 = vmatprep.subr.mxu0 0.0
        %2465 = vmatpush1.msra.mxu0 0.0
        %2466 = vmatprep.subr.mxu0 0.0
        %2467 = vmatpush1.msra.mxu0 0.0
        %2468 = vmatprep.subr.mxu0 %v1076
        %2469 = vmatpush1.msra.mxu0 %v1075
        %2470 = vmatprep.subr.mxu0 %v1012
        %2471 = vmatpush1.msra.mxu0 %v1011
        %2472 = vmatprep.subr.mxu0 %v948
        %2473 = vmatpush1.msra.mxu0 %v947
        %2474 = vmatprep.subr.mxu0 %v884
        %2475 = vmatpush1.msra.mxu0 %v883
        %2476 = vmatprep.subr.mxu0 0.0
        %2477 = vmatpush2.msra.mxu0 0.0
        %2478 = vmatprep.subr.mxu0 0.0
        %2479 = vmatpush2.msra.mxu0 0.0
        %2480 = vmatprep.subr.mxu0 0.0
        %2481 = vmatpush2.msra.mxu0 0.0
        %2482 = vmatprep.subr.mxu0 0.0
        %2483 = vmatpush2.msra.mxu0 0.0
        %2484 = vmatprep.subr.mxu0 0.0
        %2485 = vmatpush2.msra.mxu0 0.0
        %2486 = vmatprep.subr.mxu0 0.0
        %2487 = vmatpush2.msra.mxu0 0.0
        %2488 = vmatprep.subr.mxu0 0.0
        %2489 = vmatpush2.msra.mxu0 0.0
        %2490 = vmatprep.subr.mxu0 0.0
        %2491 = vmatpush2.msra.mxu0 0.0
        %2492 = vmatprep.subr.mxu0 0.0
        %2493 = vmatpush2.msra.mxu0 0.0
        %2494 = vmatprep.subr.mxu0 0.0
        %2495 = vmatpush2.msra.mxu0 0.0
        %2496 = vmatprep.subr.mxu0 0.0
        %2497 = vmatpush2.msra.mxu0 0.0
        %2498 = vmatprep.subr.mxu0 0.0
        %2499 = vmatpush2.msra.mxu0 0.0
        %2500 = vmatprep.subr.mxu0 0.0
        %2501 = vmatpush2.msra.mxu0 0.0
        %2502 = vmatprep.subr.mxu0 0.0
        %2503 = vmatpush2.msra.mxu0 0.0
        %2504 = vmatprep.subr.mxu0 0.0
        %2505 = vmatpush2.msra.mxu0 0.0
        %2506 = vmatprep.subr.mxu0 0.0
        %2507 = vmatpush2.msra.mxu0 0.0
        %2508 = vmatprep.mubr.f32.mxu0 0.0
        %2509 = vmatmul.mubr.f32.gmra.mxu0 %v1448
        %v2510 = vpop.f32.mrf.mxu0
        %v2511 = vadd.f32 %v1242, %v2510
        %v2512 = vpop.f32.mrf.mxu0
        %v2513 = vadd.f32 %v1246, %v2512
        %2514 = vdwg.mxu0
        %2515 = vmatprep.subr.mxu0 0.0
        %2516 = vmatpush1.msra.mxu0 0.0
        %2517 = vmatprep.subr.mxu0 0.0
        %2518 = vmatpush1.msra.mxu0 0.0
        %2519 = vmatprep.subr.mxu0 0.0
        %2520 = vmatpush1.msra.mxu0 0.0
        %2521 = vmatprep.subr.mxu0 0.0
        %2522 = vmatpush1.msra.mxu0 0.0
        %2523 = vmatprep.subr.mxu0 0.0
        %2524 = vmatpush1.msra.mxu0 0.0
        %2525 = vmatprep.subr.mxu0 0.0
        %2526 = vmatpush1.msra.mxu0 0.0
        %2527 = vmatprep.subr.mxu0 0.0
        %2528 = vmatpush1.msra.mxu0 0.0
        %2529 = vmatprep.subr.mxu0 0.0
        %2530 = vmatpush1.msra.mxu0 0.0
        %2531 = vmatprep.subr.mxu0 0.0
        %2532 = vmatpush1.msra.mxu0 0.0
        %2533 = vmatprep.subr.mxu0 0.0
        %2534 = vmatpush1.msra.mxu0 0.0
        %2535 = vmatprep.subr.mxu0 0.0
        %2536 = vmatpush1.msra.mxu0 0.0
        %2537 = vmatprep.subr.mxu0 0.0
        %2538 = vmatpush1.msra.mxu0 0.0
        %2539 = vmatprep.subr.mxu0 %v1078
        %2540 = vmatpush1.msra.mxu0 %v1077
        %2541 = vmatprep.subr.mxu0 %v1014
        %2542 = vmatpush1.msra.mxu0 %v1013
        %2543 = vmatprep.subr.mxu0 %v950
        %2544 = vmatpush1.msra.mxu0 %v949
        %2545 = vmatprep.subr.mxu0 %v886
        %2546 = vmatpush1.msra.mxu0 %v885
        %2547 = vmatprep.subr.mxu0 0.0
        %2548 = vmatpush2.msra.mxu0 0.0
        %2549 = vmatprep.subr.mxu0 0.0
        %2550 = vmatpush2.msra.mxu0 0.0
        %2551 = vmatprep.subr.mxu0 0.0
        %2552 = vmatpush2.msra.mxu0 0.0
        %2553 = vmatprep.subr.mxu0 0.0
        %2554 = vmatpush2.msra.mxu0 0.0
        %2555 = vmatprep.subr.mxu0 0.0
        %2556 = vmatpush2.msra.mxu0 0.0
        %2557 = vmatprep.subr.mxu0 0.0
        %2558 = vmatpush2.msra.mxu0 0.0
        %2559 = vmatprep.subr.mxu0 0.0
        %2560 = vmatpush2.msra.mxu0 0.0
        %2561 = vmatprep.subr.mxu0 0.0
        %2562 = vmatpush2.msra.mxu0 0.0
        %2563 = vmatprep.subr.mxu0 0.0
        %2564 = vmatpush2.msra.mxu0 0.0
        %2565 = vmatprep.subr.mxu0 0.0
        %2566 = vmatpush2.msra.mxu0 0.0
        %2567 = vmatprep.subr.mxu0 0.0
        %2568 = vmatpush2.msra.mxu0 0.0
        %2569 = vmatprep.subr.mxu0 0.0
        %2570 = vmatpush2.msra.mxu0 0.0
        %2571 = vmatprep.subr.mxu0 0.0
        %2572 = vmatpush2.msra.mxu0 0.0
        %2573 = vmatprep.subr.mxu0 0.0
        %2574 = vmatpush2.msra.mxu0 0.0
        %2575 = vmatprep.subr.mxu0 0.0
        %2576 = vmatpush2.msra.mxu0 0.0
        %2577 = vmatprep.subr.mxu0 0.0
        %2578 = vmatpush2.msra.mxu0 0.0
        %2579 = vmatprep.mubr.f32.mxu0 0.0
        %2580 = vmatmul.mubr.f32.gmra.mxu0 %v1448
        %v2581 = vpop.f32.mrf.mxu0
        %v2582 = vadd.f32 %v1250, %v2581
        %v2583 = vpop.f32.mrf.mxu0
        %v2584 = vadd.f32 %v1254, %v2583
        %2585 = vdwg.mxu0
        %2586 = vmatprep.subr.mxu0 0.0
        %2587 = vmatpush1.msra.mxu0 0.0
        %2588 = vmatprep.subr.mxu0 0.0
        %2589 = vmatpush1.msra.mxu0 0.0
        %2590 = vmatprep.subr.mxu0 0.0
        %2591 = vmatpush1.msra.mxu0 0.0
        %2592 = vmatprep.subr.mxu0 0.0
        %2593 = vmatpush1.msra.mxu0 0.0
        %2594 = vmatprep.subr.mxu0 0.0
        %2595 = vmatpush1.msra.mxu0 0.0
        %2596 = vmatprep.subr.mxu0 0.0
        %2597 = vmatpush1.msra.mxu0 0.0
        %2598 = vmatprep.subr.mxu0 0.0
        %2599 = vmatpush1.msra.mxu0 0.0
        %2600 = vmatprep.subr.mxu0 0.0
        %2601 = vmatpush1.msra.mxu0 0.0
        %2602 = vmatprep.subr.mxu0 0.0
        %2603 = vmatpush1.msra.mxu0 0.0
        %2604 = vmatprep.subr.mxu0 0.0
        %2605 = vmatpush1.msra.mxu0 0.0
        %2606 = vmatprep.subr.mxu0 0.0
        %2607 = vmatpush1.msra.mxu0 0.0
        %2608 = vmatprep.subr.mxu0 0.0
        %2609 = vmatpush1.msra.mxu0 0.0
        %2610 = vmatprep.subr.mxu0 %v1080
        %2611 = vmatpush1.msra.mxu0 %v1079
        %2612 = vmatprep.subr.mxu0 %v1016
        %2613 = vmatpush1.msra.mxu0 %v1015
        %2614 = vmatprep.subr.mxu0 %v952
        %2615 = vmatpush1.msra.mxu0 %v951
        %2616 = vmatprep.subr.mxu0 %v888
        %2617 = vmatpush1.msra.mxu0 %v887
        %2618 = vmatprep.subr.mxu0 0.0
        %2619 = vmatpush2.msra.mxu0 0.0
        %2620 = vmatprep.subr.mxu0 0.0
        %2621 = vmatpush2.msra.mxu0 0.0
        %2622 = vmatprep.subr.mxu0 0.0
        %2623 = vmatpush2.msra.mxu0 0.0
        %2624 = vmatprep.subr.mxu0 0.0
        %2625 = vmatpush2.msra.mxu0 0.0
        %2626 = vmatprep.subr.mxu0 0.0
        %2627 = vmatpush2.msra.mxu0 0.0
        %2628 = vmatprep.subr.mxu0 0.0
        %2629 = vmatpush2.msra.mxu0 0.0
        %2630 = vmatprep.subr.mxu0 0.0
        %2631 = vmatpush2.msra.mxu0 0.0
        %2632 = vmatprep.subr.mxu0 0.0
        %2633 = vmatpush2.msra.mxu0 0.0
        %2634 = vmatprep.subr.mxu0 0.0
        %2635 = vmatpush2.msra.mxu0 0.0
        %2636 = vmatprep.subr.mxu0 0.0
        %2637 = vmatpush2.msra.mxu0 0.0
        %2638 = vmatprep.subr.mxu0 0.0
        %2639 = vmatpush2.msra.mxu0 0.0
        %2640 = vmatprep.subr.mxu0 0.0
        %2641 = vmatpush2.msra.mxu0 0.0
        %2642 = vmatprep.subr.mxu0 0.0
        %2643 = vmatpush2.msra.mxu0 0.0
        %2644 = vmatprep.subr.mxu0 0.0
        %2645 = vmatpush2.msra.mxu0 0.0
        %2646 = vmatprep.subr.mxu0 0.0
        %2647 = vmatpush2.msra.mxu0 0.0
        %2648 = vmatprep.subr.mxu0 0.0
        %2649 = vmatpush2.msra.mxu0 0.0
        %2650 = vmatprep.mubr.f32.mxu0 0.0
        %2651 = vmatmul.mubr.f32.gmra.mxu0 %v1448
        %v2652 = vpop.f32.mrf.mxu0
        %v2653 = vadd.f32 %v1258, %v2652
        %v2654 = vpop.f32.mrf.mxu0
        %v2655 = vadd.f32 %v1262, %v2654
        %2656 = vdwg.mxu0
        %2657 = vmatprep.subr.mxu0 0.0
        %2658 = vmatpush1.msra.mxu0 0.0
        %2659 = vmatprep.subr.mxu0 0.0
        %2660 = vmatpush1.msra.mxu0 0.0
        %2661 = vmatprep.subr.mxu0 0.0
        %2662 = vmatpush1.msra.mxu0 0.0
        %2663 = vmatprep.subr.mxu0 0.0
        %2664 = vmatpush1.msra.mxu0 0.0
        %2665 = vmatprep.subr.mxu0 0.0
        %2666 = vmatpush1.msra.mxu0 0.0
        %2667 = vmatprep.subr.mxu0 0.0
        %2668 = vmatpush1.msra.mxu0 0.0
        %2669 = vmatprep.subr.mxu0 0.0
        %2670 = vmatpush1.msra.mxu0 0.0
        %2671 = vmatprep.subr.mxu0 0.0
        %2672 = vmatpush1.msra.mxu0 0.0
        %2673 = vmatprep.subr.mxu0 0.0
        %2674 = vmatpush1.msra.mxu0 0.0
        %2675 = vmatprep.subr.mxu0 0.0
        %2676 = vmatpush1.msra.mxu0 0.0
        %2677 = vmatprep.subr.mxu0 0.0
        %2678 = vmatpush1.msra.mxu0 0.0
        %2679 = vmatprep.subr.mxu0 0.0
        %2680 = vmatpush1.msra.mxu0 0.0
        %2681 = vmatprep.subr.mxu0 %v1082
        %2682 = vmatpush1.msra.mxu0 %v1081
        %2683 = vmatprep.subr.mxu0 %v1018
        %2684 = vmatpush1.msra.mxu0 %v1017
        %2685 = vmatprep.subr.mxu0 %v954
        %2686 = vmatpush1.msra.mxu0 %v953
        %2687 = vmatprep.subr.mxu0 %v890
        %2688 = vmatpush1.msra.mxu0 %v889
        %2689 = vmatprep.subr.mxu0 0.0
        %2690 = vmatpush2.msra.mxu0 0.0
        %2691 = vmatprep.subr.mxu0 0.0
        %2692 = vmatpush2.msra.mxu0 0.0
        %2693 = vmatprep.subr.mxu0 0.0
        %2694 = vmatpush2.msra.mxu0 0.0
        %2695 = vmatprep.subr.mxu0 0.0
        %2696 = vmatpush2.msra.mxu0 0.0
        %2697 = vmatprep.subr.mxu0 0.0
        %2698 = vmatpush2.msra.mxu0 0.0
        %2699 = vmatprep.subr.mxu0 0.0
        %2700 = vmatpush2.msra.mxu0 0.0
        %2701 = vmatprep.subr.mxu0 0.0
        %2702 = vmatpush2.msra.mxu0 0.0
        %2703 = vmatprep.subr.mxu0 0.0
        %2704 = vmatpush2.msra.mxu0 0.0
        %2705 = vmatprep.subr.mxu0 0.0
        %2706 = vmatpush2.msra.mxu0 0.0
        %2707 = vmatprep.subr.mxu0 0.0
        %2708 = vmatpush2.msra.mxu0 0.0
        %2709 = vmatprep.subr.mxu0 0.0
        %2710 = vmatpush2.msra.mxu0 0.0
        %2711 = vmatprep.subr.mxu0 0.0
        %2712 = vmatpush2.msra.mxu0 0.0
        %2713 = vmatprep.subr.mxu0 0.0
        %2714 = vmatpush2.msra.mxu0 0.0
        %2715 = vmatprep.subr.mxu0 0.0
        %2716 = vmatpush2.msra.mxu0 0.0
        %2717 = vmatprep.subr.mxu0 0.0
        %2718 = vmatpush2.msra.mxu0 0.0
        %2719 = vmatprep.subr.mxu0 0.0
        %2720 = vmatpush2.msra.mxu0 0.0
        %2721 = vmatprep.mubr.f32.mxu0 0.0
        %2722 = vmatmul.mubr.f32.gmra.mxu0 %v1448
        %v2723 = vpop.f32.mrf.mxu0
        %v2724 = vadd.f32 %v1266, %v2723
        %v2725 = vpop.f32.mrf.mxu0
        %v2726 = vadd.f32 %v1270, %v2725
        %2727 = vdwg.mxu0
        %2728 = vmatprep.subr.mxu0 0.0
        %2729 = vmatpush1.msra.mxu0 0.0
        %2730 = vmatprep.subr.mxu0 0.0
        %2731 = vmatpush1.msra.mxu0 0.0
        %2732 = vmatprep.subr.mxu0 0.0
        %2733 = vmatpush1.msra.mxu0 0.0
        %2734 = vmatprep.subr.mxu0 0.0
        %2735 = vmatpush1.msra.mxu0 0.0
        %2736 = vmatprep.subr.mxu0 0.0
        %2737 = vmatpush1.msra.mxu0 0.0
        %2738 = vmatprep.subr.mxu0 0.0
        %2739 = vmatpush1.msra.mxu0 0.0
        %2740 = vmatprep.subr.mxu0 0.0
        %2741 = vmatpush1.msra.mxu0 0.0
        %2742 = vmatprep.subr.mxu0 0.0
        %2743 = vmatpush1.msra.mxu0 0.0
        %2744 = vmatprep.subr.mxu0 0.0
        %2745 = vmatpush1.msra.mxu0 0.0
        %2746 = vmatprep.subr.mxu0 0.0
        %2747 = vmatpush1.msra.mxu0 0.0
        %2748 = vmatprep.subr.mxu0 0.0
        %2749 = vmatpush1.msra.mxu0 0.0
        %2750 = vmatprep.subr.mxu0 0.0
        %2751 = vmatpush1.msra.mxu0 0.0
        %2752 = vmatprep.subr.mxu0 %v1084
        %2753 = vmatpush1.msra.mxu0 %v1083
        %2754 = vmatprep.subr.mxu0 %v1020
        %2755 = vmatpush1.msra.mxu0 %v1019
        %2756 = vmatprep.subr.mxu0 %v956
        %2757 = vmatpush1.msra.mxu0 %v955
        %2758 = vmatprep.subr.mxu0 %v892
        %2759 = vmatpush1.msra.mxu0 %v891
        %2760 = vmatprep.subr.mxu0 0.0
        %2761 = vmatpush2.msra.mxu0 0.0
        %2762 = vmatprep.subr.mxu0 0.0
        %2763 = vmatpush2.msra.mxu0 0.0
        %2764 = vmatprep.subr.mxu0 0.0
        %2765 = vmatpush2.msra.mxu0 0.0
        %2766 = vmatprep.subr.mxu0 0.0
        %2767 = vmatpush2.msra.mxu0 0.0
        %2768 = vmatprep.subr.mxu0 0.0
        %2769 = vmatpush2.msra.mxu0 0.0
        %2770 = vmatprep.subr.mxu0 0.0
        %2771 = vmatpush2.msra.mxu0 0.0
        %2772 = vmatprep.subr.mxu0 0.0
        %2773 = vmatpush2.msra.mxu0 0.0
        %2774 = vmatprep.subr.mxu0 0.0
        %2775 = vmatpush2.msra.mxu0 0.0
        %2776 = vmatprep.subr.mxu0 0.0
        %2777 = vmatpush2.msra.mxu0 0.0
        %2778 = vmatprep.subr.mxu0 0.0
        %2779 = vmatpush2.msra.mxu0 0.0
        %2780 = vmatprep.subr.mxu0 0.0
        %2781 = vmatpush2.msra.mxu0 0.0
        %2782 = vmatprep.subr.mxu0 0.0
        %2783 = vmatpush2.msra.mxu0 0.0
        %2784 = vmatprep.subr.mxu0 0.0
        %2785 = vmatpush2.msra.mxu0 0.0
        %2786 = vmatprep.subr.mxu0 0.0
        %2787 = vmatpush2.msra.mxu0 0.0
        %2788 = vmatprep.subr.mxu0 0.0
        %2789 = vmatpush2.msra.mxu0 0.0
        %2790 = vmatprep.subr.mxu0 0.0
        %2791 = vmatpush2.msra.mxu0 0.0
        %2792 = vmatprep.mubr.f32.mxu0 0.0
        %2793 = vmatmul.mubr.f32.gmra.mxu0 %v1448
        %v2794 = vpop.f32.mrf.mxu0
        %v2795 = vadd.f32 %v1274, %v2794
        %v2796 = vpop.f32.mrf.mxu0
        %v2797 = vadd.f32 %v1278, %v2796
        %2798 = vdwg.mxu0
        %2799 = vmatprep.subr.mxu0 0.0
        %2800 = vmatpush1.msra.mxu0 0.0
        %2801 = vmatprep.subr.mxu0 0.0
        %2802 = vmatpush1.msra.mxu0 0.0
        %2803 = vmatprep.subr.mxu0 0.0
        %2804 = vmatpush1.msra.mxu0 0.0
        %2805 = vmatprep.subr.mxu0 0.0
        %2806 = vmatpush1.msra.mxu0 0.0
        %2807 = vmatprep.subr.mxu0 0.0
        %2808 = vmatpush1.msra.mxu0 0.0
        %2809 = vmatprep.subr.mxu0 0.0
        %2810 = vmatpush1.msra.mxu0 0.0
        %2811 = vmatprep.subr.mxu0 0.0
        %2812 = vmatpush1.msra.mxu0 0.0
        %2813 = vmatprep.subr.mxu0 0.0
        %2814 = vmatpush1.msra.mxu0 0.0
        %2815 = vmatprep.subr.mxu0 0.0
        %2816 = vmatpush1.msra.mxu0 0.0
        %2817 = vmatprep.subr.mxu0 0.0
        %2818 = vmatpush1.msra.mxu0 0.0
        %2819 = vmatprep.subr.mxu0 0.0
        %2820 = vmatpush1.msra.mxu0 0.0
        %2821 = vmatprep.subr.mxu0 0.0
        %2822 = vmatpush1.msra.mxu0 0.0
        %2823 = vmatprep.subr.mxu0 %v1086
        %2824 = vmatpush1.msra.mxu0 %v1085
        %2825 = vmatprep.subr.mxu0 %v1022
        %2826 = vmatpush1.msra.mxu0 %v1021
        %2827 = vmatprep.subr.mxu0 %v958
        %2828 = vmatpush1.msra.mxu0 %v957
        %2829 = vmatprep.subr.mxu0 %v894
        %2830 = vmatpush1.msra.mxu0 %v893
        %2831 = vmatprep.subr.mxu0 0.0
        %2832 = vmatpush2.msra.mxu0 0.0
        %2833 = vmatprep.subr.mxu0 0.0
        %2834 = vmatpush2.msra.mxu0 0.0
        %2835 = vmatprep.subr.mxu0 0.0
        %2836 = vmatpush2.msra.mxu0 0.0
        %2837 = vmatprep.subr.mxu0 0.0
        %2838 = vmatpush2.msra.mxu0 0.0
        %2839 = vmatprep.subr.mxu0 0.0
        %2840 = vmatpush2.msra.mxu0 0.0
        %2841 = vmatprep.subr.mxu0 0.0
        %2842 = vmatpush2.msra.mxu0 0.0
        %2843 = vmatprep.subr.mxu0 0.0
        %2844 = vmatpush2.msra.mxu0 0.0
        %2845 = vmatprep.subr.mxu0 0.0
        %2846 = vmatpush2.msra.mxu0 0.0
        %2847 = vmatprep.subr.mxu0 0.0
        %2848 = vmatpush2.msra.mxu0 0.0
        %2849 = vmatprep.subr.mxu0 0.0
        %2850 = vmatpush2.msra.mxu0 0.0
        %2851 = vmatprep.subr.mxu0 0.0
        %2852 = vmatpush2.msra.mxu0 0.0
        %2853 = vmatprep.subr.mxu0 0.0
        %2854 = vmatpush2.msra.mxu0 0.0
        %2855 = vmatprep.subr.mxu0 0.0
        %2856 = vmatpush2.msra.mxu0 0.0
        %2857 = vmatprep.subr.mxu0 0.0
        %2858 = vmatpush2.msra.mxu0 0.0
        %2859 = vmatprep.subr.mxu0 0.0
        %2860 = vmatpush2.msra.mxu0 0.0
        %2861 = vmatprep.subr.mxu0 0.0
        %2862 = vmatpush2.msra.mxu0 0.0
        %2863 = vmatprep.mubr.f32.mxu0 0.0
        %2864 = vmatmul.mubr.f32.gmra.mxu0 %v1448
        %v2865 = vpop.f32.mrf.mxu0
        %v2866 = vadd.f32 %v1282, %v2865
        %v2867 = vpop.f32.mrf.mxu0
        %v2868 = vadd.f32 %v1286, %v2867
        %2869 = vdwg.mxu0
        %2870 = vmatprep.subr.mxu0 0.0
        %2871 = vmatpush1.msra.mxu0 0.0
        %2872 = vmatprep.subr.mxu0 0.0
        %2873 = vmatpush1.msra.mxu0 0.0
        %2874 = vmatprep.subr.mxu0 0.0
        %2875 = vmatpush1.msra.mxu0 0.0
        %2876 = vmatprep.subr.mxu0 0.0
        %2877 = vmatpush1.msra.mxu0 0.0
        %2878 = vmatprep.subr.mxu0 0.0
        %2879 = vmatpush1.msra.mxu0 0.0
        %2880 = vmatprep.subr.mxu0 0.0
        %2881 = vmatpush1.msra.mxu0 0.0
        %2882 = vmatprep.subr.mxu0 0.0
        %2883 = vmatpush1.msra.mxu0 0.0
        %2884 = vmatprep.subr.mxu0 0.0
        %2885 = vmatpush1.msra.mxu0 0.0
        %2886 = vmatprep.subr.mxu0 0.0
        %2887 = vmatpush1.msra.mxu0 0.0
        %2888 = vmatprep.subr.mxu0 0.0
        %2889 = vmatpush1.msra.mxu0 0.0
        %2890 = vmatprep.subr.mxu0 0.0
        %2891 = vmatpush1.msra.mxu0 0.0
        %2892 = vmatprep.subr.mxu0 0.0
        %2893 = vmatpush1.msra.mxu0 0.0
        %2894 = vmatprep.subr.mxu0 %v1088
        %2895 = vmatpush1.msra.mxu0 %v1087
        %2896 = vmatprep.subr.mxu0 %v1024
        %2897 = vmatpush1.msra.mxu0 %v1023
        %2898 = vmatprep.subr.mxu0 %v960
        %2899 = vmatpush1.msra.mxu0 %v959
        %2900 = vmatprep.subr.mxu0 %v896
        %2901 = vmatpush1.msra.mxu0 %v895
        %2902 = vmatprep.subr.mxu0 0.0
        %2903 = vmatpush2.msra.mxu0 0.0
        %2904 = vmatprep.subr.mxu0 0.0
        %2905 = vmatpush2.msra.mxu0 0.0
        %2906 = vmatprep.subr.mxu0 0.0
        %2907 = vmatpush2.msra.mxu0 0.0
        %2908 = vmatprep.subr.mxu0 0.0
        %2909 = vmatpush2.msra.mxu0 0.0
        %2910 = vmatprep.subr.mxu0 0.0
        %2911 = vmatpush2.msra.mxu0 0.0
        %2912 = vmatprep.subr.mxu0 0.0
        %2913 = vmatpush2.msra.mxu0 0.0
        %2914 = vmatprep.subr.mxu0 0.0
        %2915 = vmatpush2.msra.mxu0 0.0
        %2916 = vmatprep.subr.mxu0 0.0
        %2917 = vmatpush2.msra.mxu0 0.0
        %2918 = vmatprep.subr.mxu0 0.0
        %2919 = vmatpush2.msra.mxu0 0.0
        %2920 = vmatprep.subr.mxu0 0.0
        %2921 = vmatpush2.msra.mxu0 0.0
        %2922 = vmatprep.subr.mxu0 0.0
        %2923 = vmatpush2.msra.mxu0 0.0
        %2924 = vmatprep.subr.mxu0 0.0
        %2925 = vmatpush2.msra.mxu0 0.0
        %2926 = vmatprep.subr.mxu0 0.0
        %2927 = vmatpush2.msra.mxu0 0.0
        %2928 = vmatprep.subr.mxu0 0.0
        %2929 = vmatpush2.msra.mxu0 0.0
        %2930 = vmatprep.subr.mxu0 0.0
        %2931 = vmatpush2.msra.mxu0 0.0
        %2932 = vmatprep.subr.mxu0 0.0
        %2933 = vmatpush2.msra.mxu0 0.0
        %2934 = vmatprep.mubr.f32.mxu0 0.0
        %2935 = vmatmul.mubr.f32.gmra.mxu0 %v1448
        %v2936 = vpop.f32.mrf.mxu0
        %v2937 = vadd.f32 %v1290, %v2936
        %v2938 = vpop.f32.mrf.mxu0
        %v2939 = vadd.f32 %v1294, %v2938
        %2940 = vdwg.mxu0
        %2941 = vmatprep.subr.mxu0 0.0
        %2942 = vmatpush1.msra.mxu0 0.0
        %2943 = vmatprep.subr.mxu0 0.0
        %2944 = vmatpush1.msra.mxu0 0.0
        %2945 = vmatprep.subr.mxu0 0.0
        %2946 = vmatpush1.msra.mxu0 0.0
        %2947 = vmatprep.subr.mxu0 0.0
        %2948 = vmatpush1.msra.mxu0 0.0
        %2949 = vmatprep.subr.mxu0 0.0
        %2950 = vmatpush1.msra.mxu0 0.0
        %2951 = vmatprep.subr.mxu0 0.0
        %2952 = vmatpush1.msra.mxu0 0.0
        %2953 = vmatprep.subr.mxu0 0.0
        %2954 = vmatpush1.msra.mxu0 0.0
        %2955 = vmatprep.subr.mxu0 0.0
        %2956 = vmatpush1.msra.mxu0 0.0
        %2957 = vmatprep.subr.mxu0 0.0
        %2958 = vmatpush1.msra.mxu0 0.0
        %2959 = vmatprep.subr.mxu0 0.0
        %2960 = vmatpush1.msra.mxu0 0.0
        %2961 = vmatprep.subr.mxu0 0.0
        %2962 = vmatpush1.msra.mxu0 0.0
        %2963 = vmatprep.subr.mxu0 0.0
        %2964 = vmatpush1.msra.mxu0 0.0
        %2965 = vmatprep.subr.mxu0 %v1090
        %2966 = vmatpush1.msra.mxu0 %v1089
        %2967 = vmatprep.subr.mxu0 %v1026
        %2968 = vmatpush1.msra.mxu0 %v1025
        %2969 = vmatprep.subr.mxu0 %v962
        %2970 = vmatpush1.msra.mxu0 %v961
        %2971 = vmatprep.subr.mxu0 %v898
        %2972 = vmatpush1.msra.mxu0 %v897
        %2973 = vmatprep.subr.mxu0 0.0
        %2974 = vmatpush2.msra.mxu0 0.0
        %2975 = vmatprep.subr.mxu0 0.0
        %2976 = vmatpush2.msra.mxu0 0.0
        %2977 = vmatprep.subr.mxu0 0.0
        %2978 = vmatpush2.msra.mxu0 0.0
        %2979 = vmatprep.subr.mxu0 0.0
        %2980 = vmatpush2.msra.mxu0 0.0
        %2981 = vmatprep.subr.mxu0 0.0
        %2982 = vmatpush2.msra.mxu0 0.0
        %2983 = vmatprep.subr.mxu0 0.0
        %2984 = vmatpush2.msra.mxu0 0.0
        %2985 = vmatprep.subr.mxu0 0.0
        %2986 = vmatpush2.msra.mxu0 0.0
        %2987 = vmatprep.subr.mxu0 0.0
        %2988 = vmatpush2.msra.mxu0 0.0
        %2989 = vmatprep.subr.mxu0 0.0
        %2990 = vmatpush2.msra.mxu0 0.0
        %2991 = vmatprep.subr.mxu0 0.0
        %2992 = vmatpush2.msra.mxu0 0.0
        %2993 = vmatprep.subr.mxu0 0.0
        %2994 = vmatpush2.msra.mxu0 0.0
        %2995 = vmatprep.subr.mxu0 0.0
        %2996 = vmatpush2.msra.mxu0 0.0
        %2997 = vmatprep.subr.mxu0 0.0
        %2998 = vmatpush2.msra.mxu0 0.0
        %2999 = vmatprep.subr.mxu0 0.0
        %3000 = vmatpush2.msra.mxu0 0.0
        %3001 = vmatprep.subr.mxu0 0.0
        %3002 = vmatpush2.msra.mxu0 0.0
        %3003 = vmatprep.subr.mxu0 0.0
        %3004 = vmatpush2.msra.mxu0 0.0
        %3005 = vmatprep.mubr.f32.mxu0 0.0
        %3006 = vmatmul.mubr.f32.gmra.mxu0 %v1448
        %v3007 = vpop.f32.mrf.mxu0
        %v3008 = vadd.f32 %v1298, %v3007
        %v3009 = vpop.f32.mrf.mxu0
        %v3010 = vadd.f32 %v1302, %v3009
        %3011 = vdwg.mxu0
        %3012 = vmatprep.subr.mxu0 0.0
        %3013 = vmatpush1.msra.mxu0 0.0
        %3014 = vmatprep.subr.mxu0 0.0
        %3015 = vmatpush1.msra.mxu0 0.0
        %3016 = vmatprep.subr.mxu0 0.0
        %3017 = vmatpush1.msra.mxu0 0.0
        %3018 = vmatprep.subr.mxu0 0.0
        %3019 = vmatpush1.msra.mxu0 0.0
        %3020 = vmatprep.subr.mxu0 0.0
        %3021 = vmatpush1.msra.mxu0 0.0
        %3022 = vmatprep.subr.mxu0 0.0
        %3023 = vmatpush1.msra.mxu0 0.0
        %3024 = vmatprep.subr.mxu0 0.0
        %3025 = vmatpush1.msra.mxu0 0.0
        %3026 = vmatprep.subr.mxu0 0.0
        %3027 = vmatpush1.msra.mxu0 0.0
        %3028 = vmatprep.subr.mxu0 0.0
        %3029 = vmatpush1.msra.mxu0 0.0
        %3030 = vmatprep.subr.mxu0 0.0
        %3031 = vmatpush1.msra.mxu0 0.0
        %3032 = vmatprep.subr.mxu0 0.0
        %3033 = vmatpush1.msra.mxu0 0.0
        %3034 = vmatprep.subr.mxu0 0.0
        %3035 = vmatpush1.msra.mxu0 0.0
        %3036 = vmatprep.subr.mxu0 %v1092
        %3037 = vmatpush1.msra.mxu0 %v1091
        %3038 = vmatprep.subr.mxu0 %v1028
        %3039 = vmatpush1.msra.mxu0 %v1027
        %3040 = vmatprep.subr.mxu0 %v964
        %3041 = vmatpush1.msra.mxu0 %v963
        %3042 = vmatprep.subr.mxu0 %v900
        %3043 = vmatpush1.msra.mxu0 %v899
        %3044 = vmatprep.subr.mxu0 0.0
        %3045 = vmatpush2.msra.mxu0 0.0
        %3046 = vmatprep.subr.mxu0 0.0
        %3047 = vmatpush2.msra.mxu0 0.0
        %3048 = vmatprep.subr.mxu0 0.0
        %3049 = vmatpush2.msra.mxu0 0.0
        %3050 = vmatprep.subr.mxu0 0.0
        %3051 = vmatpush2.msra.mxu0 0.0
        %3052 = vmatprep.subr.mxu0 0.0
        %3053 = vmatpush2.msra.mxu0 0.0
        %3054 = vmatprep.subr.mxu0 0.0
        %3055 = vmatpush2.msra.mxu0 0.0
        %3056 = vmatprep.subr.mxu0 0.0
        %3057 = vmatpush2.msra.mxu0 0.0
        %3058 = vmatprep.subr.mxu0 0.0
        %3059 = vmatpush2.msra.mxu0 0.0
        %3060 = vmatprep.subr.mxu0 0.0
        %3061 = vmatpush2.msra.mxu0 0.0
        %3062 = vmatprep.subr.mxu0 0.0
        %3063 = vmatpush2.msra.mxu0 0.0
        %3064 = vmatprep.subr.mxu0 0.0
        %3065 = vmatpush2.msra.mxu0 0.0
        %3066 = vmatprep.subr.mxu0 0.0
        %3067 = vmatpush2.msra.mxu0 0.0
        %3068 = vmatprep.subr.mxu0 0.0
        %3069 = vmatpush2.msra.mxu0 0.0
        %3070 = vmatprep.subr.mxu0 0.0
        %3071 = vmatpush2.msra.mxu0 0.0
        %3072 = vmatprep.subr.mxu0 0.0
        %3073 = vmatpush2.msra.mxu0 0.0
        %3074 = vmatprep.subr.mxu0 0.0
        %3075 = vmatpush2.msra.mxu0 0.0
        %3076 = vmatprep.mubr.f32.mxu0 0.0
        %3077 = vmatmul.mubr.f32.gmra.mxu0 %v1448
        %v3078 = vpop.f32.mrf.mxu0
        %v3079 = vadd.f32 %v1306, %v3078
        %v3080 = vpop.f32.mrf.mxu0
        %v3081 = vadd.f32 %v1310, %v3080
        %3082 = vdwg.mxu0
        %3083 = vmatprep.subr.mxu0 0.0
        %3084 = vmatpush1.msra.mxu0 0.0
        %3085 = vmatprep.subr.mxu0 0.0
        %3086 = vmatpush1.msra.mxu0 0.0
        %3087 = vmatprep.subr.mxu0 0.0
        %3088 = vmatpush1.msra.mxu0 0.0
        %3089 = vmatprep.subr.mxu0 0.0
        %3090 = vmatpush1.msra.mxu0 0.0
        %3091 = vmatprep.subr.mxu0 0.0
        %3092 = vmatpush1.msra.mxu0 0.0
        %3093 = vmatprep.subr.mxu0 0.0
        %3094 = vmatpush1.msra.mxu0 0.0
        %3095 = vmatprep.subr.mxu0 0.0
        %3096 = vmatpush1.msra.mxu0 0.0
        %3097 = vmatprep.subr.mxu0 0.0
        %3098 = vmatpush1.msra.mxu0 0.0
        %3099 = vmatprep.subr.mxu0 0.0
        %3100 = vmatpush1.msra.mxu0 0.0
        %3101 = vmatprep.subr.mxu0 0.0
        %3102 = vmatpush1.msra.mxu0 0.0
        %3103 = vmatprep.subr.mxu0 0.0
        %3104 = vmatpush1.msra.mxu0 0.0
        %3105 = vmatprep.subr.mxu0 0.0
        %3106 = vmatpush1.msra.mxu0 0.0
        %3107 = vmatprep.subr.mxu0 %v1094
        %3108 = vmatpush1.msra.mxu0 %v1093
        %3109 = vmatprep.subr.mxu0 %v1030
        %3110 = vmatpush1.msra.mxu0 %v1029
        %3111 = vmatprep.subr.mxu0 %v966
        %3112 = vmatpush1.msra.mxu0 %v965
        %3113 = vmatprep.subr.mxu0 %v902
        %3114 = vmatpush1.msra.mxu0 %v901
        %3115 = vmatprep.subr.mxu0 0.0
        %3116 = vmatpush2.msra.mxu0 0.0
        %3117 = vmatprep.subr.mxu0 0.0
        %3118 = vmatpush2.msra.mxu0 0.0
        %3119 = vmatprep.subr.mxu0 0.0
        %3120 = vmatpush2.msra.mxu0 0.0
        %3121 = vmatprep.subr.mxu0 0.0
        %3122 = vmatpush2.msra.mxu0 0.0
        %3123 = vmatprep.subr.mxu0 0.0
        %3124 = vmatpush2.msra.mxu0 0.0
        %3125 = vmatprep.subr.mxu0 0.0
        %3126 = vmatpush2.msra.mxu0 0.0
        %3127 = vmatprep.subr.mxu0 0.0
        %3128 = vmatpush2.msra.mxu0 0.0
        %3129 = vmatprep.subr.mxu0 0.0
        %3130 = vmatpush2.msra.mxu0 0.0
        %3131 = vmatprep.subr.mxu0 0.0
        %3132 = vmatpush2.msra.mxu0 0.0
        %3133 = vmatprep.subr.mxu0 0.0
        %3134 = vmatpush2.msra.mxu0 0.0
        %3135 = vmatprep.subr.mxu0 0.0
        %3136 = vmatpush2.msra.mxu0 0.0
        %3137 = vmatprep.subr.mxu0 0.0
        %3138 = vmatpush2.msra.mxu0 0.0
        %3139 = vmatprep.subr.mxu0 0.0
        %3140 = vmatpush2.msra.mxu0 0.0
        %3141 = vmatprep.subr.mxu0 0.0
        %3142 = vmatpush2.msra.mxu0 0.0
        %3143 = vmatprep.subr.mxu0 0.0
        %3144 = vmatpush2.msra.mxu0 0.0
        %3145 = vmatprep.subr.mxu0 0.0
        %3146 = vmatpush2.msra.mxu0 0.0
        %3147 = vmatprep.mubr.f32.mxu0 0.0
        %3148 = vmatmul.mubr.f32.gmra.mxu0 %v1448
        %v3149 = vpop.f32.mrf.mxu0
        %v3150 = vadd.f32 %v1314, %v3149
        %v3151 = vpop.f32.mrf.mxu0
        %v3152 = vadd.f32 %v1318, %v3151
        %3153 = vdwg.mxu0
        %3154 = vmatprep.subr.mxu0 0.0
        %3155 = vmatpush1.msra.mxu0 0.0
        %3156 = vmatprep.subr.mxu0 0.0
        %3157 = vmatpush1.msra.mxu0 0.0
        %3158 = vmatprep.subr.mxu0 0.0
        %3159 = vmatpush1.msra.mxu0 0.0
        %3160 = vmatprep.subr.mxu0 0.0
        %3161 = vmatpush1.msra.mxu0 0.0
        %3162 = vmatprep.subr.mxu0 0.0
        %3163 = vmatpush1.msra.mxu0 0.0
        %3164 = vmatprep.subr.mxu0 0.0
        %3165 = vmatpush1.msra.mxu0 0.0
        %3166 = vmatprep.subr.mxu0 0.0
        %3167 = vmatpush1.msra.mxu0 0.0
        %3168 = vmatprep.subr.mxu0 0.0
        %3169 = vmatpush1.msra.mxu0 0.0
        %3170 = vmatprep.subr.mxu0 0.0
        %3171 = vmatpush1.msra.mxu0 0.0
        %3172 = vmatprep.subr.mxu0 0.0
        %3173 = vmatpush1.msra.mxu0 0.0
        %3174 = vmatprep.subr.mxu0 0.0
        %3175 = vmatpush1.msra.mxu0 0.0
        %3176 = vmatprep.subr.mxu0 0.0
        %3177 = vmatpush1.msra.mxu0 0.0
        %3178 = vmatprep.subr.mxu0 %v1096
        %3179 = vmatpush1.msra.mxu0 %v1095
        %3180 = vmatprep.subr.mxu0 %v1032
        %3181 = vmatpush1.msra.mxu0 %v1031
        %3182 = vmatprep.subr.mxu0 %v968
        %3183 = vmatpush1.msra.mxu0 %v967
        %3184 = vmatprep.subr.mxu0 %v904
        %3185 = vmatpush1.msra.mxu0 %v903
        %3186 = vmatprep.subr.mxu0 0.0
        %3187 = vmatpush2.msra.mxu0 0.0
        %3188 = vmatprep.subr.mxu0 0.0
        %3189 = vmatpush2.msra.mxu0 0.0
        %3190 = vmatprep.subr.mxu0 0.0
        %3191 = vmatpush2.msra.mxu0 0.0
        %3192 = vmatprep.subr.mxu0 0.0
        %3193 = vmatpush2.msra.mxu0 0.0
        %3194 = vmatprep.subr.mxu0 0.0
        %3195 = vmatpush2.msra.mxu0 0.0
        %3196 = vmatprep.subr.mxu0 0.0
        %3197 = vmatpush2.msra.mxu0 0.0
        %3198 = vmatprep.subr.mxu0 0.0
        %3199 = vmatpush2.msra.mxu0 0.0
        %3200 = vmatprep.subr.mxu0 0.0
        %3201 = vmatpush2.msra.mxu0 0.0
        %3202 = vmatprep.subr.mxu0 0.0
        %3203 = vmatpush2.msra.mxu0 0.0
        %3204 = vmatprep.subr.mxu0 0.0
        %3205 = vmatpush2.msra.mxu0 0.0
        %3206 = vmatprep.subr.mxu0 0.0
        %3207 = vmatpush2.msra.mxu0 0.0
        %3208 = vmatprep.subr.mxu0 0.0
        %3209 = vmatpush2.msra.mxu0 0.0
        %3210 = vmatprep.subr.mxu0 0.0
        %3211 = vmatpush2.msra.mxu0 0.0
        %3212 = vmatprep.subr.mxu0 0.0
        %3213 = vmatpush2.msra.mxu0 0.0
        %3214 = vmatprep.subr.mxu0 0.0
        %3215 = vmatpush2.msra.mxu0 0.0
        %3216 = vmatprep.subr.mxu0 0.0
        %3217 = vmatpush2.msra.mxu0 0.0
        %3218 = vmatprep.mubr.f32.mxu0 0.0
        %3219 = vmatmul.mubr.f32.gmra.mxu0 %v1448
        %v3220 = vpop.f32.mrf.mxu0
        %v3221 = vadd.f32 %v1322, %v3220
        %v3222 = vpop.f32.mrf.mxu0
        %v3223 = vadd.f32 %v1326, %v3222
        %3224 = vdwg.mxu0
        %3225 = vmatprep.subr.mxu0 0.0
        %3226 = vmatpush1.msra.mxu0 0.0
        %3227 = vmatprep.subr.mxu0 0.0
        %3228 = vmatpush1.msra.mxu0 0.0
        %3229 = vmatprep.subr.mxu0 0.0
        %3230 = vmatpush1.msra.mxu0 0.0
        %3231 = vmatprep.subr.mxu0 0.0
        %3232 = vmatpush1.msra.mxu0 0.0
        %3233 = vmatprep.subr.mxu0 0.0
        %3234 = vmatpush1.msra.mxu0 0.0
        %3235 = vmatprep.subr.mxu0 0.0
        %3236 = vmatpush1.msra.mxu0 0.0
        %3237 = vmatprep.subr.mxu0 0.0
        %3238 = vmatpush1.msra.mxu0 0.0
        %3239 = vmatprep.subr.mxu0 0.0
        %3240 = vmatpush1.msra.mxu0 0.0
        %3241 = vmatprep.subr.mxu0 0.0
        %3242 = vmatpush1.msra.mxu0 0.0
        %3243 = vmatprep.subr.mxu0 0.0
        %3244 = vmatpush1.msra.mxu0 0.0
        %3245 = vmatprep.subr.mxu0 0.0
        %3246 = vmatpush1.msra.mxu0 0.0
        %3247 = vmatprep.subr.mxu0 0.0
        %3248 = vmatpush1.msra.mxu0 0.0
        %3249 = vmatprep.subr.mxu0 %v1098
        %3250 = vmatpush1.msra.mxu0 %v1097
        %3251 = vmatprep.subr.mxu0 %v1034
        %3252 = vmatpush1.msra.mxu0 %v1033
        %3253 = vmatprep.subr.mxu0 %v970
        %3254 = vmatpush1.msra.mxu0 %v969
        %3255 = vmatprep.subr.mxu0 %v906
        %3256 = vmatpush1.msra.mxu0 %v905
        %3257 = vmatprep.subr.mxu0 0.0
        %3258 = vmatpush2.msra.mxu0 0.0
        %3259 = vmatprep.subr.mxu0 0.0
        %3260 = vmatpush2.msra.mxu0 0.0
        %3261 = vmatprep.subr.mxu0 0.0
        %3262 = vmatpush2.msra.mxu0 0.0
        %3263 = vmatprep.subr.mxu0 0.0
        %3264 = vmatpush2.msra.mxu0 0.0
        %3265 = vmatprep.subr.mxu0 0.0
        %3266 = vmatpush2.msra.mxu0 0.0
        %3267 = vmatprep.subr.mxu0 0.0
        %3268 = vmatpush2.msra.mxu0 0.0
        %3269 = vmatprep.subr.mxu0 0.0
        %3270 = vmatpush2.msra.mxu0 0.0
        %3271 = vmatprep.subr.mxu0 0.0
        %3272 = vmatpush2.msra.mxu0 0.0
        %3273 = vmatprep.subr.mxu0 0.0
        %3274 = vmatpush2.msra.mxu0 0.0
        %3275 = vmatprep.subr.mxu0 0.0
        %3276 = vmatpush2.msra.mxu0 0.0
        %3277 = vmatprep.subr.mxu0 0.0
        %3278 = vmatpush2.msra.mxu0 0.0
        %3279 = vmatprep.subr.mxu0 0.0
        %3280 = vmatpush2.msra.mxu0 0.0
        %3281 = vmatprep.subr.mxu0 0.0
        %3282 = vmatpush2.msra.mxu0 0.0
        %3283 = vmatprep.subr.mxu0 0.0
        %3284 = vmatpush2.msra.mxu0 0.0
        %3285 = vmatprep.subr.mxu0 0.0
        %3286 = vmatpush2.msra.mxu0 0.0
        %3287 = vmatprep.subr.mxu0 0.0
        %3288 = vmatpush2.msra.mxu0 0.0
        %3289 = vmatprep.mubr.f32.mxu0 0.0
        %3290 = vmatmul.mubr.f32.gmra.mxu0 %v1448
        %v3291 = vpop.f32.mrf.mxu0
        %v3292 = vadd.f32 %v1330, %v3291
        %v3293 = vpop.f32.mrf.mxu0
        %v3294 = vadd.f32 %v1334, %v3293
        %3295 = vdwg.mxu0
        %3296 = vmatprep.subr.mxu0 0.0
        %3297 = vmatpush1.msra.mxu0 0.0
        %3298 = vmatprep.subr.mxu0 0.0
        %3299 = vmatpush1.msra.mxu0 0.0
        %3300 = vmatprep.subr.mxu0 0.0
        %3301 = vmatpush1.msra.mxu0 0.0
        %3302 = vmatprep.subr.mxu0 0.0
        %3303 = vmatpush1.msra.mxu0 0.0
        %3304 = vmatprep.subr.mxu0 0.0
        %3305 = vmatpush1.msra.mxu0 0.0
        %3306 = vmatprep.subr.mxu0 0.0
        %3307 = vmatpush1.msra.mxu0 0.0
        %3308 = vmatprep.subr.mxu0 0.0
        %3309 = vmatpush1.msra.mxu0 0.0
        %3310 = vmatprep.subr.mxu0 0.0
        %3311 = vmatpush1.msra.mxu0 0.0
        %3312 = vmatprep.subr.mxu0 0.0
        %3313 = vmatpush1.msra.mxu0 0.0
        %3314 = vmatprep.subr.mxu0 0.0
        %3315 = vmatpush1.msra.mxu0 0.0
        %3316 = vmatprep.subr.mxu0 0.0
        %3317 = vmatpush1.msra.mxu0 0.0
        %3318 = vmatprep.subr.mxu0 0.0
        %3319 = vmatpush1.msra.mxu0 0.0
        %3320 = vmatprep.subr.mxu0 %v1100
        %3321 = vmatpush1.msra.mxu0 %v1099
        %3322 = vmatprep.subr.mxu0 %v1036
        %3323 = vmatpush1.msra.mxu0 %v1035
        %3324 = vmatprep.subr.mxu0 %v972
        %3325 = vmatpush1.msra.mxu0 %v971
        %3326 = vmatprep.subr.mxu0 %v908
        %3327 = vmatpush1.msra.mxu0 %v907
        %3328 = vmatprep.subr.mxu0 0.0
        %3329 = vmatpush2.msra.mxu0 0.0
        %3330 = vmatprep.subr.mxu0 0.0
        %3331 = vmatpush2.msra.mxu0 0.0
        %3332 = vmatprep.subr.mxu0 0.0
        %3333 = vmatpush2.msra.mxu0 0.0
        %3334 = vmatprep.subr.mxu0 0.0
        %3335 = vmatpush2.msra.mxu0 0.0
        %3336 = vmatprep.subr.mxu0 0.0
        %3337 = vmatpush2.msra.mxu0 0.0
        %3338 = vmatprep.subr.mxu0 0.0
        %3339 = vmatpush2.msra.mxu0 0.0
        %3340 = vmatprep.subr.mxu0 0.0
        %3341 = vmatpush2.msra.mxu0 0.0
        %3342 = vmatprep.subr.mxu0 0.0
        %3343 = vmatpush2.msra.mxu0 0.0
        %3344 = vmatprep.subr.mxu0 0.0
        %3345 = vmatpush2.msra.mxu0 0.0
        %3346 = vmatprep.subr.mxu0 0.0
        %3347 = vmatpush2.msra.mxu0 0.0
        %3348 = vmatprep.subr.mxu0 0.0
        %3349 = vmatpush2.msra.mxu0 0.0
        %3350 = vmatprep.subr.mxu0 0.0
        %3351 = vmatpush2.msra.mxu0 0.0
        %3352 = vmatprep.subr.mxu0 0.0
        %3353 = vmatpush2.msra.mxu0 0.0
        %3354 = vmatprep.subr.mxu0 0.0
        %3355 = vmatpush2.msra.mxu0 0.0
        %3356 = vmatprep.subr.mxu0 0.0
        %3357 = vmatpush2.msra.mxu0 0.0
        %3358 = vmatprep.subr.mxu0 0.0
        %3359 = vmatpush2.msra.mxu0 0.0
        %3360 = vmatprep.mubr.f32.mxu0 0.0
        %3361 = vmatmul.mubr.f32.gmra.mxu0 %v1448
        %v3362 = vpop.f32.mrf.mxu0
        %v3363 = vadd.f32 %v1338, %v3362
        %v3364 = vpop.f32.mrf.mxu0
        %v3365 = vadd.f32 %v1342, %v3364
        %3366 = vdwg.mxu0
        %3367 = vmatprep.subr.mxu0 0.0
        %3368 = vmatpush1.msra.mxu0 0.0
        %3369 = vmatprep.subr.mxu0 0.0
        %3370 = vmatpush1.msra.mxu0 0.0
        %3371 = vmatprep.subr.mxu0 0.0
        %3372 = vmatpush1.msra.mxu0 0.0
        %3373 = vmatprep.subr.mxu0 0.0
        %3374 = vmatpush1.msra.mxu0 0.0
        %3375 = vmatprep.subr.mxu0 0.0
        %3376 = vmatpush1.msra.mxu0 0.0
        %3377 = vmatprep.subr.mxu0 0.0
        %3378 = vmatpush1.msra.mxu0 0.0
        %3379 = vmatprep.subr.mxu0 0.0
        %3380 = vmatpush1.msra.mxu0 0.0
        %3381 = vmatprep.subr.mxu0 0.0
        %3382 = vmatpush1.msra.mxu0 0.0
        %3383 = vmatprep.subr.mxu0 0.0
        %3384 = vmatpush1.msra.mxu0 0.0
        %3385 = vmatprep.subr.mxu0 0.0
        %3386 = vmatpush1.msra.mxu0 0.0
        %3387 = vmatprep.subr.mxu0 0.0
        %3388 = vmatpush1.msra.mxu0 0.0
        %3389 = vmatprep.subr.mxu0 0.0
        %3390 = vmatpush1.msra.mxu0 0.0
        %3391 = vmatprep.subr.mxu0 %v1102
        %3392 = vmatpush1.msra.mxu0 %v1101
        %3393 = vmatprep.subr.mxu0 %v1038
        %3394 = vmatpush1.msra.mxu0 %v1037
        %3395 = vmatprep.subr.mxu0 %v974
        %3396 = vmatpush1.msra.mxu0 %v973
        %3397 = vmatprep.subr.mxu0 %v910
        %3398 = vmatpush1.msra.mxu0 %v909
        %3399 = vmatprep.subr.mxu0 0.0
        %3400 = vmatpush2.msra.mxu0 0.0
        %3401 = vmatprep.subr.mxu0 0.0
        %3402 = vmatpush2.msra.mxu0 0.0
        %3403 = vmatprep.subr.mxu0 0.0
        %3404 = vmatpush2.msra.mxu0 0.0
        %3405 = vmatprep.subr.mxu0 0.0
        %3406 = vmatpush2.msra.mxu0 0.0
        %3407 = vmatprep.subr.mxu0 0.0
        %3408 = vmatpush2.msra.mxu0 0.0
        %3409 = vmatprep.subr.mxu0 0.0
        %3410 = vmatpush2.msra.mxu0 0.0
        %3411 = vmatprep.subr.mxu0 0.0
        %3412 = vmatpush2.msra.mxu0 0.0
        %3413 = vmatprep.subr.mxu0 0.0
        %3414 = vmatpush2.msra.mxu0 0.0
        %3415 = vmatprep.subr.mxu0 0.0
        %3416 = vmatpush2.msra.mxu0 0.0
        %3417 = vmatprep.subr.mxu0 0.0
        %3418 = vmatpush2.msra.mxu0 0.0
        %3419 = vmatprep.subr.mxu0 0.0
        %3420 = vmatpush2.msra.mxu0 0.0
        %3421 = vmatprep.subr.mxu0 0.0
        %3422 = vmatpush2.msra.mxu0 0.0
        %3423 = vmatprep.subr.mxu0 0.0
        %3424 = vmatpush2.msra.mxu0 0.0
        %3425 = vmatprep.subr.mxu0 0.0
        %3426 = vmatpush2.msra.mxu0 0.0
        %3427 = vmatprep.subr.mxu0 0.0
        %3428 = vmatpush2.msra.mxu0 0.0
        %3429 = vmatprep.subr.mxu0 0.0
        %3430 = vmatpush2.msra.mxu0 0.0
        %3431 = vmatprep.mubr.f32.mxu0 0.0
        %3432 = vmatmul.mubr.f32.gmra.mxu0 %v1448
        %v3433 = vpop.f32.mrf.mxu0
        %v3434 = vadd.f32 %v1346, %v3433
        %v3435 = vpop.f32.mrf.mxu0
        %v3436 = vadd.f32 %v1350, %v3435
        %3437 = vdwg.mxu0
        %3438 = vmatprep.subr.mxu0 0.0
        %3439 = vmatpush1.msra.mxu0 0.0
        %3440 = vmatprep.subr.mxu0 0.0
        %3441 = vmatpush1.msra.mxu0 0.0
        %3442 = vmatprep.subr.mxu0 0.0
        %3443 = vmatpush1.msra.mxu0 0.0
        %3444 = vmatprep.subr.mxu0 0.0
        %3445 = vmatpush1.msra.mxu0 0.0
        %3446 = vmatprep.subr.mxu0 0.0
        %3447 = vmatpush1.msra.mxu0 0.0
        %3448 = vmatprep.subr.mxu0 0.0
        %3449 = vmatpush1.msra.mxu0 0.0
        %3450 = vmatprep.subr.mxu0 0.0
        %3451 = vmatpush1.msra.mxu0 0.0
        %3452 = vmatprep.subr.mxu0 0.0
        %3453 = vmatpush1.msra.mxu0 0.0
        %3454 = vmatprep.subr.mxu0 0.0
        %3455 = vmatpush1.msra.mxu0 0.0
        %3456 = vmatprep.subr.mxu0 0.0
        %3457 = vmatpush1.msra.mxu0 0.0
        %3458 = vmatprep.subr.mxu0 0.0
        %3459 = vmatpush1.msra.mxu0 0.0
        %3460 = vmatprep.subr.mxu0 0.0
        %3461 = vmatpush1.msra.mxu0 0.0
        %3462 = vmatprep.subr.mxu0 %v1104
        %3463 = vmatpush1.msra.mxu0 %v1103
        %3464 = vmatprep.subr.mxu0 %v1040
        %3465 = vmatpush1.msra.mxu0 %v1039
        %3466 = vmatprep.subr.mxu0 %v976
        %3467 = vmatpush1.msra.mxu0 %v975
        %3468 = vmatprep.subr.mxu0 %v912
        %3469 = vmatpush1.msra.mxu0 %v911
        %3470 = vmatprep.subr.mxu0 0.0
        %3471 = vmatpush2.msra.mxu0 0.0
        %3472 = vmatprep.subr.mxu0 0.0
        %3473 = vmatpush2.msra.mxu0 0.0
        %3474 = vmatprep.subr.mxu0 0.0
        %3475 = vmatpush2.msra.mxu0 0.0
        %3476 = vmatprep.subr.mxu0 0.0
        %3477 = vmatpush2.msra.mxu0 0.0
        %3478 = vmatprep.subr.mxu0 0.0
        %3479 = vmatpush2.msra.mxu0 0.0
        %3480 = vmatprep.subr.mxu0 0.0
        %3481 = vmatpush2.msra.mxu0 0.0
        %3482 = vmatprep.subr.mxu0 0.0
        %3483 = vmatpush2.msra.mxu0 0.0
        %3484 = vmatprep.subr.mxu0 0.0
        %3485 = vmatpush2.msra.mxu0 0.0
        %3486 = vmatprep.subr.mxu0 0.0
        %3487 = vmatpush2.msra.mxu0 0.0
        %3488 = vmatprep.subr.mxu0 0.0
        %3489 = vmatpush2.msra.mxu0 0.0
        %3490 = vmatprep.subr.mxu0 0.0
        %3491 = vmatpush2.msra.mxu0 0.0
        %3492 = vmatprep.subr.mxu0 0.0
        %3493 = vmatpush2.msra.mxu0 0.0
        %3494 = vmatprep.subr.mxu0 0.0
        %3495 = vmatpush2.msra.mxu0 0.0
        %3496 = vmatprep.subr.mxu0 0.0
        %3497 = vmatpush2.msra.mxu0 0.0
        %3498 = vmatprep.subr.mxu0 0.0
        %3499 = vmatpush2.msra.mxu0 0.0
        %3500 = vmatprep.subr.mxu0 0.0
        %3501 = vmatpush2.msra.mxu0 0.0
        %3502 = vmatprep.mubr.f32.mxu0 0.0
        %3503 = vmatmul.mubr.f32.gmra.mxu0 %v1448
        %v3504 = vpop.f32.mrf.mxu0
        %v3505 = vadd.f32 %v1354, %v3504
        %v3506 = vpop.f32.mrf.mxu0
        %v3507 = vadd.f32 %v1358, %v3506
        %3508 = vdwg.mxu0
        %3509 = vmatprep.subr.mxu0 0.0
        %3510 = vmatpush1.msra.mxu0 0.0
        %3511 = vmatprep.subr.mxu0 0.0
        %3512 = vmatpush1.msra.mxu0 0.0
        %3513 = vmatprep.subr.mxu0 0.0
        %3514 = vmatpush1.msra.mxu0 0.0
        %3515 = vmatprep.subr.mxu0 0.0
        %3516 = vmatpush1.msra.mxu0 0.0
        %3517 = vmatprep.subr.mxu0 0.0
        %3518 = vmatpush1.msra.mxu0 0.0
        %3519 = vmatprep.subr.mxu0 0.0
        %3520 = vmatpush1.msra.mxu0 0.0
        %3521 = vmatprep.subr.mxu0 0.0
        %3522 = vmatpush1.msra.mxu0 0.0
        %3523 = vmatprep.subr.mxu0 0.0
        %3524 = vmatpush1.msra.mxu0 0.0
        %3525 = vmatprep.subr.mxu0 0.0
        %3526 = vmatpush1.msra.mxu0 0.0
        %3527 = vmatprep.subr.mxu0 0.0
        %3528 = vmatpush1.msra.mxu0 0.0
        %3529 = vmatprep.subr.mxu0 0.0
        %3530 = vmatpush1.msra.mxu0 0.0
        %3531 = vmatprep.subr.mxu0 0.0
        %3532 = vmatpush1.msra.mxu0 0.0
        %3533 = vmatprep.subr.mxu0 %v1106
        %3534 = vmatpush1.msra.mxu0 %v1105
        %3535 = vmatprep.subr.mxu0 %v1042
        %3536 = vmatpush1.msra.mxu0 %v1041
        %3537 = vmatprep.subr.mxu0 %v978
        %3538 = vmatpush1.msra.mxu0 %v977
        %3539 = vmatprep.subr.mxu0 %v914
        %3540 = vmatpush1.msra.mxu0 %v913
        %3541 = vmatprep.subr.mxu0 0.0
        %3542 = vmatpush2.msra.mxu0 0.0
        %3543 = vmatprep.subr.mxu0 0.0
        %3544 = vmatpush2.msra.mxu0 0.0
        %3545 = vmatprep.subr.mxu0 0.0
        %3546 = vmatpush2.msra.mxu0 0.0
        %3547 = vmatprep.subr.mxu0 0.0
        %3548 = vmatpush2.msra.mxu0 0.0
        %3549 = vmatprep.subr.mxu0 0.0
        %3550 = vmatpush2.msra.mxu0 0.0
        %3551 = vmatprep.subr.mxu0 0.0
        %3552 = vmatpush2.msra.mxu0 0.0
        %3553 = vmatprep.subr.mxu0 0.0
        %3554 = vmatpush2.msra.mxu0 0.0
        %3555 = vmatprep.subr.mxu0 0.0
        %3556 = vmatpush2.msra.mxu0 0.0
        %3557 = vmatprep.subr.mxu0 0.0
        %3558 = vmatpush2.msra.mxu0 0.0
        %3559 = vmatprep.subr.mxu0 0.0
        %3560 = vmatpush2.msra.mxu0 0.0
        %3561 = vmatprep.subr.mxu0 0.0
        %3562 = vmatpush2.msra.mxu0 0.0
        %3563 = vmatprep.subr.mxu0 0.0
        %3564 = vmatpush2.msra.mxu0 0.0
        %3565 = vmatprep.subr.mxu0 0.0
        %3566 = vmatpush2.msra.mxu0 0.0
        %3567 = vmatprep.subr.mxu0 0.0
        %3568 = vmatpush2.msra.mxu0 0.0
        %3569 = vmatprep.subr.mxu0 0.0
        %3570 = vmatpush2.msra.mxu0 0.0
        %3571 = vmatprep.subr.mxu0 0.0
        %3572 = vmatpush2.msra.mxu0 0.0
        %3573 = vmatprep.mubr.f32.mxu0 0.0
        %3574 = vmatmul.mubr.f32.gmra.mxu0 %v1448
        %v3575 = vpop.f32.mrf.mxu0
        %v3576 = vadd.f32 %v1362, %v3575
        %v3577 = vpop.f32.mrf.mxu0
        %v3578 = vadd.f32 %v1366, %v3577
        %3579 = vdwg.mxu0
        %3580 = vmatprep.subr.mxu0 0.0
        %3581 = vmatpush1.msra.mxu0 0.0
        %3582 = vmatprep.subr.mxu0 0.0
        %3583 = vmatpush1.msra.mxu0 0.0
        %3584 = vmatprep.subr.mxu0 0.0
        %3585 = vmatpush1.msra.mxu0 0.0
        %3586 = vmatprep.subr.mxu0 0.0
        %3587 = vmatpush1.msra.mxu0 0.0
        %3588 = vmatprep.subr.mxu0 0.0
        %3589 = vmatpush1.msra.mxu0 0.0
        %3590 = vmatprep.subr.mxu0 0.0
        %3591 = vmatpush1.msra.mxu0 0.0
        %3592 = vmatprep.subr.mxu0 0.0
        %3593 = vmatpush1.msra.mxu0 0.0
        %3594 = vmatprep.subr.mxu0 0.0
        %3595 = vmatpush1.msra.mxu0 0.0
        %3596 = vmatprep.subr.mxu0 0.0
        %3597 = vmatpush1.msra.mxu0 0.0
        %3598 = vmatprep.subr.mxu0 0.0
        %3599 = vmatpush1.msra.mxu0 0.0
        %3600 = vmatprep.subr.mxu0 0.0
        %3601 = vmatpush1.msra.mxu0 0.0
        %3602 = vmatprep.subr.mxu0 0.0
        %3603 = vmatpush1.msra.mxu0 0.0
        %3604 = vmatprep.subr.mxu0 %v1108
        %3605 = vmatpush1.msra.mxu0 %v1107
        %3606 = vmatprep.subr.mxu0 %v1044
        %3607 = vmatpush1.msra.mxu0 %v1043
        %3608 = vmatprep.subr.mxu0 %v980
        %3609 = vmatpush1.msra.mxu0 %v979
        %3610 = vmatprep.subr.mxu0 %v916
        %3611 = vmatpush1.msra.mxu0 %v915
        %3612 = vmatprep.subr.mxu0 0.0
        %3613 = vmatpush2.msra.mxu0 0.0
        %3614 = vmatprep.subr.mxu0 0.0
        %3615 = vmatpush2.msra.mxu0 0.0
        %3616 = vmatprep.subr.mxu0 0.0
        %3617 = vmatpush2.msra.mxu0 0.0
        %3618 = vmatprep.subr.mxu0 0.0
        %3619 = vmatpush2.msra.mxu0 0.0
        %3620 = vmatprep.subr.mxu0 0.0
        %3621 = vmatpush2.msra.mxu0 0.0
        %3622 = vmatprep.subr.mxu0 0.0
        %3623 = vmatpush2.msra.mxu0 0.0
        %3624 = vmatprep.subr.mxu0 0.0
        %3625 = vmatpush2.msra.mxu0 0.0
        %3626 = vmatprep.subr.mxu0 0.0
        %3627 = vmatpush2.msra.mxu0 0.0
        %3628 = vmatprep.subr.mxu0 0.0
        %3629 = vmatpush2.msra.mxu0 0.0
        %3630 = vmatprep.subr.mxu0 0.0
        %3631 = vmatpush2.msra.mxu0 0.0
        %3632 = vmatprep.subr.mxu0 0.0
        %3633 = vmatpush2.msra.mxu0 0.0
        %3634 = vmatprep.subr.mxu0 0.0
        %3635 = vmatpush2.msra.mxu0 0.0
        %3636 = vmatprep.subr.mxu0 0.0
        %3637 = vmatpush2.msra.mxu0 0.0
        %3638 = vmatprep.subr.mxu0 0.0
        %3639 = vmatpush2.msra.mxu0 0.0
        %3640 = vmatprep.subr.mxu0 0.0
        %3641 = vmatpush2.msra.mxu0 0.0
        %3642 = vmatprep.subr.mxu0 0.0
        %3643 = vmatpush2.msra.mxu0 0.0
        %3644 = vmatprep.mubr.f32.mxu0 0.0
        %3645 = vmatmul.mubr.f32.gmra.mxu0 %v1448
        %v3646 = vpop.f32.mrf.mxu0
        %v3647 = vadd.f32 %v1370, %v3646
        %v3648 = vpop.f32.mrf.mxu0
        %v3649 = vadd.f32 %v1374, %v3648
        %3650 = vdwg.mxu0
        %3651 = vmatprep.subr.mxu0 0.0
        %3652 = vmatpush1.msra.mxu0 0.0
        %3653 = vmatprep.subr.mxu0 0.0
        %3654 = vmatpush1.msra.mxu0 0.0
        %3655 = vmatprep.subr.mxu0 0.0
        %3656 = vmatpush1.msra.mxu0 0.0
        %3657 = vmatprep.subr.mxu0 0.0
        %3658 = vmatpush1.msra.mxu0 0.0
        %3659 = vmatprep.subr.mxu0 0.0
        %3660 = vmatpush1.msra.mxu0 0.0
        %3661 = vmatprep.subr.mxu0 0.0
        %3662 = vmatpush1.msra.mxu0 0.0
        %3663 = vmatprep.subr.mxu0 0.0
        %3664 = vmatpush1.msra.mxu0 0.0
        %3665 = vmatprep.subr.mxu0 0.0
        %3666 = vmatpush1.msra.mxu0 0.0
        %3667 = vmatprep.subr.mxu0 0.0
        %3668 = vmatpush1.msra.mxu0 0.0
        %3669 = vmatprep.subr.mxu0 0.0
        %3670 = vmatpush1.msra.mxu0 0.0
        %3671 = vmatprep.subr.mxu0 0.0
        %3672 = vmatpush1.msra.mxu0 0.0
        %3673 = vmatprep.subr.mxu0 0.0
        %3674 = vmatpush1.msra.mxu0 0.0
        %3675 = vmatprep.subr.mxu0 %v1110
        %3676 = vmatpush1.msra.mxu0 %v1109
        %3677 = vmatprep.subr.mxu0 %v1046
        %3678 = vmatpush1.msra.mxu0 %v1045
        %3679 = vmatprep.subr.mxu0 %v982
        %3680 = vmatpush1.msra.mxu0 %v981
        %3681 = vmatprep.subr.mxu0 %v918
        %3682 = vmatpush1.msra.mxu0 %v917
        %3683 = vmatprep.subr.mxu0 0.0
        %3684 = vmatpush2.msra.mxu0 0.0
        %3685 = vmatprep.subr.mxu0 0.0
        %3686 = vmatpush2.msra.mxu0 0.0
        %3687 = vmatprep.subr.mxu0 0.0
        %3688 = vmatpush2.msra.mxu0 0.0
        %3689 = vmatprep.subr.mxu0 0.0
        %3690 = vmatpush2.msra.mxu0 0.0
        %3691 = vmatprep.subr.mxu0 0.0
        %3692 = vmatpush2.msra.mxu0 0.0
        %3693 = vmatprep.subr.mxu0 0.0
        %3694 = vmatpush2.msra.mxu0 0.0
        %3695 = vmatprep.subr.mxu0 0.0
        %3696 = vmatpush2.msra.mxu0 0.0
        %3697 = vmatprep.subr.mxu0 0.0
        %3698 = vmatpush2.msra.mxu0 0.0
        %3699 = vmatprep.subr.mxu0 0.0
        %3700 = vmatpush2.msra.mxu0 0.0
        %3701 = vmatprep.subr.mxu0 0.0
        %3702 = vmatpush2.msra.mxu0 0.0
        %3703 = vmatprep.subr.mxu0 0.0
        %3704 = vmatpush2.msra.mxu0 0.0
        %3705 = vmatprep.subr.mxu0 0.0
        %3706 = vmatpush2.msra.mxu0 0.0
        %3707 = vmatprep.subr.mxu0 0.0
        %3708 = vmatpush2.msra.mxu0 0.0
        %3709 = vmatprep.subr.mxu0 0.0
        %3710 = vmatpush2.msra.mxu0 0.0
        %3711 = vmatprep.subr.mxu0 0.0
        %3712 = vmatpush2.msra.mxu0 0.0
        %3713 = vmatprep.subr.mxu0 0.0
        %3714 = vmatpush2.msra.mxu0 0.0
        %3715 = vmatprep.mubr.f32.mxu0 0.0
        %3716 = vmatmul.mubr.f32.gmra.mxu0 %v1448
        %v3717 = vpop.f32.mrf.mxu0
        %v3718 = vadd.f32 %v1378, %v3717
        %v3719 = vpop.f32.mrf.mxu0
        %v3720 = vadd.f32 %v1382, %v3719
        %3721 = vdwg.mxu0
        %v3786 = vcombine.low %v1517, %v1519
        %v3787 = vcombine.low %v1588, %v1590
        %v3788 = vcombine.low %v1659, %v1661
        %v3789 = vcombine.low %v1730, %v1732
        %v3791 = vunpack.c.l.s4 1966171168
        %v3792 = vunpack.c.0.s8 %v3791
        %v3793 = vlaneseq
        %v3794 = vshrl.u32 %v3793, 7
        %v3795 = vsub.s32 %v3792, %v3794
        %v3796 = vrot.slane %v3786, %v3795
        %v3798 = vunpack.c.l.s4 1966171168
        %v3799 = vunpack.c.0.s8 %v3798
        %v3800 = vlaneseq
        %v3801 = vshrl.u32 %v3800, 7
        %v3802 = vsub.s32 %v3799, %v3801
        %v3803 = vrot.slane %v3787, %v3802
        %v3805 = vunpack.c.l.s4 1966171168
        %v3806 = vunpack.c.0.s8 %v3805
        %v3807 = vlaneseq
        %v3808 = vshrl.u32 %v3807, 7
        %v3809 = vsub.s32 %v3806, %v3808
        %v3810 = vrot.slane %v3788, %v3809
        %v3812 = vunpack.c.l.s4 1966171168
        %v3813 = vunpack.c.0.s8 %v3812
        %v3814 = vlaneseq
        %v3815 = vshrl.u32 %v3814, 7
        %v3816 = vsub.s32 %v3813, %v3815
        %v3817 = vrot.slane %v3789, %v3816
        %v3818 = vcombine.low %v3796, %v3803
        %v3819 = vcombine.low %v3810, %v3817
        %v3821 = vunpack.c.l.s4 1966171168
        %v3822 = vunpack.c.0.s8 %v3821
        %v3823 = vlaneseq
        %v3824 = vshrl.u32 %v3823, 7
        %v3825 = vsub.s32 %v3822, %v3824
        %v3826 = vrot.slane %v3818, %v3825
        %v3828 = vunpack.c.l.s4 1966171168
        %v3829 = vunpack.c.0.s8 %v3828
        %v3830 = vlaneseq
        %v3831 = vshrl.u32 %v3830, 7
        %v3832 = vsub.s32 %v3829, %v3831
        %v3833 = vrot.slane %v3819, %v3832
        %v3834 = vcombine.low %v3826, %v3833
        %v3835 = vcombine.low %v1801, %v1803
        %v3836 = vcombine.low %v1872, %v1874
        %v3837 = vcombine.low %v1943, %v1945
        %v3838 = vcombine.low %v2014, %v2016
        %v3840 = vunpack.c.l.s4 1966171168
        %v3841 = vunpack.c.0.s8 %v3840
        %v3842 = vlaneseq
        %v3843 = vshrl.u32 %v3842, 7
        %v3844 = vsub.s32 %v3841, %v3843
        %v3845 = vrot.slane %v3835, %v3844
        %v3847 = vunpack.c.l.s4 1966171168
        %v3848 = vunpack.c.0.s8 %v3847
        %v3849 = vlaneseq
        %v3850 = vshrl.u32 %v3849, 7
        %v3851 = vsub.s32 %v3848, %v3850
        %v3852 = vrot.slane %v3836, %v3851
        %v3854 = vunpack.c.l.s4 1966171168
        %v3855 = vunpack.c.0.s8 %v3854
        %v3856 = vlaneseq
        %v3857 = vshrl.u32 %v3856, 7
        %v3858 = vsub.s32 %v3855, %v3857
        %v3859 = vrot.slane %v3837, %v3858
        %v3861 = vunpack.c.l.s4 1966171168
        %v3862 = vunpack.c.0.s8 %v3861
        %v3863 = vlaneseq
        %v3864 = vshrl.u32 %v3863, 7
        %v3865 = vsub.s32 %v3862, %v3864
        %v3866 = vrot.slane %v3838, %v3865
        %v3867 = vcombine.low %v3845, %v3852
        %v3868 = vcombine.low %v3859, %v3866
        %v3870 = vunpack.c.l.s4 1966171168
        %v3871 = vunpack.c.0.s8 %v3870
        %v3872 = vlaneseq
        %v3873 = vshrl.u32 %v3872, 7
        %v3874 = vsub.s32 %v3871, %v3873
        %v3875 = vrot.slane %v3867, %v3874
        %v3877 = vunpack.c.l.s4 1966171168
        %v3878 = vunpack.c.0.s8 %v3877
        %v3879 = vlaneseq
        %v3880 = vshrl.u32 %v3879, 7
        %v3881 = vsub.s32 %v3878, %v3880
        %v3882 = vrot.slane %v3868, %v3881
        %v3883 = vcombine.low %v3875, %v3882
        %v3884 = vcombine.low %v2085, %v2087
        %v3885 = vcombine.low %v2156, %v2158
        %v3886 = vcombine.low %v2227, %v2229
        %v3887 = vcombine.low %v2298, %v2300
        %v3889 = vunpack.c.l.s4 1966171168
        %v3890 = vunpack.c.0.s8 %v3889
        %v3891 = vlaneseq
        %v3892 = vshrl.u32 %v3891, 7
        %v3893 = vsub.s32 %v3890, %v3892
        %v3894 = vrot.slane %v3884, %v3893
        %v3896 = vunpack.c.l.s4 1966171168
        %v3897 = vunpack.c.0.s8 %v3896
        %v3898 = vlaneseq
        %v3899 = vshrl.u32 %v3898, 7
        %v3900 = vsub.s32 %v3897, %v3899
        %v3901 = vrot.slane %v3885, %v3900
        %v3903 = vunpack.c.l.s4 1966171168
        %v3904 = vunpack.c.0.s8 %v3903
        %v3905 = vlaneseq
        %v3906 = vshrl.u32 %v3905, 7
        %v3907 = vsub.s32 %v3904, %v3906
        %v3908 = vrot.slane %v3886, %v3907
        %v3910 = vunpack.c.l.s4 1966171168
        %v3911 = vunpack.c.0.s8 %v3910
        %v3912 = vlaneseq
        %v3913 = vshrl.u32 %v3912, 7
        %v3914 = vsub.s32 %v3911, %v3913
        %v3915 = vrot.slane %v3887, %v3914
        %v3916 = vcombine.low %v3894, %v3901
        %v3917 = vcombine.low %v3908, %v3915
        %v3919 = vunpack.c.l.s4 1966171168
        %v3920 = vunpack.c.0.s8 %v3919
        %v3921 = vlaneseq
        %v3922 = vshrl.u32 %v3921, 7
        %v3923 = vsub.s32 %v3920, %v3922
        %v3924 = vrot.slane %v3916, %v3923
        %v3926 = vunpack.c.l.s4 1966171168
        %v3927 = vunpack.c.0.s8 %v3926
        %v3928 = vlaneseq
        %v3929 = vshrl.u32 %v3928, 7
        %v3930 = vsub.s32 %v3927, %v3929
        %v3931 = vrot.slane %v3917, %v3930
        %v3932 = vcombine.low %v3924, %v3931
        %v3933 = vcombine.low %v2369, %v2371
        %v3934 = vcombine.low %v2440, %v2442
        %v3935 = vcombine.low %v2511, %v2513
        %v3936 = vcombine.low %v2582, %v2584
        %v3938 = vunpack.c.l.s4 1966171168
        %v3939 = vunpack.c.0.s8 %v3938
        %v3940 = vlaneseq
        %v3941 = vshrl.u32 %v3940, 7
        %v3942 = vsub.s32 %v3939, %v3941
        %v3943 = vrot.slane %v3933, %v3942
        %v3945 = vunpack.c.l.s4 1966171168
        %v3946 = vunpack.c.0.s8 %v3945
        %v3947 = vlaneseq
        %v3948 = vshrl.u32 %v3947, 7
        %v3949 = vsub.s32 %v3946, %v3948
        %v3950 = vrot.slane %v3934, %v3949
        %v3952 = vunpack.c.l.s4 1966171168
        %v3953 = vunpack.c.0.s8 %v3952
        %v3954 = vlaneseq
        %v3955 = vshrl.u32 %v3954, 7
        %v3956 = vsub.s32 %v3953, %v3955
        %v3957 = vrot.slane %v3935, %v3956
        %v3959 = vunpack.c.l.s4 1966171168
        %v3960 = vunpack.c.0.s8 %v3959
        %v3961 = vlaneseq
        %v3962 = vshrl.u32 %v3961, 7
        %v3963 = vsub.s32 %v3960, %v3962
        %v3964 = vrot.slane %v3936, %v3963
        %v3965 = vcombine.low %v3943, %v3950
        %v3966 = vcombine.low %v3957, %v3964
        %v3968 = vunpack.c.l.s4 1966171168
        %v3969 = vunpack.c.0.s8 %v3968
        %v3970 = vlaneseq
        %v3971 = vshrl.u32 %v3970, 7
        %v3972 = vsub.s32 %v3969, %v3971
        %v3973 = vrot.slane %v3965, %v3972
        %v3975 = vunpack.c.l.s4 1966171168
        %v3976 = vunpack.c.0.s8 %v3975
        %v3977 = vlaneseq
        %v3978 = vshrl.u32 %v3977, 7
        %v3979 = vsub.s32 %v3976, %v3978
        %v3980 = vrot.slane %v3966, %v3979
        %v3981 = vcombine.low %v3973, %v3980
        %v3982 = vcombine.low %v2653, %v2655
        %v3983 = vcombine.low %v2724, %v2726
        %v3984 = vcombine.low %v2795, %v2797
        %v3985 = vcombine.low %v2866, %v2868
        %v3987 = vunpack.c.l.s4 1966171168
        %v3988 = vunpack.c.0.s8 %v3987
        %v3989 = vlaneseq
        %v3990 = vshrl.u32 %v3989, 7
        %v3991 = vsub.s32 %v3988, %v3990
        %v3992 = vrot.slane %v3982, %v3991
        %v3994 = vunpack.c.l.s4 1966171168
        %v3995 = vunpack.c.0.s8 %v3994
        %v3996 = vlaneseq
        %v3997 = vshrl.u32 %v3996, 7
        %v3998 = vsub.s32 %v3995, %v3997
        %v3999 = vrot.slane %v3983, %v3998
        %v4001 = vunpack.c.l.s4 1966171168
        %v4002 = vunpack.c.0.s8 %v4001
        %v4003 = vlaneseq
        %v4004 = vshrl.u32 %v4003, 7
        %v4005 = vsub.s32 %v4002, %v4004
        %v4006 = vrot.slane %v3984, %v4005
        %v4008 = vunpack.c.l.s4 1966171168
        %v4009 = vunpack.c.0.s8 %v4008
        %v4010 = vlaneseq
        %v4011 = vshrl.u32 %v4010, 7
        %v4012 = vsub.s32 %v4009, %v4011
        %v4013 = vrot.slane %v3985, %v4012
        %v4014 = vcombine.low %v3992, %v3999
        %v4015 = vcombine.low %v4006, %v4013
        %v4017 = vunpack.c.l.s4 1966171168
        %v4018 = vunpack.c.0.s8 %v4017
        %v4019 = vlaneseq
        %v4020 = vshrl.u32 %v4019, 7
        %v4021 = vsub.s32 %v4018, %v4020
        %v4022 = vrot.slane %v4014, %v4021
        %v4024 = vunpack.c.l.s4 1966171168
        %v4025 = vunpack.c.0.s8 %v4024
        %v4026 = vlaneseq
        %v4027 = vshrl.u32 %v4026, 7
        %v4028 = vsub.s32 %v4025, %v4027
        %v4029 = vrot.slane %v4015, %v4028
        %v4030 = vcombine.low %v4022, %v4029
        %v4031 = vcombine.low %v2937, %v2939
        %v4032 = vcombine.low %v3008, %v3010
        %v4033 = vcombine.low %v3079, %v3081
        %v4034 = vcombine.low %v3150, %v3152
        %v4036 = vunpack.c.l.s4 1966171168
        %v4037 = vunpack.c.0.s8 %v4036
        %v4038 = vlaneseq
        %v4039 = vshrl.u32 %v4038, 7
        %v4040 = vsub.s32 %v4037, %v4039
        %v4041 = vrot.slane %v4031, %v4040
        %v4043 = vunpack.c.l.s4 1966171168
        %v4044 = vunpack.c.0.s8 %v4043
        %v4045 = vlaneseq
        %v4046 = vshrl.u32 %v4045, 7
        %v4047 = vsub.s32 %v4044, %v4046
        %v4048 = vrot.slane %v4032, %v4047
        %v4050 = vunpack.c.l.s4 1966171168
        %v4051 = vunpack.c.0.s8 %v4050
        %v4052 = vlaneseq
        %v4053 = vshrl.u32 %v4052, 7
        %v4054 = vsub.s32 %v4051, %v4053
        %v4055 = vrot.slane %v4033, %v4054
        %v4057 = vunpack.c.l.s4 1966171168
        %v4058 = vunpack.c.0.s8 %v4057
        %v4059 = vlaneseq
        %v4060 = vshrl.u32 %v4059, 7
        %v4061 = vsub.s32 %v4058, %v4060
        %v4062 = vrot.slane %v4034, %v4061
        %v4063 = vcombine.low %v4041, %v4048
        %v4064 = vcombine.low %v4055, %v4062
        %v4066 = vunpack.c.l.s4 1966171168
        %v4067 = vunpack.c.0.s8 %v4066
        %v4068 = vlaneseq
        %v4069 = vshrl.u32 %v4068, 7
        %v4070 = vsub.s32 %v4067, %v4069
        %v4071 = vrot.slane %v4063, %v4070
        %v4073 = vunpack.c.l.s4 1966171168
        %v4074 = vunpack.c.0.s8 %v4073
        %v4075 = vlaneseq
        %v4076 = vshrl.u32 %v4075, 7
        %v4077 = vsub.s32 %v4074, %v4076
        %v4078 = vrot.slane %v4064, %v4077
        %v4079 = vcombine.low %v4071, %v4078
        %v4080 = vcombine.low %v3221, %v3223
        %v4081 = vcombine.low %v3292, %v3294
        %v4082 = vcombine.low %v3363, %v3365
        %v4083 = vcombine.low %v3434, %v3436
        %v4085 = vunpack.c.l.s4 1966171168
        %v4086 = vunpack.c.0.s8 %v4085
        %v4087 = vlaneseq
        %v4088 = vshrl.u32 %v4087, 7
        %v4089 = vsub.s32 %v4086, %v4088
        %v4090 = vrot.slane %v4080, %v4089
        %v4092 = vunpack.c.l.s4 1966171168
        %v4093 = vunpack.c.0.s8 %v4092
        %v4094 = vlaneseq
        %v4095 = vshrl.u32 %v4094, 7
        %v4096 = vsub.s32 %v4093, %v4095
        %v4097 = vrot.slane %v4081, %v4096
        %v4099 = vunpack.c.l.s4 1966171168
        %v4100 = vunpack.c.0.s8 %v4099
        %v4101 = vlaneseq
        %v4102 = vshrl.u32 %v4101, 7
        %v4103 = vsub.s32 %v4100, %v4102
        %v4104 = vrot.slane %v4082, %v4103
        %v4106 = vunpack.c.l.s4 1966171168
        %v4107 = vunpack.c.0.s8 %v4106
        %v4108 = vlaneseq
        %v4109 = vshrl.u32 %v4108, 7
        %v4110 = vsub.s32 %v4107, %v4109
        %v4111 = vrot.slane %v4083, %v4110
        %v4112 = vcombine.low %v4090, %v4097
        %v4113 = vcombine.low %v4104, %v4111
        %v4115 = vunpack.c.l.s4 1966171168
        %v4116 = vunpack.c.0.s8 %v4115
        %v4117 = vlaneseq
        %v4118 = vshrl.u32 %v4117, 7
        %v4119 = vsub.s32 %v4116, %v4118
        %v4120 = vrot.slane %v4112, %v4119
        %v4122 = vunpack.c.l.s4 1966171168
        %v4123 = vunpack.c.0.s8 %v4122
        %v4124 = vlaneseq
        %v4125 = vshrl.u32 %v4124, 7
        %v4126 = vsub.s32 %v4123, %v4125
        %v4127 = vrot.slane %v4113, %v4126
        %v4128 = vcombine.low %v4120, %v4127
        %v4129 = vcombine.low %v3505, %v3507
        %v4130 = vcombine.low %v3576, %v3578
        %v4131 = vcombine.low %v3647, %v3649
        %v4132 = vcombine.low %v3718, %v3720
        %v4134 = vunpack.c.l.s4 1966171168
        %v4135 = vunpack.c.0.s8 %v4134
        %v4136 = vlaneseq
        %v4137 = vshrl.u32 %v4136, 7
        %v4138 = vsub.s32 %v4135, %v4137
        %v4139 = vrot.slane %v4129, %v4138
        %v4141 = vunpack.c.l.s4 1966171168
        %v4142 = vunpack.c.0.s8 %v4141
        %v4143 = vlaneseq
        %v4144 = vshrl.u32 %v4143, 7
        %v4145 = vsub.s32 %v4142, %v4144
        %v4146 = vrot.slane %v4130, %v4145
        %v4148 = vunpack.c.l.s4 1966171168
        %v4149 = vunpack.c.0.s8 %v4148
        %v4150 = vlaneseq
        %v4151 = vshrl.u32 %v4150, 7
        %v4152 = vsub.s32 %v4149, %v4151
        %v4153 = vrot.slane %v4131, %v4152
        %v4155 = vunpack.c.l.s4 1966171168
        %v4156 = vunpack.c.0.s8 %v4155
        %v4157 = vlaneseq
        %v4158 = vshrl.u32 %v4157, 7
        %v4159 = vsub.s32 %v4156, %v4158
        %v4160 = vrot.slane %v4132, %v4159
        %v4161 = vcombine.low %v4139, %v4146
        %v4162 = vcombine.low %v4153, %v4160
        %v4164 = vunpack.c.l.s4 1966171168
        %v4165 = vunpack.c.0.s8 %v4164
        %v4166 = vlaneseq
        %v4167 = vshrl.u32 %v4166, 7
        %v4168 = vsub.s32 %v4165, %v4167
        %v4169 = vrot.slane %v4161, %v4168
        %v4171 = vunpack.c.l.s4 1966171168
        %v4172 = vunpack.c.0.s8 %v4171
        %v4173 = vlaneseq
        %v4174 = vshrl.u32 %v4173, 7
        %v4175 = vsub.s32 %v4172, %v4174
        %v4176 = vrot.slane %v4162, %v4175
        %v4177 = vcombine.low %v4169, %v4176
        %4186 = vst [vmem:[%s772] sm:$0xff] %v3834
        %4187 = vst [vmem:[%s772 + $0x8] sm:$0xff] %v3883
        %4188 = vst [vmem:[%s772 + $0x10] sm:$0xff] %v3932
        %4189 = vst [vmem:[%s772 + $0x18] sm:$0xff] %v3981
        %4190 = vst [vmem:[%s772 + $0x20] sm:$0xff] %v4030
        %4191 = vst [vmem:[%s772 + $0x28] sm:$0xff] %v4079
        %4192 = vst [vmem:[%s772 + $0x30] sm:$0xff] %v4128
        %4193 = vst [vmem:[%s772 + $0x38] sm:$0xff] %v4177
        %s4194 = smul.u32 64, %s16
        %p4195 = scmp.lt.s32.totalorder %s4194, 831
        %s4196 = scalar_select %p4195, %s4194, 831
        %s4197 = scalar_lea.vmem %s5, %s4196
        // Predicated region
        $region64: #{cifarcnn_hyper_forward.5} parent=58 // pred_check
          %p4198 = pneg %p149
        $region65: #{cifarcnn_hyper_forward.5} parent=58 // pred_check_branch
          %4200 = sbr.rel (%p4198) target = $region67
        $region66: #{cifarcnn_hyper_forward.5} parent=58 // pred_region
          %s4201 = smul.u32 64, %s16
        $region67: #{cifarcnn_hyper_forward.5} parent=58 // pred_fallthru
          _
      $region59: #{cifarcnn_hyper_forward.5} parent=5 // pred_fallthru
        _
      %p4202 = scmp.le.s32.totalorder 2, %s11
      // Predicated region
      $region68: #{cifarcnn_hyper_forward.5} parent=5 // pred_check
        %p4203 = pneg %p4202
      $region69: #{cifarcnn_hyper_forward.5} parent=5 // pred_check_branch
        %4205 = sbr.rel (%p4203) target = $region71
      $region70: #{cifarcnn_hyper_forward.5} parent=5 // pred_region
        %s4206 = ssub.s32 %s11, 2
        // Predicated region
        $region72: #{cifarcnn_hyper_forward.5} parent=70 // pred_check
          %p4207 = pneg %p155
        $region73: #{cifarcnn_hyper_forward.5} parent=70 // pred_check_branch
          %4209 = sbr.rel (%p4207) target = $region75
        $region74: #{cifarcnn_hyper_forward.5} parent=70 // pred_region
          %s4210 = smul.u32 64, %s17
          %p4211 = scmp.lt.s32.totalorder %s4210, 831
          %s4212 = scalar_select %p4211, %s4210, 831
          %s4213 = scalar_lea.vmem %s5, %s4212
        $region75: #{cifarcnn_hyper_forward.5} parent=70 // pred_fallthru
          _
      $region71: #{cifarcnn_hyper_forward.5} parent=5 // pred_fallthru
        _
    $region6: #{cifarcnn_hyper_forward.5} parent=1 // loop_footer
      %s15 = sadd.s32 1, %s11
    $region7: #{cifarcnn_hyper_forward.5} parent=1 // loop_footer_branch
      %10 = sbr.rel target = $region3
    $region8: #{cifarcnn_hyper_forward.5} parent=1 // loop_exit
      _

// kernel: cifarcnn_hyper_forward.6
$region0: #{cifarcnn_hyper_forward.6}
  #allocation0 [shape = 'u32[]', space=smem, size = 0x4, offset = 0x4, fixed_abs, tag = 'smem constant byte address 0x4 - core index']
  #allocation1 [shape = 'u32[144,128]{1,0:T(1,128)}', space=vmem, size = 0x12000, scoped, tag = 'internal scratch']
  %s0 = inlined_call_operand.vmem [shape: bf16[1568,128], index: 0, kind: input, shape index: {}]
  %s1 = inlined_call_operand.vmem [shape: bf16[128,128], index: 1, kind: input, shape index: {}]
  %s2 = inlined_call_operand.vmem [shape: f32[1,128], index: 2, kind: input, shape index: {}]
  %s3 = inlined_call_operand.vmem [shape: f32[392,128], index: 3, kind: output, shape index: {}]
  %s4 = sld [smem:[#allocation0]]
  $region22: #{cifarcnn_hyper_forward.6} parent=0
    _
  %s6 = ssub.s32 1, %s4
  %s7 = scalar_select 0, %s6, %s4
  // Predicated region
  $region2: #{cifarcnn_hyper_forward.6} parent=0 // pred_check
    _
  $region3: #{cifarcnn_hyper_forward.6} parent=0 // pred_check_branch
    %9 = sbr.rel (0) target = $region5
  $region4: #{cifarcnn_hyper_forward.6} parent=0 // pred_region
    _
  $region5: #{cifarcnn_hyper_forward.6} parent=0 // pred_fallthru
    _
  // Predicated region
  $region6: #{cifarcnn_hyper_forward.6} parent=0 // pred_check
    _
  $region7: #{cifarcnn_hyper_forward.6} parent=0 // pred_check_branch
    %11 = sbr.rel (0) target = $region9
  $region8: #{cifarcnn_hyper_forward.6} parent=0 // pred_region
    _
  $region9: #{cifarcnn_hyper_forward.6} parent=0 // pred_fallthru
    _
  // Predicated region
  $region10: #{cifarcnn_hyper_forward.6} parent=0 // pred_check
    _
  $region11: #{cifarcnn_hyper_forward.6} parent=0 // pred_check_branch
    %13 = sbr.rel (0) target = $region13
  $region12: #{cifarcnn_hyper_forward.6} parent=0 // pred_region
    _
  $region13: #{cifarcnn_hyper_forward.6} parent=0 // pred_fallthru
    _
  %v15 = vld [vmem:[%s0] sm:$0xf]
  %v16 = vld [vmem:[%s0 + $0x4] sm:$0xf]
  %v17 = vld [vmem:[%s0 + $0x8] sm:$0xf]
  %v18 = vld [vmem:[%s0 + $0xc] sm:$0xf]
  %v19 = vld [vmem:[%s0 + $0x10] sm:$0xf]
  %v20 = vld [vmem:[%s0 + $0x14] sm:$0xf]
  %v21 = vld [vmem:[%s0 + $0x18] sm:$0xf]
  %v22 = vld [vmem:[%s0 + $0x1c] sm:$0xf]
  %v23 = vld [vmem:[%s0 + $0x20] sm:$0xf]
  %v24 = vld [vmem:[%s0 + $0x24] sm:$0xf]
  %v25 = vld [vmem:[%s0 + $0x28] sm:$0xf]
  %v26 = vld [vmem:[%s0 + $0x2c] sm:$0xf]
  %v27 = vld [vmem:[%s0 + $0x30] sm:$0xf]
  %v28 = vld [vmem:[%s0 + $0x34] sm:$0xf]
  %v29 = vld [vmem:[%s0 + $0x38] sm:$0xf]
  %v30 = vld [vmem:[%s0 + $0x3c] sm:$0xf]
  %v31 = vld [vmem:[%s0 + $0x40] sm:$0xf]
  %v32 = vld [vmem:[%s0 + $0x44] sm:$0xf]
  %v33 = vld [vmem:[%s0 + $0x48] sm:$0xf]
  %v34 = vld [vmem:[%s0 + $0x4c] sm:$0xf]
  %v35 = vld [vmem:[%s0 + $0x50] sm:$0xf]
  %v36 = vld [vmem:[%s0 + $0x54] sm:$0xf]
  %v37 = vld [vmem:[%s0 + $0x58] sm:$0xf]
  %v38 = vld [vmem:[%s0 + $0x5c] sm:$0xf]
  %v39 = vld [vmem:[%s0 + $0x60] sm:$0xf]
  %v40 = vld [vmem:[%s0 + $0x64] sm:$0xf]
  %v41 = vld [vmem:[%s0 + $0x68] sm:$0xf]
  %v42 = vld [vmem:[%s0 + $0x6c] sm:$0xf]
  %v43 = vld [vmem:[%s0 + $0x70] sm:$0xf]
  %v44 = vld [vmem:[%s0 + $0x74] sm:$0xf]
  %v45 = vld [vmem:[%s0 + $0x78] sm:$0xf]
  %v46 = vld [vmem:[%s0 + $0x7c] sm:$0xf]
  %v47 = vld [vmem:[%s0 + $0x80] sm:$0xf]
  %v48 = vld [vmem:[%s0 + $0x84] sm:$0xf]
  %v49 = vld [vmem:[%s0 + $0x88] sm:$0xf]
  %v50 = vld [vmem:[%s0 + $0x8c] sm:$0xf]
  %v51 = vld [vmem:[%s0 + $0x90] sm:$0xf]
  %v52 = vld [vmem:[%s0 + $0x94] sm:$0xf]
  %v53 = vld [vmem:[%s0 + $0x98] sm:$0xf]
  %v54 = vld [vmem:[%s0 + $0x9c] sm:$0xf]
  %v55 = vld [vmem:[%s0 + $0xa0] sm:$0xf]
  %v56 = vld [vmem:[%s0 + $0xa4] sm:$0xf]
  %v57 = vld [vmem:[%s0 + $0xa8] sm:$0xf]
  %v58 = vld [vmem:[%s0 + $0xac] sm:$0xf]
  %v59 = vld [vmem:[%s0 + $0xb0] sm:$0xf]
  %v60 = vld [vmem:[%s0 + $0xb4] sm:$0xf]
  %v61 = vld [vmem:[%s0 + $0xb8] sm:$0xf]
  %v62 = vld [vmem:[%s0 + $0xbc] sm:$0xf]
  %v63 = vld [vmem:[%s0 + $0xc0] sm:$0xf]
  %v64 = vld [vmem:[%s0 + $0xc4] sm:$0xf]
  %v65 = vld [vmem:[%s0 + $0xc8] sm:$0xf]
  %v66 = vld [vmem:[%s0 + $0xcc] sm:$0xf]
  %v67 = vld [vmem:[%s0 + $0xd0] sm:$0xf]
  %v68 = vld [vmem:[%s0 + $0xd4] sm:$0xf]
  %v69 = vld [vmem:[%s0 + $0xd8] sm:$0xf]
  %v70 = vld [vmem:[%s0 + $0xdc] sm:$0xf]
  %v71 = vld [vmem:[%s0 + $0xe0] sm:$0xf]
  %v72 = vld [vmem:[%s0 + $0xe4] sm:$0xf]
  %v73 = vld [vmem:[%s0 + $0xe8] sm:$0xf]
  %v74 = vld [vmem:[%s0 + $0xec] sm:$0xf]
  %v75 = vld [vmem:[%s0 + $0xf0] sm:$0xf]
  %v76 = vld [vmem:[%s0 + $0xf4] sm:$0xf]
  %v77 = vld [vmem:[%s0 + $0xf8] sm:$0xf]
  %v78 = vld [vmem:[%s0 + $0xfc] sm:$0xf]
  %v79 = vld [vmem:[%s0 + $0x100] sm:$0xf]
  %v80 = vld [vmem:[%s0 + $0x104] sm:$0xf]
  %v81 = vld [vmem:[%s0 + $0x108] sm:$0xf]
  %v82 = vld [vmem:[%s0 + $0x10c] sm:$0xf]
  %v83 = vld [vmem:[%s0 + $0x110] sm:$0xf]
  %v84 = vld [vmem:[%s0 + $0x114] sm:$0xf]
  %v85 = vld [vmem:[%s0 + $0x118] sm:$0xf]
  %v86 = vld [vmem:[%s0 + $0x11c] sm:$0xf]
  %v87 = vld [vmem:[%s0 + $0x120] sm:$0xf]
  %v88 = vld [vmem:[%s0 + $0x124] sm:$0xf]
  %v89 = vld [vmem:[%s0 + $0x128] sm:$0xf]
  %v90 = vld [vmem:[%s0 + $0x12c] sm:$0xf]
  %v91 = vld [vmem:[%s0 + $0x130] sm:$0xf]
  %v92 = vld [vmem:[%s0 + $0x134] sm:$0xf]
  %v93 = vld [vmem:[%s0 + $0x138] sm:$0xf]
  %v94 = vld [vmem:[%s0 + $0x13c] sm:$0xf]
  %v95 = vld [vmem:[%s0 + $0x140] sm:$0xf]
  %v96 = vld [vmem:[%s0 + $0x144] sm:$0xf]
  %v97 = vld [vmem:[%s0 + $0x148] sm:$0xf]
  %v98 = vld [vmem:[%s0 + $0x14c] sm:$0xf]
  %v99 = vld [vmem:[%s0 + $0x150] sm:$0xf]
  %v100 = vld [vmem:[%s0 + $0x154] sm:$0xf]
  %v101 = vld [vmem:[%s0 + $0x158] sm:$0xf]
  %v102 = vld [vmem:[%s0 + $0x15c] sm:$0xf]
  %v103 = vld [vmem:[%s0 + $0x160] sm:$0xf]
  %v104 = vld [vmem:[%s0 + $0x164] sm:$0xf]
  %v105 = vld [vmem:[%s0 + $0x168] sm:$0xf]
  %v106 = vld [vmem:[%s0 + $0x16c] sm:$0xf]
  %v107 = vld [vmem:[%s0 + $0x170] sm:$0xf]
  %v108 = vld [vmem:[%s0 + $0x174] sm:$0xf]
  %v109 = vld [vmem:[%s0 + $0x178] sm:$0xf]
  %v110 = vld [vmem:[%s0 + $0x17c] sm:$0xf]
  %v111 = vld [vmem:[%s0 + $0x180] sm:$0xf]
  %v112 = vld [vmem:[%s0 + $0x184] sm:$0xf]
  %v113 = vld [vmem:[%s0 + $0x188] sm:$0xf]
  %v114 = vld [vmem:[%s0 + $0x18c] sm:$0xf]
  %v115 = vld [vmem:[%s0 + $0x190] sm:$0xf]
  %v116 = vld [vmem:[%s0 + $0x194] sm:$0xf]
  %v117 = vld [vmem:[%s0 + $0x198] sm:$0xf]
  %v118 = vld [vmem:[%s0 + $0x19c] sm:$0xf]
  %v119 = vld [vmem:[%s0 + $0x1a0] sm:$0xf]
  %v120 = vld [vmem:[%s0 + $0x1a4] sm:$0xf]
  %v121 = vld [vmem:[%s0 + $0x1a8] sm:$0xf]
  %v122 = vld [vmem:[%s0 + $0x1ac] sm:$0xf]
  %v123 = vld [vmem:[%s0 + $0x1b0] sm:$0xf]
  %v124 = vld [vmem:[%s0 + $0x1b4] sm:$0xf]
  %v125 = vld [vmem:[%s0 + $0x1b8] sm:$0xf]
  %v126 = vld [vmem:[%s0 + $0x1bc] sm:$0xf]
  %v127 = vld [vmem:[%s0 + $0x1c0] sm:$0xf]
  %v128 = vld [vmem:[%s0 + $0x1c4] sm:$0xf]
  %v129 = vld [vmem:[%s0 + $0x1c8] sm:$0xf]
  %v130 = vld [vmem:[%s0 + $0x1cc] sm:$0xf]
  %v131 = vld [vmem:[%s0 + $0x1d0] sm:$0xf]
  %v132 = vld [vmem:[%s0 + $0x1d4] sm:$0xf]
  %v133 = vld [vmem:[%s0 + $0x1d8] sm:$0xf]
  %v134 = vld [vmem:[%s0 + $0x1dc] sm:$0xf]
  %v135 = vld [vmem:[%s0 + $0x1e0] sm:$0xf]
  %v136 = vld [vmem:[%s0 + $0x1e4] sm:$0xf]
  %v137 = vld [vmem:[%s0 + $0x1e8] sm:$0xf]
  %v138 = vld [vmem:[%s0 + $0x1ec] sm:$0xf]
  %v139 = vld [vmem:[%s0 + $0x1f0] sm:$0xf]
  %v140 = vld [vmem:[%s0 + $0x1f4] sm:$0xf]
  %v141 = vld [vmem:[%s0 + $0x1f8] sm:$0xf]
  %v142 = vld [vmem:[%s0 + $0x1fc] sm:$0xf]
  %v143 = vld [vmem:[%s0 + $0x200] sm:$0xf]
  %v144 = vld [vmem:[%s0 + $0x204] sm:$0xf]
  %v145 = vld [vmem:[%s0 + $0x208] sm:$0xf]
  %v146 = vld [vmem:[%s0 + $0x20c] sm:$0xf]
  %v147 = vld [vmem:[%s0 + $0x210] sm:$0xf]
  %v148 = vld [vmem:[%s0 + $0x214] sm:$0xf]
  %v149 = vld [vmem:[%s0 + $0x218] sm:$0xf]
  %v150 = vld [vmem:[%s0 + $0x21c] sm:$0xf]
  %v151 = vld [vmem:[%s0 + $0x220] sm:$0xf]
  %v152 = vld [vmem:[%s0 + $0x224] sm:$0xf]
  %v153 = vld [vmem:[%s0 + $0x228] sm:$0xf]
  %v154 = vld [vmem:[%s0 + $0x22c] sm:$0xf]
  %v155 = vld [vmem:[%s0 + $0x230] sm:$0xf]
  %v156 = vld [vmem:[%s0 + $0x234] sm:$0xf]
  %v157 = vld [vmem:[%s0 + $0x238] sm:$0xf]
  %v158 = vld [vmem:[%s0 + $0x23c] sm:$0xf]
  %v159 = vld [vmem:[%s0 + $0x240] sm:$0xf]
  %v160 = vld [vmem:[%s0 + $0x244] sm:$0xf]
  %v161 = vld [vmem:[%s0 + $0x248] sm:$0xf]
  %v162 = vld [vmem:[%s0 + $0x24c] sm:$0xf]
  %v163 = vld [vmem:[%s0 + $0x250] sm:$0xf]
  %v164 = vld [vmem:[%s0 + $0x254] sm:$0xf]
  %v165 = vld [vmem:[%s0 + $0x258] sm:$0xf]
  %v166 = vld [vmem:[%s0 + $0x25c] sm:$0xf]
  %v167 = vld [vmem:[%s0 + $0x260] sm:$0xf]
  %v168 = vld [vmem:[%s0 + $0x264] sm:$0xf]
  %v169 = vld [vmem:[%s0 + $0x268] sm:$0xf]
  %v170 = vld [vmem:[%s0 + $0x26c] sm:$0xf]
  %v171 = vld [vmem:[%s0 + $0x270] sm:$0xf]
  %v172 = vld [vmem:[%s0 + $0x274] sm:$0xf]
  %v173 = vld [vmem:[%s0 + $0x278] sm:$0xf]
  %v174 = vld [vmem:[%s0 + $0x27c] sm:$0xf]
  %v175 = vld [vmem:[%s0 + $0x280] sm:$0xf]
  %v176 = vld [vmem:[%s0 + $0x284] sm:$0xf]
  %v177 = vld [vmem:[%s0 + $0x288] sm:$0xf]
  %v178 = vld [vmem:[%s0 + $0x28c] sm:$0xf]
  %v179 = vld [vmem:[%s0 + $0x290] sm:$0xf]
  %v180 = vld [vmem:[%s0 + $0x294] sm:$0xf]
  %v181 = vld [vmem:[%s0 + $0x298] sm:$0xf]
  %v182 = vld [vmem:[%s0 + $0x29c] sm:$0xf]
  %v183 = vld [vmem:[%s0 + $0x2a0] sm:$0xf]
  %v184 = vld [vmem:[%s0 + $0x2a4] sm:$0xf]
  %v185 = vld [vmem:[%s0 + $0x2a8] sm:$0xf]
  %v186 = vld [vmem:[%s0 + $0x2ac] sm:$0xf]
  %v187 = vld [vmem:[%s0 + $0x2b0] sm:$0xf]
  %v188 = vld [vmem:[%s0 + $0x2b4] sm:$0xf]
  %v189 = vld [vmem:[%s0 + $0x2b8] sm:$0xf]
  %v190 = vld [vmem:[%s0 + $0x2bc] sm:$0xf]
  %v191 = vld [vmem:[%s0 + $0x2c0] sm:$0xf]
  %v192 = vld [vmem:[%s0 + $0x2c4] sm:$0xf]
  %v193 = vld [vmem:[%s0 + $0x2c8] sm:$0xf]
  %v194 = vld [vmem:[%s0 + $0x2cc] sm:$0xf]
  %v195 = vld [vmem:[%s0 + $0x2d0] sm:$0xf]
  %v196 = vld [vmem:[%s0 + $0x2d4] sm:$0xf]
  %v197 = vld [vmem:[%s0 + $0x2d8] sm:$0xf]
  %v198 = vld [vmem:[%s0 + $0x2dc] sm:$0xf]
  %v199 = vld [vmem:[%s0 + $0x2e0] sm:$0xf]
  %v200 = vld [vmem:[%s0 + $0x2e4] sm:$0xf]
  %v201 = vld [vmem:[%s0 + $0x2e8] sm:$0xf]
  %v202 = vld [vmem:[%s0 + $0x2ec] sm:$0xf]
  %v203 = vld [vmem:[%s0 + $0x2f0] sm:$0xf]
  %v204 = vld [vmem:[%s0 + $0x2f4] sm:$0xf]
  %v205 = vld [vmem:[%s0 + $0x2f8] sm:$0xf]
  %v206 = vld [vmem:[%s0 + $0x2fc] sm:$0xf]
  %v207 = vld [vmem:[%s0 + $0x300] sm:$0xf]
  %v208 = vld [vmem:[%s0 + $0x304] sm:$0xf]
  %v209 = vld [vmem:[%s0 + $0x308] sm:$0xf]
  %v210 = vld [vmem:[%s0 + $0x30c] sm:$0xf]
  %v211 = vld [vmem:[%s1] sm:$0xf]
  %v212 = vld [vmem:[%s1 + $0x4] sm:$0xf]
  %v213 = vld [vmem:[%s1 + $0x8] sm:$0xf]
  %v214 = vld [vmem:[%s1 + $0xc] sm:$0xf]
  %v215 = vld [vmem:[%s1 + $0x10] sm:$0xf]
  %v216 = vld [vmem:[%s1 + $0x14] sm:$0xf]
  %v217 = vld [vmem:[%s1 + $0x18] sm:$0xf]
  %v218 = vld [vmem:[%s1 + $0x1c] sm:$0xf]
  %v219 = vld [vmem:[%s1 + $0x20] sm:$0xf]
  %v220 = vld [vmem:[%s1 + $0x24] sm:$0xf]
  %v221 = vld [vmem:[%s1 + $0x28] sm:$0xf]
  %v222 = vld [vmem:[%s1 + $0x2c] sm:$0xf]
  %v223 = vld [vmem:[%s1 + $0x30] sm:$0xf]
  %v224 = vld [vmem:[%s1 + $0x34] sm:$0xf]
  %v225 = vld [vmem:[%s1 + $0x38] sm:$0xf]
  %v226 = vld [vmem:[%s1 + $0x3c] sm:$0xf]
  %v227 = vld [vmem:[%s2] sm:$0x1]
  %v229 = vlaneseq
  %v230 = vshrl.u32 %v229, 7
  %v231 = vsub.s32 0, %v230
  %v232 = vrot.slane %v227, %v231
  %v430 = vunpack.c.l.b16 %v15
  %v431 = vunpack.c.l.b16 %v16
  %v432 = vunpack.c.l.b16 %v17
  %v433 = vunpack.c.l.b16 %v18
  %v434 = vunpack.c.l.b16 %v19
  %v435 = vunpack.c.l.b16 %v20
  %v436 = vunpack.c.l.b16 %v21
  %v437 = vunpack.c.l.b16 %v22
  %v438 = vunpack.c.l.b16 %v23
  %v439 = vunpack.c.l.b16 %v24
  %v440 = vunpack.c.l.b16 %v25
  %v441 = vunpack.c.l.b16 %v26
  %v442 = vunpack.c.l.b16 %v27
  %v443 = vunpack.c.l.b16 %v28
  %v444 = vunpack.c.l.b16 %v29
  %v445 = vunpack.c.l.b16 %v30
  %v446 = vunpack.c.l.b16 %v31
  %v447 = vunpack.c.l.b16 %v32
  %v448 = vunpack.c.l.b16 %v33
  %v449 = vunpack.c.l.b16 %v34
  %v450 = vunpack.c.l.b16 %v35
  %v451 = vunpack.c.l.b16 %v36
  %v452 = vunpack.c.l.b16 %v37
  %v453 = vunpack.c.l.b16 %v38
  %v454 = vunpack.c.l.b16 %v39
  %v455 = vunpack.c.l.b16 %v40
  %v456 = vunpack.c.l.b16 %v41
  %v457 = vunpack.c.l.b16 %v42
  %v458 = vunpack.c.l.b16 %v43
  %v459 = vunpack.c.l.b16 %v44
  %v460 = vunpack.c.l.b16 %v45
  %v461 = vunpack.c.l.b16 %v46
  %v462 = vunpack.c.l.b16 %v47
  %v463 = vunpack.c.l.b16 %v48
  %v464 = vunpack.c.l.b16 %v49
  %v465 = vunpack.c.l.b16 %v50
  %v466 = vunpack.c.l.b16 %v51
  %v467 = vunpack.c.l.b16 %v52
  %v468 = vunpack.c.l.b16 %v53
  %v469 = vunpack.c.l.b16 %v54
  %v470 = vunpack.c.l.b16 %v55
  %v471 = vunpack.c.l.b16 %v56
  %v472 = vunpack.c.l.b16 %v57
  %v473 = vunpack.c.l.b16 %v58
  %v474 = vunpack.c.l.b16 %v59
  %v475 = vunpack.c.l.b16 %v60
  %v476 = vunpack.c.l.b16 %v61
  %v477 = vunpack.c.l.b16 %v62
  %v478 = vunpack.c.l.b16 %v63
  %v479 = vunpack.c.l.b16 %v64
  %v480 = vunpack.c.l.b16 %v65
  %v481 = vunpack.c.l.b16 %v66
  %v482 = vunpack.c.l.b16 %v67
  %v483 = vunpack.c.l.b16 %v68
  %v484 = vunpack.c.l.b16 %v69
  %v485 = vunpack.c.l.b16 %v70
  %v486 = vunpack.c.l.b16 %v71
  %v487 = vunpack.c.l.b16 %v72
  %v488 = vunpack.c.l.b16 %v73
  %v489 = vunpack.c.l.b16 %v74
  %v490 = vunpack.c.l.b16 %v75
  %v491 = vunpack.c.l.b16 %v76
  %v492 = vunpack.c.l.b16 %v77
  %v493 = vunpack.c.l.b16 %v78
  %v494 = vunpack.c.l.b16 %v79
  %v495 = vunpack.c.l.b16 %v80
  %v496 = vunpack.c.l.b16 %v81
  %v497 = vunpack.c.l.b16 %v82
  %v498 = vunpack.c.l.b16 %v83
  %v499 = vunpack.c.l.b16 %v84
  %v500 = vunpack.c.l.b16 %v85
  %v501 = vunpack.c.l.b16 %v86
  %v502 = vunpack.c.l.b16 %v87
  %v503 = vunpack.c.l.b16 %v88
  %v504 = vunpack.c.l.b16 %v89
  %v505 = vunpack.c.l.b16 %v90
  %v506 = vunpack.c.l.b16 %v91
  %v507 = vunpack.c.l.b16 %v92
  %v508 = vunpack.c.l.b16 %v93
  %v509 = vunpack.c.l.b16 %v94
  %v510 = vunpack.c.l.b16 %v95
  %v511 = vunpack.c.l.b16 %v96
  %v512 = vunpack.c.l.b16 %v97
  %v513 = vunpack.c.l.b16 %v98
  %v514 = vunpack.c.l.b16 %v99
  %v515 = vunpack.c.l.b16 %v100
  %v516 = vunpack.c.l.b16 %v101
  %v517 = vunpack.c.l.b16 %v102
  %v518 = vunpack.c.l.b16 %v103
  %v519 = vunpack.c.l.b16 %v104
  %v520 = vunpack.c.l.b16 %v105
  %v521 = vunpack.c.l.b16 %v106
  %v522 = vunpack.c.l.b16 %v107
  %v523 = vunpack.c.l.b16 %v108
  %v524 = vunpack.c.l.b16 %v109
  %v525 = vunpack.c.l.b16 %v110
  %v526 = vunpack.c.l.b16 %v111
  %v527 = vunpack.c.l.b16 %v112
  %v528 = vunpack.c.l.b16 %v113
  %v529 = vunpack.c.l.b16 %v114
  %v530 = vunpack.c.l.b16 %v115
  %v531 = vunpack.c.l.b16 %v116
  %v532 = vunpack.c.l.b16 %v117
  %v533 = vunpack.c.l.b16 %v118
  %v534 = vunpack.c.l.b16 %v119
  %v535 = vunpack.c.l.b16 %v120
  %v536 = vunpack.c.l.b16 %v121
  %v537 = vunpack.c.l.b16 %v122
  %v538 = vunpack.c.l.b16 %v123
  %v539 = vunpack.c.l.b16 %v124
  %v540 = vunpack.c.l.b16 %v125
  %v541 = vunpack.c.l.b16 %v126
  %v542 = vunpack.c.l.b16 %v127
  %v543 = vunpack.c.l.b16 %v128
  %v544 = vunpack.c.l.b16 %v129
  %v545 = vunpack.c.l.b16 %v130
  %v546 = vunpack.c.l.b16 %v131
  %v547 = vunpack.c.l.b16 %v132
  %v548 = vunpack.c.l.b16 %v133
  %v549 = vunpack.c.l.b16 %v134
  %v550 = vunpack.c.l.b16 %v135
  %v551 = vunpack.c.l.b16 %v136
  %v552 = vunpack.c.l.b16 %v137
  %v553 = vunpack.c.l.b16 %v138
  %v554 = vunpack.c.l.b16 %v139
  %v555 = vunpack.c.l.b16 %v140
  %v556 = vunpack.c.l.b16 %v141
  %v557 = vunpack.c.l.b16 %v142
  %v558 = vunpack.c.l.b16 %v143
  %v559 = vunpack.c.l.b16 %v144
  %v560 = vunpack.c.l.b16 %v145
  %v561 = vunpack.c.l.b16 %v146
  %v562 = vunpack.c.l.b16 %v147
  %v563 = vunpack.c.l.b16 %v148
  %v564 = vunpack.c.l.b16 %v149
  %v565 = vunpack.c.l.b16 %v150
  %v566 = vunpack.c.l.b16 %v151
  %v567 = vunpack.c.l.b16 %v152
  %v568 = vunpack.c.l.b16 %v153
  %v569 = vunpack.c.l.b16 %v154
  %v570 = vunpack.c.l.b16 %v155
  %v571 = vunpack.c.l.b16 %v156
  %v572 = vunpack.c.l.b16 %v157
  %v573 = vunpack.c.l.b16 %v158
  %v574 = vunpack.c.l.b16 %v159
  %v575 = vunpack.c.l.b16 %v160
  %v576 = vunpack.c.l.b16 %v161
  %v577 = vunpack.c.l.b16 %v162
  %v578 = vunpack.c.l.b16 %v163
  %v579 = vunpack.c.l.b16 %v164
  %v580 = vunpack.c.l.b16 %v165
  %v581 = vunpack.c.l.b16 %v166
  %v582 = vunpack.c.l.b16 %v167
  %v583 = vunpack.c.l.b16 %v168
  %v584 = vunpack.c.l.b16 %v169
  %v585 = vunpack.c.l.b16 %v170
  %v586 = vunpack.c.l.b16 %v171
  %v587 = vunpack.c.l.b16 %v172
  %v588 = vunpack.c.l.b16 %v173
  %v589 = vunpack.c.l.b16 %v174
  %v590 = vunpack.c.l.b16 %v175
  %v591 = vunpack.c.l.b16 %v176
  %v592 = vunpack.c.l.b16 %v177
  %v593 = vunpack.c.l.b16 %v178
  %v594 = vunpack.c.l.b16 %v179
  %v595 = vunpack.c.l.b16 %v180
  %v596 = vunpack.c.l.b16 %v181
  %v597 = vunpack.c.l.b16 %v182
  %v598 = vunpack.c.l.b16 %v183
  %v599 = vunpack.c.l.b16 %v184
  %v600 = vunpack.c.l.b16 %v185
  %v601 = vunpack.c.l.b16 %v186
  %v602 = vunpack.c.l.b16 %v187
  %v603 = vunpack.c.l.b16 %v188
  %v604 = vunpack.c.l.b16 %v189
  %v605 = vunpack.c.l.b16 %v190
  %v606 = vunpack.c.l.b16 %v191
  %v607 = vunpack.c.l.b16 %v192
  %v608 = vunpack.c.l.b16 %v193
  %v609 = vunpack.c.l.b16 %v194
  %v610 = vunpack.c.l.b16 %v195
  %v611 = vunpack.c.l.b16 %v196
  %v612 = vunpack.c.l.b16 %v197
  %v613 = vunpack.c.l.b16 %v198
  %v614 = vunpack.c.l.b16 %v199
  %v615 = vunpack.c.l.b16 %v200
  %v616 = vunpack.c.l.b16 %v201
  %v617 = vunpack.c.l.b16 %v202
  %v618 = vunpack.c.l.b16 %v203
  %v619 = vunpack.c.l.b16 %v204
  %v620 = vunpack.c.l.b16 %v205
  %v621 = vunpack.c.l.b16 %v206
  %v622 = vunpack.c.l.b16 %v207
  %v623 = vunpack.c.l.b16 %v208
  %v624 = vunpack.c.l.b16 %v209
  %v625 = vunpack.c.l.b16 %v210
  %v626 = vpack.c.b16 %v431, %v430
  %v627 = vpack.c.b16 %v433, %v432
  %v628 = vpack.c.b16 %v435, %v434
  %v629 = vpack.c.b16 %v437, %v436
  %v630 = vpack.c.b16 %v439, %v438
  %v631 = vpack.c.b16 %v441, %v440
  %v632 = vpack.c.b16 %v443, %v442
  %v633 = vpack.c.b16 %v445, %v444
  %v634 = vpack.c.b16 %v447, %v446
  %v635 = vpack.c.b16 %v449, %v448
  %v636 = vpack.c.b16 %v451, %v450
  %v637 = vpack.c.b16 %v453, %v452
  %v638 = vpack.c.b16 %v455, %v454
  %v639 = vpack.c.b16 %v457, %v456
  %v640 = vpack.c.b16 %v459, %v458
  %v641 = vpack.c.b16 %v461, %v460
  %v642 = vpack.c.b16 %v463, %v462
  %v643 = vpack.c.b16 %v465, %v464
  %v644 = vpack.c.b16 %v467, %v466
  %v645 = vpack.c.b16 %v469, %v468
  %v646 = vpack.c.b16 %v471, %v470
  %v647 = vpack.c.b16 %v473, %v472
  %v648 = vpack.c.b16 %v475, %v474
  %v649 = vpack.c.b16 %v477, %v476
  %v650 = vpack.c.b16 %v479, %v478
  %v651 = vpack.c.b16 %v481, %v480
  %v652 = vpack.c.b16 %v483, %v482
  %v653 = vpack.c.b16 %v485, %v484
  %v654 = vpack.c.b16 %v487, %v486
  %v655 = vpack.c.b16 %v489, %v488
  %v656 = vpack.c.b16 %v491, %v490
  %v657 = vpack.c.b16 %v493, %v492
  %v658 = vpack.c.b16 %v495, %v494
  %v659 = vpack.c.b16 %v497, %v496
  %v660 = vpack.c.b16 %v499, %v498
  %v661 = vpack.c.b16 %v501, %v500
  %v662 = vpack.c.b16 %v503, %v502
  %v663 = vpack.c.b16 %v505, %v504
  %v664 = vpack.c.b16 %v507, %v506
  %v665 = vpack.c.b16 %v509, %v508
  %v666 = vpack.c.b16 %v511, %v510
  %v667 = vpack.c.b16 %v513, %v512
  %v668 = vpack.c.b16 %v515, %v514
  %v669 = vpack.c.b16 %v517, %v516
  %v670 = vpack.c.b16 %v519, %v518
  %v671 = vpack.c.b16 %v521, %v520
  %v672 = vpack.c.b16 %v523, %v522
  %v673 = vpack.c.b16 %v525, %v524
  %v674 = vpack.c.b16 %v527, %v526
  %v675 = vpack.c.b16 %v529, %v528
  %v676 = vpack.c.b16 %v531, %v530
  %v677 = vpack.c.b16 %v533, %v532
  %v678 = vpack.c.b16 %v535, %v534
  %v679 = vpack.c.b16 %v537, %v536
  %v680 = vpack.c.b16 %v539, %v538
  %v681 = vpack.c.b16 %v541, %v540
  %v682 = vpack.c.b16 %v543, %v542
  %v683 = vpack.c.b16 %v545, %v544
  %v684 = vpack.c.b16 %v547, %v546
  %v685 = vpack.c.b16 %v549, %v548
  %v686 = vpack.c.b16 %v551, %v550
  %v687 = vpack.c.b16 %v553, %v552
  %v688 = vpack.c.b16 %v555, %v554
  %v689 = vpack.c.b16 %v557, %v556
  %v690 = vpack.c.b16 %v559, %v558
  %v691 = vpack.c.b16 %v561, %v560
  %v692 = vpack.c.b16 %v563, %v562
  %v693 = vpack.c.b16 %v565, %v564
  %v694 = vpack.c.b16 %v567, %v566
  %v695 = vpack.c.b16 %v569, %v568
  %v696 = vpack.c.b16 %v571, %v570
  %v697 = vpack.c.b16 %v573, %v572
  %v698 = vpack.c.b16 %v575, %v574
  %v699 = vpack.c.b16 %v577, %v576
  %v700 = vpack.c.b16 %v579, %v578
  %v701 = vpack.c.b16 %v581, %v580
  %v702 = vpack.c.b16 %v583, %v582
  %v703 = vpack.c.b16 %v585, %v584
  %v704 = vpack.c.b16 %v587, %v586
  %v705 = vpack.c.b16 %v589, %v588
  %v706 = vpack.c.b16 %v591, %v590
  %v707 = vpack.c.b16 %v593, %v592
  %v708 = vpack.c.b16 %v595, %v594
  %v709 = vpack.c.b16 %v597, %v596
  %v710 = vpack.c.b16 %v599, %v598
  %v711 = vpack.c.b16 %v601, %v600
  %v712 = vpack.c.b16 %v603, %v602
  %v713 = vpack.c.b16 %v605, %v604
  %v714 = vpack.c.b16 %v607, %v606
  %v715 = vpack.c.b16 %v609, %v608
  %v716 = vpack.c.b16 %v611, %v610
  %v717 = vpack.c.b16 %v613, %v612
  %v718 = vpack.c.b16 %v615, %v614
  %v719 = vpack.c.b16 %v617, %v616
  %v720 = vpack.c.b16 %v619, %v618
  %v721 = vpack.c.b16 %v621, %v620
  %v722 = vpack.c.b16 %v623, %v622
  %v723 = vpack.c.b16 %v625, %v624
  %v838 = vunpack.c.l.b16 %v211
  %v839 = vunpack.c.l.b16 %v212
  %v840 = vunpack.c.l.b16 %v213
  %v841 = vunpack.c.l.b16 %v214
  %v842 = vunpack.c.l.b16 %v215
  %v843 = vunpack.c.l.b16 %v216
  %v844 = vunpack.c.l.b16 %v217
  %v845 = vunpack.c.l.b16 %v218
  %v846 = vunpack.c.l.b16 %v219
  %v847 = vunpack.c.l.b16 %v220
  %v848 = vunpack.c.l.b16 %v221
  %v849 = vunpack.c.l.b16 %v222
  %v850 = vunpack.c.l.b16 %v223
  %v851 = vunpack.c.l.b16 %v224
  %v852 = vunpack.c.l.b16 %v225
  %v853 = vunpack.c.l.b16 %v226
  %v854 = vpack.c.b16 %v839, %v838
  %v855 = vpack.c.b16 %v841, %v840
  %v856 = vpack.c.b16 %v843, %v842
  %v857 = vpack.c.b16 %v845, %v844
  %v858 = vpack.c.b16 %v847, %v846
  %v859 = vpack.c.b16 %v849, %v848
  %v860 = vpack.c.b16 %v851, %v850
  %v861 = vpack.c.b16 %v853, %v852
  %870 = vmatprep.subr.bf16.mxu0 0
  %871 = vmatpush1.bf16.msra.mxu0 %v861
  %872 = vmatprep.subr.bf16.mxu0 0
  %873 = vmatpush1.bf16.msra.mxu0 %v860
  %874 = vmatprep.subr.bf16.mxu0 0
  %875 = vmatpush1.bf16.msra.mxu0 %v859
  %876 = vmatprep.subr.bf16.mxu0 0
  %877 = vmatpush1.bf16.msra.mxu0 %v858
  %878 = vmatprep.subr.bf16.mxu0 0
  %879 = vmatpush1.bf16.msra.mxu0 %v857
  %880 = vmatprep.subr.bf16.mxu0 0
  %881 = vmatpush1.bf16.msra.mxu0 %v856
  %882 = vmatprep.subr.bf16.mxu0 0
  %883 = vmatpush1.bf16.msra.mxu0 %v855
  %884 = vmatprep.subr.bf16.mxu0 0
  %885 = vmatpush1.bf16.msra.mxu0 %v854
  %886 = vmatprep.subr.bf16.mxu0 0
  %887 = vmatpush2.bf16.msra.mxu0 0
  %888 = vmatprep.subr.bf16.mxu0 0
  %889 = vmatpush2.bf16.msra.mxu0 0
  %890 = vmatprep.subr.bf16.mxu0 0
  %891 = vmatpush2.bf16.msra.mxu0 0
  %892 = vmatprep.subr.bf16.mxu0 0
  %893 = vmatpush2.bf16.msra.mxu0 0
  %894 = vmatprep.subr.bf16.mxu0 0
  %895 = vmatpush2.bf16.msra.mxu0 0
  %896 = vmatprep.subr.bf16.mxu0 0
  %897 = vmatpush2.bf16.msra.mxu0 0
  %898 = vmatprep.subr.bf16.mxu0 0
  %899 = vmatpush2.bf16.msra.mxu0 0
  %900 = vmatprep.subr.bf16.mxu0 0
  %901 = vmatpush2.bf16.msra.mxu0 0
  %902 = vmatprep.mubr.bf16.mxu0 0
  %903 = vmatmul.mubr.bf16.gmra.mxu0 %v626
  %v904 = vpop.f32.mrf.mxu0
  %v905 = vadd.f32 %v232, %v904
  %v906 = vpop.f32.mrf.mxu0
  %v907 = vpop.f32.mrf.mxu0
  %v908 = vadd.f32 %v232, %v907
  %v909 = vpop.f32.mrf.mxu0
  %910 = vmatprep.mubr.bf16.mxu0 0
  %911 = vmatmul.mubr.bf16.gmra.mxu0 %v627
  %v912 = vpop.f32.mrf.mxu0
  %v913 = vadd.f32 %v232, %v912
  %v914 = vpop.f32.mrf.mxu0
  %v915 = vpop.f32.mrf.mxu0
  %v916 = vadd.f32 %v232, %v915
  %v917 = vpop.f32.mrf.mxu0
  %918 = vmatprep.mubr.bf16.mxu0 0
  %919 = vmatmul.mubr.bf16.gmra.mxu0 %v628
  %v920 = vpop.f32.mrf.mxu0
  %v921 = vadd.f32 %v232, %v920
  %v922 = vpop.f32.mrf.mxu0
  %v923 = vpop.f32.mrf.mxu0
  %v924 = vadd.f32 %v232, %v923
  %v925 = vpop.f32.mrf.mxu0
  %926 = vmatprep.mubr.bf16.mxu0 0
  %927 = vmatmul.mubr.bf16.gmra.mxu0 %v629
  %v928 = vpop.f32.mrf.mxu0
  %v929 = vadd.f32 %v232, %v928
  %v930 = vpop.f32.mrf.mxu0
  %v931 = vpop.f32.mrf.mxu0
  %v932 = vadd.f32 %v232, %v931
  %v933 = vpop.f32.mrf.mxu0
  %934 = vmatprep.mubr.bf16.mxu0 0
  %935 = vmatmul.mubr.bf16.gmra.mxu0 %v630
  %v936 = vpop.f32.mrf.mxu0
  %v937 = vadd.f32 %v232, %v936
  %v938 = vpop.f32.mrf.mxu0
  %v939 = vpop.f32.mrf.mxu0
  %v940 = vadd.f32 %v232, %v939
  %v941 = vpop.f32.mrf.mxu0
  %942 = vmatprep.mubr.bf16.mxu0 0
  %943 = vmatmul.mubr.bf16.gmra.mxu0 %v631
  %v944 = vpop.f32.mrf.mxu0
  %v945 = vadd.f32 %v232, %v944
  %v946 = vpop.f32.mrf.mxu0
  %v947 = vpop.f32.mrf.mxu0
  %v948 = vadd.f32 %v232, %v947
  %v949 = vpop.f32.mrf.mxu0
  %950 = vmatprep.mubr.bf16.mxu0 0
  %951 = vmatmul.mubr.bf16.gmra.mxu0 %v632
  %v952 = vpop.f32.mrf.mxu0
  %v953 = vadd.f32 %v232, %v952
  %v954 = vpop.f32.mrf.mxu0
  %v955 = vpop.f32.mrf.mxu0
  %v956 = vadd.f32 %v232, %v955
  %v957 = vpop.f32.mrf.mxu0
  %958 = vmatprep.mubr.bf16.mxu0 0
  %959 = vmatmul.mubr.bf16.gmra.mxu0 %v633
  %v960 = vpop.f32.mrf.mxu0
  %v961 = vadd.f32 %v232, %v960
  %v962 = vpop.f32.mrf.mxu0
  %v963 = vpop.f32.mrf.mxu0
  %v964 = vadd.f32 %v232, %v963
  %v965 = vpop.f32.mrf.mxu0
  %966 = vmatprep.mubr.bf16.mxu0 0
  %967 = vmatmul.mubr.bf16.gmra.mxu0 %v634
  %v968 = vpop.f32.mrf.mxu0
  %v969 = vadd.f32 %v232, %v968
  %v970 = vpop.f32.mrf.mxu0
  %v971 = vpop.f32.mrf.mxu0
  %v972 = vadd.f32 %v232, %v971
  %v973 = vpop.f32.mrf.mxu0
  %974 = vmatprep.mubr.bf16.mxu0 0
  %975 = vmatmul.mubr.bf16.gmra.mxu0 %v635
  %v976 = vpop.f32.mrf.mxu0
  %v977 = vadd.f32 %v232, %v976
  %v978 = vpop.f32.mrf.mxu0
  %v979 = vpop.f32.mrf.mxu0
  %v980 = vadd.f32 %v232, %v979
  %v981 = vpop.f32.mrf.mxu0
  %982 = vmatprep.mubr.bf16.mxu0 0
  %983 = vmatmul.mubr.bf16.gmra.mxu0 %v636
  %v984 = vpop.f32.mrf.mxu0
  %v985 = vadd.f32 %v232, %v984
  %v986 = vpop.f32.mrf.mxu0
  %v987 = vpop.f32.mrf.mxu0
  %v988 = vadd.f32 %v232, %v987
  %v989 = vpop.f32.mrf.mxu0
  %990 = vmatprep.mubr.bf16.mxu0 0
  %991 = vmatmul.mubr.bf16.gmra.mxu0 %v637
  %v992 = vpop.f32.mrf.mxu0
  %v993 = vadd.f32 %v232, %v992
  %v994 = vpop.f32.mrf.mxu0
  %v995 = vpop.f32.mrf.mxu0
  %v996 = vadd.f32 %v232, %v995
  %v997 = vpop.f32.mrf.mxu0
  %998 = vmatprep.mubr.bf16.mxu0 0
  %999 = vmatmul.mubr.bf16.gmra.mxu0 %v638
  %v1000 = vpop.f32.mrf.mxu0
  %v1001 = vadd.f32 %v232, %v1000
  %v1002 = vpop.f32.mrf.mxu0
  %v1003 = vpop.f32.mrf.mxu0
  %v1004 = vadd.f32 %v232, %v1003
  %v1005 = vpop.f32.mrf.mxu0
  %1006 = vmatprep.mubr.bf16.mxu0 0
  %1007 = vmatmul.mubr.bf16.gmra.mxu0 %v639
  %v1008 = vpop.f32.mrf.mxu0
  %v1009 = vadd.f32 %v232, %v1008
  %v1010 = vpop.f32.mrf.mxu0
  %v1011 = vpop.f32.mrf.mxu0
  %v1012 = vadd.f32 %v232, %v1011
  %v1013 = vpop.f32.mrf.mxu0
  %1014 = vmatprep.mubr.bf16.mxu0 0
  %1015 = vmatmul.mubr.bf16.gmra.mxu0 %v640
  %v1016 = vpop.f32.mrf.mxu0
  %v1017 = vadd.f32 %v232, %v1016
  %v1018 = vpop.f32.mrf.mxu0
  %v1019 = vpop.f32.mrf.mxu0
  %v1020 = vadd.f32 %v232, %v1019
  %v1021 = vpop.f32.mrf.mxu0
  %1022 = vmatprep.mubr.bf16.mxu0 0
  %1023 = vmatmul.mubr.bf16.gmra.mxu0 %v641
  %v1024 = vpop.f32.mrf.mxu0
  %v1025 = vadd.f32 %v232, %v1024
  %v1026 = vpop.f32.mrf.mxu0
  %v1027 = vpop.f32.mrf.mxu0
  %v1028 = vadd.f32 %v232, %v1027
  %v1029 = vpop.f32.mrf.mxu0
  %1030 = vmatprep.mubr.bf16.mxu0 0
  %1031 = vmatmul.mubr.bf16.gmra.mxu0 %v642
  %v1032 = vpop.f32.mrf.mxu0
  %v1033 = vadd.f32 %v232, %v1032
  %v1034 = vpop.f32.mrf.mxu0
  %v1035 = vpop.f32.mrf.mxu0
  %v1036 = vadd.f32 %v232, %v1035
  %v1037 = vpop.f32.mrf.mxu0
  %1038 = vmatprep.mubr.bf16.mxu0 0
  %1039 = vmatmul.mubr.bf16.gmra.mxu0 %v643
  %v1040 = vpop.f32.mrf.mxu0
  %v1041 = vadd.f32 %v232, %v1040
  %v1042 = vpop.f32.mrf.mxu0
  %v1043 = vpop.f32.mrf.mxu0
  %v1044 = vadd.f32 %v232, %v1043
  %v1045 = vpop.f32.mrf.mxu0
  %1046 = vmatprep.mubr.bf16.mxu0 0
  %1047 = vmatmul.mubr.bf16.gmra.mxu0 %v644
  %v1048 = vpop.f32.mrf.mxu0
  %v1049 = vadd.f32 %v232, %v1048
  %v1050 = vpop.f32.mrf.mxu0
  %v1051 = vpop.f32.mrf.mxu0
  %v1052 = vadd.f32 %v232, %v1051
  %v1053 = vpop.f32.mrf.mxu0
  %1054 = vmatprep.mubr.bf16.mxu0 0
  %1055 = vmatmul.mubr.bf16.gmra.mxu0 %v645
  %v1056 = vpop.f32.mrf.mxu0
  %v1057 = vadd.f32 %v232, %v1056
  %v1058 = vpop.f32.mrf.mxu0
  %v1059 = vpop.f32.mrf.mxu0
  %v1060 = vadd.f32 %v232, %v1059
  %v1061 = vpop.f32.mrf.mxu0
  %1062 = vmatprep.mubr.bf16.mxu0 0
  %1063 = vmatmul.mubr.bf16.gmra.mxu0 %v646
  %v1064 = vpop.f32.mrf.mxu0
  %v1065 = vadd.f32 %v232, %v1064
  %v1066 = vpop.f32.mrf.mxu0
  %v1067 = vpop.f32.mrf.mxu0
  %v1068 = vadd.f32 %v232, %v1067
  %v1069 = vpop.f32.mrf.mxu0
  %1070 = vmatprep.mubr.bf16.mxu0 0
  %1071 = vmatmul.mubr.bf16.gmra.mxu0 %v647
  %v1072 = vpop.f32.mrf.mxu0
  %v1073 = vadd.f32 %v232, %v1072
  %v1074 = vpop.f32.mrf.mxu0
  %v1075 = vpop.f32.mrf.mxu0
  %v1076 = vadd.f32 %v232, %v1075
  %v1077 = vpop.f32.mrf.mxu0
  %1078 = vmatprep.mubr.bf16.mxu0 0
  %1079 = vmatmul.mubr.bf16.gmra.mxu0 %v648
  %v1080 = vpop.f32.mrf.mxu0
  %v1081 = vadd.f32 %v232, %v1080
  %v1082 = vpop.f32.mrf.mxu0
  %v1083 = vpop.f32.mrf.mxu0
  %v1084 = vadd.f32 %v232, %v1083
  %v1085 = vpop.f32.mrf.mxu0
  %1086 = vmatprep.mubr.bf16.mxu0 0
  %1087 = vmatmul.mubr.bf16.gmra.mxu0 %v649
  %v1088 = vpop.f32.mrf.mxu0
  %v1089 = vadd.f32 %v232, %v1088
  %v1090 = vpop.f32.mrf.mxu0
  %v1091 = vpop.f32.mrf.mxu0
  %v1092 = vadd.f32 %v232, %v1091
  %v1093 = vpop.f32.mrf.mxu0
  %1094 = vmatprep.mubr.bf16.mxu0 0
  %1095 = vmatmul.mubr.bf16.gmra.mxu0 %v650
  %v1096 = vpop.f32.mrf.mxu0
  %v1097 = vadd.f32 %v232, %v1096
  %v1098 = vpop.f32.mrf.mxu0
  %v1099 = vpop.f32.mrf.mxu0
  %v1100 = vadd.f32 %v232, %v1099
  %v1101 = vpop.f32.mrf.mxu0
  %1102 = vmatprep.mubr.bf16.mxu0 0
  %1103 = vmatmul.mubr.bf16.gmra.mxu0 %v651
  %v1104 = vpop.f32.mrf.mxu0
  %v1105 = vadd.f32 %v232, %v1104
  %v1106 = vpop.f32.mrf.mxu0
  %v1107 = vpop.f32.mrf.mxu0
  %v1108 = vadd.f32 %v232, %v1107
  %v1109 = vpop.f32.mrf.mxu0
  %1110 = vmatprep.mubr.bf16.mxu0 0
  %1111 = vmatmul.mubr.bf16.gmra.mxu0 %v652
  %v1112 = vpop.f32.mrf.mxu0
  %v1113 = vadd.f32 %v232, %v1112
  %v1114 = vpop.f32.mrf.mxu0
  %v1115 = vpop.f32.mrf.mxu0
  %v1116 = vadd.f32 %v232, %v1115
  %v1117 = vpop.f32.mrf.mxu0
  %1118 = vmatprep.mubr.bf16.mxu0 0
  %1119 = vmatmul.mubr.bf16.gmra.mxu0 %v653
  %v1120 = vpop.f32.mrf.mxu0
  %v1121 = vadd.f32 %v232, %v1120
  %v1122 = vpop.f32.mrf.mxu0
  %v1123 = vpop.f32.mrf.mxu0
  %v1124 = vadd.f32 %v232, %v1123
  %v1125 = vpop.f32.mrf.mxu0
  %1126 = vmatprep.mubr.bf16.mxu0 0
  %1127 = vmatmul.mubr.bf16.gmra.mxu0 %v654
  %v1128 = vpop.f32.mrf.mxu0
  %v1129 = vadd.f32 %v232, %v1128
  %v1130 = vpop.f32.mrf.mxu0
  %v1131 = vpop.f32.mrf.mxu0
  %v1132 = vadd.f32 %v232, %v1131
  %v1133 = vpop.f32.mrf.mxu0
  %1134 = vmatprep.mubr.bf16.mxu0 0
  %1135 = vmatmul.mubr.bf16.gmra.mxu0 %v655
  %v1136 = vpop.f32.mrf.mxu0
  %v1137 = vadd.f32 %v232, %v1136
  %v1138 = vpop.f32.mrf.mxu0
  %v1139 = vpop.f32.mrf.mxu0
  %v1140 = vadd.f32 %v232, %v1139
  %v1141 = vpop.f32.mrf.mxu0
  %1142 = vmatprep.mubr.bf16.mxu0 0
  %1143 = vmatmul.mubr.bf16.gmra.mxu0 %v656
  %v1144 = vpop.f32.mrf.mxu0
  %v1145 = vadd.f32 %v232, %v1144
  %v1146 = vpop.f32.mrf.mxu0
  %v1147 = vpop.f32.mrf.mxu0
  %v1148 = vadd.f32 %v232, %v1147
  %v1149 = vpop.f32.mrf.mxu0
  %1150 = vmatprep.mubr.bf16.mxu0 0
  %1151 = vmatmul.mubr.bf16.gmra.mxu0 %v657
  %v1152 = vpop.f32.mrf.mxu0
  %v1153 = vadd.f32 %v232, %v1152
  %v1154 = vpop.f32.mrf.mxu0
  %v1155 = vpop.f32.mrf.mxu0
  %v1156 = vadd.f32 %v232, %v1155
  %v1157 = vpop.f32.mrf.mxu0
  %1158 = vmatprep.mubr.bf16.mxu0 0
  %1159 = vmatmul.mubr.bf16.gmra.mxu0 %v658
  %v1160 = vpop.f32.mrf.mxu0
  %v1161 = vadd.f32 %v232, %v1160
  %v1162 = vpop.f32.mrf.mxu0
  %v1163 = vpop.f32.mrf.mxu0
  %v1164 = vadd.f32 %v232, %v1163
  %v1165 = vpop.f32.mrf.mxu0
  %1166 = vmatprep.mubr.bf16.mxu0 0
  %1167 = vmatmul.mubr.bf16.gmra.mxu0 %v659
  %v1168 = vpop.f32.mrf.mxu0
  %v1169 = vadd.f32 %v232, %v1168
  %v1170 = vpop.f32.mrf.mxu0
  %v1171 = vpop.f32.mrf.mxu0
  %v1172 = vadd.f32 %v232, %v1171
  %v1173 = vpop.f32.mrf.mxu0
  %1174 = vmatprep.mubr.bf16.mxu0 0
  %1175 = vmatmul.mubr.bf16.gmra.mxu0 %v660
  %v1176 = vpop.f32.mrf.mxu0
  %v1177 = vadd.f32 %v232, %v1176
  %v1178 = vpop.f32.mrf.mxu0
  %v1179 = vpop.f32.mrf.mxu0
  %v1180 = vadd.f32 %v232, %v1179
  %v1181 = vpop.f32.mrf.mxu0
  %1182 = vmatprep.mubr.bf16.mxu0 0
  %1183 = vmatmul.mubr.bf16.gmra.mxu0 %v661
  %v1184 = vpop.f32.mrf.mxu0
  %v1185 = vadd.f32 %v232, %v1184
  %v1186 = vpop.f32.mrf.mxu0
  %v1187 = vpop.f32.mrf.mxu0
  %v1188 = vadd.f32 %v232, %v1187
  %v1189 = vpop.f32.mrf.mxu0
  %1190 = vmatprep.mubr.bf16.mxu0 0
  %1191 = vmatmul.mubr.bf16.gmra.mxu0 %v662
  %v1192 = vpop.f32.mrf.mxu0
  %v1193 = vadd.f32 %v232, %v1192
  %v1194 = vpop.f32.mrf.mxu0
  %v1195 = vpop.f32.mrf.mxu0
  %v1196 = vadd.f32 %v232, %v1195
  %v1197 = vpop.f32.mrf.mxu0
  %1198 = vmatprep.mubr.bf16.mxu0 0
  %1199 = vmatmul.mubr.bf16.gmra.mxu0 %v663
  %v1200 = vpop.f32.mrf.mxu0
  %v1201 = vadd.f32 %v232, %v1200
  %v1202 = vpop.f32.mrf.mxu0
  %v1203 = vpop.f32.mrf.mxu0
  %v1204 = vadd.f32 %v232, %v1203
  %v1205 = vpop.f32.mrf.mxu0
  %1206 = vmatprep.mubr.bf16.mxu0 0
  %1207 = vmatmul.mubr.bf16.gmra.mxu0 %v664
  %v1208 = vpop.f32.mrf.mxu0
  %v1209 = vadd.f32 %v232, %v1208
  %v1210 = vpop.f32.mrf.mxu0
  %v1211 = vpop.f32.mrf.mxu0
  %v1212 = vadd.f32 %v232, %v1211
  %v1213 = vpop.f32.mrf.mxu0
  %1214 = vmatprep.mubr.bf16.mxu0 0
  %1215 = vmatmul.mubr.bf16.gmra.mxu0 %v665
  %v1216 = vpop.f32.mrf.mxu0
  %v1217 = vadd.f32 %v232, %v1216
  %v1218 = vpop.f32.mrf.mxu0
  %v1219 = vpop.f32.mrf.mxu0
  %v1220 = vadd.f32 %v232, %v1219
  %v1221 = vpop.f32.mrf.mxu0
  %1222 = vmatprep.mubr.bf16.mxu0 0
  %1223 = vmatmul.mubr.bf16.gmra.mxu0 %v666
  %v1224 = vpop.f32.mrf.mxu0
  %v1225 = vadd.f32 %v232, %v1224
  %v1226 = vpop.f32.mrf.mxu0
  %v1227 = vpop.f32.mrf.mxu0
  %v1228 = vadd.f32 %v232, %v1227
  %v1229 = vpop.f32.mrf.mxu0
  %1230 = vmatprep.mubr.bf16.mxu0 0
  %1231 = vmatmul.mubr.bf16.gmra.mxu0 %v667
  %v1232 = vpop.f32.mrf.mxu0
  %v1233 = vadd.f32 %v232, %v1232
  %v1234 = vpop.f32.mrf.mxu0
  %v1235 = vpop.f32.mrf.mxu0
  %v1236 = vadd.f32 %v232, %v1235
  %v1237 = vpop.f32.mrf.mxu0
  %1238 = vmatprep.mubr.bf16.mxu0 0
  %1239 = vmatmul.mubr.bf16.gmra.mxu0 %v668
  %v1240 = vpop.f32.mrf.mxu0
  %v1241 = vadd.f32 %v232, %v1240
  %v1242 = vpop.f32.mrf.mxu0
  %v1243 = vpop.f32.mrf.mxu0
  %v1244 = vadd.f32 %v232, %v1243
  %v1245 = vpop.f32.mrf.mxu0
  %1246 = vmatprep.mubr.bf16.mxu0 0
  %1247 = vmatmul.mubr.bf16.gmra.mxu0 %v669
  %v1248 = vpop.f32.mrf.mxu0
  %v1249 = vadd.f32 %v232, %v1248
  %v1250 = vpop.f32.mrf.mxu0
  %v1251 = vpop.f32.mrf.mxu0
  %v1252 = vadd.f32 %v232, %v1251
  %v1253 = vpop.f32.mrf.mxu0
  %1254 = vmatprep.mubr.bf16.mxu0 0
  %1255 = vmatmul.mubr.bf16.gmra.mxu0 %v670
  %v1256 = vpop.f32.mrf.mxu0
  %v1257 = vadd.f32 %v232, %v1256
  %v1258 = vpop.f32.mrf.mxu0
  %v1259 = vpop.f32.mrf.mxu0
  %v1260 = vadd.f32 %v232, %v1259
  %v1261 = vpop.f32.mrf.mxu0
  %1262 = vmatprep.mubr.bf16.mxu0 0
  %1263 = vmatmul.mubr.bf16.gmra.mxu0 %v671
  %v1264 = vpop.f32.mrf.mxu0
  %v1265 = vadd.f32 %v232, %v1264
  %v1266 = vpop.f32.mrf.mxu0
  %v1267 = vpop.f32.mrf.mxu0
  %v1268 = vadd.f32 %v232, %v1267
  %v1269 = vpop.f32.mrf.mxu0
  %1270 = vmatprep.mubr.bf16.mxu0 0
  %1271 = vmatmul.mubr.bf16.gmra.mxu0 %v672
  %v1272 = vpop.f32.mrf.mxu0
  %v1273 = vadd.f32 %v232, %v1272
  %v1274 = vpop.f32.mrf.mxu0
  %v1275 = vpop.f32.mrf.mxu0
  %v1276 = vadd.f32 %v232, %v1275
  %v1277 = vpop.f32.mrf.mxu0
  %1278 = vmatprep.mubr.bf16.mxu0 0
  %1279 = vmatmul.mubr.bf16.gmra.mxu0 %v673
  %v1280 = vpop.f32.mrf.mxu0
  %v1281 = vadd.f32 %v232, %v1280
  %v1282 = vpop.f32.mrf.mxu0
  %v1283 = vpop.f32.mrf.mxu0
  %v1284 = vadd.f32 %v232, %v1283
  %v1285 = vpop.f32.mrf.mxu0
  %1286 = vmatprep.mubr.bf16.mxu0 0
  %1287 = vmatmul.mubr.bf16.gmra.mxu0 %v674
  %v1288 = vpop.f32.mrf.mxu0
  %v1289 = vadd.f32 %v232, %v1288
  %v1290 = vpop.f32.mrf.mxu0
  %v1291 = vpop.f32.mrf.mxu0
  %v1292 = vadd.f32 %v232, %v1291
  %v1293 = vpop.f32.mrf.mxu0
  %1294 = vmatprep.mubr.bf16.mxu0 0
  %1295 = vmatmul.mubr.bf16.gmra.mxu0 %v675
  %v1296 = vpop.f32.mrf.mxu0
  %v1297 = vadd.f32 %v232, %v1296
  %v1298 = vpop.f32.mrf.mxu0
  %v1299 = vpop.f32.mrf.mxu0
  %v1300 = vadd.f32 %v232, %v1299
  %v1301 = vpop.f32.mrf.mxu0
  %1302 = vmatprep.mubr.bf16.mxu0 0
  %1303 = vmatmul.mubr.bf16.gmra.mxu0 %v676
  %v1304 = vpop.f32.mrf.mxu0
  %v1305 = vadd.f32 %v232, %v1304
  %v1306 = vpop.f32.mrf.mxu0
  %v1307 = vpop.f32.mrf.mxu0
  %v1308 = vadd.f32 %v232, %v1307
  %v1309 = vpop.f32.mrf.mxu0
  %1310 = vmatprep.mubr.bf16.mxu0 0
  %1311 = vmatmul.mubr.bf16.gmra.mxu0 %v677
  %v1312 = vpop.f32.mrf.mxu0
  %v1313 = vadd.f32 %v232, %v1312
  %v1314 = vpop.f32.mrf.mxu0
  %v1315 = vpop.f32.mrf.mxu0
  %v1316 = vadd.f32 %v232, %v1315
  %v1317 = vpop.f32.mrf.mxu0
  %1318 = vmatprep.mubr.bf16.mxu0 0
  %1319 = vmatmul.mubr.bf16.gmra.mxu0 %v678
  %v1320 = vpop.f32.mrf.mxu0
  %v1321 = vadd.f32 %v232, %v1320
  %v1322 = vpop.f32.mrf.mxu0
  %v1323 = vpop.f32.mrf.mxu0
  %v1324 = vadd.f32 %v232, %v1323
  %v1325 = vpop.f32.mrf.mxu0
  %1326 = vmatprep.mubr.bf16.mxu0 0
  %1327 = vmatmul.mubr.bf16.gmra.mxu0 %v679
  %v1328 = vpop.f32.mrf.mxu0
  %v1329 = vadd.f32 %v232, %v1328
  %v1330 = vpop.f32.mrf.mxu0
  %v1331 = vpop.f32.mrf.mxu0
  %v1332 = vadd.f32 %v232, %v1331
  %v1333 = vpop.f32.mrf.mxu0
  %1334 = vmatprep.mubr.bf16.mxu0 0
  %1335 = vmatmul.mubr.bf16.gmra.mxu0 %v680
  %v1336 = vpop.f32.mrf.mxu0
  %v1337 = vadd.f32 %v232, %v1336
  %v1338 = vpop.f32.mrf.mxu0
  %v1339 = vpop.f32.mrf.mxu0
  %v1340 = vadd.f32 %v232, %v1339
  %v1341 = vpop.f32.mrf.mxu0
  %1342 = vmatprep.mubr.bf16.mxu0 0
  %1343 = vmatmul.mubr.bf16.gmra.mxu0 %v681
  %v1344 = vpop.f32.mrf.mxu0
  %v1345 = vadd.f32 %v232, %v1344
  %v1346 = vpop.f32.mrf.mxu0
  %v1347 = vpop.f32.mrf.mxu0
  %v1348 = vadd.f32 %v232, %v1347
  %v1349 = vpop.f32.mrf.mxu0
  %1350 = vmatprep.mubr.bf16.mxu0 0
  %1351 = vmatmul.mubr.bf16.gmra.mxu0 %v682
  %v1352 = vpop.f32.mrf.mxu0
  %v1353 = vadd.f32 %v232, %v1352
  %v1354 = vpop.f32.mrf.mxu0
  %v1355 = vpop.f32.mrf.mxu0
  %v1356 = vadd.f32 %v232, %v1355
  %v1357 = vpop.f32.mrf.mxu0
  %1358 = vmatprep.mubr.bf16.mxu0 0
  %1359 = vmatmul.mubr.bf16.gmra.mxu0 %v683
  %v1360 = vpop.f32.mrf.mxu0
  %v1361 = vadd.f32 %v232, %v1360
  %v1362 = vpop.f32.mrf.mxu0
  %v1363 = vpop.f32.mrf.mxu0
  %v1364 = vadd.f32 %v232, %v1363
  %v1365 = vpop.f32.mrf.mxu0
  %1366 = vmatprep.mubr.bf16.mxu0 0
  %1367 = vmatmul.mubr.bf16.gmra.mxu0 %v684
  %v1368 = vpop.f32.mrf.mxu0
  %v1369 = vadd.f32 %v232, %v1368
  %v1370 = vpop.f32.mrf.mxu0
  %v1371 = vpop.f32.mrf.mxu0
  %v1372 = vadd.f32 %v232, %v1371
  %v1373 = vpop.f32.mrf.mxu0
  %1374 = vmatprep.mubr.bf16.mxu0 0
  %1375 = vmatmul.mubr.bf16.gmra.mxu0 %v685
  %v1376 = vpop.f32.mrf.mxu0
  %v1377 = vadd.f32 %v232, %v1376
  %v1378 = vpop.f32.mrf.mxu0
  %v1379 = vpop.f32.mrf.mxu0
  %v1380 = vadd.f32 %v232, %v1379
  %v1381 = vpop.f32.mrf.mxu0
  %1382 = vmatprep.mubr.bf16.mxu0 0
  %1383 = vmatmul.mubr.bf16.gmra.mxu0 %v686
  %v1384 = vpop.f32.mrf.mxu0
  %v1385 = vadd.f32 %v232, %v1384
  %v1386 = vpop.f32.mrf.mxu0
  %v1387 = vpop.f32.mrf.mxu0
  %v1388 = vadd.f32 %v232, %v1387
  %v1389 = vpop.f32.mrf.mxu0
  %1390 = vmatprep.mubr.bf16.mxu0 0
  %1391 = vmatmul.mubr.bf16.gmra.mxu0 %v687
  %v1392 = vpop.f32.mrf.mxu0
  %v1393 = vadd.f32 %v232, %v1392
  %v1394 = vpop.f32.mrf.mxu0
  %v1395 = vpop.f32.mrf.mxu0
  %v1396 = vadd.f32 %v232, %v1395
  %v1397 = vpop.f32.mrf.mxu0
  %1398 = vmatprep.mubr.bf16.mxu0 0
  %1399 = vmatmul.mubr.bf16.gmra.mxu0 %v688
  %v1400 = vpop.f32.mrf.mxu0
  %v1401 = vadd.f32 %v232, %v1400
  %v1402 = vpop.f32.mrf.mxu0
  %v1403 = vpop.f32.mrf.mxu0
  %v1404 = vadd.f32 %v232, %v1403
  %v1405 = vpop.f32.mrf.mxu0
  %1406 = vmatprep.mubr.bf16.mxu0 0
  %1407 = vmatmul.mubr.bf16.gmra.mxu0 %v689
  %v1408 = vpop.f32.mrf.mxu0
  %v1409 = vadd.f32 %v232, %v1408
  %v1410 = vpop.f32.mrf.mxu0
  %v1411 = vpop.f32.mrf.mxu0
  %v1412 = vadd.f32 %v232, %v1411
  %v1413 = vpop.f32.mrf.mxu0
  %1414 = vmatprep.mubr.bf16.mxu0 0
  %1415 = vmatmul.mubr.bf16.gmra.mxu0 %v690
  %v1416 = vpop.f32.mrf.mxu0
  %v1417 = vadd.f32 %v232, %v1416
  %v1418 = vpop.f32.mrf.mxu0
  %v1419 = vpop.f32.mrf.mxu0
  %v1420 = vadd.f32 %v232, %v1419
  %v1421 = vpop.f32.mrf.mxu0
  %1422 = vmatprep.mubr.bf16.mxu0 0
  %1423 = vmatmul.mubr.bf16.gmra.mxu0 %v691
  %v1424 = vpop.f32.mrf.mxu0
  %v1425 = vadd.f32 %v232, %v1424
  %v1426 = vpop.f32.mrf.mxu0
  %v1427 = vpop.f32.mrf.mxu0
  %v1428 = vadd.f32 %v232, %v1427
  %v1429 = vpop.f32.mrf.mxu0
  %1430 = vmatprep.mubr.bf16.mxu0 0
  %1431 = vmatmul.mubr.bf16.gmra.mxu0 %v692
  %v1432 = vpop.f32.mrf.mxu0
  %v1433 = vadd.f32 %v232, %v1432
  %v1434 = vpop.f32.mrf.mxu0
  %v1435 = vpop.f32.mrf.mxu0
  %v1436 = vadd.f32 %v232, %v1435
  %v1437 = vpop.f32.mrf.mxu0
  %1438 = vmatprep.mubr.bf16.mxu0 0
  %1439 = vmatmul.mubr.bf16.gmra.mxu0 %v693
  %v1440 = vpop.f32.mrf.mxu0
  %v1441 = vadd.f32 %v232, %v1440
  %v1442 = vpop.f32.mrf.mxu0
  %v1443 = vpop.f32.mrf.mxu0
  %v1444 = vadd.f32 %v232, %v1443
  %v1445 = vpop.f32.mrf.mxu0
  %1446 = vmatprep.mubr.bf16.mxu0 0
  %1447 = vmatmul.mubr.bf16.gmra.mxu0 %v694
  %v1448 = vpop.f32.mrf.mxu0
  %v1449 = vadd.f32 %v232, %v1448
  %v1450 = vpop.f32.mrf.mxu0
  %v1451 = vpop.f32.mrf.mxu0
  %v1452 = vadd.f32 %v232, %v1451
  %v1453 = vpop.f32.mrf.mxu0
  %1454 = vmatprep.mubr.bf16.mxu0 0
  %1455 = vmatmul.mubr.bf16.gmra.mxu0 %v695
  %v1456 = vpop.f32.mrf.mxu0
  %v1457 = vadd.f32 %v232, %v1456
  %v1458 = vpop.f32.mrf.mxu0
  %v1459 = vpop.f32.mrf.mxu0
  %v1460 = vadd.f32 %v232, %v1459
  %v1461 = vpop.f32.mrf.mxu0
  %1462 = vmatprep.mubr.bf16.mxu0 0
  %1463 = vmatmul.mubr.bf16.gmra.mxu0 %v696
  %v1464 = vpop.f32.mrf.mxu0
  %v1465 = vadd.f32 %v232, %v1464
  %v1466 = vpop.f32.mrf.mxu0
  %v1467 = vpop.f32.mrf.mxu0
  %v1468 = vadd.f32 %v232, %v1467
  %v1469 = vpop.f32.mrf.mxu0
  %1470 = vmatprep.mubr.bf16.mxu0 0
  %1471 = vmatmul.mubr.bf16.gmra.mxu0 %v697
  %v1472 = vpop.f32.mrf.mxu0
  %v1473 = vadd.f32 %v232, %v1472
  %v1474 = vpop.f32.mrf.mxu0
  %v1475 = vpop.f32.mrf.mxu0
  %v1476 = vadd.f32 %v232, %v1475
  %v1477 = vpop.f32.mrf.mxu0
  %1478 = vmatprep.mubr.bf16.mxu0 0
  %1479 = vmatmul.mubr.bf16.gmra.mxu0 %v698
  %v1480 = vpop.f32.mrf.mxu0
  %v1481 = vadd.f32 %v232, %v1480
  %v1482 = vpop.f32.mrf.mxu0
  %v1483 = vpop.f32.mrf.mxu0
  %v1484 = vadd.f32 %v232, %v1483
  %v1485 = vpop.f32.mrf.mxu0
  %1486 = vmatprep.mubr.bf16.mxu0 0
  %1487 = vmatmul.mubr.bf16.gmra.mxu0 %v699
  %v1488 = vpop.f32.mrf.mxu0
  %v1489 = vadd.f32 %v232, %v1488
  %v1490 = vpop.f32.mrf.mxu0
  %v1491 = vpop.f32.mrf.mxu0
  %v1492 = vadd.f32 %v232, %v1491
  %v1493 = vpop.f32.mrf.mxu0
  %1494 = vmatprep.mubr.bf16.mxu0 0
  %1495 = vmatmul.mubr.bf16.gmra.mxu0 %v700
  %v1496 = vpop.f32.mrf.mxu0
  %v1497 = vadd.f32 %v232, %v1496
  %v1498 = vpop.f32.mrf.mxu0
  %v1499 = vpop.f32.mrf.mxu0
  %v1500 = vadd.f32 %v232, %v1499
  %v1501 = vpop.f32.mrf.mxu0
  %1502 = vmatprep.mubr.bf16.mxu0 0
  %1503 = vmatmul.mubr.bf16.gmra.mxu0 %v701
  %v1504 = vpop.f32.mrf.mxu0
  %v1505 = vadd.f32 %v232, %v1504
  %v1506 = vpop.f32.mrf.mxu0
  %v1507 = vpop.f32.mrf.mxu0
  %v1508 = vadd.f32 %v232, %v1507
  %v1509 = vpop.f32.mrf.mxu0
  %1510 = vmatprep.mubr.bf16.mxu0 0
  %1511 = vmatmul.mubr.bf16.gmra.mxu0 %v702
  %v1512 = vpop.f32.mrf.mxu0
  %v1513 = vadd.f32 %v232, %v1512
  %v1514 = vpop.f32.mrf.mxu0
  %v1515 = vpop.f32.mrf.mxu0
  %v1516 = vadd.f32 %v232, %v1515
  %v1517 = vpop.f32.mrf.mxu0
  %1518 = vmatprep.mubr.bf16.mxu0 0
  %1519 = vmatmul.mubr.bf16.gmra.mxu0 %v703
  %v1520 = vpop.f32.mrf.mxu0
  %v1521 = vadd.f32 %v232, %v1520
  %v1522 = vpop.f32.mrf.mxu0
  %v1523 = vpop.f32.mrf.mxu0
  %v1524 = vadd.f32 %v232, %v1523
  %v1525 = vpop.f32.mrf.mxu0
  %1526 = vmatprep.mubr.bf16.mxu0 0
  %1527 = vmatmul.mubr.bf16.gmra.mxu0 %v704
  %v1528 = vpop.f32.mrf.mxu0
  %v1529 = vadd.f32 %v232, %v1528
  %v1530 = vpop.f32.mrf.mxu0
  %v1531 = vpop.f32.mrf.mxu0
  %v1532 = vadd.f32 %v232, %v1531
  %v1533 = vpop.f32.mrf.mxu0
  %1534 = vmatprep.mubr.bf16.mxu0 0
  %1535 = vmatmul.mubr.bf16.gmra.mxu0 %v705
  %v1536 = vpop.f32.mrf.mxu0
  %v1537 = vadd.f32 %v232, %v1536
  %v1538 = vpop.f32.mrf.mxu0
  %v1539 = vpop.f32.mrf.mxu0
  %v1540 = vadd.f32 %v232, %v1539
  %v1541 = vpop.f32.mrf.mxu0
  %1542 = vmatprep.mubr.bf16.mxu0 0
  %1543 = vmatmul.mubr.bf16.gmra.mxu0 %v706
  %v1544 = vpop.f32.mrf.mxu0
  %v1545 = vadd.f32 %v232, %v1544
  %v1546 = vpop.f32.mrf.mxu0
  %v1547 = vpop.f32.mrf.mxu0
  %v1548 = vadd.f32 %v232, %v1547
  %v1549 = vpop.f32.mrf.mxu0
  %1550 = vmatprep.mubr.bf16.mxu0 0
  %1551 = vmatmul.mubr.bf16.gmra.mxu0 %v707
  %v1552 = vpop.f32.mrf.mxu0
  %v1553 = vadd.f32 %v232, %v1552
  %v1554 = vpop.f32.mrf.mxu0
  %v1555 = vpop.f32.mrf.mxu0
  %v1556 = vadd.f32 %v232, %v1555
  %v1557 = vpop.f32.mrf.mxu0
  %1558 = vmatprep.mubr.bf16.mxu0 0
  %1559 = vmatmul.mubr.bf16.gmra.mxu0 %v708
  %v1560 = vpop.f32.mrf.mxu0
  %v1561 = vadd.f32 %v232, %v1560
  %v1562 = vpop.f32.mrf.mxu0
  %v1563 = vpop.f32.mrf.mxu0
  %v1564 = vadd.f32 %v232, %v1563
  %v1565 = vpop.f32.mrf.mxu0
  %1566 = vmatprep.mubr.bf16.mxu0 0
  %1567 = vmatmul.mubr.bf16.gmra.mxu0 %v709
  %v1568 = vpop.f32.mrf.mxu0
  %v1569 = vadd.f32 %v232, %v1568
  %v1570 = vpop.f32.mrf.mxu0
  %v1571 = vpop.f32.mrf.mxu0
  %v1572 = vadd.f32 %v232, %v1571
  %v1573 = vpop.f32.mrf.mxu0
  %1574 = vmatprep.mubr.bf16.mxu0 0
  %1575 = vmatmul.mubr.bf16.gmra.mxu0 %v710
  %v1576 = vpop.f32.mrf.mxu0
  %v1577 = vadd.f32 %v232, %v1576
  %v1578 = vpop.f32.mrf.mxu0
  %v1579 = vpop.f32.mrf.mxu0
  %v1580 = vadd.f32 %v232, %v1579
  %v1581 = vpop.f32.mrf.mxu0
  %1582 = vmatprep.mubr.bf16.mxu0 0
  %1583 = vmatmul.mubr.bf16.gmra.mxu0 %v711
  %v1584 = vpop.f32.mrf.mxu0
  %v1585 = vadd.f32 %v232, %v1584
  %v1586 = vpop.f32.mrf.mxu0
  %v1587 = vpop.f32.mrf.mxu0
  %v1588 = vadd.f32 %v232, %v1587
  %v1589 = vpop.f32.mrf.mxu0
  %1590 = vmatprep.mubr.bf16.mxu0 0
  %1591 = vmatmul.mubr.bf16.gmra.mxu0 %v712
  %v1592 = vpop.f32.mrf.mxu0
  %v1593 = vadd.f32 %v232, %v1592
  %v1594 = vpop.f32.mrf.mxu0
  %v1595 = vpop.f32.mrf.mxu0
  %v1596 = vadd.f32 %v232, %v1595
  %v1597 = vpop.f32.mrf.mxu0
  %1598 = vmatprep.mubr.bf16.mxu0 0
  %1599 = vmatmul.mubr.bf16.gmra.mxu0 %v713
  %v1600 = vpop.f32.mrf.mxu0
  %v1601 = vadd.f32 %v232, %v1600
  %v1602 = vpop.f32.mrf.mxu0
  %v1603 = vpop.f32.mrf.mxu0
  %v1604 = vadd.f32 %v232, %v1603
  %v1605 = vpop.f32.mrf.mxu0
  %1606 = vmatprep.mubr.bf16.mxu0 0
  %1607 = vmatmul.mubr.bf16.gmra.mxu0 %v714
  %v1608 = vpop.f32.mrf.mxu0
  %v1609 = vadd.f32 %v232, %v1608
  %v1610 = vpop.f32.mrf.mxu0
  %v1611 = vpop.f32.mrf.mxu0
  %v1612 = vadd.f32 %v232, %v1611
  %v1613 = vpop.f32.mrf.mxu0
  %1614 = vmatprep.mubr.bf16.mxu0 0
  %1615 = vmatmul.mubr.bf16.gmra.mxu0 %v715
  %v1616 = vpop.f32.mrf.mxu0
  %v1617 = vadd.f32 %v232, %v1616
  %v1618 = vpop.f32.mrf.mxu0
  %v1619 = vpop.f32.mrf.mxu0
  %v1620 = vadd.f32 %v232, %v1619
  %v1621 = vpop.f32.mrf.mxu0
  %1622 = vmatprep.mubr.bf16.mxu0 0
  %1623 = vmatmul.mubr.bf16.gmra.mxu0 %v716
  %v1624 = vpop.f32.mrf.mxu0
  %v1625 = vadd.f32 %v232, %v1624
  %v1626 = vpop.f32.mrf.mxu0
  %v1627 = vpop.f32.mrf.mxu0
  %v1628 = vadd.f32 %v232, %v1627
  %v1629 = vpop.f32.mrf.mxu0
  %1630 = vmatprep.mubr.bf16.mxu0 0
  %1631 = vmatmul.mubr.bf16.gmra.mxu0 %v717
  %v1632 = vpop.f32.mrf.mxu0
  %v1633 = vadd.f32 %v232, %v1632
  %v1634 = vpop.f32.mrf.mxu0
  %v1635 = vpop.f32.mrf.mxu0
  %v1636 = vadd.f32 %v232, %v1635
  %v1637 = vpop.f32.mrf.mxu0
  %1638 = vmatprep.mubr.bf16.mxu0 0
  %1639 = vmatmul.mubr.bf16.gmra.mxu0 %v718
  %v1640 = vpop.f32.mrf.mxu0
  %v1641 = vadd.f32 %v232, %v1640
  %v1642 = vpop.f32.mrf.mxu0
  %v1643 = vpop.f32.mrf.mxu0
  %v1644 = vadd.f32 %v232, %v1643
  %v1645 = vpop.f32.mrf.mxu0
  %1646 = vmatprep.mubr.bf16.mxu0 0
  %1647 = vmatmul.mubr.bf16.gmra.mxu0 %v719
  %v1648 = vpop.f32.mrf.mxu0
  %v1649 = vadd.f32 %v232, %v1648
  %v1650 = vpop.f32.mrf.mxu0
  %v1651 = vpop.f32.mrf.mxu0
  %v1652 = vadd.f32 %v232, %v1651
  %v1653 = vpop.f32.mrf.mxu0
  %1654 = vmatprep.mubr.bf16.mxu0 0
  %1655 = vmatmul.mubr.bf16.gmra.mxu0 %v720
  %v1656 = vpop.f32.mrf.mxu0
  %v1657 = vadd.f32 %v232, %v1656
  %v1658 = vpop.f32.mrf.mxu0
  %v1659 = vpop.f32.mrf.mxu0
  %v1660 = vadd.f32 %v232, %v1659
  %v1661 = vpop.f32.mrf.mxu0
  %1662 = vmatprep.mubr.bf16.mxu0 0
  %1663 = vmatmul.mubr.bf16.gmra.mxu0 %v721
  %v1664 = vpop.f32.mrf.mxu0
  %v1665 = vadd.f32 %v232, %v1664
  %v1666 = vpop.f32.mrf.mxu0
  %v1667 = vpop.f32.mrf.mxu0
  %v1668 = vadd.f32 %v232, %v1667
  %v1669 = vpop.f32.mrf.mxu0
  %1670 = vmatprep.mubr.bf16.mxu0 0
  %1671 = vmatmul.mubr.bf16.gmra.mxu0 %v722
  %v1672 = vpop.f32.mrf.mxu0
  %v1673 = vadd.f32 %v232, %v1672
  %v1674 = vpop.f32.mrf.mxu0
  %v1675 = vpop.f32.mrf.mxu0
  %v1676 = vadd.f32 %v232, %v1675
  %v1677 = vpop.f32.mrf.mxu0
  %1678 = vmatprep.mubr.bf16.mxu0 0
  %1679 = vmatmul.mubr.bf16.gmra.mxu0 %v723
  %v1680 = vpop.f32.mrf.mxu0
  %v1681 = vadd.f32 %v232, %v1680
  %v1682 = vpop.f32.mrf.mxu0
  %v1683 = vpop.f32.mrf.mxu0
  %v1684 = vadd.f32 %v232, %v1683
  %v1685 = vpop.f32.mrf.mxu0
  %1686 = vdwg.mxu0
  %vm1687 = vcmp.gt.f32.partialorder %v905, 0.0
  %vm1688 = vcmp.gt.f32.partialorder %v908, 0.0
  %vm1689 = vcmp.gt.f32.partialorder %v913, 0.0
  %vm1690 = vcmp.gt.f32.partialorder %v916, 0.0
  %vm1691 = vcmp.gt.f32.partialorder %v921, 0.0
  %vm1692 = vcmp.gt.f32.partialorder %v924, 0.0
  %vm1693 = vcmp.gt.f32.partialorder %v929, 0.0
  %vm1694 = vcmp.gt.f32.partialorder %v932, 0.0
  %vm1695 = vcmp.gt.f32.partialorder %v937, 0.0
  %vm1696 = vcmp.gt.f32.partialorder %v940, 0.0
  %vm1697 = vcmp.gt.f32.partialorder %v945, 0.0
  %vm1698 = vcmp.gt.f32.partialorder %v948, 0.0
  %vm1699 = vcmp.gt.f32.partialorder %v953, 0.0
  %vm1700 = vcmp.gt.f32.partialorder %v956, 0.0
  %vm1701 = vcmp.gt.f32.partialorder %v961, 0.0
  %vm1702 = vcmp.gt.f32.partialorder %v964, 0.0
  %vm1703 = vcmp.gt.f32.partialorder %v969, 0.0
  %vm1704 = vcmp.gt.f32.partialorder %v972, 0.0
  %vm1705 = vcmp.gt.f32.partialorder %v977, 0.0
  %vm1706 = vcmp.gt.f32.partialorder %v980, 0.0
  %vm1707 = vcmp.gt.f32.partialorder %v985, 0.0
  %vm1708 = vcmp.gt.f32.partialorder %v988, 0.0
  %vm1709 = vcmp.gt.f32.partialorder %v993, 0.0
  %vm1710 = vcmp.gt.f32.partialorder %v996, 0.0
  %vm1711 = vcmp.gt.f32.partialorder %v1001, 0.0
  %vm1712 = vcmp.gt.f32.partialorder %v1004, 0.0
  %vm1713 = vcmp.gt.f32.partialorder %v1009, 0.0
  %vm1714 = vcmp.gt.f32.partialorder %v1012, 0.0
  %vm1715 = vcmp.gt.f32.partialorder %v1017, 0.0
  %vm1716 = vcmp.gt.f32.partialorder %v1020, 0.0
  %vm1717 = vcmp.gt.f32.partialorder %v1025, 0.0
  %vm1718 = vcmp.gt.f32.partialorder %v1028, 0.0
  %vm1719 = vcmp.gt.f32.partialorder %v1033, 0.0
  %vm1720 = vcmp.gt.f32.partialorder %v1036, 0.0
  %vm1721 = vcmp.gt.f32.partialorder %v1041, 0.0
  %vm1722 = vcmp.gt.f32.partialorder %v1044, 0.0
  %vm1723 = vcmp.gt.f32.partialorder %v1049, 0.0
  %vm1724 = vcmp.gt.f32.partialorder %v1052, 0.0
  %vm1725 = vcmp.gt.f32.partialorder %v1057, 0.0
  %vm1726 = vcmp.gt.f32.partialorder %v1060, 0.0
  %vm1727 = vcmp.gt.f32.partialorder %v1065, 0.0
  %vm1728 = vcmp.gt.f32.partialorder %v1068, 0.0
  %vm1729 = vcmp.gt.f32.partialorder %v1073, 0.0
  %vm1730 = vcmp.gt.f32.partialorder %v1076, 0.0
  %vm1731 = vcmp.gt.f32.partialorder %v1081, 0.0
  %vm1732 = vcmp.gt.f32.partialorder %v1084, 0.0
  %vm1733 = vcmp.gt.f32.partialorder %v1089, 0.0
  %vm1734 = vcmp.gt.f32.partialorder %v1092, 0.0
  %vm1735 = vcmp.gt.f32.partialorder %v1097, 0.0
  %vm1736 = vcmp.gt.f32.partialorder %v1100, 0.0
  %vm1737 = vcmp.gt.f32.partialorder %v1105, 0.0
  %vm1738 = vcmp.gt.f32.partialorder %v1108, 0.0
  %vm1739 = vcmp.gt.f32.partialorder %v1113, 0.0
  %vm1740 = vcmp.gt.f32.partialorder %v1116, 0.0
  %vm1741 = vcmp.gt.f32.partialorder %v1121, 0.0
  %vm1742 = vcmp.gt.f32.partialorder %v1124, 0.0
  %vm1743 = vcmp.gt.f32.partialorder %v1129, 0.0
  %vm1744 = vcmp.gt.f32.partialorder %v1132, 0.0
  %vm1745 = vcmp.gt.f32.partialorder %v1137, 0.0
  %vm1746 = vcmp.gt.f32.partialorder %v1140, 0.0
  %vm1747 = vcmp.gt.f32.partialorder %v1145, 0.0
  %vm1748 = vcmp.gt.f32.partialorder %v1148, 0.0
  %vm1749 = vcmp.gt.f32.partialorder %v1153, 0.0
  %vm1750 = vcmp.gt.f32.partialorder %v1156, 0.0
  %vm1751 = vcmp.gt.f32.partialorder %v1161, 0.0
  %vm1752 = vcmp.gt.f32.partialorder %v1164, 0.0
  %vm1753 = vcmp.gt.f32.partialorder %v1169, 0.0
  %vm1754 = vcmp.gt.f32.partialorder %v1172, 0.0
  %vm1755 = vcmp.gt.f32.partialorder %v1177, 0.0
  %vm1756 = vcmp.gt.f32.partialorder %v1180, 0.0
  %vm1757 = vcmp.gt.f32.partialorder %v1185, 0.0
  %vm1758 = vcmp.gt.f32.partialorder %v1188, 0.0
  %vm1759 = vcmp.gt.f32.partialorder %v1193, 0.0
  %vm1760 = vcmp.gt.f32.partialorder %v1196, 0.0
  %vm1761 = vcmp.gt.f32.partialorder %v1201, 0.0
  %vm1762 = vcmp.gt.f32.partialorder %v1204, 0.0
  %vm1763 = vcmp.gt.f32.partialorder %v1209, 0.0
  %vm1764 = vcmp.gt.f32.partialorder %v1212, 0.0
  %vm1765 = vcmp.gt.f32.partialorder %v1217, 0.0
  %vm1766 = vcmp.gt.f32.partialorder %v1220, 0.0
  %vm1767 = vcmp.gt.f32.partialorder %v1225, 0.0
  %vm1768 = vcmp.gt.f32.partialorder %v1228, 0.0
  %vm1769 = vcmp.gt.f32.partialorder %v1233, 0.0
  %vm1770 = vcmp.gt.f32.partialorder %v1236, 0.0
  %vm1771 = vcmp.gt.f32.partialorder %v1241, 0.0
  %vm1772 = vcmp.gt.f32.partialorder %v1244, 0.0
  %vm1773 = vcmp.gt.f32.partialorder %v1249, 0.0
  %vm1774 = vcmp.gt.f32.partialorder %v1252, 0.0
  %vm1775 = vcmp.gt.f32.partialorder %v1257, 0.0
  %vm1776 = vcmp.gt.f32.partialorder %v1260, 0.0
  %vm1777 = vcmp.gt.f32.partialorder %v1265, 0.0
  %vm1778 = vcmp.gt.f32.partialorder %v1268, 0.0
  %vm1779 = vcmp.gt.f32.partialorder %v1273, 0.0
  %vm1780 = vcmp.gt.f32.partialorder %v1276, 0.0
  %vm1781 = vcmp.gt.f32.partialorder %v1281, 0.0
  %vm1782 = vcmp.gt.f32.partialorder %v1284, 0.0
  %vm1783 = vcmp.gt.f32.partialorder %v1289, 0.0
  %vm1784 = vcmp.gt.f32.partialorder %v1292, 0.0
  %vm1785 = vcmp.gt.f32.partialorder %v1297, 0.0
  %vm1786 = vcmp.gt.f32.partialorder %v1300, 0.0
  %vm1787 = vcmp.gt.f32.partialorder %v1305, 0.0
  %vm1788 = vcmp.gt.f32.partialorder %v1308, 0.0
  %vm1789 = vcmp.gt.f32.partialorder %v1313, 0.0
  %vm1790 = vcmp.gt.f32.partialorder %v1316, 0.0
  %vm1791 = vcmp.gt.f32.partialorder %v1321, 0.0
  %vm1792 = vcmp.gt.f32.partialorder %v1324, 0.0
  %vm1793 = vcmp.gt.f32.partialorder %v1329, 0.0
  %vm1794 = vcmp.gt.f32.partialorder %v1332, 0.0
  %vm1795 = vcmp.gt.f32.partialorder %v1337, 0.0
  %vm1796 = vcmp.gt.f32.partialorder %v1340, 0.0
  %vm1797 = vcmp.gt.f32.partialorder %v1345, 0.0
  %vm1798 = vcmp.gt.f32.partialorder %v1348, 0.0
  %vm1799 = vcmp.gt.f32.partialorder %v1353, 0.0
  %vm1800 = vcmp.gt.f32.partialorder %v1356, 0.0
  %vm1801 = vcmp.gt.f32.partialorder %v1361, 0.0
  %vm1802 = vcmp.gt.f32.partialorder %v1364, 0.0
  %vm1803 = vcmp.gt.f32.partialorder %v1369, 0.0
  %vm1804 = vcmp.gt.f32.partialorder %v1372, 0.0
  %vm1805 = vcmp.gt.f32.partialorder %v1377, 0.0
  %vm1806 = vcmp.gt.f32.partialorder %v1380, 0.0
  %vm1807 = vcmp.gt.f32.partialorder %v1385, 0.0
  %vm1808 = vcmp.gt.f32.partialorder %v1388, 0.0
  %vm1809 = vcmp.gt.f32.partialorder %v1393, 0.0
  %vm1810 = vcmp.gt.f32.partialorder %v1396, 0.0
  %vm1811 = vcmp.gt.f32.partialorder %v1401, 0.0
  %vm1812 = vcmp.gt.f32.partialorder %v1404, 0.0
  %vm1813 = vcmp.gt.f32.partialorder %v1409, 0.0
  %vm1814 = vcmp.gt.f32.partialorder %v1412, 0.0
  %vm1815 = vcmp.gt.f32.partialorder %v1417, 0.0
  %vm1816 = vcmp.gt.f32.partialorder %v1420, 0.0
  %vm1817 = vcmp.gt.f32.partialorder %v1425, 0.0
  %vm1818 = vcmp.gt.f32.partialorder %v1428, 0.0
  %vm1819 = vcmp.gt.f32.partialorder %v1433, 0.0
  %vm1820 = vcmp.gt.f32.partialorder %v1436, 0.0
  %vm1821 = vcmp.gt.f32.partialorder %v1441, 0.0
  %vm1822 = vcmp.gt.f32.partialorder %v1444, 0.0
  %vm1823 = vcmp.gt.f32.partialorder %v1449, 0.0
  %vm1824 = vcmp.gt.f32.partialorder %v1452, 0.0
  %vm1825 = vcmp.gt.f32.partialorder %v1457, 0.0
  %vm1826 = vcmp.gt.f32.partialorder %v1460, 0.0
  %vm1827 = vcmp.gt.f32.partialorder %v1465, 0.0
  %vm1828 = vcmp.gt.f32.partialorder %v1468, 0.0
  %vm1829 = vcmp.gt.f32.partialorder %v1473, 0.0
  %vm1830 = vcmp.gt.f32.partialorder %v1476, 0.0
  %vm1831 = vcmp.gt.f32.partialorder %v1481, 0.0
  %vm1832 = vcmp.gt.f32.partialorder %v1484, 0.0
  %vm1833 = vcmp.gt.f32.partialorder %v1489, 0.0
  %vm1834 = vcmp.gt.f32.partialorder %v1492, 0.0
  %vm1835 = vcmp.gt.f32.partialorder %v1497, 0.0
  %vm1836 = vcmp.gt.f32.partialorder %v1500, 0.0
  %vm1837 = vcmp.gt.f32.partialorder %v1505, 0.0
  %vm1838 = vcmp.gt.f32.partialorder %v1508, 0.0
  %vm1839 = vcmp.gt.f32.partialorder %v1513, 0.0
  %vm1840 = vcmp.gt.f32.partialorder %v1516, 0.0
  %vm1841 = vcmp.gt.f32.partialorder %v1521, 0.0
  %vm1842 = vcmp.gt.f32.partialorder %v1524, 0.0
  %vm1843 = vcmp.gt.f32.partialorder %v1529, 0.0
  %vm1844 = vcmp.gt.f32.partialorder %v1532, 0.0
  %vm1845 = vcmp.gt.f32.partialorder %v1537, 0.0
  %vm1846 = vcmp.gt.f32.partialorder %v1540, 0.0
  %vm1847 = vcmp.gt.f32.partialorder %v1545, 0.0
  %vm1848 = vcmp.gt.f32.partialorder %v1548, 0.0
  %vm1849 = vcmp.gt.f32.partialorder %v1553, 0.0
  %vm1850 = vcmp.gt.f32.partialorder %v1556, 0.0
  %vm1851 = vcmp.gt.f32.partialorder %v1561, 0.0
  %vm1852 = vcmp.gt.f32.partialorder %v1564, 0.0
  %vm1853 = vcmp.gt.f32.partialorder %v1569, 0.0
  %vm1854 = vcmp.gt.f32.partialorder %v1572, 0.0
  %vm1855 = vcmp.gt.f32.partialorder %v1577, 0.0
  %vm1856 = vcmp.gt.f32.partialorder %v1580, 0.0
  %vm1857 = vcmp.gt.f32.partialorder %v1585, 0.0
  %vm1858 = vcmp.gt.f32.partialorder %v1588, 0.0
  %vm1859 = vcmp.gt.f32.partialorder %v1593, 0.0
  %vm1860 = vcmp.gt.f32.partialorder %v1596, 0.0
  %vm1861 = vcmp.gt.f32.partialorder %v1601, 0.0
  %vm1862 = vcmp.gt.f32.partialorder %v1604, 0.0
  %vm1863 = vcmp.gt.f32.partialorder %v1609, 0.0
  %vm1864 = vcmp.gt.f32.partialorder %v1612, 0.0
  %vm1865 = vcmp.gt.f32.partialorder %v1617, 0.0
  %vm1866 = vcmp.gt.f32.partialorder %v1620, 0.0
  %vm1867 = vcmp.gt.f32.partialorder %v1625, 0.0
  %vm1868 = vcmp.gt.f32.partialorder %v1628, 0.0
  %vm1869 = vcmp.gt.f32.partialorder %v1633, 0.0
  %vm1870 = vcmp.gt.f32.partialorder %v1636, 0.0
  %vm1871 = vcmp.gt.f32.partialorder %v1641, 0.0
  %vm1872 = vcmp.gt.f32.partialorder %v1644, 0.0
  %vm1873 = vcmp.gt.f32.partialorder %v1649, 0.0
  %vm1874 = vcmp.gt.f32.partialorder %v1652, 0.0
  %vm1875 = vcmp.gt.f32.partialorder %v1657, 0.0
  %vm1876 = vcmp.gt.f32.partialorder %v1660, 0.0
  %vm1877 = vcmp.gt.f32.partialorder %v1665, 0.0
  %vm1878 = vcmp.gt.f32.partialorder %v1668, 0.0
  %vm1879 = vcmp.gt.f32.partialorder %v1673, 0.0
  %vm1880 = vcmp.gt.f32.partialorder %v1676, 0.0
  %vm1881 = vcmp.gt.f32.partialorder %v1681, 0.0
  %vm1882 = vcmp.gt.f32.partialorder %v1684, 0.0
  %v1883 = vmul.f32 %v905, 0.01
  %v1884 = vmul.f32 %v908, 0.01
  %v1885 = vmul.f32 %v913, 0.01
  %v1886 = vmul.f32 %v916, 0.01
  %v1887 = vmul.f32 %v921, 0.01
  %v1888 = vmul.f32 %v924, 0.01
  %v1889 = vmul.f32 %v929, 0.01
  %v1890 = vmul.f32 %v932, 0.01
  %v1891 = vmul.f32 %v937, 0.01
  %v1892 = vmul.f32 %v940, 0.01
  %v1893 = vmul.f32 %v945, 0.01
  %v1894 = vmul.f32 %v948, 0.01
  %v1895 = vmul.f32 %v953, 0.01
  %v1896 = vmul.f32 %v956, 0.01
  %v1897 = vmul.f32 %v961, 0.01
  %v1898 = vmul.f32 %v964, 0.01
  %v1899 = vmul.f32 %v969, 0.01
  %v1900 = vmul.f32 %v972, 0.01
  %v1901 = vmul.f32 %v977, 0.01
  %v1902 = vmul.f32 %v980, 0.01
  %v1903 = vmul.f32 %v985, 0.01
  %v1904 = vmul.f32 %v988, 0.01
  %v1905 = vmul.f32 %v993, 0.01
  %v1906 = vmul.f32 %v996, 0.01
  %v1907 = vmul.f32 %v1001, 0.01
  %v1908 = vmul.f32 %v1004, 0.01
  %v1909 = vmul.f32 %v1009, 0.01
  %v1910 = vmul.f32 %v1012, 0.01
  %v1911 = vmul.f32 %v1017, 0.01
  %v1912 = vmul.f32 %v1020, 0.01
  %v1913 = vmul.f32 %v1025, 0.01
  %v1914 = vmul.f32 %v1028, 0.01
  %v1915 = vmul.f32 %v1033, 0.01
  %v1916 = vmul.f32 %v1036, 0.01
  %v1917 = vmul.f32 %v1041, 0.01
  %v1918 = vmul.f32 %v1044, 0.01
  %v1919 = vmul.f32 %v1049, 0.01
  %v1920 = vmul.f32 %v1052, 0.01
  %v1921 = vmul.f32 %v1057, 0.01
  %v1922 = vmul.f32 %v1060, 0.01
  %v1923 = vmul.f32 %v1065, 0.01
  %v1924 = vmul.f32 %v1068, 0.01
  %v1925 = vmul.f32 %v1073, 0.01
  %v1926 = vmul.f32 %v1076, 0.01
  %v1927 = vmul.f32 %v1081, 0.01
  %v1928 = vmul.f32 %v1084, 0.01
  %v1929 = vmul.f32 %v1089, 0.01
  %v1930 = vmul.f32 %v1092, 0.01
  %v1931 = vmul.f32 %v1097, 0.01
  %v1932 = vmul.f32 %v1100, 0.01
  %v1933 = vmul.f32 %v1105, 0.01
  %v1934 = vmul.f32 %v1108, 0.01
  %v1935 = vmul.f32 %v1113, 0.01
  %v1936 = vmul.f32 %v1116, 0.01
  %v1937 = vmul.f32 %v1121, 0.01
  %v1938 = vmul.f32 %v1124, 0.01
  %v1939 = vmul.f32 %v1129, 0.01
  %v1940 = vmul.f32 %v1132, 0.01
  %v1941 = vmul.f32 %v1137, 0.01
  %v1942 = vmul.f32 %v1140, 0.01
  %v1943 = vmul.f32 %v1145, 0.01
  %v1944 = vmul.f32 %v1148, 0.01
  %v1945 = vmul.f32 %v1153, 0.01
  %v1946 = vmul.f32 %v1156, 0.01
  %v1947 = vmul.f32 %v1161, 0.01
  %v1948 = vmul.f32 %v1164, 0.01
  %v1949 = vmul.f32 %v1169, 0.01
  %v1950 = vmul.f32 %v1172, 0.01
  %v1951 = vmul.f32 %v1177, 0.01
  %v1952 = vmul.f32 %v1180, 0.01
  %v1953 = vmul.f32 %v1185, 0.01
  %v1954 = vmul.f32 %v1188, 0.01
  %v1955 = vmul.f32 %v1193, 0.01
  %v1956 = vmul.f32 %v1196, 0.01
  %v1957 = vmul.f32 %v1201, 0.01
  %v1958 = vmul.f32 %v1204, 0.01
  %v1959 = vmul.f32 %v1209, 0.01
  %v1960 = vmul.f32 %v1212, 0.01
  %v1961 = vmul.f32 %v1217, 0.01
  %v1962 = vmul.f32 %v1220, 0.01
  %v1963 = vmul.f32 %v1225, 0.01
  %v1964 = vmul.f32 %v1228, 0.01
  %v1965 = vmul.f32 %v1233, 0.01
  %v1966 = vmul.f32 %v1236, 0.01
  %v1967 = vmul.f32 %v1241, 0.01
  %v1968 = vmul.f32 %v1244, 0.01
  %v1969 = vmul.f32 %v1249, 0.01
  %v1970 = vmul.f32 %v1252, 0.01
  %v1971 = vmul.f32 %v1257, 0.01
  %v1972 = vmul.f32 %v1260, 0.01
  %v1973 = vmul.f32 %v1265, 0.01
  %v1974 = vmul.f32 %v1268, 0.01
  %v1975 = vmul.f32 %v1273, 0.01
  %v1976 = vmul.f32 %v1276, 0.01
  %v1977 = vmul.f32 %v1281, 0.01
  %v1978 = vmul.f32 %v1284, 0.01
  %v1979 = vmul.f32 %v1289, 0.01
  %v1980 = vmul.f32 %v1292, 0.01
  %v1981 = vmul.f32 %v1297, 0.01
  %v1982 = vmul.f32 %v1300, 0.01
  %v1983 = vmul.f32 %v1305, 0.01
  %v1984 = vmul.f32 %v1308, 0.01
  %v1985 = vmul.f32 %v1313, 0.01
  %v1986 = vmul.f32 %v1316, 0.01
  %v1987 = vmul.f32 %v1321, 0.01
  %v1988 = vmul.f32 %v1324, 0.01
  %v1989 = vmul.f32 %v1329, 0.01
  %v1990 = vmul.f32 %v1332, 0.01
  %v1991 = vmul.f32 %v1337, 0.01
  %v1992 = vmul.f32 %v1340, 0.01
  %v1993 = vmul.f32 %v1345, 0.01
  %v1994 = vmul.f32 %v1348, 0.01
  %v1995 = vmul.f32 %v1353, 0.01
  %v1996 = vmul.f32 %v1356, 0.01
  %v1997 = vmul.f32 %v1361, 0.01
  %v1998 = vmul.f32 %v1364, 0.01
  %v1999 = vmul.f32 %v1369, 0.01
  %v2000 = vmul.f32 %v1372, 0.01
  %v2001 = vmul.f32 %v1377, 0.01
  %v2002 = vmul.f32 %v1380, 0.01
  %v2003 = vmul.f32 %v1385, 0.01
  %v2004 = vmul.f32 %v1388, 0.01
  %v2005 = vmul.f32 %v1393, 0.01
  %v2006 = vmul.f32 %v1396, 0.01
  %v2007 = vmul.f32 %v1401, 0.01
  %v2008 = vmul.f32 %v1404, 0.01
  %v2009 = vmul.f32 %v1409, 0.01
  %v2010 = vmul.f32 %v1412, 0.01
  %v2011 = vmul.f32 %v1417, 0.01
  %v2012 = vmul.f32 %v1420, 0.01
  %v2013 = vmul.f32 %v1425, 0.01
  %v2014 = vmul.f32 %v1428, 0.01
  %v2015 = vmul.f32 %v1433, 0.01
  %v2016 = vmul.f32 %v1436, 0.01
  %v2017 = vmul.f32 %v1441, 0.01
  %v2018 = vmul.f32 %v1444, 0.01
  %v2019 = vmul.f32 %v1449, 0.01
  %v2020 = vmul.f32 %v1452, 0.01
  %v2021 = vmul.f32 %v1457, 0.01
  %v2022 = vmul.f32 %v1460, 0.01
  %v2023 = vmul.f32 %v1465, 0.01
  %v2024 = vmul.f32 %v1468, 0.01
  %v2025 = vmul.f32 %v1473, 0.01
  %v2026 = vmul.f32 %v1476, 0.01
  %v2027 = vmul.f32 %v1481, 0.01
  %v2028 = vmul.f32 %v1484, 0.01
  %v2029 = vmul.f32 %v1489, 0.01
  %v2030 = vmul.f32 %v1492, 0.01
  %v2031 = vmul.f32 %v1497, 0.01
  %v2032 = vmul.f32 %v1500, 0.01
  %v2033 = vmul.f32 %v1505, 0.01
  %v2034 = vmul.f32 %v1508, 0.01
  %v2035 = vmul.f32 %v1513, 0.01
  %v2036 = vmul.f32 %v1516, 0.01
  %v2037 = vmul.f32 %v1521, 0.01
  %v2038 = vmul.f32 %v1524, 0.01
  %v2039 = vmul.f32 %v1529, 0.01
  %v2040 = vmul.f32 %v1532, 0.01
  %v2041 = vmul.f32 %v1537, 0.01
  %v2042 = vmul.f32 %v1540, 0.01
  %v2043 = vmul.f32 %v1545, 0.01
  %v2044 = vmul.f32 %v1548, 0.01
  %v2045 = vmul.f32 %v1553, 0.01
  %v2046 = vmul.f32 %v1556, 0.01
  %v2047 = vmul.f32 %v1561, 0.01
  %v2048 = vmul.f32 %v1564, 0.01
  %v2049 = vmul.f32 %v1569, 0.01
  %v2050 = vmul.f32 %v1572, 0.01
  %v2051 = vmul.f32 %v1577, 0.01
  %v2052 = vmul.f32 %v1580, 0.01
  %v2053 = vmul.f32 %v1585, 0.01
  %v2054 = vmul.f32 %v1588, 0.01
  %v2055 = vmul.f32 %v1593, 0.01
  %v2056 = vmul.f32 %v1596, 0.01
  %v2057 = vmul.f32 %v1601, 0.01
  %v2058 = vmul.f32 %v1604, 0.01
  %v2059 = vmul.f32 %v1609, 0.01
  %v2060 = vmul.f32 %v1612, 0.01
  %v2061 = vmul.f32 %v1617, 0.01
  %v2062 = vmul.f32 %v1620, 0.01
  %v2063 = vmul.f32 %v1625, 0.01
  %v2064 = vmul.f32 %v1628, 0.01
  %v2065 = vmul.f32 %v1633, 0.01
  %v2066 = vmul.f32 %v1636, 0.01
  %v2067 = vmul.f32 %v1641, 0.01
  %v2068 = vmul.f32 %v1644, 0.01
  %v2069 = vmul.f32 %v1649, 0.01
  %v2070 = vmul.f32 %v1652, 0.01
  %v2071 = vmul.f32 %v1657, 0.01
  %v2072 = vmul.f32 %v1660, 0.01
  %v2073 = vmul.f32 %v1665, 0.01
  %v2074 = vmul.f32 %v1668, 0.01
  %v2075 = vmul.f32 %v1673, 0.01
  %v2076 = vmul.f32 %v1676, 0.01
  %v2077 = vmul.f32 %v1681, 0.01
  %v2078 = vmul.f32 %v1684, 0.01
  %v2079 = vsel %vm1687, %v905, %v1883
  %v2080 = vsel %vm1688, %v908, %v1884
  %v2081 = vsel %vm1689, %v913, %v1885
  %v2082 = vsel %vm1690, %v916, %v1886
  %v2083 = vsel %vm1691, %v921, %v1887
  %v2084 = vsel %vm1692, %v924, %v1888
  %v2085 = vsel %vm1693, %v929, %v1889
  %v2086 = vsel %vm1694, %v932, %v1890
  %v2087 = vsel %vm1695, %v937, %v1891
  %v2088 = vsel %vm1696, %v940, %v1892
  %v2089 = vsel %vm1697, %v945, %v1893
  %v2090 = vsel %vm1698, %v948, %v1894
  %v2091 = vsel %vm1699, %v953, %v1895
  %v2092 = vsel %vm1700, %v956, %v1896
  %v2093 = vsel %vm1701, %v961, %v1897
  %v2094 = vsel %vm1702, %v964, %v1898
  %v2095 = vsel %vm1703, %v969, %v1899
  %v2096 = vsel %vm1704, %v972, %v1900
  %v2097 = vsel %vm1705, %v977, %v1901
  %v2098 = vsel %vm1706, %v980, %v1902
  %v2099 = vsel %vm1707, %v985, %v1903
  %v2100 = vsel %vm1708, %v988, %v1904
  %v2101 = vsel %vm1709, %v993, %v1905
  %v2102 = vsel %vm1710, %v996, %v1906
  %v2103 = vsel %vm1711, %v1001, %v1907
  %v2104 = vsel %vm1712, %v1004, %v1908
  %v2105 = vsel %vm1713, %v1009, %v1909
  %v2106 = vsel %vm1714, %v1012, %v1910
  %v2107 = vsel %vm1715, %v1017, %v1911
  %v2108 = vsel %vm1716, %v1020, %v1912
  %v2109 = vsel %vm1717, %v1025, %v1913
  %v2110 = vsel %vm1718, %v1028, %v1914
  %v2111 = vsel %vm1719, %v1033, %v1915
  %v2112 = vsel %vm1720, %v1036, %v1916
  %v2113 = vsel %vm1721, %v1041, %v1917
  %v2114 = vsel %vm1722, %v1044, %v1918
  %v2115 = vsel %vm1723, %v1049, %v1919
  %v2116 = vsel %vm1724, %v1052, %v1920
  %v2117 = vsel %vm1725, %v1057, %v1921
  %v2118 = vsel %vm1726, %v1060, %v1922
  %v2119 = vsel %vm1727, %v1065, %v1923
  %v2120 = vsel %vm1728, %v1068, %v1924
  %v2121 = vsel %vm1729, %v1073, %v1925
  %v2122 = vsel %vm1730, %v1076, %v1926
  %v2123 = vsel %vm1731, %v1081, %v1927
  %v2124 = vsel %vm1732, %v1084, %v1928
  %v2125 = vsel %vm1733, %v1089, %v1929
  %v2126 = vsel %vm1734, %v1092, %v1930
  %v2127 = vsel %vm1735, %v1097, %v1931
  %v2128 = vsel %vm1736, %v1100, %v1932
  %v2129 = vsel %vm1737, %v1105, %v1933
  %v2130 = vsel %vm1738, %v1108, %v1934
  %v2131 = vsel %vm1739, %v1113, %v1935
  %v2132 = vsel %vm1740, %v1116, %v1936
  %v2133 = vsel %vm1741, %v1121, %v1937
  %v2134 = vsel %vm1742, %v1124, %v1938
  %v2135 = vsel %vm1743, %v1129, %v1939
  %v2136 = vsel %vm1744, %v1132, %v1940
  %v2137 = vsel %vm1745, %v1137, %v1941
  %v2138 = vsel %vm1746, %v1140, %v1942
  %v2139 = vsel %vm1747, %v1145, %v1943
  %v2140 = vsel %vm1748, %v1148, %v1944
  %v2141 = vsel %vm1749, %v1153, %v1945
  %v2142 = vsel %vm1750, %v1156, %v1946
  %v2143 = vsel %vm1751, %v1161, %v1947
  %v2144 = vsel %vm1752, %v1164, %v1948
  %v2145 = vsel %vm1753, %v1169, %v1949
  %v2146 = vsel %vm1754, %v1172, %v1950
  %v2147 = vsel %vm1755, %v1177, %v1951
  %v2148 = vsel %vm1756, %v1180, %v1952
  %v2149 = vsel %vm1757, %v1185, %v1953
  %v2150 = vsel %vm1758, %v1188, %v1954
  %v2151 = vsel %vm1759, %v1193, %v1955
  %v2152 = vsel %vm1760, %v1196, %v1956
  %v2153 = vsel %vm1761, %v1201, %v1957
  %v2154 = vsel %vm1762, %v1204, %v1958
  %v2155 = vsel %vm1763, %v1209, %v1959
  %v2156 = vsel %vm1764, %v1212, %v1960
  %v2157 = vsel %vm1765, %v1217, %v1961
  %v2158 = vsel %vm1766, %v1220, %v1962
  %v2159 = vsel %vm1767, %v1225, %v1963
  %v2160 = vsel %vm1768, %v1228, %v1964
  %v2161 = vsel %vm1769, %v1233, %v1965
  %v2162 = vsel %vm1770, %v1236, %v1966
  %v2163 = vsel %vm1771, %v1241, %v1967
  %v2164 = vsel %vm1772, %v1244, %v1968
  %v2165 = vsel %vm1773, %v1249, %v1969
  %v2166 = vsel %vm1774, %v1252, %v1970
  %v2167 = vsel %vm1775, %v1257, %v1971
  %v2168 = vsel %vm1776, %v1260, %v1972
  %v2169 = vsel %vm1777, %v1265, %v1973
  %v2170 = vsel %vm1778, %v1268, %v1974
  %v2171 = vsel %vm1779, %v1273, %v1975
  %v2172 = vsel %vm1780, %v1276, %v1976
  %v2173 = vsel %vm1781, %v1281, %v1977
  %v2174 = vsel %vm1782, %v1284, %v1978
  %v2175 = vsel %vm1783, %v1289, %v1979
  %v2176 = vsel %vm1784, %v1292, %v1980
  %v2177 = vsel %vm1785, %v1297, %v1981
  %v2178 = vsel %vm1786, %v1300, %v1982
  %v2179 = vsel %vm1787, %v1305, %v1983
  %v2180 = vsel %vm1788, %v1308, %v1984
  %v2181 = vsel %vm1789, %v1313, %v1985
  %v2182 = vsel %vm1790, %v1316, %v1986
  %v2183 = vsel %vm1791, %v1321, %v1987
  %v2184 = vsel %vm1792, %v1324, %v1988
  %v2185 = vsel %vm1793, %v1329, %v1989
  %v2186 = vsel %vm1794, %v1332, %v1990
  %v2187 = vsel %vm1795, %v1337, %v1991
  %v2188 = vsel %vm1796, %v1340, %v1992
  %v2189 = vsel %vm1797, %v1345, %v1993
  %v2190 = vsel %vm1798, %v1348, %v1994
  %v2191 = vsel %vm1799, %v1353, %v1995
  %v2192 = vsel %vm1800, %v1356, %v1996
  %v2193 = vsel %vm1801, %v1361, %v1997
  %v2194 = vsel %vm1802, %v1364, %v1998
  %v2195 = vsel %vm1803, %v1369, %v1999
  %v2196 = vsel %vm1804, %v1372, %v2000
  %v2197 = vsel %vm1805, %v1377, %v2001
  %v2198 = vsel %vm1806, %v1380, %v2002
  %v2199 = vsel %vm1807, %v1385, %v2003
  %v2200 = vsel %vm1808, %v1388, %v2004
  %v2201 = vsel %vm1809, %v1393, %v2005
  %v2202 = vsel %vm1810, %v1396, %v2006
  %v2203 = vsel %vm1811, %v1401, %v2007
  %v2204 = vsel %vm1812, %v1404, %v2008
  %v2205 = vsel %vm1813, %v1409, %v2009
  %v2206 = vsel %vm1814, %v1412, %v2010
  %v2207 = vsel %vm1815, %v1417, %v2011
  %v2208 = vsel %vm1816, %v1420, %v2012
  %v2209 = vsel %vm1817, %v1425, %v2013
  %v2210 = vsel %vm1818, %v1428, %v2014
  %v2211 = vsel %vm1819, %v1433, %v2015
  %v2212 = vsel %vm1820, %v1436, %v2016
  %v2213 = vsel %vm1821, %v1441, %v2017
  %v2214 = vsel %vm1822, %v1444, %v2018
  %v2215 = vsel %vm1823, %v1449, %v2019
  %v2216 = vsel %vm1824, %v1452, %v2020
  %v2217 = vsel %vm1825, %v1457, %v2021
  %v2218 = vsel %vm1826, %v1460, %v2022
  %v2219 = vsel %vm1827, %v1465, %v2023
  %v2220 = vsel %vm1828, %v1468, %v2024
  %v2221 = vsel %vm1829, %v1473, %v2025
  %v2222 = vsel %vm1830, %v1476, %v2026
  %v2223 = vsel %vm1831, %v1481, %v2027
  %v2224 = vsel %vm1832, %v1484, %v2028
  %v2225 = vsel %vm1833, %v1489, %v2029
  %v2226 = vsel %vm1834, %v1492, %v2030
  %v2227 = vsel %vm1835, %v1497, %v2031
  %v2228 = vsel %vm1836, %v1500, %v2032
  %v2229 = vsel %vm1837, %v1505, %v2033
  %v2230 = vsel %vm1838, %v1508, %v2034
  %v2231 = vsel %vm1839, %v1513, %v2035
  %v2232 = vsel %vm1840, %v1516, %v2036
  %v2233 = vsel %vm1841, %v1521, %v2037
  %v2234 = vsel %vm1842, %v1524, %v2038
  %v2235 = vsel %vm1843, %v1529, %v2039
  %v2236 = vsel %vm1844, %v1532, %v2040
  %v2237 = vsel %vm1845, %v1537, %v2041
  %v2238 = vsel %vm1846, %v1540, %v2042
  %v2239 = vsel %vm1847, %v1545, %v2043
  %v2240 = vsel %vm1848, %v1548, %v2044
  %v2241 = vsel %vm1849, %v1553, %v2045
  %v2242 = vsel %vm1850, %v1556, %v2046
  %v2243 = vsel %vm1851, %v1561, %v2047
  %v2244 = vsel %vm1852, %v1564, %v2048
  %v2245 = vsel %vm1853, %v1569, %v2049
  %v2246 = vsel %vm1854, %v1572, %v2050
  %v2247 = vsel %vm1855, %v1577, %v2051
  %v2248 = vsel %vm1856, %v1580, %v2052
  %v2249 = vsel %vm1857, %v1585, %v2053
  %v2250 = vsel %vm1858, %v1588, %v2054
  %v2251 = vsel %vm1859, %v1593, %v2055
  %v2252 = vsel %vm1860, %v1596, %v2056
  %v2253 = vsel %vm1861, %v1601, %v2057
  %v2254 = vsel %vm1862, %v1604, %v2058
  %v2255 = vsel %vm1863, %v1609, %v2059
  %v2256 = vsel %vm1864, %v1612, %v2060
  %v2257 = vsel %vm1865, %v1617, %v2061
  %v2258 = vsel %vm1866, %v1620, %v2062
  %v2259 = vsel %vm1867, %v1625, %v2063
  %v2260 = vsel %vm1868, %v1628, %v2064
  %v2261 = vsel %vm1869, %v1633, %v2065
  %v2262 = vsel %vm1870, %v1636, %v2066
  %v2263 = vsel %vm1871, %v1641, %v2067
  %v2264 = vsel %vm1872, %v1644, %v2068
  %v2265 = vsel %vm1873, %v1649, %v2069
  %v2266 = vsel %vm1874, %v1652, %v2070
  %v2267 = vsel %vm1875, %v1657, %v2071
  %v2268 = vsel %vm1876, %v1660, %v2072
  %v2269 = vsel %vm1877, %v1665, %v2073
  %v2270 = vsel %vm1878, %v1668, %v2074
  %v2271 = vsel %vm1879, %v1673, %v2075
  %v2272 = vsel %vm1880, %v1676, %v2076
  %v2273 = vsel %vm1881, %v1681, %v2077
  %v2274 = vsel %vm1882, %v1684, %v2078
  %v2275 = vmax.f32 %v2079, %v2128
  %v2276 = vmax.f32 %v2080, %v2129
  %v2277 = vmax.f32 %v2081, %v2130
  %v2278 = vmax.f32 %v2082, %v2131
  %v2279 = vmax.f32 %v2083, %v2132
  %v2280 = vmax.f32 %v2084, %v2133
  %v2281 = vmax.f32 %v2085, %v2134
  %v2282 = vmax.f32 %v2086, %v2135
  %v2283 = vmax.f32 %v2087, %v2136
  %v2284 = vmax.f32 %v2088, %v2137
  %v2285 = vmax.f32 %v2089, %v2138
  %v2286 = vmax.f32 %v2090, %v2139
  %v2287 = vmax.f32 %v2091, %v2140
  %v2288 = vmax.f32 %v2092, %v2141
  %v2289 = vmax.f32 %v2093, %v2142
  %v2290 = vmax.f32 %v2094, %v2143
  %v2291 = vmax.f32 %v2095, %v2144
  %v2292 = vmax.f32 %v2096, %v2145
  %v2293 = vmax.f32 %v2097, %v2146
  %v2294 = vmax.f32 %v2098, %v2147
  %v2295 = vmax.f32 %v2099, %v2148
  %v2296 = vmax.f32 %v2100, %v2149
  %v2297 = vmax.f32 %v2101, %v2150
  %v2298 = vmax.f32 %v2102, %v2151
  %v2299 = vmax.f32 %v2103, %v2152
  %v2300 = vmax.f32 %v2104, %v2153
  %v2301 = vmax.f32 %v2105, %v2154
  %v2302 = vmax.f32 %v2106, %v2155
  %v2303 = vmax.f32 %v2107, %v2156
  %v2304 = vmax.f32 %v2108, %v2157
  %v2305 = vmax.f32 %v2109, %v2158
  %v2306 = vmax.f32 %v2110, %v2159
  %v2307 = vmax.f32 %v2111, %v2160
  %v2308 = vmax.f32 %v2112, %v2161
  %v2309 = vmax.f32 %v2113, %v2162
  %v2310 = vmax.f32 %v2114, %v2163
  %v2311 = vmax.f32 %v2115, %v2164
  %v2312 = vmax.f32 %v2116, %v2165
  %v2313 = vmax.f32 %v2117, %v2166
  %v2314 = vmax.f32 %v2118, %v2167
  %v2315 = vmax.f32 %v2119, %v2168
  %v2316 = vmax.f32 %v2120, %v2169
  %v2317 = vmax.f32 %v2121, %v2170
  %v2318 = vmax.f32 %v2122, %v2171
  %v2319 = vmax.f32 %v2123, %v2172
  %v2320 = vmax.f32 %v2124, %v2173
  %v2321 = vmax.f32 %v2125, %v2174
  %v2322 = vmax.f32 %v2126, %v2175
  %v2323 = vmax.f32 %v2127, %v2176
  %v2324 = vmax.f32 %v2177, %v2226
  %v2325 = vmax.f32 %v2178, %v2227
  %v2326 = vmax.f32 %v2179, %v2228
  %v2327 = vmax.f32 %v2180, %v2229
  %v2328 = vmax.f32 %v2181, %v2230
  %v2329 = vmax.f32 %v2182, %v2231
  %v2330 = vmax.f32 %v2183, %v2232
  %v2331 = vmax.f32 %v2184, %v2233
  %v2332 = vmax.f32 %v2185, %v2234
  %v2333 = vmax.f32 %v2186, %v2235
  %v2334 = vmax.f32 %v2187, %v2236
  %v2335 = vmax.f32 %v2188, %v2237
  %v2336 = vmax.f32 %v2189, %v2238
  %v2337 = vmax.f32 %v2190, %v2239
  %v2338 = vmax.f32 %v2191, %v2240
  %v2339 = vmax.f32 %v2192, %v2241
  %v2340 = vmax.f32 %v2193, %v2242
  %v2341 = vmax.f32 %v2194, %v2243
  %v2342 = vmax.f32 %v2195, %v2244
  %v2343 = vmax.f32 %v2196, %v2245
  %v2344 = vmax.f32 %v2197, %v2246
  %v2345 = vmax.f32 %v2198, %v2247
  %v2346 = vmax.f32 %v2199, %v2248
  %v2347 = vmax.f32 %v2200, %v2249
  %v2348 = vmax.f32 %v2201, %v2250
  %v2349 = vmax.f32 %v2202, %v2251
  %v2350 = vmax.f32 %v2203, %v2252
  %v2351 = vmax.f32 %v2204, %v2253
  %v2352 = vmax.f32 %v2205, %v2254
  %v2353 = vmax.f32 %v2206, %v2255
  %v2354 = vmax.f32 %v2207, %v2256
  %v2355 = vmax.f32 %v2208, %v2257
  %v2356 = vmax.f32 %v2209, %v2258
  %v2357 = vmax.f32 %v2210, %v2259
  %v2358 = vmax.f32 %v2211, %v2260
  %v2359 = vmax.f32 %v2212, %v2261
  %v2360 = vmax.f32 %v2213, %v2262
  %v2361 = vmax.f32 %v2214, %v2263
  %v2362 = vmax.f32 %v2215, %v2264
  %v2363 = vmax.f32 %v2216, %v2265
  %v2364 = vmax.f32 %v2217, %v2266
  %v2365 = vmax.f32 %v2218, %v2267
  %v2366 = vmax.f32 %v2219, %v2268
  %v2367 = vmax.f32 %v2220, %v2269
  %v2368 = vmax.f32 %v2221, %v2270
  %v2369 = vmax.f32 %v2222, %v2271
  %v2370 = vmax.f32 %v2223, %v2272
  %v2371 = vmax.f32 %v2224, %v2273
  %v2372 = vmax.f32 %v2225, %v2274
  %v2373 = vmax.f32 %v2275, %v2324
  %v2374 = vmax.f32 %v2276, %v2325
  %v2375 = vmax.f32 %v2277, %v2326
  %v2376 = vmax.f32 %v2278, %v2327
  %v2377 = vmax.f32 %v2279, %v2328
  %v2378 = vmax.f32 %v2280, %v2329
  %v2379 = vmax.f32 %v2281, %v2330
  %v2380 = vmax.f32 %v2282, %v2331
  %v2381 = vmax.f32 %v2283, %v2332
  %v2382 = vmax.f32 %v2284, %v2333
  %v2383 = vmax.f32 %v2285, %v2334
  %v2384 = vmax.f32 %v2286, %v2335
  %v2385 = vmax.f32 %v2287, %v2336
  %v2386 = vmax.f32 %v2288, %v2337
  %v2387 = vmax.f32 %v2289, %v2338
  %v2388 = vmax.f32 %v2290, %v2339
  %v2389 = vmax.f32 %v2291, %v2340
  %v2390 = vmax.f32 %v2292, %v2341
  %v2391 = vmax.f32 %v2293, %v2342
  %v2392 = vmax.f32 %v2294, %v2343
  %v2393 = vmax.f32 %v2295, %v2344
  %v2394 = vmax.f32 %v2296, %v2345
  %v2395 = vmax.f32 %v2297, %v2346
  %v2396 = vmax.f32 %v2298, %v2347
  %v2397 = vmax.f32 %v2299, %v2348
  %v2398 = vmax.f32 %v2300, %v2349
  %v2399 = vmax.f32 %v2301, %v2350
  %v2400 = vmax.f32 %v2302, %v2351
  %v2401 = vmax.f32 %v2303, %v2352
  %v2402 = vmax.f32 %v2304, %v2353
  %v2403 = vmax.f32 %v2305, %v2354
  %v2404 = vmax.f32 %v2306, %v2355
  %v2405 = vmax.f32 %v2307, %v2356
  %v2406 = vmax.f32 %v2308, %v2357
  %v2407 = vmax.f32 %v2309, %v2358
  %v2408 = vmax.f32 %v2310, %v2359
  %v2409 = vmax.f32 %v2311, %v2360
  %v2410 = vmax.f32 %v2312, %v2361
  %v2411 = vmax.f32 %v2313, %v2362
  %v2412 = vmax.f32 %v2314, %v2363
  %v2413 = vmax.f32 %v2315, %v2364
  %v2414 = vmax.f32 %v2316, %v2365
  %v2415 = vmax.f32 %v2317, %v2366
  %v2416 = vmax.f32 %v2318, %v2367
  %v2417 = vmax.f32 %v2319, %v2368
  %v2418 = vmax.f32 %v2320, %v2369
  %v2419 = vmax.f32 %v2321, %v2370
  %v2420 = vmax.f32 %v2322, %v2371
  %v2421 = vmax.f32 %v2323, %v2372
  %2422 = vst [vmem:[%s3] sm:$0xff] %v2373
  %2423 = vst [vmem:[%s3 + $0x8] sm:$0xff] %v2374
  %2424 = vst [vmem:[%s3 + $0x10] sm:$0xff] %v2375
  %2425 = vst [vmem:[%s3 + $0x18] sm:$0xff] %v2376
  %2426 = vst [vmem:[%s3 + $0x20] sm:$0xff] %v2377
  %2427 = vst [vmem:[%s3 + $0x28] sm:$0xff] %v2378
  %2428 = vst [vmem:[%s3 + $0x30] sm:$0xff] %v2379
  %2429 = vst [vmem:[%s3 + $0x38] sm:$0xff] %v2380
  %2430 = vst [vmem:[%s3 + $0x40] sm:$0xff] %v2381
  %2431 = vst [vmem:[%s3 + $0x48] sm:$0xff] %v2382
  %2432 = vst [vmem:[%s3 + $0x50] sm:$0xff] %v2383
  %2433 = vst [vmem:[%s3 + $0x58] sm:$0xff] %v2384
  %2434 = vst [vmem:[%s3 + $0x60] sm:$0xff] %v2385
  %2435 = vst [vmem:[%s3 + $0x68] sm:$0xff] %v2386
  %2436 = vst [vmem:[%s3 + $0x70] sm:$0xff] %v2387
  %2437 = vst [vmem:[%s3 + $0x78] sm:$0xff] %v2388
  %2438 = vst [vmem:[%s3 + $0x80] sm:$0xff] %v2389
  %2439 = vst [vmem:[%s3 + $0x88] sm:$0xff] %v2390
  %2440 = vst [vmem:[%s3 + $0x90] sm:$0xff] %v2391
  %2441 = vst [vmem:[%s3 + $0x98] sm:$0xff] %v2392
  %2442 = vst [vmem:[%s3 + $0xa0] sm:$0xff] %v2393
  %2443 = vst [vmem:[%s3 + $0xa8] sm:$0xff] %v2394
  %2444 = vst [vmem:[%s3 + $0xb0] sm:$0xff] %v2395
  %2445 = vst [vmem:[%s3 + $0xb8] sm:$0xff] %v2396
  %2446 = vst [vmem:[%s3 + $0xc0] sm:$0xff] %v2397
  %2447 = vst [vmem:[%s3 + $0xc8] sm:$0xff] %v2398
  %2448 = vst [vmem:[%s3 + $0xd0] sm:$0xff] %v2399
  %2449 = vst [vmem:[%s3 + $0xd8] sm:$0xff] %v2400
  %2450 = vst [vmem:[%s3 + $0xe0] sm:$0xff] %v2401
  %2451 = vst [vmem:[%s3 + $0xe8] sm:$0xff] %v2402
  %2452 = vst [vmem:[%s3 + $0xf0] sm:$0xff] %v2403
  %2453 = vst [vmem:[%s3 + $0xf8] sm:$0xff] %v2404
  %2454 = vst [vmem:[%s3 + $0x100] sm:$0xff] %v2405
  %2455 = vst [vmem:[%s3 + $0x108] sm:$0xff] %v2406
  %2456 = vst [vmem:[%s3 + $0x110] sm:$0xff] %v2407
  %2457 = vst [vmem:[%s3 + $0x118] sm:$0xff] %v2408
  %2458 = vst [vmem:[%s3 + $0x120] sm:$0xff] %v2409
  %2459 = vst [vmem:[%s3 + $0x128] sm:$0xff] %v2410
  %2460 = vst [vmem:[%s3 + $0x130] sm:$0xff] %v2411
  %2461 = vst [vmem:[%s3 + $0x138] sm:$0xff] %v2412
  %2462 = vst [vmem:[%s3 + $0x140] sm:$0xff] %v2413
  %2463 = vst [vmem:[%s3 + $0x148] sm:$0xff] %v2414
  %2464 = vst [vmem:[%s3 + $0x150] sm:$0xff] %v2415
  %2465 = vst [vmem:[%s3 + $0x158] sm:$0xff] %v2416
  %2466 = vst [vmem:[%s3 + $0x160] sm:$0xff] %v2417
  %2467 = vst [vmem:[%s3 + $0x168] sm:$0xff] %v2418
  %2468 = vst [vmem:[%s3 + $0x170] sm:$0xff] %v2419
  %2469 = vst [vmem:[%s3 + $0x178] sm:$0xff] %v2420
  %2470 = vst [vmem:[%s3 + $0x180] sm:$0xff] %v2421
  // Predicated region
  $region14: #{cifarcnn_hyper_forward.6} parent=0 // pred_check
    _
  $region15: #{cifarcnn_hyper_forward.6} parent=0 // pred_check_branch
    %2472 = sbr.rel (0) target = $region17
  $region16: #{cifarcnn_hyper_forward.6} parent=0 // pred_region
    _
  $region17: #{cifarcnn_hyper_forward.6} parent=0 // pred_fallthru
    _
  // Predicated region
  $region18: #{cifarcnn_hyper_forward.6} parent=0 // pred_check
    _
  $region19: #{cifarcnn_hyper_forward.6} parent=0 // pred_check_branch
    %2474 = sbr.rel (0) target = $region21
  $region20: #{cifarcnn_hyper_forward.6} parent=0 // pred_region
    _
  $region21: #{cifarcnn_hyper_forward.6} parent=0 // pred_fallthru
    _

// kernel: cifarcnn_hyper_forward.7
$region0: #{cifarcnn_hyper_forward.7}
  #allocation0 [shape = 'u32[]', space=smem, size = 0x4, offset = 0x4, fixed_abs, tag = 'smem constant byte address 0x4 - core index']
  #allocation1 [shape = 'u32[144,128]{1,0:T(1,128)}', space=vmem, size = 0x12000, scoped, tag = 'internal scratch']
  %s0 = inlined_call_operand.vmem [shape: bf16[288,512], index: 0, kind: input, shape index: {}]
  %s1 = inlined_call_operand.vmem [shape: bf16[512,128], index: 1, kind: input, shape index: {}]
  %s2 = inlined_call_operand.vmem [shape: f32[1,128], index: 2, kind: input, shape index: {}]
  %s3 = inlined_call_operand.vmem [shape: f32[72,128], index: 3, kind: output, shape index: {}]
  %s4 = sld [smem:[#allocation0]]
  $region22: #{cifarcnn_hyper_forward.7} parent=0
    _
  %s6 = ssub.s32 1, %s4
  %s7 = scalar_select 0, %s6, %s4
  // Predicated region
  $region2: #{cifarcnn_hyper_forward.7} parent=0 // pred_check
    _
  $region3: #{cifarcnn_hyper_forward.7} parent=0 // pred_check_branch
    %9 = sbr.rel (0) target = $region5
  $region4: #{cifarcnn_hyper_forward.7} parent=0 // pred_region
    _
  $region5: #{cifarcnn_hyper_forward.7} parent=0 // pred_fallthru
    _
  // Predicated region
  $region6: #{cifarcnn_hyper_forward.7} parent=0 // pred_check
    _
  $region7: #{cifarcnn_hyper_forward.7} parent=0 // pred_check_branch
    %11 = sbr.rel (0) target = $region9
  $region8: #{cifarcnn_hyper_forward.7} parent=0 // pred_region
    _
  $region9: #{cifarcnn_hyper_forward.7} parent=0 // pred_fallthru
    _
  // Predicated region
  $region10: #{cifarcnn_hyper_forward.7} parent=0 // pred_check
    _
  $region11: #{cifarcnn_hyper_forward.7} parent=0 // pred_check_branch
    %13 = sbr.rel (0) target = $region13
  $region12: #{cifarcnn_hyper_forward.7} parent=0 // pred_region
    _
  $region13: #{cifarcnn_hyper_forward.7} parent=0 // pred_fallthru
    _
  %v15 = vld [vmem:[%s0] sm:$0xff]
  %v16 = vld [vmem:[%s0 + $0x8] sm:$0xff]
  %v17 = vld [vmem:[%s0 + $0x10] sm:$0xff]
  %v18 = vld [vmem:[%s0 + $0x18] sm:$0xff]
  %v19 = vld [vmem:[%s0 + $0x20] sm:$0xff]
  %v20 = vld [vmem:[%s0 + $0x28] sm:$0xff]
  %v21 = vld [vmem:[%s0 + $0x30] sm:$0xff]
  %v22 = vld [vmem:[%s0 + $0x38] sm:$0xff]
  %v23 = vld [vmem:[%s0 + $0x40] sm:$0xff]
  %v24 = vld [vmem:[%s0 + $0x48] sm:$0xff]
  %v25 = vld [vmem:[%s0 + $0x50] sm:$0xff]
  %v26 = vld [vmem:[%s0 + $0x58] sm:$0xff]
  %v27 = vld [vmem:[%s0 + $0x60] sm:$0xff]
  %v28 = vld [vmem:[%s0 + $0x68] sm:$0xff]
  %v29 = vld [vmem:[%s0 + $0x70] sm:$0xff]
  %v30 = vld [vmem:[%s0 + $0x78] sm:$0xff]
  %v31 = vld [vmem:[%s0 + $0x80] sm:$0xff]
  %v32 = vld [vmem:[%s0 + $0x88] sm:$0xff]
  %v33 = vld [vmem:[%s0 + $0x90] sm:$0xff]
  %v34 = vld [vmem:[%s0 + $0x98] sm:$0xff]
  %v35 = vld [vmem:[%s0 + $0xa0] sm:$0xff]
  %v36 = vld [vmem:[%s0 + $0xa8] sm:$0xff]
  %v37 = vld [vmem:[%s0 + $0xb0] sm:$0xff]
  %v38 = vld [vmem:[%s0 + $0xb8] sm:$0xff]
  %v39 = vld [vmem:[%s0 + $0xc0] sm:$0xff]
  %v40 = vld [vmem:[%s0 + $0xc8] sm:$0xff]
  %v41 = vld [vmem:[%s0 + $0xd0] sm:$0xff]
  %v42 = vld [vmem:[%s0 + $0xd8] sm:$0xff]
  %v43 = vld [vmem:[%s0 + $0xe0] sm:$0xff]
  %v44 = vld [vmem:[%s0 + $0xe8] sm:$0xff]
  %v45 = vld [vmem:[%s0 + $0xf0] sm:$0xff]
  %v46 = vld [vmem:[%s0 + $0xf8] sm:$0xff]
  %v47 = vld [vmem:[%s0 + $0x100] sm:$0xff]
  %v48 = vld [vmem:[%s0 + $0x108] sm:$0xff]
  %v49 = vld [vmem:[%s0 + $0x110] sm:$0xff]
  %v50 = vld [vmem:[%s0 + $0x118] sm:$0xff]
  %v51 = vld [vmem:[%s0 + $0x120] sm:$0xff]
  %v52 = vld [vmem:[%s0 + $0x128] sm:$0xff]
  %v53 = vld [vmem:[%s0 + $0x130] sm:$0xff]
  %v54 = vld [vmem:[%s0 + $0x138] sm:$0xff]
  %v55 = vld [vmem:[%s0 + $0x140] sm:$0xff]
  %v56 = vld [vmem:[%s0 + $0x148] sm:$0xff]
  %v57 = vld [vmem:[%s0 + $0x150] sm:$0xff]
  %v58 = vld [vmem:[%s0 + $0x158] sm:$0xff]
  %v59 = vld [vmem:[%s0 + $0x160] sm:$0xff]
  %v60 = vld [vmem:[%s0 + $0x168] sm:$0xff]
  %v61 = vld [vmem:[%s0 + $0x170] sm:$0xff]
  %v62 = vld [vmem:[%s0 + $0x178] sm:$0xff]
  %v63 = vld [vmem:[%s0 + $0x180] sm:$0xff]
  %v64 = vld [vmem:[%s0 + $0x188] sm:$0xff]
  %v65 = vld [vmem:[%s0 + $0x190] sm:$0xff]
  %v66 = vld [vmem:[%s0 + $0x198] sm:$0xff]
  %v67 = vld [vmem:[%s0 + $0x1a0] sm:$0xff]
  %v68 = vld [vmem:[%s0 + $0x1a8] sm:$0xff]
  %v69 = vld [vmem:[%s0 + $0x1b0] sm:$0xff]
  %v70 = vld [vmem:[%s0 + $0x1b8] sm:$0xff]
  %v71 = vld [vmem:[%s0 + $0x1c0] sm:$0xff]
  %v72 = vld [vmem:[%s0 + $0x1c8] sm:$0xff]
  %v73 = vld [vmem:[%s0 + $0x1d0] sm:$0xff]
  %v74 = vld [vmem:[%s0 + $0x1d8] sm:$0xff]
  %v75 = vld [vmem:[%s0 + $0x1e0] sm:$0xff]
  %v76 = vld [vmem:[%s0 + $0x1e8] sm:$0xff]
  %v77 = vld [vmem:[%s0 + $0x1f0] sm:$0xff]
  %v78 = vld [vmem:[%s0 + $0x1f8] sm:$0xff]
  %v79 = vld [vmem:[%s0 + $0x200] sm:$0xff]
  %v80 = vld [vmem:[%s0 + $0x208] sm:$0xff]
  %v81 = vld [vmem:[%s0 + $0x210] sm:$0xff]
  %v82 = vld [vmem:[%s0 + $0x218] sm:$0xff]
  %v83 = vld [vmem:[%s0 + $0x220] sm:$0xff]
  %v84 = vld [vmem:[%s0 + $0x228] sm:$0xff]
  %v85 = vld [vmem:[%s0 + $0x230] sm:$0xff]
  %v86 = vld [vmem:[%s0 + $0x238] sm:$0xff]
  %v87 = vld [vmem:[%s1] sm:$0xf]
  %v88 = vld [vmem:[%s1 + $0x4] sm:$0xf]
  %v89 = vld [vmem:[%s1 + $0x8] sm:$0xf]
  %v90 = vld [vmem:[%s1 + $0xc] sm:$0xf]
  %v91 = vld [vmem:[%s1 + $0x10] sm:$0xf]
  %v92 = vld [vmem:[%s1 + $0x14] sm:$0xf]
  %v93 = vld [vmem:[%s1 + $0x18] sm:$0xf]
  %v94 = vld [vmem:[%s1 + $0x1c] sm:$0xf]
  %v95 = vld [vmem:[%s1 + $0x20] sm:$0xf]
  %v96 = vld [vmem:[%s1 + $0x24] sm:$0xf]
  %v97 = vld [vmem:[%s1 + $0x28] sm:$0xf]
  %v98 = vld [vmem:[%s1 + $0x2c] sm:$0xf]
  %v99 = vld [vmem:[%s1 + $0x30] sm:$0xf]
  %v100 = vld [vmem:[%s1 + $0x34] sm:$0xf]
  %v101 = vld [vmem:[%s1 + $0x38] sm:$0xf]
  %v102 = vld [vmem:[%s1 + $0x3c] sm:$0xf]
  %v103 = vld [vmem:[%s1 + $0x40] sm:$0xf]
  %v104 = vld [vmem:[%s1 + $0x44] sm:$0xf]
  %v105 = vld [vmem:[%s1 + $0x48] sm:$0xf]
  %v106 = vld [vmem:[%s1 + $0x4c] sm:$0xf]
  %v107 = vld [vmem:[%s1 + $0x50] sm:$0xf]
  %v108 = vld [vmem:[%s1 + $0x54] sm:$0xf]
  %v109 = vld [vmem:[%s1 + $0x58] sm:$0xf]
  %v110 = vld [vmem:[%s1 + $0x5c] sm:$0xf]
  %v111 = vld [vmem:[%s1 + $0x60] sm:$0xf]
  %v112 = vld [vmem:[%s1 + $0x64] sm:$0xf]
  %v113 = vld [vmem:[%s1 + $0x68] sm:$0xf]
  %v114 = vld [vmem:[%s1 + $0x6c] sm:$0xf]
  %v115 = vld [vmem:[%s1 + $0x70] sm:$0xf]
  %v116 = vld [vmem:[%s1 + $0x74] sm:$0xf]
  %v117 = vld [vmem:[%s1 + $0x78] sm:$0xf]
  %v118 = vld [vmem:[%s1 + $0x7c] sm:$0xf]
  %v119 = vld [vmem:[%s1 + $0x80] sm:$0xf]
  %v120 = vld [vmem:[%s1 + $0x84] sm:$0xf]
  %v121 = vld [vmem:[%s1 + $0x88] sm:$0xf]
  %v122 = vld [vmem:[%s1 + $0x8c] sm:$0xf]
  %v123 = vld [vmem:[%s1 + $0x90] sm:$0xf]
  %v124 = vld [vmem:[%s1 + $0x94] sm:$0xf]
  %v125 = vld [vmem:[%s1 + $0x98] sm:$0xf]
  %v126 = vld [vmem:[%s1 + $0x9c] sm:$0xf]
  %v127 = vld [vmem:[%s1 + $0xa0] sm:$0xf]
  %v128 = vld [vmem:[%s1 + $0xa4] sm:$0xf]
  %v129 = vld [vmem:[%s1 + $0xa8] sm:$0xf]
  %v130 = vld [vmem:[%s1 + $0xac] sm:$0xf]
  %v131 = vld [vmem:[%s1 + $0xb0] sm:$0xf]
  %v132 = vld [vmem:[%s1 + $0xb4] sm:$0xf]
  %v133 = vld [vmem:[%s1 + $0xb8] sm:$0xf]
  %v134 = vld [vmem:[%s1 + $0xbc] sm:$0xf]
  %v135 = vld [vmem:[%s1 + $0xc0] sm:$0xf]
  %v136 = vld [vmem:[%s1 + $0xc4] sm:$0xf]
  %v137 = vld [vmem:[%s1 + $0xc8] sm:$0xf]
  %v138 = vld [vmem:[%s1 + $0xcc] sm:$0xf]
  %v139 = vld [vmem:[%s1 + $0xd0] sm:$0xf]
  %v140 = vld [vmem:[%s1 + $0xd4] sm:$0xf]
  %v141 = vld [vmem:[%s1 + $0xd8] sm:$0xf]
  %v142 = vld [vmem:[%s1 + $0xdc] sm:$0xf]
  %v143 = vld [vmem:[%s1 + $0xe0] sm:$0xf]
  %v144 = vld [vmem:[%s1 + $0xe4] sm:$0xf]
  %v145 = vld [vmem:[%s1 + $0xe8] sm:$0xf]
  %v146 = vld [vmem:[%s1 + $0xec] sm:$0xf]
  %v147 = vld [vmem:[%s1 + $0xf0] sm:$0xf]
  %v148 = vld [vmem:[%s1 + $0xf4] sm:$0xf]
  %v149 = vld [vmem:[%s1 + $0xf8] sm:$0xf]
  %v150 = vld [vmem:[%s1 + $0xfc] sm:$0xf]
  %v151 = vld [vmem:[%s2] sm:$0x1]
  %v153 = vlaneseq
  %v154 = vshrl.u32 %v153, 7
  %v155 = vsub.s32 0, %v154
  %v156 = vrot.slane %v151, %v155
  %v230 = vunpack.c.l.b16 %v15
  %v231 = vunpack.c.h.b16 %v15
  %v232 = vunpack.c.l.b16 %v16
  %v233 = vunpack.c.h.b16 %v16
  %v234 = vunpack.c.l.b16 %v17
  %v235 = vunpack.c.h.b16 %v17
  %v236 = vunpack.c.l.b16 %v18
  %v237 = vunpack.c.h.b16 %v18
  %v238 = vunpack.c.l.b16 %v19
  %v239 = vunpack.c.h.b16 %v19
  %v240 = vunpack.c.l.b16 %v20
  %v241 = vunpack.c.h.b16 %v20
  %v242 = vunpack.c.l.b16 %v21
  %v243 = vunpack.c.h.b16 %v21
  %v244 = vunpack.c.l.b16 %v22
  %v245 = vunpack.c.h.b16 %v22
  %v246 = vunpack.c.l.b16 %v23
  %v247 = vunpack.c.h.b16 %v23
  %v248 = vunpack.c.l.b16 %v24
  %v249 = vunpack.c.h.b16 %v24
  %v250 = vunpack.c.l.b16 %v25
  %v251 = vunpack.c.h.b16 %v25
  %v252 = vunpack.c.l.b16 %v26
  %v253 = vunpack.c.h.b16 %v26
  %v254 = vunpack.c.l.b16 %v27
  %v255 = vunpack.c.h.b16 %v27
  %v256 = vunpack.c.l.b16 %v28
  %v257 = vunpack.c.h.b16 %v28
  %v258 = vunpack.c.l.b16 %v29
  %v259 = vunpack.c.h.b16 %v29
  %v260 = vunpack.c.l.b16 %v30
  %v261 = vunpack.c.h.b16 %v30
  %v262 = vunpack.c.l.b16 %v31
  %v263 = vunpack.c.h.b16 %v31
  %v264 = vunpack.c.l.b16 %v32
  %v265 = vunpack.c.h.b16 %v32
  %v266 = vunpack.c.l.b16 %v33
  %v267 = vunpack.c.h.b16 %v33
  %v268 = vunpack.c.l.b16 %v34
  %v269 = vunpack.c.h.b16 %v34
  %v270 = vunpack.c.l.b16 %v35
  %v271 = vunpack.c.h.b16 %v35
  %v272 = vunpack.c.l.b16 %v36
  %v273 = vunpack.c.h.b16 %v36
  %v274 = vunpack.c.l.b16 %v37
  %v275 = vunpack.c.h.b16 %v37
  %v276 = vunpack.c.l.b16 %v38
  %v277 = vunpack.c.h.b16 %v38
  %v278 = vunpack.c.l.b16 %v39
  %v279 = vunpack.c.h.b16 %v39
  %v280 = vunpack.c.l.b16 %v40
  %v281 = vunpack.c.h.b16 %v40
  %v282 = vunpack.c.l.b16 %v41
  %v283 = vunpack.c.h.b16 %v41
  %v284 = vunpack.c.l.b16 %v42
  %v285 = vunpack.c.h.b16 %v42
  %v286 = vunpack.c.l.b16 %v43
  %v287 = vunpack.c.h.b16 %v43
  %v288 = vunpack.c.l.b16 %v44
  %v289 = vunpack.c.h.b16 %v44
  %v290 = vunpack.c.l.b16 %v45
  %v291 = vunpack.c.h.b16 %v45
  %v292 = vunpack.c.l.b16 %v46
  %v293 = vunpack.c.h.b16 %v46
  %v294 = vunpack.c.l.b16 %v47
  %v295 = vunpack.c.h.b16 %v47
  %v296 = vunpack.c.l.b16 %v48
  %v297 = vunpack.c.h.b16 %v48
  %v298 = vunpack.c.l.b16 %v49
  %v299 = vunpack.c.h.b16 %v49
  %v300 = vunpack.c.l.b16 %v50
  %v301 = vunpack.c.h.b16 %v50
  %v302 = vunpack.c.l.b16 %v51
  %v303 = vunpack.c.h.b16 %v51
  %v304 = vunpack.c.l.b16 %v52
  %v305 = vunpack.c.h.b16 %v52
  %v306 = vunpack.c.l.b16 %v53
  %v307 = vunpack.c.h.b16 %v53
  %v308 = vunpack.c.l.b16 %v54
  %v309 = vunpack.c.h.b16 %v54
  %v310 = vunpack.c.l.b16 %v55
  %v311 = vunpack.c.h.b16 %v55
  %v312 = vunpack.c.l.b16 %v56
  %v313 = vunpack.c.h.b16 %v56
  %v314 = vunpack.c.l.b16 %v57
  %v315 = vunpack.c.h.b16 %v57
  %v316 = vunpack.c.l.b16 %v58
  %v317 = vunpack.c.h.b16 %v58
  %v318 = vunpack.c.l.b16 %v59
  %v319 = vunpack.c.h.b16 %v59
  %v320 = vunpack.c.l.b16 %v60
  %v321 = vunpack.c.h.b16 %v60
  %v322 = vunpack.c.l.b16 %v61
  %v323 = vunpack.c.h.b16 %v61
  %v324 = vunpack.c.l.b16 %v62
  %v325 = vunpack.c.h.b16 %v62
  %v326 = vunpack.c.l.b16 %v63
  %v327 = vunpack.c.h.b16 %v63
  %v328 = vunpack.c.l.b16 %v64
  %v329 = vunpack.c.h.b16 %v64
  %v330 = vunpack.c.l.b16 %v65
  %v331 = vunpack.c.h.b16 %v65
  %v332 = vunpack.c.l.b16 %v66
  %v333 = vunpack.c.h.b16 %v66
  %v334 = vunpack.c.l.b16 %v67
  %v335 = vunpack.c.h.b16 %v67
  %v336 = vunpack.c.l.b16 %v68
  %v337 = vunpack.c.h.b16 %v68
  %v338 = vunpack.c.l.b16 %v69
  %v339 = vunpack.c.h.b16 %v69
  %v340 = vunpack.c.l.b16 %v70
  %v341 = vunpack.c.h.b16 %v70
  %v342 = vunpack.c.l.b16 %v71
  %v343 = vunpack.c.h.b16 %v71
  %v344 = vunpack.c.l.b16 %v72
  %v345 = vunpack.c.h.b16 %v72
  %v346 = vunpack.c.l.b16 %v73
  %v347 = vunpack.c.h.b16 %v73
  %v348 = vunpack.c.l.b16 %v74
  %v349 = vunpack.c.h.b16 %v74
  %v350 = vunpack.c.l.b16 %v75
  %v351 = vunpack.c.h.b16 %v75
  %v352 = vunpack.c.l.b16 %v76
  %v353 = vunpack.c.h.b16 %v76
  %v354 = vunpack.c.l.b16 %v77
  %v355 = vunpack.c.h.b16 %v77
  %v356 = vunpack.c.l.b16 %v78
  %v357 = vunpack.c.h.b16 %v78
  %v358 = vunpack.c.l.b16 %v79
  %v359 = vunpack.c.h.b16 %v79
  %v360 = vunpack.c.l.b16 %v80
  %v361 = vunpack.c.h.b16 %v80
  %v362 = vunpack.c.l.b16 %v81
  %v363 = vunpack.c.h.b16 %v81
  %v364 = vunpack.c.l.b16 %v82
  %v365 = vunpack.c.h.b16 %v82
  %v366 = vunpack.c.l.b16 %v83
  %v367 = vunpack.c.h.b16 %v83
  %v368 = vunpack.c.l.b16 %v84
  %v369 = vunpack.c.h.b16 %v84
  %v370 = vunpack.c.l.b16 %v85
  %v371 = vunpack.c.h.b16 %v85
  %v372 = vunpack.c.l.b16 %v86
  %v373 = vunpack.c.h.b16 %v86
  %v374 = vpack.c.b16 %v234, %v230
  %v375 = vpack.c.b16 %v235, %v231
  %v376 = vpack.c.b16 %v236, %v232
  %v377 = vpack.c.b16 %v237, %v233
  %v378 = vpack.c.b16 %v242, %v238
  %v379 = vpack.c.b16 %v243, %v239
  %v380 = vpack.c.b16 %v244, %v240
  %v381 = vpack.c.b16 %v245, %v241
  %v382 = vpack.c.b16 %v250, %v246
  %v383 = vpack.c.b16 %v251, %v247
  %v384 = vpack.c.b16 %v252, %v248
  %v385 = vpack.c.b16 %v253, %v249
  %v386 = vpack.c.b16 %v258, %v254
  %v387 = vpack.c.b16 %v259, %v255
  %v388 = vpack.c.b16 %v260, %v256
  %v389 = vpack.c.b16 %v261, %v257
  %v390 = vpack.c.b16 %v266, %v262
  %v391 = vpack.c.b16 %v267, %v263
  %v392 = vpack.c.b16 %v268, %v264
  %v393 = vpack.c.b16 %v269, %v265
  %v394 = vpack.c.b16 %v274, %v270
  %v395 = vpack.c.b16 %v275, %v271
  %v396 = vpack.c.b16 %v276, %v272
  %v397 = vpack.c.b16 %v277, %v273
  %v398 = vpack.c.b16 %v282, %v278
  %v399 = vpack.c.b16 %v283, %v279
  %v400 = vpack.c.b16 %v284, %v280
  %v401 = vpack.c.b16 %v285, %v281
  %v402 = vpack.c.b16 %v290, %v286
  %v403 = vpack.c.b16 %v291, %v287
  %v404 = vpack.c.b16 %v292, %v288
  %v405 = vpack.c.b16 %v293, %v289
  %v406 = vpack.c.b16 %v298, %v294
  %v407 = vpack.c.b16 %v299, %v295
  %v408 = vpack.c.b16 %v300, %v296
  %v409 = vpack.c.b16 %v301, %v297
  %v410 = vpack.c.b16 %v306, %v302
  %v411 = vpack.c.b16 %v307, %v303
  %v412 = vpack.c.b16 %v308, %v304
  %v413 = vpack.c.b16 %v309, %v305
  %v414 = vpack.c.b16 %v314, %v310
  %v415 = vpack.c.b16 %v315, %v311
  %v416 = vpack.c.b16 %v316, %v312
  %v417 = vpack.c.b16 %v317, %v313
  %v418 = vpack.c.b16 %v322, %v318
  %v419 = vpack.c.b16 %v323, %v319
  %v420 = vpack.c.b16 %v324, %v320
  %v421 = vpack.c.b16 %v325, %v321
  %v422 = vpack.c.b16 %v330, %v326
  %v423 = vpack.c.b16 %v331, %v327
  %v424 = vpack.c.b16 %v332, %v328
  %v425 = vpack.c.b16 %v333, %v329
  %v426 = vpack.c.b16 %v338, %v334
  %v427 = vpack.c.b16 %v339, %v335
  %v428 = vpack.c.b16 %v340, %v336
  %v429 = vpack.c.b16 %v341, %v337
  %v430 = vpack.c.b16 %v346, %v342
  %v431 = vpack.c.b16 %v347, %v343
  %v432 = vpack.c.b16 %v348, %v344
  %v433 = vpack.c.b16 %v349, %v345
  %v434 = vpack.c.b16 %v354, %v350
  %v435 = vpack.c.b16 %v355, %v351
  %v436 = vpack.c.b16 %v356, %v352
  %v437 = vpack.c.b16 %v357, %v353
  %v438 = vpack.c.b16 %v362, %v358
  %v439 = vpack.c.b16 %v363, %v359
  %v440 = vpack.c.b16 %v364, %v360
  %v441 = vpack.c.b16 %v365, %v361
  %v442 = vpack.c.b16 %v370, %v366
  %v443 = vpack.c.b16 %v371, %v367
  %v444 = vpack.c.b16 %v372, %v368
  %v445 = vpack.c.b16 %v373, %v369
  %v582 = vunpack.c.l.b16 %v87
  %v583 = vunpack.c.l.b16 %v88
  %v584 = vunpack.c.l.b16 %v89
  %v585 = vunpack.c.l.b16 %v90
  %v586 = vunpack.c.l.b16 %v91
  %v587 = vunpack.c.l.b16 %v92
  %v588 = vunpack.c.l.b16 %v93
  %v589 = vunpack.c.l.b16 %v94
  %v590 = vunpack.c.l.b16 %v95
  %v591 = vunpack.c.l.b16 %v96
  %v592 = vunpack.c.l.b16 %v97
  %v593 = vunpack.c.l.b16 %v98
  %v594 = vunpack.c.l.b16 %v99
  %v595 = vunpack.c.l.b16 %v100
  %v596 = vunpack.c.l.b16 %v101
  %v597 = vunpack.c.l.b16 %v102
  %v598 = vunpack.c.l.b16 %v103
  %v599 = vunpack.c.l.b16 %v104
  %v600 = vunpack.c.l.b16 %v105
  %v601 = vunpack.c.l.b16 %v106
  %v602 = vunpack.c.l.b16 %v107
  %v603 = vunpack.c.l.b16 %v108
  %v604 = vunpack.c.l.b16 %v109
  %v605 = vunpack.c.l.b16 %v110
  %v606 = vunpack.c.l.b16 %v111
  %v607 = vunpack.c.l.b16 %v112
  %v608 = vunpack.c.l.b16 %v113
  %v609 = vunpack.c.l.b16 %v114
  %v610 = vunpack.c.l.b16 %v115
  %v611 = vunpack.c.l.b16 %v116
  %v612 = vunpack.c.l.b16 %v117
  %v613 = vunpack.c.l.b16 %v118
  %v614 = vunpack.c.l.b16 %v119
  %v615 = vunpack.c.l.b16 %v120
  %v616 = vunpack.c.l.b16 %v121
  %v617 = vunpack.c.l.b16 %v122
  %v618 = vunpack.c.l.b16 %v123
  %v619 = vunpack.c.l.b16 %v124
  %v620 = vunpack.c.l.b16 %v125
  %v621 = vunpack.c.l.b16 %v126
  %v622 = vunpack.c.l.b16 %v127
  %v623 = vunpack.c.l.b16 %v128
  %v624 = vunpack.c.l.b16 %v129
  %v625 = vunpack.c.l.b16 %v130
  %v626 = vunpack.c.l.b16 %v131
  %v627 = vunpack.c.l.b16 %v132
  %v628 = vunpack.c.l.b16 %v133
  %v629 = vunpack.c.l.b16 %v134
  %v630 = vunpack.c.l.b16 %v135
  %v631 = vunpack.c.l.b16 %v136
  %v632 = vunpack.c.l.b16 %v137
  %v633 = vunpack.c.l.b16 %v138
  %v634 = vunpack.c.l.b16 %v139
  %v635 = vunpack.c.l.b16 %v140
  %v636 = vunpack.c.l.b16 %v141
  %v637 = vunpack.c.l.b16 %v142
  %v638 = vunpack.c.l.b16 %v143
  %v639 = vunpack.c.l.b16 %v144
  %v640 = vunpack.c.l.b16 %v145
  %v641 = vunpack.c.l.b16 %v146
  %v642 = vunpack.c.l.b16 %v147
  %v643 = vunpack.c.l.b16 %v148
  %v644 = vunpack.c.l.b16 %v149
  %v645 = vunpack.c.l.b16 %v150
  %v646 = vpack.c.b16 %v583, %v582
  %v647 = vpack.c.b16 %v585, %v584
  %v648 = vpack.c.b16 %v587, %v586
  %v649 = vpack.c.b16 %v589, %v588
  %v650 = vpack.c.b16 %v591, %v590
  %v651 = vpack.c.b16 %v593, %v592
  %v652 = vpack.c.b16 %v595, %v594
  %v653 = vpack.c.b16 %v597, %v596
  %v654 = vpack.c.b16 %v599, %v598
  %v655 = vpack.c.b16 %v601, %v600
  %v656 = vpack.c.b16 %v603, %v602
  %v657 = vpack.c.b16 %v605, %v604
  %v658 = vpack.c.b16 %v607, %v606
  %v659 = vpack.c.b16 %v609, %v608
  %v660 = vpack.c.b16 %v611, %v610
  %v661 = vpack.c.b16 %v613, %v612
  %v662 = vpack.c.b16 %v615, %v614
  %v663 = vpack.c.b16 %v617, %v616
  %v664 = vpack.c.b16 %v619, %v618
  %v665 = vpack.c.b16 %v621, %v620
  %v666 = vpack.c.b16 %v623, %v622
  %v667 = vpack.c.b16 %v625, %v624
  %v668 = vpack.c.b16 %v627, %v626
  %v669 = vpack.c.b16 %v629, %v628
  %v670 = vpack.c.b16 %v631, %v630
  %v671 = vpack.c.b16 %v633, %v632
  %v672 = vpack.c.b16 %v635, %v634
  %v673 = vpack.c.b16 %v637, %v636
  %v674 = vpack.c.b16 %v639, %v638
  %v675 = vpack.c.b16 %v641, %v640
  %v676 = vpack.c.b16 %v643, %v642
  %v677 = vpack.c.b16 %v645, %v644
  %710 = vmatprep.subr.bf16.mxu0 0
  %711 = vmatpush1.bf16.msra.mxu0 %v653
  %712 = vmatprep.subr.bf16.mxu0 0
  %713 = vmatpush1.bf16.msra.mxu0 %v652
  %714 = vmatprep.subr.bf16.mxu0 0
  %715 = vmatpush1.bf16.msra.mxu0 %v651
  %716 = vmatprep.subr.bf16.mxu0 0
  %717 = vmatpush1.bf16.msra.mxu0 %v650
  %718 = vmatprep.subr.bf16.mxu0 0
  %719 = vmatpush1.bf16.msra.mxu0 %v649
  %720 = vmatprep.subr.bf16.mxu0 0
  %721 = vmatpush1.bf16.msra.mxu0 %v648
  %722 = vmatprep.subr.bf16.mxu0 0
  %723 = vmatpush1.bf16.msra.mxu0 %v647
  %724 = vmatprep.subr.bf16.mxu0 0
  %725 = vmatpush1.bf16.msra.mxu0 %v646
  %726 = vmatprep.subr.bf16.mxu0 0
  %727 = vmatpush2.bf16.msra.mxu0 %v661
  %728 = vmatprep.subr.bf16.mxu0 0
  %729 = vmatpush2.bf16.msra.mxu0 %v660
  %730 = vmatprep.subr.bf16.mxu0 0
  %731 = vmatpush2.bf16.msra.mxu0 %v659
  %732 = vmatprep.subr.bf16.mxu0 0
  %733 = vmatpush2.bf16.msra.mxu0 %v658
  %734 = vmatprep.subr.bf16.mxu0 0
  %735 = vmatpush2.bf16.msra.mxu0 %v657
  %736 = vmatprep.subr.bf16.mxu0 0
  %737 = vmatpush2.bf16.msra.mxu0 %v656
  %738 = vmatprep.subr.bf16.mxu0 0
  %739 = vmatpush2.bf16.msra.mxu0 %v655
  %740 = vmatprep.subr.bf16.mxu0 0
  %741 = vmatpush2.bf16.msra.mxu0 %v654
  %742 = vmatprep.mubr.bf16.mxu0 %v375
  %743 = vmatmul.mubr.bf16.gmra.mxu0 %v374
  %v744 = vpop.f32.mrf.mxu0
  %v745 = vadd.f32 %v156, %v744
  %v746 = vpop.f32.mrf.mxu0
  %v747 = vpop.f32.mrf.mxu0
  %v748 = vadd.f32 %v156, %v747
  %v749 = vpop.f32.mrf.mxu0
  %750 = vmatprep.mubr.bf16.mxu0 %v379
  %751 = vmatmul.mubr.bf16.gmra.mxu0 %v378
  %v752 = vpop.f32.mrf.mxu0
  %v753 = vadd.f32 %v156, %v752
  %v754 = vpop.f32.mrf.mxu0
  %v755 = vpop.f32.mrf.mxu0
  %v756 = vadd.f32 %v156, %v755
  %v757 = vpop.f32.mrf.mxu0
  %758 = vmatprep.mubr.bf16.mxu0 %v383
  %759 = vmatmul.mubr.bf16.gmra.mxu0 %v382
  %v760 = vpop.f32.mrf.mxu0
  %v761 = vadd.f32 %v156, %v760
  %v762 = vpop.f32.mrf.mxu0
  %v763 = vpop.f32.mrf.mxu0
  %v764 = vadd.f32 %v156, %v763
  %v765 = vpop.f32.mrf.mxu0
  %766 = vmatprep.mubr.bf16.mxu0 %v387
  %767 = vmatmul.mubr.bf16.gmra.mxu0 %v386
  %v768 = vpop.f32.mrf.mxu0
  %v769 = vadd.f32 %v156, %v768
  %v770 = vpop.f32.mrf.mxu0
  %v771 = vpop.f32.mrf.mxu0
  %v772 = vadd.f32 %v156, %v771
  %v773 = vpop.f32.mrf.mxu0
  %774 = vmatprep.mubr.bf16.mxu0 %v391
  %775 = vmatmul.mubr.bf16.gmra.mxu0 %v390
  %v776 = vpop.f32.mrf.mxu0
  %v777 = vadd.f32 %v156, %v776
  %v778 = vpop.f32.mrf.mxu0
  %v779 = vpop.f32.mrf.mxu0
  %v780 = vadd.f32 %v156, %v779
  %v781 = vpop.f32.mrf.mxu0
  %782 = vmatprep.mubr.bf16.mxu0 %v395
  %783 = vmatmul.mubr.bf16.gmra.mxu0 %v394
  %v784 = vpop.f32.mrf.mxu0
  %v785 = vadd.f32 %v156, %v784
  %v786 = vpop.f32.mrf.mxu0
  %v787 = vpop.f32.mrf.mxu0
  %v788 = vadd.f32 %v156, %v787
  %v789 = vpop.f32.mrf.mxu0
  %790 = vmatprep.mubr.bf16.mxu0 %v399
  %791 = vmatmul.mubr.bf16.gmra.mxu0 %v398
  %v792 = vpop.f32.mrf.mxu0
  %v793 = vadd.f32 %v156, %v792
  %v794 = vpop.f32.mrf.mxu0
  %v795 = vpop.f32.mrf.mxu0
  %v796 = vadd.f32 %v156, %v795
  %v797 = vpop.f32.mrf.mxu0
  %798 = vmatprep.mubr.bf16.mxu0 %v403
  %799 = vmatmul.mubr.bf16.gmra.mxu0 %v402
  %v800 = vpop.f32.mrf.mxu0
  %v801 = vadd.f32 %v156, %v800
  %v802 = vpop.f32.mrf.mxu0
  %v803 = vpop.f32.mrf.mxu0
  %v804 = vadd.f32 %v156, %v803
  %v805 = vpop.f32.mrf.mxu0
  %806 = vmatprep.mubr.bf16.mxu0 %v407
  %807 = vmatmul.mubr.bf16.gmra.mxu0 %v406
  %v808 = vpop.f32.mrf.mxu0
  %v809 = vadd.f32 %v156, %v808
  %v810 = vpop.f32.mrf.mxu0
  %v811 = vpop.f32.mrf.mxu0
  %v812 = vadd.f32 %v156, %v811
  %v813 = vpop.f32.mrf.mxu0
  %814 = vmatprep.mubr.bf16.mxu0 %v411
  %815 = vmatmul.mubr.bf16.gmra.mxu0 %v410
  %v816 = vpop.f32.mrf.mxu0
  %v817 = vadd.f32 %v156, %v816
  %v818 = vpop.f32.mrf.mxu0
  %v819 = vpop.f32.mrf.mxu0
  %v820 = vadd.f32 %v156, %v819
  %v821 = vpop.f32.mrf.mxu0
  %822 = vmatprep.mubr.bf16.mxu0 %v415
  %823 = vmatmul.mubr.bf16.gmra.mxu0 %v414
  %v824 = vpop.f32.mrf.mxu0
  %v825 = vadd.f32 %v156, %v824
  %v826 = vpop.f32.mrf.mxu0
  %v827 = vpop.f32.mrf.mxu0
  %v828 = vadd.f32 %v156, %v827
  %v829 = vpop.f32.mrf.mxu0
  %830 = vmatprep.mubr.bf16.mxu0 %v419
  %831 = vmatmul.mubr.bf16.gmra.mxu0 %v418
  %v832 = vpop.f32.mrf.mxu0
  %v833 = vadd.f32 %v156, %v832
  %v834 = vpop.f32.mrf.mxu0
  %v835 = vpop.f32.mrf.mxu0
  %v836 = vadd.f32 %v156, %v835
  %v837 = vpop.f32.mrf.mxu0
  %838 = vmatprep.mubr.bf16.mxu0 %v423
  %839 = vmatmul.mubr.bf16.gmra.mxu0 %v422
  %v840 = vpop.f32.mrf.mxu0
  %v841 = vadd.f32 %v156, %v840
  %v842 = vpop.f32.mrf.mxu0
  %v843 = vpop.f32.mrf.mxu0
  %v844 = vadd.f32 %v156, %v843
  %v845 = vpop.f32.mrf.mxu0
  %846 = vmatprep.mubr.bf16.mxu0 %v427
  %847 = vmatmul.mubr.bf16.gmra.mxu0 %v426
  %v848 = vpop.f32.mrf.mxu0
  %v849 = vadd.f32 %v156, %v848
  %v850 = vpop.f32.mrf.mxu0
  %v851 = vpop.f32.mrf.mxu0
  %v852 = vadd.f32 %v156, %v851
  %v853 = vpop.f32.mrf.mxu0
  %854 = vmatprep.mubr.bf16.mxu0 %v431
  %855 = vmatmul.mubr.bf16.gmra.mxu0 %v430
  %v856 = vpop.f32.mrf.mxu0
  %v857 = vadd.f32 %v156, %v856
  %v858 = vpop.f32.mrf.mxu0
  %v859 = vpop.f32.mrf.mxu0
  %v860 = vadd.f32 %v156, %v859
  %v861 = vpop.f32.mrf.mxu0
  %862 = vmatprep.mubr.bf16.mxu0 %v435
  %863 = vmatmul.mubr.bf16.gmra.mxu0 %v434
  %v864 = vpop.f32.mrf.mxu0
  %v865 = vadd.f32 %v156, %v864
  %v866 = vpop.f32.mrf.mxu0
  %v867 = vpop.f32.mrf.mxu0
  %v868 = vadd.f32 %v156, %v867
  %v869 = vpop.f32.mrf.mxu0
  %870 = vmatprep.mubr.bf16.mxu0 %v439
  %871 = vmatmul.mubr.bf16.gmra.mxu0 %v438
  %v872 = vpop.f32.mrf.mxu0
  %v873 = vadd.f32 %v156, %v872
  %v874 = vpop.f32.mrf.mxu0
  %v875 = vpop.f32.mrf.mxu0
  %v876 = vadd.f32 %v156, %v875
  %v877 = vpop.f32.mrf.mxu0
  %878 = vmatprep.mubr.bf16.mxu0 %v443
  %879 = vmatmul.mubr.bf16.gmra.mxu0 %v442
  %v880 = vpop.f32.mrf.mxu0
  %v881 = vadd.f32 %v156, %v880
  %v882 = vpop.f32.mrf.mxu0
  %v883 = vpop.f32.mrf.mxu0
  %v884 = vadd.f32 %v156, %v883
  %v885 = vpop.f32.mrf.mxu0
  %886 = vdwg.mxu0
  %887 = vmatprep.subr.bf16.mxu0 0
  %888 = vmatpush1.bf16.msra.mxu0 %v669
  %889 = vmatprep.subr.bf16.mxu0 0
  %890 = vmatpush1.bf16.msra.mxu0 %v668
  %891 = vmatprep.subr.bf16.mxu0 0
  %892 = vmatpush1.bf16.msra.mxu0 %v667
  %893 = vmatprep.subr.bf16.mxu0 0
  %894 = vmatpush1.bf16.msra.mxu0 %v666
  %895 = vmatprep.subr.bf16.mxu0 0
  %896 = vmatpush1.bf16.msra.mxu0 %v665
  %897 = vmatprep.subr.bf16.mxu0 0
  %898 = vmatpush1.bf16.msra.mxu0 %v664
  %899 = vmatprep.subr.bf16.mxu0 0
  %900 = vmatpush1.bf16.msra.mxu0 %v663
  %901 = vmatprep.subr.bf16.mxu0 0
  %902 = vmatpush1.bf16.msra.mxu0 %v662
  %903 = vmatprep.subr.bf16.mxu0 0
  %904 = vmatpush2.bf16.msra.mxu0 %v677
  %905 = vmatprep.subr.bf16.mxu0 0
  %906 = vmatpush2.bf16.msra.mxu0 %v676
  %907 = vmatprep.subr.bf16.mxu0 0
  %908 = vmatpush2.bf16.msra.mxu0 %v675
  %909 = vmatprep.subr.bf16.mxu0 0
  %910 = vmatpush2.bf16.msra.mxu0 %v674
  %911 = vmatprep.subr.bf16.mxu0 0
  %912 = vmatpush2.bf16.msra.mxu0 %v673
  %913 = vmatprep.subr.bf16.mxu0 0
  %914 = vmatpush2.bf16.msra.mxu0 %v672
  %915 = vmatprep.subr.bf16.mxu0 0
  %916 = vmatpush2.bf16.msra.mxu0 %v671
  %917 = vmatprep.subr.bf16.mxu0 0
  %918 = vmatpush2.bf16.msra.mxu0 %v670
  %919 = vmatprep.mubr.bf16.mxu0 %v377
  %920 = vmatmul.mubr.bf16.gmra.mxu0 %v376
  %v921 = vpop.f32.mrf.mxu0
  %v922 = vadd.f32 %v745, %v921
  %v923 = vpop.f32.mrf.mxu0
  %v924 = vpop.f32.mrf.mxu0
  %v925 = vadd.f32 %v748, %v924
  %v926 = vpop.f32.mrf.mxu0
  %927 = vmatprep.mubr.bf16.mxu0 %v381
  %928 = vmatmul.mubr.bf16.gmra.mxu0 %v380
  %v929 = vpop.f32.mrf.mxu0
  %v930 = vadd.f32 %v753, %v929
  %v931 = vpop.f32.mrf.mxu0
  %v932 = vpop.f32.mrf.mxu0
  %v933 = vadd.f32 %v756, %v932
  %v934 = vpop.f32.mrf.mxu0
  %935 = vmatprep.mubr.bf16.mxu0 %v385
  %936 = vmatmul.mubr.bf16.gmra.mxu0 %v384
  %v937 = vpop.f32.mrf.mxu0
  %v938 = vadd.f32 %v761, %v937
  %v939 = vpop.f32.mrf.mxu0
  %v940 = vpop.f32.mrf.mxu0
  %v941 = vadd.f32 %v764, %v940
  %v942 = vpop.f32.mrf.mxu0
  %943 = vmatprep.mubr.bf16.mxu0 %v389
  %944 = vmatmul.mubr.bf16.gmra.mxu0 %v388
  %v945 = vpop.f32.mrf.mxu0
  %v946 = vadd.f32 %v769, %v945
  %v947 = vpop.f32.mrf.mxu0
  %v948 = vpop.f32.mrf.mxu0
  %v949 = vadd.f32 %v772, %v948
  %v950 = vpop.f32.mrf.mxu0
  %951 = vmatprep.mubr.bf16.mxu0 %v393
  %952 = vmatmul.mubr.bf16.gmra.mxu0 %v392
  %v953 = vpop.f32.mrf.mxu0
  %v954 = vadd.f32 %v777, %v953
  %v955 = vpop.f32.mrf.mxu0
  %v956 = vpop.f32.mrf.mxu0
  %v957 = vadd.f32 %v780, %v956
  %v958 = vpop.f32.mrf.mxu0
  %959 = vmatprep.mubr.bf16.mxu0 %v397
  %960 = vmatmul.mubr.bf16.gmra.mxu0 %v396
  %v961 = vpop.f32.mrf.mxu0
  %v962 = vadd.f32 %v785, %v961
  %v963 = vpop.f32.mrf.mxu0
  %v964 = vpop.f32.mrf.mxu0
  %v965 = vadd.f32 %v788, %v964
  %v966 = vpop.f32.mrf.mxu0
  %967 = vmatprep.mubr.bf16.mxu0 %v401
  %968 = vmatmul.mubr.bf16.gmra.mxu0 %v400
  %v969 = vpop.f32.mrf.mxu0
  %v970 = vadd.f32 %v793, %v969
  %v971 = vpop.f32.mrf.mxu0
  %v972 = vpop.f32.mrf.mxu0
  %v973 = vadd.f32 %v796, %v972
  %v974 = vpop.f32.mrf.mxu0
  %975 = vmatprep.mubr.bf16.mxu0 %v405
  %976 = vmatmul.mubr.bf16.gmra.mxu0 %v404
  %v977 = vpop.f32.mrf.mxu0
  %v978 = vadd.f32 %v801, %v977
  %v979 = vpop.f32.mrf.mxu0
  %v980 = vpop.f32.mrf.mxu0
  %v981 = vadd.f32 %v804, %v980
  %v982 = vpop.f32.mrf.mxu0
  %983 = vmatprep.mubr.bf16.mxu0 %v409
  %984 = vmatmul.mubr.bf16.gmra.mxu0 %v408
  %v985 = vpop.f32.mrf.mxu0
  %v986 = vadd.f32 %v809, %v985
  %v987 = vpop.f32.mrf.mxu0
  %v988 = vpop.f32.mrf.mxu0
  %v989 = vadd.f32 %v812, %v988
  %v990 = vpop.f32.mrf.mxu0
  %991 = vmatprep.mubr.bf16.mxu0 %v413
  %992 = vmatmul.mubr.bf16.gmra.mxu0 %v412
  %v993 = vpop.f32.mrf.mxu0
  %v994 = vadd.f32 %v817, %v993
  %v995 = vpop.f32.mrf.mxu0
  %v996 = vpop.f32.mrf.mxu0
  %v997 = vadd.f32 %v820, %v996
  %v998 = vpop.f32.mrf.mxu0
  %999 = vmatprep.mubr.bf16.mxu0 %v417
  %1000 = vmatmul.mubr.bf16.gmra.mxu0 %v416
  %v1001 = vpop.f32.mrf.mxu0
  %v1002 = vadd.f32 %v825, %v1001
  %v1003 = vpop.f32.mrf.mxu0
  %v1004 = vpop.f32.mrf.mxu0
  %v1005 = vadd.f32 %v828, %v1004
  %v1006 = vpop.f32.mrf.mxu0
  %1007 = vmatprep.mubr.bf16.mxu0 %v421
  %1008 = vmatmul.mubr.bf16.gmra.mxu0 %v420
  %v1009 = vpop.f32.mrf.mxu0
  %v1010 = vadd.f32 %v833, %v1009
  %v1011 = vpop.f32.mrf.mxu0
  %v1012 = vpop.f32.mrf.mxu0
  %v1013 = vadd.f32 %v836, %v1012
  %v1014 = vpop.f32.mrf.mxu0
  %1015 = vmatprep.mubr.bf16.mxu0 %v425
  %1016 = vmatmul.mubr.bf16.gmra.mxu0 %v424
  %v1017 = vpop.f32.mrf.mxu0
  %v1018 = vadd.f32 %v841, %v1017
  %v1019 = vpop.f32.mrf.mxu0
  %v1020 = vpop.f32.mrf.mxu0
  %v1021 = vadd.f32 %v844, %v1020
  %v1022 = vpop.f32.mrf.mxu0
  %1023 = vmatprep.mubr.bf16.mxu0 %v429
  %1024 = vmatmul.mubr.bf16.gmra.mxu0 %v428
  %v1025 = vpop.f32.mrf.mxu0
  %v1026 = vadd.f32 %v849, %v1025
  %v1027 = vpop.f32.mrf.mxu0
  %v1028 = vpop.f32.mrf.mxu0
  %v1029 = vadd.f32 %v852, %v1028
  %v1030 = vpop.f32.mrf.mxu0
  %1031 = vmatprep.mubr.bf16.mxu0 %v433
  %1032 = vmatmul.mubr.bf16.gmra.mxu0 %v432
  %v1033 = vpop.f32.mrf.mxu0
  %v1034 = vadd.f32 %v857, %v1033
  %v1035 = vpop.f32.mrf.mxu0
  %v1036 = vpop.f32.mrf.mxu0
  %v1037 = vadd.f32 %v860, %v1036
  %v1038 = vpop.f32.mrf.mxu0
  %1039 = vmatprep.mubr.bf16.mxu0 %v437
  %1040 = vmatmul.mubr.bf16.gmra.mxu0 %v436
  %v1041 = vpop.f32.mrf.mxu0
  %v1042 = vadd.f32 %v865, %v1041
  %v1043 = vpop.f32.mrf.mxu0
  %v1044 = vpop.f32.mrf.mxu0
  %v1045 = vadd.f32 %v868, %v1044
  %v1046 = vpop.f32.mrf.mxu0
  %1047 = vmatprep.mubr.bf16.mxu0 %v441
  %1048 = vmatmul.mubr.bf16.gmra.mxu0 %v440
  %v1049 = vpop.f32.mrf.mxu0
  %v1050 = vadd.f32 %v873, %v1049
  %v1051 = vpop.f32.mrf.mxu0
  %v1052 = vpop.f32.mrf.mxu0
  %v1053 = vadd.f32 %v876, %v1052
  %v1054 = vpop.f32.mrf.mxu0
  %1055 = vmatprep.mubr.bf16.mxu0 %v445
  %1056 = vmatmul.mubr.bf16.gmra.mxu0 %v444
  %v1057 = vpop.f32.mrf.mxu0
  %v1058 = vadd.f32 %v881, %v1057
  %v1059 = vpop.f32.mrf.mxu0
  %v1060 = vpop.f32.mrf.mxu0
  %v1061 = vadd.f32 %v884, %v1060
  %v1062 = vpop.f32.mrf.mxu0
  %1063 = vdwg.mxu0
  %vm1064 = vcmp.gt.f32.partialorder %v922, 0.0
  %vm1065 = vcmp.gt.f32.partialorder %v925, 0.0
  %vm1066 = vcmp.gt.f32.partialorder %v930, 0.0
  %vm1067 = vcmp.gt.f32.partialorder %v933, 0.0
  %vm1068 = vcmp.gt.f32.partialorder %v938, 0.0
  %vm1069 = vcmp.gt.f32.partialorder %v941, 0.0
  %vm1070 = vcmp.gt.f32.partialorder %v946, 0.0
  %vm1071 = vcmp.gt.f32.partialorder %v949, 0.0
  %vm1072 = vcmp.gt.f32.partialorder %v954, 0.0
  %vm1073 = vcmp.gt.f32.partialorder %v957, 0.0
  %vm1074 = vcmp.gt.f32.partialorder %v962, 0.0
  %vm1075 = vcmp.gt.f32.partialorder %v965, 0.0
  %vm1076 = vcmp.gt.f32.partialorder %v970, 0.0
  %vm1077 = vcmp.gt.f32.partialorder %v973, 0.0
  %vm1078 = vcmp.gt.f32.partialorder %v978, 0.0
  %vm1079 = vcmp.gt.f32.partialorder %v981, 0.0
  %vm1080 = vcmp.gt.f32.partialorder %v986, 0.0
  %vm1081 = vcmp.gt.f32.partialorder %v989, 0.0
  %vm1082 = vcmp.gt.f32.partialorder %v994, 0.0
  %vm1083 = vcmp.gt.f32.partialorder %v997, 0.0
  %vm1084 = vcmp.gt.f32.partialorder %v1002, 0.0
  %vm1085 = vcmp.gt.f32.partialorder %v1005, 0.0
  %vm1086 = vcmp.gt.f32.partialorder %v1010, 0.0
  %vm1087 = vcmp.gt.f32.partialorder %v1013, 0.0
  %vm1088 = vcmp.gt.f32.partialorder %v1018, 0.0
  %vm1089 = vcmp.gt.f32.partialorder %v1021, 0.0
  %vm1090 = vcmp.gt.f32.partialorder %v1026, 0.0
  %vm1091 = vcmp.gt.f32.partialorder %v1029, 0.0
  %vm1092 = vcmp.gt.f32.partialorder %v1034, 0.0
  %vm1093 = vcmp.gt.f32.partialorder %v1037, 0.0
  %vm1094 = vcmp.gt.f32.partialorder %v1042, 0.0
  %vm1095 = vcmp.gt.f32.partialorder %v1045, 0.0
  %vm1096 = vcmp.gt.f32.partialorder %v1050, 0.0
  %vm1097 = vcmp.gt.f32.partialorder %v1053, 0.0
  %vm1098 = vcmp.gt.f32.partialorder %v1058, 0.0
  %vm1099 = vcmp.gt.f32.partialorder %v1061, 0.0
  %v1100 = vmul.f32 %v922, 0.01
  %v1101 = vmul.f32 %v925, 0.01
  %v1102 = vmul.f32 %v930, 0.01
  %v1103 = vmul.f32 %v933, 0.01
  %v1104 = vmul.f32 %v938, 0.01
  %v1105 = vmul.f32 %v941, 0.01
  %v1106 = vmul.f32 %v946, 0.01
  %v1107 = vmul.f32 %v949, 0.01
  %v1108 = vmul.f32 %v954, 0.01
  %v1109 = vmul.f32 %v957, 0.01
  %v1110 = vmul.f32 %v962, 0.01
  %v1111 = vmul.f32 %v965, 0.01
  %v1112 = vmul.f32 %v970, 0.01
  %v1113 = vmul.f32 %v973, 0.01
  %v1114 = vmul.f32 %v978, 0.01
  %v1115 = vmul.f32 %v981, 0.01
  %v1116 = vmul.f32 %v986, 0.01
  %v1117 = vmul.f32 %v989, 0.01
  %v1118 = vmul.f32 %v994, 0.01
  %v1119 = vmul.f32 %v997, 0.01
  %v1120 = vmul.f32 %v1002, 0.01
  %v1121 = vmul.f32 %v1005, 0.01
  %v1122 = vmul.f32 %v1010, 0.01
  %v1123 = vmul.f32 %v1013, 0.01
  %v1124 = vmul.f32 %v1018, 0.01
  %v1125 = vmul.f32 %v1021, 0.01
  %v1126 = vmul.f32 %v1026, 0.01
  %v1127 = vmul.f32 %v1029, 0.01
  %v1128 = vmul.f32 %v1034, 0.01
  %v1129 = vmul.f32 %v1037, 0.01
  %v1130 = vmul.f32 %v1042, 0.01
  %v1131 = vmul.f32 %v1045, 0.01
  %v1132 = vmul.f32 %v1050, 0.01
  %v1133 = vmul.f32 %v1053, 0.01
  %v1134 = vmul.f32 %v1058, 0.01
  %v1135 = vmul.f32 %v1061, 0.01
  %v1136 = vsel %vm1064, %v922, %v1100
  %v1137 = vsel %vm1065, %v925, %v1101
  %v1138 = vsel %vm1066, %v930, %v1102
  %v1139 = vsel %vm1067, %v933, %v1103
  %v1140 = vsel %vm1068, %v938, %v1104
  %v1141 = vsel %vm1069, %v941, %v1105
  %v1142 = vsel %vm1070, %v946, %v1106
  %v1143 = vsel %vm1071, %v949, %v1107
  %v1144 = vsel %vm1072, %v954, %v1108
  %v1145 = vsel %vm1073, %v957, %v1109
  %v1146 = vsel %vm1074, %v962, %v1110
  %v1147 = vsel %vm1075, %v965, %v1111
  %v1148 = vsel %vm1076, %v970, %v1112
  %v1149 = vsel %vm1077, %v973, %v1113
  %v1150 = vsel %vm1078, %v978, %v1114
  %v1151 = vsel %vm1079, %v981, %v1115
  %v1152 = vsel %vm1080, %v986, %v1116
  %v1153 = vsel %vm1081, %v989, %v1117
  %v1154 = vsel %vm1082, %v994, %v1118
  %v1155 = vsel %vm1083, %v997, %v1119
  %v1156 = vsel %vm1084, %v1002, %v1120
  %v1157 = vsel %vm1085, %v1005, %v1121
  %v1158 = vsel %vm1086, %v1010, %v1122
  %v1159 = vsel %vm1087, %v1013, %v1123
  %v1160 = vsel %vm1088, %v1018, %v1124
  %v1161 = vsel %vm1089, %v1021, %v1125
  %v1162 = vsel %vm1090, %v1026, %v1126
  %v1163 = vsel %vm1091, %v1029, %v1127
  %v1164 = vsel %vm1092, %v1034, %v1128
  %v1165 = vsel %vm1093, %v1037, %v1129
  %v1166 = vsel %vm1094, %v1042, %v1130
  %v1167 = vsel %vm1095, %v1045, %v1131
  %v1168 = vsel %vm1096, %v1050, %v1132
  %v1169 = vsel %vm1097, %v1053, %v1133
  %v1170 = vsel %vm1098, %v1058, %v1134
  %v1171 = vsel %vm1099, %v1061, %v1135
  %v1172 = vmax.f32 %v1136, %v1145
  %v1173 = vmax.f32 %v1137, %v1146
  %v1174 = vmax.f32 %v1138, %v1147
  %v1175 = vmax.f32 %v1139, %v1148
  %v1176 = vmax.f32 %v1140, %v1149
  %v1177 = vmax.f32 %v1141, %v1150
  %v1178 = vmax.f32 %v1142, %v1151
  %v1179 = vmax.f32 %v1143, %v1152
  %v1180 = vmax.f32 %v1144, %v1153
  %v1181 = vmax.f32 %v1154, %v1163
  %v1182 = vmax.f32 %v1155, %v1164
  %v1183 = vmax.f32 %v1156, %v1165
  %v1184 = vmax.f32 %v1157, %v1166
  %v1185 = vmax.f32 %v1158, %v1167
  %v1186 = vmax.f32 %v1159, %v1168
  %v1187 = vmax.f32 %v1160, %v1169
  %v1188 = vmax.f32 %v1161, %v1170
  %v1189 = vmax.f32 %v1162, %v1171
  %v1190 = vmax.f32 %v1172, %v1181
  %v1191 = vmax.f32 %v1173, %v1182
  %v1192 = vmax.f32 %v1174, %v1183
  %v1193 = vmax.f32 %v1175, %v1184
  %v1194 = vmax.f32 %v1176, %v1185
  %v1195 = vmax.f32 %v1177, %v1186
  %v1196 = vmax.f32 %v1178, %v1187
  %v1197 = vmax.f32 %v1179, %v1188
  %v1198 = vmax.f32 %v1180, %v1189
  %1199 = vst [vmem:[%s3] sm:$0xff] %v1190
  %1200 = vst [vmem:[%s3 + $0x8] sm:$0xff] %v1191
  %1201 = vst [vmem:[%s3 + $0x10] sm:$0xff] %v1192
  %1202 = vst [vmem:[%s3 + $0x18] sm:$0xff] %v1193
  %1203 = vst [vmem:[%s3 + $0x20] sm:$0xff] %v1194
  %1204 = vst [vmem:[%s3 + $0x28] sm:$0xff] %v1195
  %1205 = vst [vmem:[%s3 + $0x30] sm:$0xff] %v1196
  %1206 = vst [vmem:[%s3 + $0x38] sm:$0xff] %v1197
  %1207 = vst [vmem:[%s3 + $0x40] sm:$0xff] %v1198
  // Predicated region
  $region14: #{cifarcnn_hyper_forward.7} parent=0 // pred_check
    _
  $region15: #{cifarcnn_hyper_forward.7} parent=0 // pred_check_branch
    %1209 = sbr.rel (0) target = $region17
  $region16: #{cifarcnn_hyper_forward.7} parent=0 // pred_region
    _
  $region17: #{cifarcnn_hyper_forward.7} parent=0 // pred_fallthru
    _
  // Predicated region
  $region18: #{cifarcnn_hyper_forward.7} parent=0 // pred_check
    _
  $region19: #{cifarcnn_hyper_forward.7} parent=0 // pred_check_branch
    %1211 = sbr.rel (0) target = $region21
  $region20: #{cifarcnn_hyper_forward.7} parent=0 // pred_region
    _
  $region21: #{cifarcnn_hyper_forward.7} parent=0 // pred_fallthru
    _

// kernel: cifarcnn_hyper_forward.8
$region0: #{cifarcnn_hyper_forward.8}
  #allocation0 [shape = 'u32[]', space=smem, size = 0x4, offset = 0x4, fixed_abs, tag = 'smem constant byte address 0x4 - core index']
  #allocation1 [shape = 'u32[144,128]{1,0:T(1,128)}', space=vmem, size = 0x12000, scoped, tag = 'internal scratch']
  %s0 = inlined_call_operand.vmem [shape: bf16[96,384], index: 0, kind: input, shape index: {}]
  %s1 = inlined_call_operand.vmem [shape: bf16[384,128], index: 1, kind: input, shape index: {}]
  %s2 = inlined_call_operand.vmem [shape: f32[1,128], index: 2, kind: input, shape index: {}]
  %s3 = inlined_call_operand.vmem [shape: f32[24,128], index: 3, kind: output, shape index: {}]
  %s4 = sld [smem:[#allocation0]]
  $region22: #{cifarcnn_hyper_forward.8} parent=0
    _
  %s6 = ssub.s32 1, %s4
  %s7 = scalar_select 0, %s6, %s4
  // Predicated region
  $region2: #{cifarcnn_hyper_forward.8} parent=0 // pred_check
    _
  $region3: #{cifarcnn_hyper_forward.8} parent=0 // pred_check_branch
    %9 = sbr.rel (0) target = $region5
  $region4: #{cifarcnn_hyper_forward.8} parent=0 // pred_region
    _
  $region5: #{cifarcnn_hyper_forward.8} parent=0 // pred_fallthru
    _
  // Predicated region
  $region6: #{cifarcnn_hyper_forward.8} parent=0 // pred_check
    _
  $region7: #{cifarcnn_hyper_forward.8} parent=0 // pred_check_branch
    %11 = sbr.rel (0) target = $region9
  $region8: #{cifarcnn_hyper_forward.8} parent=0 // pred_region
    _
  $region9: #{cifarcnn_hyper_forward.8} parent=0 // pred_fallthru
    _
  // Predicated region
  $region10: #{cifarcnn_hyper_forward.8} parent=0 // pred_check
    _
  $region11: #{cifarcnn_hyper_forward.8} parent=0 // pred_check_branch
    %13 = sbr.rel (0) target = $region13
  $region12: #{cifarcnn_hyper_forward.8} parent=0 // pred_region
    _
  $region13: #{cifarcnn_hyper_forward.8} parent=0 // pred_fallthru
    _
  %v15 = vld [vmem:[%s0] sm:$0xff]
  %v16 = vld [vmem:[%s0 + $0x8] sm:$0xf]
  %v17 = vld [vmem:[%s0 + $0xc] sm:$0xff]
  %v18 = vld [vmem:[%s0 + $0x14] sm:$0xf]
  %v19 = vld [vmem:[%s0 + $0x18] sm:$0xff]
  %v20 = vld [vmem:[%s0 + $0x20] sm:$0xf]
  %v21 = vld [vmem:[%s0 + $0x24] sm:$0xff]
  %v22 = vld [vmem:[%s0 + $0x2c] sm:$0xf]
  %v23 = vld [vmem:[%s0 + $0x30] sm:$0xff]
  %v24 = vld [vmem:[%s0 + $0x38] sm:$0xf]
  %v25 = vld [vmem:[%s0 + $0x3c] sm:$0xff]
  %v26 = vld [vmem:[%s0 + $0x44] sm:$0xf]
  %v27 = vld [vmem:[%s0 + $0x48] sm:$0xff]
  %v28 = vld [vmem:[%s0 + $0x50] sm:$0xf]
  %v29 = vld [vmem:[%s0 + $0x54] sm:$0xff]
  %v30 = vld [vmem:[%s0 + $0x5c] sm:$0xf]
  %v31 = vld [vmem:[%s0 + $0x60] sm:$0xff]
  %v32 = vld [vmem:[%s0 + $0x68] sm:$0xf]
  %v33 = vld [vmem:[%s0 + $0x6c] sm:$0xff]
  %v34 = vld [vmem:[%s0 + $0x74] sm:$0xf]
  %v35 = vld [vmem:[%s0 + $0x78] sm:$0xff]
  %v36 = vld [vmem:[%s0 + $0x80] sm:$0xf]
  %v37 = vld [vmem:[%s0 + $0x84] sm:$0xff]
  %v38 = vld [vmem:[%s0 + $0x8c] sm:$0xf]
  %v39 = vld [vmem:[%s1] sm:$0xf]
  %v40 = vld [vmem:[%s1 + $0x4] sm:$0xf]
  %v41 = vld [vmem:[%s1 + $0x8] sm:$0xf]
  %v42 = vld [vmem:[%s1 + $0xc] sm:$0xf]
  %v43 = vld [vmem:[%s1 + $0x10] sm:$0xf]
  %v44 = vld [vmem:[%s1 + $0x14] sm:$0xf]
  %v45 = vld [vmem:[%s1 + $0x18] sm:$0xf]
  %v46 = vld [vmem:[%s1 + $0x1c] sm:$0xf]
  %v47 = vld [vmem:[%s1 + $0x20] sm:$0xf]
  %v48 = vld [vmem:[%s1 + $0x24] sm:$0xf]
  %v49 = vld [vmem:[%s1 + $0x28] sm:$0xf]
  %v50 = vld [vmem:[%s1 + $0x2c] sm:$0xf]
  %v51 = vld [vmem:[%s1 + $0x30] sm:$0xf]
  %v52 = vld [vmem:[%s1 + $0x34] sm:$0xf]
  %v53 = vld [vmem:[%s1 + $0x38] sm:$0xf]
  %v54 = vld [vmem:[%s1 + $0x3c] sm:$0xf]
  %v55 = vld [vmem:[%s1 + $0x40] sm:$0xf]
  %v56 = vld [vmem:[%s1 + $0x44] sm:$0xf]
  %v57 = vld [vmem:[%s1 + $0x48] sm:$0xf]
  %v58 = vld [vmem:[%s1 + $0x4c] sm:$0xf]
  %v59 = vld [vmem:[%s1 + $0x50] sm:$0xf]
  %v60 = vld [vmem:[%s1 + $0x54] sm:$0xf]
  %v61 = vld [vmem:[%s1 + $0x58] sm:$0xf]
  %v62 = vld [vmem:[%s1 + $0x5c] sm:$0xf]
  %v63 = vld [vmem:[%s1 + $0x60] sm:$0xf]
  %v64 = vld [vmem:[%s1 + $0x64] sm:$0xf]
  %v65 = vld [vmem:[%s1 + $0x68] sm:$0xf]
  %v66 = vld [vmem:[%s1 + $0x6c] sm:$0xf]
  %v67 = vld [vmem:[%s1 + $0x70] sm:$0xf]
  %v68 = vld [vmem:[%s1 + $0x74] sm:$0xf]
  %v69 = vld [vmem:[%s1 + $0x78] sm:$0xf]
  %v70 = vld [vmem:[%s1 + $0x7c] sm:$0xf]
  %v71 = vld [vmem:[%s1 + $0x80] sm:$0xf]
  %v72 = vld [vmem:[%s1 + $0x84] sm:$0xf]
  %v73 = vld [vmem:[%s1 + $0x88] sm:$0xf]
  %v74 = vld [vmem:[%s1 + $0x8c] sm:$0xf]
  %v75 = vld [vmem:[%s1 + $0x90] sm:$0xf]
  %v76 = vld [vmem:[%s1 + $0x94] sm:$0xf]
  %v77 = vld [vmem:[%s1 + $0x98] sm:$0xf]
  %v78 = vld [vmem:[%s1 + $0x9c] sm:$0xf]
  %v79 = vld [vmem:[%s1 + $0xa0] sm:$0xf]
  %v80 = vld [vmem:[%s1 + $0xa4] sm:$0xf]
  %v81 = vld [vmem:[%s1 + $0xa8] sm:$0xf]
  %v82 = vld [vmem:[%s1 + $0xac] sm:$0xf]
  %v83 = vld [vmem:[%s1 + $0xb0] sm:$0xf]
  %v84 = vld [vmem:[%s1 + $0xb4] sm:$0xf]
  %v85 = vld [vmem:[%s1 + $0xb8] sm:$0xf]
  %v86 = vld [vmem:[%s1 + $0xbc] sm:$0xf]
  %v87 = vld [vmem:[%s2] sm:$0x1]
  %v89 = vlaneseq
  %v90 = vshrl.u32 %v89, 7
  %v91 = vsub.s32 0, %v90
  %v92 = vrot.slane %v87, %v91
  %v118 = vunpack.c.l.b16 %v15
  %v119 = vunpack.c.h.b16 %v15
  %v120 = vunpack.c.l.b16 %v16
  %v121 = vunpack.c.l.b16 %v17
  %v122 = vunpack.c.h.b16 %v17
  %v123 = vunpack.c.l.b16 %v18
  %v124 = vunpack.c.l.b16 %v19
  %v125 = vunpack.c.h.b16 %v19
  %v126 = vunpack.c.l.b16 %v20
  %v127 = vunpack.c.l.b16 %v21
  %v128 = vunpack.c.h.b16 %v21
  %v129 = vunpack.c.l.b16 %v22
  %v130 = vunpack.c.l.b16 %v23
  %v131 = vunpack.c.h.b16 %v23
  %v132 = vunpack.c.l.b16 %v24
  %v133 = vunpack.c.l.b16 %v25
  %v134 = vunpack.c.h.b16 %v25
  %v135 = vunpack.c.l.b16 %v26
  %v136 = vunpack.c.l.b16 %v27
  %v137 = vunpack.c.h.b16 %v27
  %v138 = vunpack.c.l.b16 %v28
  %v139 = vunpack.c.l.b16 %v29
  %v140 = vunpack.c.h.b16 %v29
  %v141 = vunpack.c.l.b16 %v30
  %v142 = vunpack.c.l.b16 %v31
  %v143 = vunpack.c.h.b16 %v31
  %v144 = vunpack.c.l.b16 %v32
  %v145 = vunpack.c.l.b16 %v33
  %v146 = vunpack.c.h.b16 %v33
  %v147 = vunpack.c.l.b16 %v34
  %v148 = vunpack.c.l.b16 %v35
  %v149 = vunpack.c.h.b16 %v35
  %v150 = vunpack.c.l.b16 %v36
  %v151 = vunpack.c.l.b16 %v37
  %v152 = vunpack.c.h.b16 %v37
  %v153 = vunpack.c.l.b16 %v38
  %v154 = vpack.c.b16 %v121, %v118
  %v155 = vpack.c.b16 %v122, %v119
  %v156 = vpack.c.b16 %v123, %v120
  %v157 = vpack.c.b16 %v127, %v124
  %v158 = vpack.c.b16 %v128, %v125
  %v159 = vpack.c.b16 %v129, %v126
  %v160 = vpack.c.b16 %v133, %v130
  %v161 = vpack.c.b16 %v134, %v131
  %v162 = vpack.c.b16 %v135, %v132
  %v163 = vpack.c.b16 %v139, %v136
  %v164 = vpack.c.b16 %v140, %v137
  %v165 = vpack.c.b16 %v141, %v138
  %v166 = vpack.c.b16 %v145, %v142
  %v167 = vpack.c.b16 %v146, %v143
  %v168 = vpack.c.b16 %v147, %v144
  %v169 = vpack.c.b16 %v151, %v148
  %v170 = vpack.c.b16 %v152, %v149
  %v171 = vpack.c.b16 %v153, %v150
  %v238 = vunpack.c.l.b16 %v39
  %v239 = vunpack.c.l.b16 %v40
  %v240 = vunpack.c.l.b16 %v41
  %v241 = vunpack.c.l.b16 %v42
  %v242 = vunpack.c.l.b16 %v43
  %v243 = vunpack.c.l.b16 %v44
  %v244 = vunpack.c.l.b16 %v45
  %v245 = vunpack.c.l.b16 %v46
  %v246 = vunpack.c.l.b16 %v47
  %v247 = vunpack.c.l.b16 %v48
  %v248 = vunpack.c.l.b16 %v49
  %v249 = vunpack.c.l.b16 %v50
  %v250 = vunpack.c.l.b16 %v51
  %v251 = vunpack.c.l.b16 %v52
  %v252 = vunpack.c.l.b16 %v53
  %v253 = vunpack.c.l.b16 %v54
  %v254 = vunpack.c.l.b16 %v55
  %v255 = vunpack.c.l.b16 %v56
  %v256 = vunpack.c.l.b16 %v57
  %v257 = vunpack.c.l.b16 %v58
  %v258 = vunpack.c.l.b16 %v59
  %v259 = vunpack.c.l.b16 %v60
  %v260 = vunpack.c.l.b16 %v61
  %v261 = vunpack.c.l.b16 %v62
  %v262 = vunpack.c.l.b16 %v63
  %v263 = vunpack.c.l.b16 %v64
  %v264 = vunpack.c.l.b16 %v65
  %v265 = vunpack.c.l.b16 %v66
  %v266 = vunpack.c.l.b16 %v67
  %v267 = vunpack.c.l.b16 %v68
  %v268 = vunpack.c.l.b16 %v69
  %v269 = vunpack.c.l.b16 %v70
  %v270 = vunpack.c.l.b16 %v71
  %v271 = vunpack.c.l.b16 %v72
  %v272 = vunpack.c.l.b16 %v73
  %v273 = vunpack.c.l.b16 %v74
  %v274 = vunpack.c.l.b16 %v75
  %v275 = vunpack.c.l.b16 %v76
  %v276 = vunpack.c.l.b16 %v77
  %v277 = vunpack.c.l.b16 %v78
  %v278 = vunpack.c.l.b16 %v79
  %v279 = vunpack.c.l.b16 %v80
  %v280 = vunpack.c.l.b16 %v81
  %v281 = vunpack.c.l.b16 %v82
  %v282 = vunpack.c.l.b16 %v83
  %v283 = vunpack.c.l.b16 %v84
  %v284 = vunpack.c.l.b16 %v85
  %v285 = vunpack.c.l.b16 %v86
  %v286 = vpack.c.b16 %v239, %v238
  %v287 = vpack.c.b16 %v241, %v240
  %v288 = vpack.c.b16 %v243, %v242
  %v289 = vpack.c.b16 %v245, %v244
  %v290 = vpack.c.b16 %v247, %v246
  %v291 = vpack.c.b16 %v249, %v248
  %v292 = vpack.c.b16 %v251, %v250
  %v293 = vpack.c.b16 %v253, %v252
  %v294 = vpack.c.b16 %v255, %v254
  %v295 = vpack.c.b16 %v257, %v256
  %v296 = vpack.c.b16 %v259, %v258
  %v297 = vpack.c.b16 %v261, %v260
  %v298 = vpack.c.b16 %v263, %v262
  %v299 = vpack.c.b16 %v265, %v264
  %v300 = vpack.c.b16 %v267, %v266
  %v301 = vpack.c.b16 %v269, %v268
  %v302 = vpack.c.b16 %v271, %v270
  %v303 = vpack.c.b16 %v273, %v272
  %v304 = vpack.c.b16 %v275, %v274
  %v305 = vpack.c.b16 %v277, %v276
  %v306 = vpack.c.b16 %v279, %v278
  %v307 = vpack.c.b16 %v281, %v280
  %v308 = vpack.c.b16 %v283, %v282
  %v309 = vpack.c.b16 %v285, %v284
  %334 = vmatprep.subr.bf16.mxu0 0
  %335 = vmatpush1.bf16.msra.mxu0 %v293
  %336 = vmatprep.subr.bf16.mxu0 0
  %337 = vmatpush1.bf16.msra.mxu0 %v292
  %338 = vmatprep.subr.bf16.mxu0 0
  %339 = vmatpush1.bf16.msra.mxu0 %v291
  %340 = vmatprep.subr.bf16.mxu0 0
  %341 = vmatpush1.bf16.msra.mxu0 %v290
  %342 = vmatprep.subr.bf16.mxu0 0
  %343 = vmatpush1.bf16.msra.mxu0 %v289
  %344 = vmatprep.subr.bf16.mxu0 0
  %345 = vmatpush1.bf16.msra.mxu0 %v288
  %346 = vmatprep.subr.bf16.mxu0 0
  %347 = vmatpush1.bf16.msra.mxu0 %v287
  %348 = vmatprep.subr.bf16.mxu0 0
  %349 = vmatpush1.bf16.msra.mxu0 %v286
  %350 = vmatprep.subr.bf16.mxu0 0
  %351 = vmatpush2.bf16.msra.mxu0 %v301
  %352 = vmatprep.subr.bf16.mxu0 0
  %353 = vmatpush2.bf16.msra.mxu0 %v300
  %354 = vmatprep.subr.bf16.mxu0 0
  %355 = vmatpush2.bf16.msra.mxu0 %v299
  %356 = vmatprep.subr.bf16.mxu0 0
  %357 = vmatpush2.bf16.msra.mxu0 %v298
  %358 = vmatprep.subr.bf16.mxu0 0
  %359 = vmatpush2.bf16.msra.mxu0 %v297
  %360 = vmatprep.subr.bf16.mxu0 0
  %361 = vmatpush2.bf16.msra.mxu0 %v296
  %362 = vmatprep.subr.bf16.mxu0 0
  %363 = vmatpush2.bf16.msra.mxu0 %v295
  %364 = vmatprep.subr.bf16.mxu0 0
  %365 = vmatpush2.bf16.msra.mxu0 %v294
  %366 = vmatprep.mubr.bf16.mxu0 %v155
  %367 = vmatmul.mubr.bf16.gmra.mxu0 %v154
  %v368 = vpop.f32.mrf.mxu0
  %v369 = vadd.f32 %v92, %v368
  %v370 = vpop.f32.mrf.mxu0
  %v371 = vpop.f32.mrf.mxu0
  %v372 = vadd.f32 %v92, %v371
  %v373 = vpop.f32.mrf.mxu0
  %374 = vmatprep.mubr.bf16.mxu0 %v158
  %375 = vmatmul.mubr.bf16.gmra.mxu0 %v157
  %v376 = vpop.f32.mrf.mxu0
  %v377 = vadd.f32 %v92, %v376
  %v378 = vpop.f32.mrf.mxu0
  %v379 = vpop.f32.mrf.mxu0
  %v380 = vadd.f32 %v92, %v379
  %v381 = vpop.f32.mrf.mxu0
  %382 = vmatprep.mubr.bf16.mxu0 %v161
  %383 = vmatmul.mubr.bf16.gmra.mxu0 %v160
  %v384 = vpop.f32.mrf.mxu0
  %v385 = vadd.f32 %v92, %v384
  %v386 = vpop.f32.mrf.mxu0
  %v387 = vpop.f32.mrf.mxu0
  %v388 = vadd.f32 %v92, %v387
  %v389 = vpop.f32.mrf.mxu0
  %390 = vmatprep.mubr.bf16.mxu0 %v164
  %391 = vmatmul.mubr.bf16.gmra.mxu0 %v163
  %v392 = vpop.f32.mrf.mxu0
  %v393 = vadd.f32 %v92, %v392
  %v394 = vpop.f32.mrf.mxu0
  %v395 = vpop.f32.mrf.mxu0
  %v396 = vadd.f32 %v92, %v395
  %v397 = vpop.f32.mrf.mxu0
  %398 = vmatprep.mubr.bf16.mxu0 %v167
  %399 = vmatmul.mubr.bf16.gmra.mxu0 %v166
  %v400 = vpop.f32.mrf.mxu0
  %v401 = vadd.f32 %v92, %v400
  %v402 = vpop.f32.mrf.mxu0
  %v403 = vpop.f32.mrf.mxu0
  %v404 = vadd.f32 %v92, %v403
  %v405 = vpop.f32.mrf.mxu0
  %406 = vmatprep.mubr.bf16.mxu0 %v170
  %407 = vmatmul.mubr.bf16.gmra.mxu0 %v169
  %v408 = vpop.f32.mrf.mxu0
  %v409 = vadd.f32 %v92, %v408
  %v410 = vpop.f32.mrf.mxu0
  %v411 = vpop.f32.mrf.mxu0
  %v412 = vadd.f32 %v92, %v411
  %v413 = vpop.f32.mrf.mxu0
  %414 = vdwg.mxu0
  %415 = vmatprep.subr.bf16.mxu0 0
  %416 = vmatpush1.bf16.msra.mxu0 %v309
  %417 = vmatprep.subr.bf16.mxu0 0
  %418 = vmatpush1.bf16.msra.mxu0 %v308
  %419 = vmatprep.subr.bf16.mxu0 0
  %420 = vmatpush1.bf16.msra.mxu0 %v307
  %421 = vmatprep.subr.bf16.mxu0 0
  %422 = vmatpush1.bf16.msra.mxu0 %v306
  %423 = vmatprep.subr.bf16.mxu0 0
  %424 = vmatpush1.bf16.msra.mxu0 %v305
  %425 = vmatprep.subr.bf16.mxu0 0
  %426 = vmatpush1.bf16.msra.mxu0 %v304
  %427 = vmatprep.subr.bf16.mxu0 0
  %428 = vmatpush1.bf16.msra.mxu0 %v303
  %429 = vmatprep.subr.bf16.mxu0 0
  %430 = vmatpush1.bf16.msra.mxu0 %v302
  %431 = vmatprep.subr.bf16.mxu0 0
  %432 = vmatpush2.bf16.msra.mxu0 0
  %433 = vmatprep.subr.bf16.mxu0 0
  %434 = vmatpush2.bf16.msra.mxu0 0
  %435 = vmatprep.subr.bf16.mxu0 0
  %436 = vmatpush2.bf16.msra.mxu0 0
  %437 = vmatprep.subr.bf16.mxu0 0
  %438 = vmatpush2.bf16.msra.mxu0 0
  %439 = vmatprep.subr.bf16.mxu0 0
  %440 = vmatpush2.bf16.msra.mxu0 0
  %441 = vmatprep.subr.bf16.mxu0 0
  %442 = vmatpush2.bf16.msra.mxu0 0
  %443 = vmatprep.subr.bf16.mxu0 0
  %444 = vmatpush2.bf16.msra.mxu0 0
  %445 = vmatprep.subr.bf16.mxu0 0
  %446 = vmatpush2.bf16.msra.mxu0 0
  %447 = vmatprep.mubr.bf16.mxu0 0
  %448 = vmatmul.mubr.bf16.gmra.mxu0 %v156
  %v449 = vpop.f32.mrf.mxu0
  %v450 = vadd.f32 %v369, %v449
  %v451 = vpop.f32.mrf.mxu0
  %v452 = vpop.f32.mrf.mxu0
  %v453 = vadd.f32 %v372, %v452
  %v454 = vpop.f32.mrf.mxu0
  %455 = vmatprep.mubr.bf16.mxu0 0
  %456 = vmatmul.mubr.bf16.gmra.mxu0 %v159
  %v457 = vpop.f32.mrf.mxu0
  %v458 = vadd.f32 %v377, %v457
  %v459 = vpop.f32.mrf.mxu0
  %v460 = vpop.f32.mrf.mxu0
  %v461 = vadd.f32 %v380, %v460
  %v462 = vpop.f32.mrf.mxu0
  %463 = vmatprep.mubr.bf16.mxu0 0
  %464 = vmatmul.mubr.bf16.gmra.mxu0 %v162
  %v465 = vpop.f32.mrf.mxu0
  %v466 = vadd.f32 %v385, %v465
  %v467 = vpop.f32.mrf.mxu0
  %v468 = vpop.f32.mrf.mxu0
  %v469 = vadd.f32 %v388, %v468
  %v470 = vpop.f32.mrf.mxu0
  %471 = vmatprep.mubr.bf16.mxu0 0
  %472 = vmatmul.mubr.bf16.gmra.mxu0 %v165
  %v473 = vpop.f32.mrf.mxu0
  %v474 = vadd.f32 %v393, %v473
  %v475 = vpop.f32.mrf.mxu0
  %v476 = vpop.f32.mrf.mxu0
  %v477 = vadd.f32 %v396, %v476
  %v478 = vpop.f32.mrf.mxu0
  %479 = vmatprep.mubr.bf16.mxu0 0
  %480 = vmatmul.mubr.bf16.gmra.mxu0 %v168
  %v481 = vpop.f32.mrf.mxu0
  %v482 = vadd.f32 %v401, %v481
  %v483 = vpop.f32.mrf.mxu0
  %v484 = vpop.f32.mrf.mxu0
  %v485 = vadd.f32 %v404, %v484
  %v486 = vpop.f32.mrf.mxu0
  %487 = vmatprep.mubr.bf16.mxu0 0
  %488 = vmatmul.mubr.bf16.gmra.mxu0 %v171
  %v489 = vpop.f32.mrf.mxu0
  %v490 = vadd.f32 %v409, %v489
  %v491 = vpop.f32.mrf.mxu0
  %v492 = vpop.f32.mrf.mxu0
  %v493 = vadd.f32 %v412, %v492
  %v494 = vpop.f32.mrf.mxu0
  %495 = vdwg.mxu0
  %vm496 = vcmp.gt.f32.partialorder %v450, 0.0
  %vm497 = vcmp.gt.f32.partialorder %v453, 0.0
  %vm498 = vcmp.gt.f32.partialorder %v458, 0.0
  %vm499 = vcmp.gt.f32.partialorder %v461, 0.0
  %vm500 = vcmp.gt.f32.partialorder %v466, 0.0
  %vm501 = vcmp.gt.f32.partialorder %v469, 0.0
  %vm502 = vcmp.gt.f32.partialorder %v474, 0.0
  %vm503 = vcmp.gt.f32.partialorder %v477, 0.0
  %vm504 = vcmp.gt.f32.partialorder %v482, 0.0
  %vm505 = vcmp.gt.f32.partialorder %v485, 0.0
  %vm506 = vcmp.gt.f32.partialorder %v490, 0.0
  %vm507 = vcmp.gt.f32.partialorder %v493, 0.0
  %v508 = vmul.f32 %v450, 0.01
  %v509 = vmul.f32 %v453, 0.01
  %v510 = vmul.f32 %v458, 0.01
  %v511 = vmul.f32 %v461, 0.01
  %v512 = vmul.f32 %v466, 0.01
  %v513 = vmul.f32 %v469, 0.01
  %v514 = vmul.f32 %v474, 0.01
  %v515 = vmul.f32 %v477, 0.01
  %v516 = vmul.f32 %v482, 0.01
  %v517 = vmul.f32 %v485, 0.01
  %v518 = vmul.f32 %v490, 0.01
  %v519 = vmul.f32 %v493, 0.01
  %v520 = vsel %vm496, %v450, %v508
  %v521 = vsel %vm497, %v453, %v509
  %v522 = vsel %vm498, %v458, %v510
  %v523 = vsel %vm499, %v461, %v511
  %v524 = vsel %vm500, %v466, %v512
  %v525 = vsel %vm501, %v469, %v513
  %v526 = vsel %vm502, %v474, %v514
  %v527 = vsel %vm503, %v477, %v515
  %v528 = vsel %vm504, %v482, %v516
  %v529 = vsel %vm505, %v485, %v517
  %v530 = vsel %vm506, %v490, %v518
  %v531 = vsel %vm507, %v493, %v519
  %v532 = vmax.f32 %v520, %v523
  %v533 = vmax.f32 %v521, %v524
  %v534 = vmax.f32 %v522, %v525
  %v535 = vmax.f32 %v526, %v529
  %v536 = vmax.f32 %v527, %v530
  %v537 = vmax.f32 %v528, %v531
  %v538 = vmax.f32 %v532, %v535
  %v539 = vmax.f32 %v533, %v536
  %v540 = vmax.f32 %v534, %v537
  %541 = vst [vmem:[%s3] sm:$0xff] %v538
  %542 = vst [vmem:[%s3 + $0x8] sm:$0xff] %v539
  %543 = vst [vmem:[%s3 + $0x10] sm:$0xff] %v540
  // Predicated region
  $region14: #{cifarcnn_hyper_forward.8} parent=0 // pred_check
    _
  $region15: #{cifarcnn_hyper_forward.8} parent=0 // pred_check_branch
    %545 = sbr.rel (0) target = $region17
  $region16: #{cifarcnn_hyper_forward.8} parent=0 // pred_region
    _
  $region17: #{cifarcnn_hyper_forward.8} parent=0 // pred_fallthru
    _
  // Predicated region
  $region18: #{cifarcnn_hyper_forward.8} parent=0 // pred_check
    _
  $region19: #{cifarcnn_hyper_forward.8} parent=0 // pred_check_branch
    %547 = sbr.rel (0) target = $region21
  $region20: #{cifarcnn_hyper_forward.8} parent=0 // pred_region
    _
  $region21: #{cifarcnn_hyper_forward.8} parent=0 // pred_fallthru
    _

// kernel: cifarcnn_hyper_forward.9
$region0: #{cifarcnn_hyper_forward.9}
  #allocation0 [shape = 'u32[]', space=smem, size = 0x4, offset = 0x4, fixed_abs, tag = 'smem constant byte address 0x4 - core index']
  #allocation1 [shape = 'u32[144,128]{1,0:T(1,128)}', space=vmem, size = 0x12000, scoped, tag = 'internal scratch']
  %s0 = inlined_call_operand.vmem [shape: f32[2,576], index: 0, kind: input, shape index: {}]
  %s1 = inlined_call_operand.vmem [shape: f32[576,128], index: 1, kind: input, shape index: {}]
  %s2 = inlined_call_operand.vmem [shape: f32[1,128], index: 2, kind: input, shape index: {}]
  %s3 = inlined_call_operand.vmem [shape: f32[128,10], index: 3, kind: input, shape index: {}]
  %s4 = inlined_call_operand.vmem [shape: f32[1,10], index: 4, kind: input, shape index: {}]
  %s5 = inlined_call_operand.hbm [shape: f32[2,128], index: 5, kind: output, shape index: {0}]
  %s6 = inlined_call_operand.hbm [shape: f32[2,10], index: 6, kind: output, shape index: {1}]
  %7 = xla_tuple %s5, %s6
  %s8 = sld [smem:[#allocation0]]
  $region38: #{cifarcnn_hyper_forward.9} parent=0
    _
  %s10 = ssub.s32 1, %s8
  %s11 = scalar_select 0, %s10, %s8
  $region1: #{cifarcnn_hyper_forward.9} parent=0
    #allocation2 [shape = 'u8[1024]{0}', space=vmem, size = 0x400, scoped, tag = 'output window, operand 0, single buffered']
    #allocation3 [shape = 's32[1]{0}', space=sflag, size = 0x4, scoped, tag = 'scoped memory for cifarcnn_hyper_forward.9']
    #allocation4 [shape = 'u8[1024]{0}', space=vmem, size = 0x400, scoped, tag = 'output window, operand 1, single buffered']
    #allocation5 [shape = 's32[1]{0}', space=sflag, size = 0x4, scoped, tag = 'scoped memory for cifarcnn_hyper_forward.9']
    %12 = vsyncpa [#allocation3], 0
    %13 = vsyncpa [#allocation5], 0
    // Predicated region
    $region2: #{cifarcnn_hyper_forward.9} parent=1 // pred_check
      _
    $region3: #{cifarcnn_hyper_forward.9} parent=1 // pred_check_branch
      %15 = sbr.rel (0) target = $region5
    $region4: #{cifarcnn_hyper_forward.9} parent=1 // pred_region
      _
    $region5: #{cifarcnn_hyper_forward.9} parent=1 // pred_fallthru
      _
    // Predicated region
    $region6: #{cifarcnn_hyper_forward.9} parent=1 // pred_check
      _
    $region7: #{cifarcnn_hyper_forward.9} parent=1 // pred_check_branch
      %17 = sbr.rel (0) target = $region9
    $region8: #{cifarcnn_hyper_forward.9} parent=1 // pred_region
      _
    $region9: #{cifarcnn_hyper_forward.9} parent=1 // pred_fallthru
      _
    // Predicated region
    $region10: #{cifarcnn_hyper_forward.9} parent=1 // pred_check
      _
    $region11: #{cifarcnn_hyper_forward.9} parent=1 // pred_check_branch
      %19 = sbr.rel (0) target = $region13
    $region12: #{cifarcnn_hyper_forward.9} parent=1 // pred_region
      _
    $region13: #{cifarcnn_hyper_forward.9} parent=1 // pred_fallthru
      _
    // Predicated region
    $region14: #{cifarcnn_hyper_forward.9} parent=1 // pred_check
      _
    $region15: #{cifarcnn_hyper_forward.9} parent=1 // pred_check_branch
      %21 = sbr.rel (0) target = $region17
    $region16: #{cifarcnn_hyper_forward.9} parent=1 // pred_region
      _
    $region17: #{cifarcnn_hyper_forward.9} parent=1 // pred_fallthru
      _
    // Predicated region
    $region18: #{cifarcnn_hyper_forward.9} parent=1 // pred_check
      _
    $region19: #{cifarcnn_hyper_forward.9} parent=1 // pred_check_branch
      %23 = sbr.rel (0) target = $region21
    $region20: #{cifarcnn_hyper_forward.9} parent=1 // pred_region
      _
    $region21: #{cifarcnn_hyper_forward.9} parent=1 // pred_fallthru
      _
    %v24 = vld [vmem:[%s0] sm:$0xff]
    %v25 = vld [vmem:[%s0 + $0x8] sm:$0x3]
    %v26 = vld [vmem:[%s1] sm:$0xff]
    %v27 = vld [vmem:[%s1 + $0x8] sm:$0xff]
    %v28 = vld [vmem:[%s1 + $0x10] sm:$0xff]
    %v29 = vld [vmem:[%s1 + $0x18] sm:$0xff]
    %v30 = vld [vmem:[%s1 + $0x20] sm:$0xff]
    %v31 = vld [vmem:[%s1 + $0x28] sm:$0xff]
    %v32 = vld [vmem:[%s1 + $0x30] sm:$0xff]
    %v33 = vld [vmem:[%s1 + $0x38] sm:$0xff]
    %v34 = vld [vmem:[%s1 + $0x40] sm:$0xff]
    %v35 = vld [vmem:[%s1 + $0x48] sm:$0xff]
    %v36 = vld [vmem:[%s1 + $0x50] sm:$0xff]
    %v37 = vld [vmem:[%s1 + $0x58] sm:$0xff]
    %v38 = vld [vmem:[%s1 + $0x60] sm:$0xff]
    %v39 = vld [vmem:[%s1 + $0x68] sm:$0xff]
    %v40 = vld [vmem:[%s1 + $0x70] sm:$0xff]
    %v41 = vld [vmem:[%s1 + $0x78] sm:$0xff]
    %v42 = vld [vmem:[%s1 + $0x80] sm:$0xff]
    %v43 = vld [vmem:[%s1 + $0x88] sm:$0xff]
    %v44 = vld [vmem:[%s1 + $0x90] sm:$0xff]
    %v45 = vld [vmem:[%s1 + $0x98] sm:$0xff]
    %v46 = vld [vmem:[%s1 + $0xa0] sm:$0xff]
    %v47 = vld [vmem:[%s1 + $0xa8] sm:$0xff]
    %v48 = vld [vmem:[%s1 + $0xb0] sm:$0xff]
    %v49 = vld [vmem:[%s1 + $0xb8] sm:$0xff]
    %v50 = vld [vmem:[%s1 + $0xc0] sm:$0xff]
    %v51 = vld [vmem:[%s1 + $0xc8] sm:$0xff]
    %v52 = vld [vmem:[%s1 + $0xd0] sm:$0xff]
    %v53 = vld [vmem:[%s1 + $0xd8] sm:$0xff]
    %v54 = vld [vmem:[%s1 + $0xe0] sm:$0xff]
    %v55 = vld [vmem:[%s1 + $0xe8] sm:$0xff]
    %v56 = vld [vmem:[%s1 + $0xf0] sm:$0xff]
    %v57 = vld [vmem:[%s1 + $0xf8] sm:$0xff]
    %v58 = vld [vmem:[%s1 + $0x100] sm:$0xff]
    %v59 = vld [vmem:[%s1 + $0x108] sm:$0xff]
    %v60 = vld [vmem:[%s1 + $0x110] sm:$0xff]
    %v61 = vld [vmem:[%s1 + $0x118] sm:$0xff]
    %v62 = vld [vmem:[%s1 + $0x120] sm:$0xff]
    %v63 = vld [vmem:[%s1 + $0x128] sm:$0xff]
    %v64 = vld [vmem:[%s1 + $0x130] sm:$0xff]
    %v65 = vld [vmem:[%s1 + $0x138] sm:$0xff]
    %v66 = vld [vmem:[%s1 + $0x140] sm:$0xff]
    %v67 = vld [vmem:[%s1 + $0x148] sm:$0xff]
    %v68 = vld [vmem:[%s1 + $0x150] sm:$0xff]
    %v69 = vld [vmem:[%s1 + $0x158] sm:$0xff]
    %v70 = vld [vmem:[%s1 + $0x160] sm:$0xff]
    %v71 = vld [vmem:[%s1 + $0x168] sm:$0xff]
    %v72 = vld [vmem:[%s1 + $0x170] sm:$0xff]
    %v73 = vld [vmem:[%s1 + $0x178] sm:$0xff]
    %v74 = vld [vmem:[%s1 + $0x180] sm:$0xff]
    %v75 = vld [vmem:[%s1 + $0x188] sm:$0xff]
    %v76 = vld [vmem:[%s1 + $0x190] sm:$0xff]
    %v77 = vld [vmem:[%s1 + $0x198] sm:$0xff]
    %v78 = vld [vmem:[%s1 + $0x1a0] sm:$0xff]
    %v79 = vld [vmem:[%s1 + $0x1a8] sm:$0xff]
    %v80 = vld [vmem:[%s1 + $0x1b0] sm:$0xff]
    %v81 = vld [vmem:[%s1 + $0x1b8] sm:$0xff]
    %v82 = vld [vmem:[%s1 + $0x1c0] sm:$0xff]
    %v83 = vld [vmem:[%s1 + $0x1c8] sm:$0xff]
    %v84 = vld [vmem:[%s1 + $0x1d0] sm:$0xff]
    %v85 = vld [vmem:[%s1 + $0x1d8] sm:$0xff]
    %v86 = vld [vmem:[%s1 + $0x1e0] sm:$0xff]
    %v87 = vld [vmem:[%s1 + $0x1e8] sm:$0xff]
    %v88 = vld [vmem:[%s1 + $0x1f0] sm:$0xff]
    %v89 = vld [vmem:[%s1 + $0x1f8] sm:$0xff]
    %v90 = vld [vmem:[%s1 + $0x200] sm:$0xff]
    %v91 = vld [vmem:[%s1 + $0x208] sm:$0xff]
    %v92 = vld [vmem:[%s1 + $0x210] sm:$0xff]
    %v93 = vld [vmem:[%s1 + $0x218] sm:$0xff]
    %v94 = vld [vmem:[%s1 + $0x220] sm:$0xff]
    %v95 = vld [vmem:[%s1 + $0x228] sm:$0xff]
    %v96 = vld [vmem:[%s1 + $0x230] sm:$0xff]
    %v97 = vld [vmem:[%s1 + $0x238] sm:$0xff]
    %v98 = vld [vmem:[%s2] sm:$0x1]
    %v100 = vlaneseq
    %v101 = vshrl.u32 %v100, 7
    %v102 = vsub.s32 0, %v101
    %v103 = vrot.slane %v98, %v102
    %v107 = vcombine.high %v24, %v24
    %v109 = vunpack.c.l.s4 1983009808
    %v110 = vunpack.c.0.s8 %v109
    %v111 = vlaneseq
    %v112 = vshrl.u32 %v111, 7
    %v113 = vsub.s32 %v110, %v112
    %v114 = vrot.slane %v24, %v113
    %v116 = vunpack.c.l.s4 1983009808
    %v117 = vunpack.c.0.s8 %v116
    %v118 = vlaneseq
    %v119 = vshrl.u32 %v118, 7
    %v120 = vsub.s32 %v117, %v119
    %v121 = vrot.slane %v107, %v120
    %v122 = vcombine.high %v114, %v114
    %v123 = vcombine.high %v121, %v121
    %v125 = vunpack.c.l.s4 1983009808
    %v126 = vunpack.c.0.s8 %v125
    %v127 = vlaneseq
    %v128 = vshrl.u32 %v127, 7
    %v129 = vsub.s32 %v126, %v128
    %v130 = vrot.slane %v25, %v129
    %vm135 = vcmask 523264
    %v136 = vsel %vm135, %v130, 0
    %138 = vmatprep.subr.mxu0 0.0
    %139 = vmatpush1.msra.mxu0 %v41
    %140 = vmatprep.subr.mxu0 0.0
    %141 = vmatpush1.msra.mxu0 %v40
    %142 = vmatprep.subr.mxu0 0.0
    %143 = vmatpush1.msra.mxu0 %v39
    %144 = vmatprep.subr.mxu0 0.0
    %145 = vmatpush1.msra.mxu0 %v38
    %146 = vmatprep.subr.mxu0 0.0
    %147 = vmatpush1.msra.mxu0 %v37
    %148 = vmatprep.subr.mxu0 0.0
    %149 = vmatpush1.msra.mxu0 %v36
    %150 = vmatprep.subr.mxu0 0.0
    %151 = vmatpush1.msra.mxu0 %v35
    %152 = vmatprep.subr.mxu0 0.0
    %153 = vmatpush1.msra.mxu0 %v34
    %154 = vmatprep.subr.mxu0 0.0
    %155 = vmatpush1.msra.mxu0 %v33
    %156 = vmatprep.subr.mxu0 0.0
    %157 = vmatpush1.msra.mxu0 %v32
    %158 = vmatprep.subr.mxu0 0.0
    %159 = vmatpush1.msra.mxu0 %v31
    %160 = vmatprep.subr.mxu0 0.0
    %161 = vmatpush1.msra.mxu0 %v30
    %162 = vmatprep.subr.mxu0 0.0
    %163 = vmatpush1.msra.mxu0 %v29
    %164 = vmatprep.subr.mxu0 0.0
    %165 = vmatpush1.msra.mxu0 %v28
    %166 = vmatprep.subr.mxu0 0.0
    %167 = vmatpush1.msra.mxu0 %v27
    %168 = vmatprep.subr.mxu0 0.0
    %169 = vmatpush1.msra.mxu0 %v26
    %170 = vmatprep.subr.mxu0 0.0
    %171 = vmatpush2.msra.mxu0 %v57
    %172 = vmatprep.subr.mxu0 0.0
    %173 = vmatpush2.msra.mxu0 %v56
    %174 = vmatprep.subr.mxu0 0.0
    %175 = vmatpush2.msra.mxu0 %v55
    %176 = vmatprep.subr.mxu0 0.0
    %177 = vmatpush2.msra.mxu0 %v54
    %178 = vmatprep.subr.mxu0 0.0
    %179 = vmatpush2.msra.mxu0 %v53
    %180 = vmatprep.subr.mxu0 0.0
    %181 = vmatpush2.msra.mxu0 %v52
    %182 = vmatprep.subr.mxu0 0.0
    %183 = vmatpush2.msra.mxu0 %v51
    %184 = vmatprep.subr.mxu0 0.0
    %185 = vmatpush2.msra.mxu0 %v50
    %186 = vmatprep.subr.mxu0 0.0
    %187 = vmatpush2.msra.mxu0 %v49
    %188 = vmatprep.subr.mxu0 0.0
    %189 = vmatpush2.msra.mxu0 %v48
    %190 = vmatprep.subr.mxu0 0.0
    %191 = vmatpush2.msra.mxu0 %v47
    %192 = vmatprep.subr.mxu0 0.0
    %193 = vmatpush2.msra.mxu0 %v46
    %194 = vmatprep.subr.mxu0 0.0
    %195 = vmatpush2.msra.mxu0 %v45
    %196 = vmatprep.subr.mxu0 0.0
    %197 = vmatpush2.msra.mxu0 %v44
    %198 = vmatprep.subr.mxu0 0.0
    %199 = vmatpush2.msra.mxu0 %v43
    %200 = vmatprep.subr.mxu0 0.0
    %201 = vmatpush2.msra.mxu0 %v42
    %202 = vmatprep.mubr.f32.mxu0 %v122
    %203 = vmatmul.mubr.f32.gmra.mxu0 %v114
    %v204 = vpop.f32.mrf.mxu0
    %v205 = vadd.f32 %v103, %v204
    %v206 = vpop.f32.mrf.mxu0
    %207 = vdwg.mxu0
    %208 = vmatprep.subr.mxu0 0.0
    %209 = vmatpush1.msra.mxu0 %v73
    %210 = vmatprep.subr.mxu0 0.0
    %211 = vmatpush1.msra.mxu0 %v72
    %212 = vmatprep.subr.mxu0 0.0
    %213 = vmatpush1.msra.mxu0 %v71
    %214 = vmatprep.subr.mxu0 0.0
    %215 = vmatpush1.msra.mxu0 %v70
    %216 = vmatprep.subr.mxu0 0.0
    %217 = vmatpush1.msra.mxu0 %v69
    %218 = vmatprep.subr.mxu0 0.0
    %219 = vmatpush1.msra.mxu0 %v68
    %220 = vmatprep.subr.mxu0 0.0
    %221 = vmatpush1.msra.mxu0 %v67
    %222 = vmatprep.subr.mxu0 0.0
    %223 = vmatpush1.msra.mxu0 %v66
    %224 = vmatprep.subr.mxu0 0.0
    %225 = vmatpush1.msra.mxu0 %v65
    %226 = vmatprep.subr.mxu0 0.0
    %227 = vmatpush1.msra.mxu0 %v64
    %228 = vmatprep.subr.mxu0 0.0
    %229 = vmatpush1.msra.mxu0 %v63
    %230 = vmatprep.subr.mxu0 0.0
    %231 = vmatpush1.msra.mxu0 %v62
    %232 = vmatprep.subr.mxu0 0.0
    %233 = vmatpush1.msra.mxu0 %v61
    %234 = vmatprep.subr.mxu0 0.0
    %235 = vmatpush1.msra.mxu0 %v60
    %236 = vmatprep.subr.mxu0 0.0
    %237 = vmatpush1.msra.mxu0 %v59
    %238 = vmatprep.subr.mxu0 0.0
    %239 = vmatpush1.msra.mxu0 %v58
    %240 = vmatprep.subr.mxu0 0.0
    %241 = vmatpush2.msra.mxu0 %v89
    %242 = vmatprep.subr.mxu0 0.0
    %243 = vmatpush2.msra.mxu0 %v88
    %244 = vmatprep.subr.mxu0 0.0
    %245 = vmatpush2.msra.mxu0 %v87
    %246 = vmatprep.subr.mxu0 0.0
    %247 = vmatpush2.msra.mxu0 %v86
    %248 = vmatprep.subr.mxu0 0.0
    %249 = vmatpush2.msra.mxu0 %v85
    %250 = vmatprep.subr.mxu0 0.0
    %251 = vmatpush2.msra.mxu0 %v84
    %252 = vmatprep.subr.mxu0 0.0
    %253 = vmatpush2.msra.mxu0 %v83
    %254 = vmatprep.subr.mxu0 0.0
    %255 = vmatpush2.msra.mxu0 %v82
    %256 = vmatprep.subr.mxu0 0.0
    %257 = vmatpush2.msra.mxu0 %v81
    %258 = vmatprep.subr.mxu0 0.0
    %259 = vmatpush2.msra.mxu0 %v80
    %260 = vmatprep.subr.mxu0 0.0
    %261 = vmatpush2.msra.mxu0 %v79
    %262 = vmatprep.subr.mxu0 0.0
    %263 = vmatpush2.msra.mxu0 %v78
    %264 = vmatprep.subr.mxu0 0.0
    %265 = vmatpush2.msra.mxu0 %v77
    %266 = vmatprep.subr.mxu0 0.0
    %267 = vmatpush2.msra.mxu0 %v76
    %268 = vmatprep.subr.mxu0 0.0
    %269 = vmatpush2.msra.mxu0 %v75
    %270 = vmatprep.subr.mxu0 0.0
    %271 = vmatpush2.msra.mxu0 %v74
    %272 = vmatprep.mubr.f32.mxu0 %v123
    %273 = vmatmul.mubr.f32.gmra.mxu0 %v121
    %v274 = vpop.f32.mrf.mxu0
    %v275 = vadd.f32 %v205, %v274
    %v276 = vpop.f32.mrf.mxu0
    %277 = vdwg.mxu0
    %278 = vmatprep.subr.mxu0 0.0
    %279 = vmatpush1.msra.mxu0 0.0
    %280 = vmatprep.subr.mxu0 0.0
    %281 = vmatpush1.msra.mxu0 0.0
    %282 = vmatprep.subr.mxu0 0.0
    %283 = vmatpush1.msra.mxu0 0.0
    %284 = vmatprep.subr.mxu0 0.0
    %285 = vmatpush1.msra.mxu0 0.0
    %286 = vmatprep.subr.mxu0 0.0
    %287 = vmatpush1.msra.mxu0 0.0
    %288 = vmatprep.subr.mxu0 0.0
    %289 = vmatpush1.msra.mxu0 0.0
    %290 = vmatprep.subr.mxu0 0.0
    %291 = vmatpush1.msra.mxu0 0.0
    %292 = vmatprep.subr.mxu0 0.0
    %293 = vmatpush1.msra.mxu0 0.0
    %294 = vmatprep.subr.mxu0 0.0
    %295 = vmatpush1.msra.mxu0 %v97
    %296 = vmatprep.subr.mxu0 0.0
    %297 = vmatpush1.msra.mxu0 %v96
    %298 = vmatprep.subr.mxu0 0.0
    %299 = vmatpush1.msra.mxu0 %v95
    %300 = vmatprep.subr.mxu0 0.0
    %301 = vmatpush1.msra.mxu0 %v94
    %302 = vmatprep.subr.mxu0 0.0
    %303 = vmatpush1.msra.mxu0 %v93
    %304 = vmatprep.subr.mxu0 0.0
    %305 = vmatpush1.msra.mxu0 %v92
    %306 = vmatprep.subr.mxu0 0.0
    %307 = vmatpush1.msra.mxu0 %v91
    %308 = vmatprep.subr.mxu0 0.0
    %309 = vmatpush1.msra.mxu0 %v90
    %310 = vmatprep.subr.mxu0 0.0
    %311 = vmatpush2.msra.mxu0 0.0
    %312 = vmatprep.subr.mxu0 0.0
    %313 = vmatpush2.msra.mxu0 0.0
    %314 = vmatprep.subr.mxu0 0.0
    %315 = vmatpush2.msra.mxu0 0.0
    %316 = vmatprep.subr.mxu0 0.0
    %317 = vmatpush2.msra.mxu0 0.0
    %318 = vmatprep.subr.mxu0 0.0
    %319 = vmatpush2.msra.mxu0 0.0
    %320 = vmatprep.subr.mxu0 0.0
    %321 = vmatpush2.msra.mxu0 0.0
    %322 = vmatprep.subr.mxu0 0.0
    %323 = vmatpush2.msra.mxu0 0.0
    %324 = vmatprep.subr.mxu0 0.0
    %325 = vmatpush2.msra.mxu0 0.0
    %326 = vmatprep.subr.mxu0 0.0
    %327 = vmatpush2.msra.mxu0 0.0
    %328 = vmatprep.subr.mxu0 0.0
    %329 = vmatpush2.msra.mxu0 0.0
    %330 = vmatprep.subr.mxu0 0.0
    %331 = vmatpush2.msra.mxu0 0.0
    %332 = vmatprep.subr.mxu0 0.0
    %333 = vmatpush2.msra.mxu0 0.0
    %334 = vmatprep.subr.mxu0 0.0
    %335 = vmatpush2.msra.mxu0 0.0
    %336 = vmatprep.subr.mxu0 0.0
    %337 = vmatpush2.msra.mxu0 0.0
    %338 = vmatprep.subr.mxu0 0.0
    %339 = vmatpush2.msra.mxu0 0.0
    %340 = vmatprep.subr.mxu0 0.0
    %341 = vmatpush2.msra.mxu0 0.0
    %342 = vmatprep.mubr.f32.mxu0 0.0
    %343 = vmatmul.mubr.f32.gmra.mxu0 %v136
    %v344 = vpop.f32.mrf.mxu0
    %v345 = vadd.f32 %v275, %v344
    %v346 = vpop.f32.mrf.mxu0
    %347 = vdwg.mxu0
    %vm348 = vcmp.gt.f32.partialorder %v345, 0.0
    %v349 = vmul.f32 %v345, 0.01
    %v350 = vsel %vm348, %v345, %v349
    %351 = vst [vmem:[#allocation2] sm:$0x3] %v350
    %v352 = vld [vmem:[%s3] sm:$0xff]
    %v353 = vld [vmem:[%s3 + $0x8] sm:$0xff]
    %v354 = vld [vmem:[%s3 + $0x10] sm:$0xff]
    %v355 = vld [vmem:[%s3 + $0x18] sm:$0xff]
    %v356 = vld [vmem:[%s3 + $0x20] sm:$0xff]
    %v357 = vld [vmem:[%s3 + $0x28] sm:$0xff]
    %v358 = vld [vmem:[%s3 + $0x30] sm:$0xff]
    %v359 = vld [vmem:[%s3 + $0x38] sm:$0xff]
    %v360 = vld [vmem:[%s3 + $0x40] sm:$0xff]
    %v361 = vld [vmem:[%s3 + $0x48] sm:$0xff]
    %v362 = vld [vmem:[%s3 + $0x50] sm:$0xff]
    %v363 = vld [vmem:[%s3 + $0x58] sm:$0xff]
    %v364 = vld [vmem:[%s3 + $0x60] sm:$0xff]
    %v365 = vld [vmem:[%s3 + $0x68] sm:$0xff]
    %v366 = vld [vmem:[%s3 + $0x70] sm:$0xff]
    %v367 = vld [vmem:[%s3 + $0x78] sm:$0xff]
    %v368 = vld [vmem:[%s4] sm:$0x1]
    %v370 = vlaneseq
    %v371 = vshrl.u32 %v370, 7
    %v372 = vsub.s32 0, %v371
    %v373 = vrot.slane %v368, %v372
    %375 = vmatprep.subr.mxu0 0.0
    %376 = vmatpush1.msra.mxu0 %v367
    %377 = vmatprep.subr.mxu0 0.0
    %378 = vmatpush1.msra.mxu0 %v366
    %379 = vmatprep.subr.mxu0 0.0
    %380 = vmatpush1.msra.mxu0 %v365
    %381 = vmatprep.subr.mxu0 0.0
    %382 = vmatpush1.msra.mxu0 %v364
    %383 = vmatprep.subr.mxu0 0.0
    %384 = vmatpush1.msra.mxu0 %v363
    %385 = vmatprep.subr.mxu0 0.0
    %386 = vmatpush1.msra.mxu0 %v362
    %387 = vmatprep.subr.mxu0 0.0
    %388 = vmatpush1.msra.mxu0 %v361
    %389 = vmatprep.subr.mxu0 0.0
    %390 = vmatpush1.msra.mxu0 %v360
    %391 = vmatprep.subr.mxu0 0.0
    %392 = vmatpush1.msra.mxu0 %v359
    %393 = vmatprep.subr.mxu0 0.0
    %394 = vmatpush1.msra.mxu0 %v358
    %395 = vmatprep.subr.mxu0 0.0
    %396 = vmatpush1.msra.mxu0 %v357
    %397 = vmatprep.subr.mxu0 0.0
    %398 = vmatpush1.msra.mxu0 %v356
    %399 = vmatprep.subr.mxu0 0.0
    %400 = vmatpush1.msra.mxu0 %v355
    %401 = vmatprep.subr.mxu0 0.0
    %402 = vmatpush1.msra.mxu0 %v354
    %403 = vmatprep.subr.mxu0 0.0
    %404 = vmatpush1.msra.mxu0 %v353
    %405 = vmatprep.subr.mxu0 0.0
    %406 = vmatpush1.msra.mxu0 %v352
    %407 = vmatprep.subr.mxu0 0.0
    %408 = vmatpush2.msra.mxu0 0.0
    %409 = vmatprep.subr.mxu0 0.0
    %410 = vmatpush2.msra.mxu0 0.0
    %411 = vmatprep.subr.mxu0 0.0
    %412 = vmatpush2.msra.mxu0 0.0
    %413 = vmatprep.subr.mxu0 0.0
    %414 = vmatpush2.msra.mxu0 0.0
    %415 = vmatprep.subr.mxu0 0.0
    %416 = vmatpush2.msra.mxu0 0.0
    %417 = vmatprep.subr.mxu0 0.0
    %418 = vmatpush2.msra.mxu0 0.0
    %419 = vmatprep.subr.mxu0 0.0
    %420 = vmatpush2.msra.mxu0 0.0
    %421 = vmatprep.subr.mxu0 0.0
    %422 = vmatpush2.msra.mxu0 0.0
    %423 = vmatprep.subr.mxu0 0.0
    %424 = vmatpush2.msra.mxu0 0.0
    %425 = vmatprep.subr.mxu0 0.0
    %426 = vmatpush2.msra.mxu0 0.0
    %427 = vmatprep.subr.mxu0 0.0
    %428 = vmatpush2.msra.mxu0 0.0
    %429 = vmatprep.subr.mxu0 0.0
    %430 = vmatpush2.msra.mxu0 0.0
    %431 = vmatprep.subr.mxu0 0.0
    %432 = vmatpush2.msra.mxu0 0.0
    %433 = vmatprep.subr.mxu0 0.0
    %434 = vmatpush2.msra.mxu0 0.0
    %435 = vmatprep.subr.mxu0 0.0
    %436 = vmatpush2.msra.mxu0 0.0
    %437 = vmatprep.subr.mxu0 0.0
    %438 = vmatpush2.msra.mxu0 0.0
    %439 = vmatprep.mubr.f32.mxu0 0.0
    %440 = vmatmul.mubr.f32.gmra.mxu0 %v350
    %v441 = vpop.f32.mrf.mxu0
    %v442 = vadd.f32 %v373, %v441
    %v443 = vpop.f32.mrf.mxu0
    %444 = vdwg.mxu0
    %vm445 = vcmask 74752
    %446 = vst.msk [vmem:[#allocation4] sm:$0x3] %vm445, %v442
    // Predicated region
    $region22: #{cifarcnn_hyper_forward.9} parent=1 // pred_check
      _
    $region23: #{cifarcnn_hyper_forward.9} parent=1 // pred_check_branch
      %448 = sbr.rel (0) target = $region25
    $region24: #{cifarcnn_hyper_forward.9} parent=1 // pred_region
      %s450 = ssub.s32 32, 32
      %451 = vsyncadd [#allocation3], %s450
      %s453 = sshll.u32 [#allocation2], 4
      %s454 = int_to_ptr.vmem [resolvable:$true] %s453
      %456 = dma.vmem_to_hbm [thread:$0]  %s454, 32, %s5, [#allocation3]
    $region25: #{cifarcnn_hyper_forward.9} parent=1 // pred_fallthru
      _
    // Predicated region
    $region26: #{cifarcnn_hyper_forward.9} parent=1 // pred_check
      _
    $region27: #{cifarcnn_hyper_forward.9} parent=1 // pred_check_branch
      %458 = sbr.rel (0) target = $region29
    $region28: #{cifarcnn_hyper_forward.9} parent=1 // pred_region
      %s460 = ssub.s32 32, 32
      %461 = vsyncadd [#allocation5], %s460
      %s463 = sshll.u32 [#allocation4], 4
      %s464 = int_to_ptr.vmem [resolvable:$true] %s463
      %466 = dma.vmem_to_hbm [thread:$0]  %s464, 32, %s6, [#allocation5]
    $region29: #{cifarcnn_hyper_forward.9} parent=1 // pred_fallthru
      _
    // Predicated region
    $region30: #{cifarcnn_hyper_forward.9} parent=1 // pred_check
      _
    $region31: #{cifarcnn_hyper_forward.9} parent=1 // pred_check_branch
      %468 = sbr.rel (0) target = $region33
    $region32: #{cifarcnn_hyper_forward.9} parent=1 // pred_region
      %469 = dma.done [#allocation3], 32
    $region33: #{cifarcnn_hyper_forward.9} parent=1 // pred_fallthru
      _
    // Predicated region
    $region34: #{cifarcnn_hyper_forward.9} parent=1 // pred_check
      _
    $region35: #{cifarcnn_hyper_forward.9} parent=1 // pred_check_branch
      %471 = sbr.rel (0) target = $region37
    $region36: #{cifarcnn_hyper_forward.9} parent=1 // pred_region
      %472 = dma.done [#allocation5], 32
    $region37: #{cifarcnn_hyper_forward.9} parent=1 // pred_fallthru
      _
    %473 = vsyncpa [#allocation3], 1
    %474 = vsyncpa [#allocation5], 1

</llo_original>
